<compile_context>
chip_gen: v5e
topology: v5e:2x2
jax: 0.10.0
libtpu: 0.0.40
codegen_flags: <defaults>
</compile_context>

<pallas_src>
import jax
import jax.numpy as jnp
from jax.experimental import pallas as pl
from jax.experimental.pallas import tpu as pltpu

EPS = 1e-5

F_IN = 1000   # input feature channels
C1 = 200      # conv1 out channels
C2 = 30       # conv2 out channels == LSTM input size
H = 15        # LSTM hidden size
NLAYERS = 2
FC1 = 5
FC2 = 2
K = 5         # conv kernel size
PAD = 2       # conv padding


# ---------------------------------------------------------------------------
# Kernel 1: conv1+BN1+ReLU -> conv2+BN2+ReLU -> (h2 @ Wih0 + b0) epilogue
# grid = (B,), "parallel".  No im2col in HBM; bf16 MXU inputs, f32 accumulate.
# ---------------------------------------------------------------------------

def _conv_stage_kernel(x_ref, w1_ref, s1_ref, b1_ref, w2_ref, s2_ref, b2_ref,
                       wih0_ref, bg0_ref, o_ref, h1p_s):
    T = o_ref.shape[1]

    # conv1 (k=5, pad=2) as 5 shifted matmuls on the padded channels-last block
    acc1 = jnp.zeros((T, C1), jnp.float32)
    for k in range(K):
        acc1 = acc1 + jnp.dot(x_ref[0, k:k + T, :], w1_ref[k],
                              preferred_element_type=jnp.float32)
    h1 = jnp.maximum(acc1 * s1_ref[...] + b1_ref[...], 0.0)      # BN1 + ReLU

    # conv2's padding=2 applies to the post-BN/ReLU activations: build the
    # zero-padded copy purely in VMEM scratch (bf16 for the MXU).
    h1p_s[0:PAD, :] = jnp.zeros((PAD, C1), h1p_s.dtype)
    h1p_s[PAD + T:PAD + T + PAD, :] = jnp.zeros((PAD, C1), h1p_s.dtype)
    h1p_s[PAD:PAD + T, :] = h1.astype(h1p_s.dtype)

    acc2 = jnp.zeros((T, C2), jnp.float32)
    for k in range(K):
        acc2 = acc2 + jnp.dot(h1p_s[k:k + T, :], w2_ref[k],
                              preferred_element_type=jnp.float32)
    h2 = jnp.maximum(acc2 * s2_ref[...] + b2_ref[...], 0.0)      # BN2 + ReLU

    # Fused epilogue: LSTM layer-0 input-gate term for the whole sequence
    # (hoisted out of the recurrence): xg0 = h2 @ Wih0 + (b_ih0 + b_hh0)
    o_ref[0] = jnp.dot(h2, wih0_ref[...],
                       preferred_element_type=jnp.float32) + bg0_ref[...]


def conv_stage(xpad, w1, s1, b1, w2, s2, b2, wih0, bg0, T):
    B = xpad.shape[0]
    G = wih0.shape[1]                     # 4*H
    flops = 2 * B * T * (K * F_IN * C1 + K * C1 * C2 + C2 * G)
    bytes_acc = (xpad.size * 2 + w1.size * 2 + w2.size * 2
                 + (s1.size + b1.size + s2.size + b2.size) * 4
                 + B * T * G * 4)
    return pl.pallas_call(
        _conv_stage_kernel,
        out_shape=jax.ShapeDtypeStruct((B, T, G), jnp.float32),
        grid=(B,),
        in_specs=[
            pl.BlockSpec((1, T + 2 * PAD, F_IN), lambda b: (b, 0, 0)),
            pl.BlockSpec((K, F_IN, C1), lambda b: (0, 0, 0)),   # resident weights
            pl.BlockSpec((1, C1), lambda b: (0, 0)),
            pl.BlockSpec((1, C1), lambda b: (0, 0)),
            pl.BlockSpec((K, C1, C2), lambda b: (0, 0, 0)),
            pl.BlockSpec((1, C2), lambda b: (0, 0)),
            pl.BlockSpec((1, C2), lambda b: (0, 0)),
            pl.BlockSpec((C2, G), lambda b: (0, 0)),
            pl.BlockSpec((1, G), lambda b: (0, 0)),
        ],
        out_specs=pl.BlockSpec((1, T, G), lambda b: (b, 0, 0)),
        scratch_shapes=[pltpu.VMEM((T + 2 * PAD, C1), jnp.bfloat16)],
        compiler_params=pltpu.CompilerParams(
            dimension_semantics=("parallel",)),
        cost_estimate=pl.CostEstimate(flops=flops, transcendentals=0,
                                      bytes_accessed=bytes_acc),
    )(xpad, w1, s1, b1, w2, s2, b2, wih0, bg0)
    # NOTE: for very long sequences add a halo'd time tiling; with grid over B
    # the per-step VMEM footprint is (T+4, 1000) bf16 + ~2 MB resident weights.


# ---------------------------------------------------------------------------
# Kernel 2: fused 2-layer LSTM + fc1/ReLU/fc2 head.
# Time-major, flattened rows (row = t*B + b). grid over time chunks, state in
# VMEM scratch; per-step work = one (B,H)x(H,4H) dot + elementwise gates.
# ---------------------------------------------------------------------------

def _lstm2_head_kernel(xg0_ref, whh0_ref, wih1_ref, whh1_ref, bg1_ref,
                       h0_ref, c0_ref, fw1_ref, fb1_ref, fw2_ref, fb2_ref,
                       o_ref, h0_s, c0_s, h1_s, c1_s, seq_s, xg1_s):
    B = h0_ref.shape[1]
    Tc = seq_s.shape[0] // B

    @pl.when(pl.program_id(0) == 0)
    def _():
        h0_s[...] = h0_ref[0]
        c0_s[...] = c0_ref[0]
        h1_s[...] = h0_ref[1]
        c1_s[...] = c0_ref[1]

    def cell(xg, h_prev, c_prev, whh):
        # gates = x-part (precomputed) + h_prev @ Whh_cat ; PyTorch order i,f,g,o
        g = xg + jnp.dot(h_prev, whh, preferred_element_type=jnp.float32)
        i_g = jax.nn.sigmoid(g[:, 0 * H:1 * H])
        f_g = jax.nn.sigmoid(g[:, 1 * H:2 * H])
        g_g = jnp.tanh(g[:, 2 * H:3 * H])
        o_g = jax.nn.sigmoid(g[:, 3 * H:4 * H])
        c_new = f_g * c_prev + i_g * g_g
        return o_g * jnp.tanh(c_new), c_new

    # ---- layer 0 recurrence over the chunk (x-part was precomputed) ----
    def body0(t, carry):
        h_new, c_new = cell(xg0_ref[pl.ds(t * B, B), :],
                            h0_s[...], c0_s[...], whh0_ref[...])
        h0_s[...] = h_new
        c0_s[...] = c_new
        seq_s[pl.ds(t * B, B), :] = h_new
        return carry
    jax.lax.fori_loop(0, Tc, body0, 0, unroll=True)

    # ---- layer 1 x-part for the whole chunk: one (Tc*B,H)x(H,4H) matmul ----
    xg1_s[...] = jnp.dot(seq_s[...], wih1_ref[...],
                         preferred_element_type=jnp.float32) + bg1_ref[...]

    # ---- layer 1 recurrence ----
    def body1(t, carry):
        h_new, c_new = cell(xg1_s[pl.ds(t * B, B), :],
                            h1_s[...], c1_s[...], whh1_ref[...])
        h1_s[...] = h_new
        c1_s[...] = c_new
        seq_s[pl.ds(t * B, B), :] = h_new
        return carry
    jax.lax.fori_loop(0, Tc, body1, 0, unroll=True)

    # ---- fused head: fc1 -> (dropout = identity in eval) -> ReLU -> fc2 ----
    z = jnp.maximum(jnp.dot(seq_s[...], fw1_ref[...],
                            preferred_element_type=jnp.float32) + fb1_ref[...],
                    0.0)
    o_ref[...] = jnp.dot(z, fw2_ref[...],
                         preferred_element_type=jnp.float32) + fb2_ref[...]


def lstm2_head_stage(xg0_flat, whh0, wih1, whh1, bg1, h0, c0,
                     fw1, fb1, fw2, fb2, B, Tc):
    TB, G = xg0_flat.shape
    n_chunks = TB // (Tc * B)
    return pl.pallas_call(
        _lstm2_head_kernel,
        out_shape=jax.ShapeDtypeStruct((TB, FC2), jnp.float32),
        grid=(n_chunks,),
        in_specs=[
            pl.BlockSpec((Tc * B, G), lambda c: (c, 0)),
            pl.BlockSpec((H, G), lambda c: (0, 0)),          # Whh layer 0 (resident)
            pl.BlockSpec((H, G), lambda c: (0, 0)),          # Wih layer 1
            pl.BlockSpec((H, G), lambda c: (0, 0)),          # Whh layer 1
            pl.BlockSpec((1, G), lambda c: (0, 0)),          # folded layer-1 bias
            pl.BlockSpec((NLAYERS, B, H), lambda c: (0, 0, 0)),
            pl.BlockSpec((NLAYERS, B, H), lambda c: (0, 0, 0)),
            pl.BlockSpec((H, FC1), lambda c: (0, 0)),
            pl.BlockSpec((1, FC1), lambda c: (0, 0)),
            pl.BlockSpec((FC1, FC2), lambda c: (0, 0)),
            pl.BlockSpec((1, FC2), lambda c: (0, 0)),
        ],
        out_specs=pl.BlockSpec((Tc * B, FC2), lambda c: (c, 0)),
        scratch_shapes=[
            pltpu.VMEM((B, H), jnp.float32),          # h, layer 0
            pltpu.VMEM((B, H), jnp.float32),          # c, layer 0
            pltpu.VMEM((B, H), jnp.float32),          # h, layer 1
            pltpu.VMEM((B, H), jnp.float32),          # c, layer 1
            pltpu.VMEM((Tc * B, H), jnp.float32),     # per-chunk hidden sequence
            pltpu.VMEM((Tc * B, 4 * H), jnp.float32), # per-chunk layer-1 x-gates
        ],
        compiler_params=pltpu.CompilerParams(
            dimension_semantics=("arbitrary",)),      # sequential recurrence
    )(xg0_flat, whh0, wih1, whh1, bg1, h0, c0, fw1, fb1, fw2, fb2)


# ---------------------------------------------------------------------------
# Forward (glue is plain JAX: BN folding, padding, layout transposes)
# ---------------------------------------------------------------------------

def _pick_time_chunk(T, B):
    for c in (32, 16, 8, 4, 2, 1):
        if T % c == 0 and (c * B) % 8 == 0:
            return c
    return T      # whole sequence as one chunk (block == full extent)


def forward(x, p):
    B, T, _ = x.shape

    # Fold eval-mode BatchNorm (+ conv bias) into per-channel scale / bias.
    s1 = p["bn1_gamma"] / jnp.sqrt(p["bn1_var"] + EPS)
    b1 = (p["conv1_b"] - p["bn1_mean"]) * s1 + p["bn1_beta"]
    s2 = p["bn2_gamma"] / jnp.sqrt(p["bn2_var"] + EPS)
    b2 = (p["conv2_b"] - p["bn2_mean"]) * s2 + p["bn2_beta"]

    # LSTM per-layer folded bias (b_ih + b_hh), gate order i|f|g|o.
    bg0 = (p["lstm_bih"][0] + p["lstm_bhh"][0]).reshape(1, 4 * H)
    bg1 = (p["lstm_bih"][1] + p["lstm_bhh"][1]).reshape(1, 4 * H)

    # conv stage (bf16 MXU inputs), fused with the LSTM layer-0 x-gate matmul.
    xpad = jnp.pad(x, ((0, 0), (PAD, PAD), (0, 0))).astype(jnp.bfloat16)
    xg0 = conv_stage(xpad,
                     p["conv1_w"].astype(jnp.bfloat16),
                     s1.reshape(1, C1), b1.reshape(1, C1),
                     p["conv2_w"].astype(jnp.bfloat16),
                     s2.reshape(1, C2), b2.reshape(1, C2),
                     p["lstm_wih0"], bg0, T)                 # (B, T, 4H)

    # time-major flatten for the recurrent stage: row index = t*B + b
    xg0_flat = jnp.transpose(xg0, (1, 0, 2)).reshape(T * B, 4 * H)
    Tc = _pick_time_chunk(T, B)
    out_flat = lstm2_head_stage(xg0_flat,
                                p["lstm_whh0"], p["lstm_wih1"], p["lstm_whh1"],
                                bg1, p["h0"], p["c0"],
                                p["fc1_w"], p["fc1_b"].reshape(1, FC1),
                                p["fc2_w"], p["fc2_b"].reshape(1, FC2),
                                B, Tc)                       # (T*B, 2)

    return jnp.transpose(out_flat.reshape(T, B, FC2), (1, 0, 2))   # (B, T, 2)


# ---------------------------------------------------------------------------
# Deterministic parameter init (shapes from the module's __init__)
# ---------------------------------------------------------------------------

def init_params(key, batch_size):
    keys = iter(jax.random.split(key, 32))   # plenty of keys (fixes StopIteration)
    f32 = jnp.float32

    def rnd(shape, scale=0.05):
        return jax.random.normal(next(keys), shape, dtype=f32) * scale

    params = {
        # Conv1d(1000, 200, k=5, p=2): stored as (K, Cin, Cout)
        # (== transpose(torch_weight, (2, 1, 0)))
        "conv1_w": rnd((K, F_IN, C1), 0.01),
        "conv1_b": rnd((C1,), 0.01),
        # BatchNorm1d(200) eval-mode running stats
        "bn1_gamma": 1.0 + rnd((C1,), 0.1),
        "bn1_beta": rnd((C1,), 0.1),
        "bn1_mean": rnd((C1,), 0.1),
        "bn1_var": 1.0 + jnp.abs(rnd((C1,), 0.1)),
        # Conv1d(200, 30, k=5, p=2)
        "conv2_w": rnd((K, C1, C2), 0.03),
        "conv2_b": rnd((C2,), 0.03),
        # BatchNorm1d(30)
        "bn2_gamma": 1.0 + rnd((C2,), 0.1),
        "bn2_beta": rnd((C2,), 0.1),
        "bn2_mean": rnd((C2,), 0.1),
        "bn2_var": 1.0 + jnp.abs(rnd((C2,), 0.1)),
        # LSTM(30, 15, 2 layers): gate weights pre-concatenated (in, 4H),
        # columns ordered i|f|g|o (== torch weight_ih/hh transposed).
        "lstm_wih0": rnd((C2, 4 * H), 0.1),
        "lstm_whh0": rnd((H, 4 * H), 0.1),
        "lstm_wih1": rnd((H, 4 * H), 0.1),
        "lstm_whh1": rnd((H, 4 * H), 0.1),
        "lstm_bih": rnd((NLAYERS, 4 * H), 0.1),
        "lstm_bhh": rnd((NLAYERS, 4 * H), 0.1),
        # Linear(15, 5) / Linear(5, 2) stored transposed (in, out)
        "fc1_w": rnd((H, FC1), 0.1),
        "fc1_b": rnd((FC1,), 0.1),
        "fc2_w": rnd((FC1, FC2), 0.1),
        "fc2_b": rnd((FC2,), 0.1),
        # h_0, c_0 = torch.rand(2, batch, 15)
        "h0": jax.random.uniform(next(keys), (NLAYERS, batch_size, H), dtype=f32),
        "c0": jax.random.uniform(next(keys), (NLAYERS, batch_size, H), dtype=f32),
    }
    return params


if __name__ == "__main__":
    B, T = 2, 8   # small batch / sequence; feature dims are fixed by the module
    key = jax.random.PRNGKey(0)
    k_x, k_p = jax.random.split(key)
    x = jax.random.normal(k_x, (B, T, F_IN), dtype=jnp.float32)
    params = init_params(k_p, B)

    out = jax.block_until_ready(jax.jit(forward)(x, params))
    assert out.shape == (B, T, FC2) and out.dtype == jnp.float32
    assert bool(jnp.all(jnp.isfinite(out)))
    print("KERNEL_OK")
</pallas_src>

<mosaic_0001>
module attributes {stable_mosaic.version = 11 : i64} {
  func.func @_conv_stage_kernel(%arg0: i32, %arg1: memref<1x12x1000xbf16, #tpu.memory_space<vmem>>, %arg2: memref<5x1000x200xbf16, #tpu.memory_space<vmem>>, %arg3: memref<1x200xf32, #tpu.memory_space<vmem>>, %arg4: memref<1x200xf32, #tpu.memory_space<vmem>>, %arg5: memref<5x200x30xbf16, #tpu.memory_space<vmem>>, %arg6: memref<1x30xf32, #tpu.memory_space<vmem>>, %arg7: memref<1x30xf32, #tpu.memory_space<vmem>>, %arg8: memref<30x60xf32, #tpu.memory_space<vmem>>, %arg9: memref<1x60xf32, #tpu.memory_space<vmem>>, %arg10: memref<1x8x60xf32, #tpu.memory_space<vmem>>, %arg11: memref<12x200xbf16, #tpu.memory_space<vmem>>) attributes {dimension_semantics = [#tpu.dimension_semantics<parallel>], iteration_bounds = array<i64: 2>, scalar_prefetch = 0 : i64, scratch_operands = 1 : i64, tpu.core_type = #tpu.core_type<tc>, window_params = [{transform_indices = @transform_0, window_bounds = array<i64: 1, 12, 1000>}, {pipeline_mode = #tpu.pipeline_mode<synchronous>, transform_indices = @transform_1, window_bounds = array<i64: 5, 1000, 200>}, {pipeline_mode = #tpu.pipeline_mode<synchronous>, transform_indices = @transform_2, window_bounds = array<i64: 1, 200>}, {pipeline_mode = #tpu.pipeline_mode<synchronous>, transform_indices = @transform_3, window_bounds = array<i64: 1, 200>}, {pipeline_mode = #tpu.pipeline_mode<synchronous>, transform_indices = @transform_4, window_bounds = array<i64: 5, 200, 30>}, {pipeline_mode = #tpu.pipeline_mode<synchronous>, transform_indices = @transform_5, window_bounds = array<i64: 1, 30>}, {pipeline_mode = #tpu.pipeline_mode<synchronous>, transform_indices = @transform_6, window_bounds = array<i64: 1, 30>}, {pipeline_mode = #tpu.pipeline_mode<synchronous>, transform_indices = @transform_7, window_bounds = array<i64: 30, 60>}, {pipeline_mode = #tpu.pipeline_mode<synchronous>, transform_indices = @transform_8, window_bounds = array<i64: 1, 60>}, {transform_indices = @transform_9, window_bounds = array<i64: 1, 8, 60>}]} {
    %cst = arith.constant 0.000000e+00 : f32
    %0 = vector.broadcast %cst : f32 to vector<8x200xf32>
    %c0 = arith.constant 0 : index
    %c0_0 = arith.constant 0 : index
    %c0_1 = arith.constant 0 : index
    %1 = vector.load %arg1[%c0, %c0_0, %c0_1] : memref<1x12x1000xbf16, #tpu.memory_space<vmem>>, vector<1x8x1000xbf16>
    %2 = vector.shape_cast %1 : vector<1x8x1000xbf16> to vector<8x1000xbf16>
    %c0_2 = arith.constant 0 : index
    %c0_3 = arith.constant 0 : index
    %c0_4 = arith.constant 0 : index
    %3 = vector.load %arg2[%c0_2, %c0_3, %c0_4] : memref<5x1000x200xbf16, #tpu.memory_space<vmem>>, vector<1x1000x200xbf16>
    %4 = vector.shape_cast %3 : vector<1x1000x200xbf16> to vector<1000x200xbf16>
    %cst_5 = arith.constant dense<0.000000e+00> : vector<8x200xf32>
    %5 = tpu.matmul %2, %4, %cst_5 {dimension_numbers = #tpu.dot_dimension_numbers<[1], [0], [0], [1], [0, 0, 1, 1], [], []>} : vector<8x1000xbf16>, vector<1000x200xbf16>, vector<8x200xf32> -> vector<8x200xf32>
    %6 = arith.addf %0, %5 : vector<8x200xf32>
    %c0_6 = arith.constant 0 : index
    %c1 = arith.constant 1 : index
    %c0_7 = arith.constant 0 : index
    %7 = vector.load %arg1[%c0_6, %c1, %c0_7] : memref<1x12x1000xbf16, #tpu.memory_space<vmem>>, vector<1x8x1000xbf16>
    %8 = vector.shape_cast %7 : vector<1x8x1000xbf16> to vector<8x1000xbf16>
    %c1_8 = arith.constant 1 : index
    %c0_9 = arith.constant 0 : index
    %c0_10 = arith.constant 0 : index
    %9 = vector.load %arg2[%c1_8, %c0_9, %c0_10] : memref<5x1000x200xbf16, #tpu.memory_space<vmem>>, vector<1x1000x200xbf16>
    %10 = vector.shape_cast %9 : vector<1x1000x200xbf16> to vector<1000x200xbf16>
    %cst_11 = arith.constant dense<0.000000e+00> : vector<8x200xf32>
    %11 = tpu.matmul %8, %10, %cst_11 {dimension_numbers = #tpu.dot_dimension_numbers<[1], [0], [0], [1], [0, 0, 1, 1], [], []>} : vector<8x1000xbf16>, vector<1000x200xbf16>, vector<8x200xf32> -> vector<8x200xf32>
    %12 = arith.addf %6, %11 : vector<8x200xf32>
    %c0_12 = arith.constant 0 : index
    %c2 = arith.constant 2 : index
    %c0_13 = arith.constant 0 : index
    %13 = vector.load %arg1[%c0_12, %c2, %c0_13] : memref<1x12x1000xbf16, #tpu.memory_space<vmem>>, vector<1x8x1000xbf16>
    %14 = vector.shape_cast %13 : vector<1x8x1000xbf16> to vector<8x1000xbf16>
    %c2_14 = arith.constant 2 : index
    %c0_15 = arith.constant 0 : index
    %c0_16 = arith.constant 0 : index
    %15 = vector.load %arg2[%c2_14, %c0_15, %c0_16] : memref<5x1000x200xbf16, #tpu.memory_space<vmem>>, vector<1x1000x200xbf16>
    %16 = vector.shape_cast %15 : vector<1x1000x200xbf16> to vector<1000x200xbf16>
    %cst_17 = arith.constant dense<0.000000e+00> : vector<8x200xf32>
    %17 = tpu.matmul %14, %16, %cst_17 {dimension_numbers = #tpu.dot_dimension_numbers<[1], [0], [0], [1], [0, 0, 1, 1], [], []>} : vector<8x1000xbf16>, vector<1000x200xbf16>, vector<8x200xf32> -> vector<8x200xf32>
    %18 = arith.addf %12, %17 : vector<8x200xf32>
    %c0_18 = arith.constant 0 : index
    %c3 = arith.constant 3 : index
    %c0_19 = arith.constant 0 : index
    %19 = vector.load %arg1[%c0_18, %c3, %c0_19] : memref<1x12x1000xbf16, #tpu.memory_space<vmem>>, vector<1x8x1000xbf16>
    %20 = vector.shape_cast %19 : vector<1x8x1000xbf16> to vector<8x1000xbf16>
    %c3_20 = arith.constant 3 : index
    %c0_21 = arith.constant 0 : index
    %c0_22 = arith.constant 0 : index
    %21 = vector.load %arg2[%c3_20, %c0_21, %c0_22] : memref<5x1000x200xbf16, #tpu.memory_space<vmem>>, vector<1x1000x200xbf16>
    %22 = vector.shape_cast %21 : vector<1x1000x200xbf16> to vector<1000x200xbf16>
    %cst_23 = arith.constant dense<0.000000e+00> : vector<8x200xf32>
    %23 = tpu.matmul %20, %22, %cst_23 {dimension_numbers = #tpu.dot_dimension_numbers<[1], [0], [0], [1], [0, 0, 1, 1], [], []>} : vector<8x1000xbf16>, vector<1000x200xbf16>, vector<8x200xf32> -> vector<8x200xf32>
    %24 = arith.addf %18, %23 : vector<8x200xf32>
    %c0_24 = arith.constant 0 : index
    %c4 = arith.constant 4 : index
    %c0_25 = arith.constant 0 : index
    %25 = vector.load %arg1[%c0_24, %c4, %c0_25] : memref<1x12x1000xbf16, #tpu.memory_space<vmem>>, vector<1x8x1000xbf16>
    %26 = vector.shape_cast %25 : vector<1x8x1000xbf16> to vector<8x1000xbf16>
    %c4_26 = arith.constant 4 : index
    %c0_27 = arith.constant 0 : index
    %c0_28 = arith.constant 0 : index
    %27 = vector.load %arg2[%c4_26, %c0_27, %c0_28] : memref<5x1000x200xbf16, #tpu.memory_space<vmem>>, vector<1x1000x200xbf16>
    %28 = vector.shape_cast %27 : vector<1x1000x200xbf16> to vector<1000x200xbf16>
    %cst_29 = arith.constant dense<0.000000e+00> : vector<8x200xf32>
    %29 = tpu.matmul %26, %28, %cst_29 {dimension_numbers = #tpu.dot_dimension_numbers<[1], [0], [0], [1], [0, 0, 1, 1], [], []>} : vector<8x1000xbf16>, vector<1000x200xbf16>, vector<8x200xf32> -> vector<8x200xf32>
    %30 = arith.addf %24, %29 : vector<8x200xf32>
    %c0_30 = arith.constant 0 : index
    %c0_31 = arith.constant 0 : index
    %31 = vector.load %arg3[%c0_30, %c0_31] : memref<1x200xf32, #tpu.memory_space<vmem>>, vector<1x200xf32>
    %32 = vector.broadcast %31 : vector<1x200xf32> to vector<8x200xf32>
    %33 = arith.mulf %30, %32 : vector<8x200xf32>
    %c0_32 = arith.constant 0 : index
    %c0_33 = arith.constant 0 : index
    %34 = vector.load %arg4[%c0_32, %c0_33] : memref<1x200xf32, #tpu.memory_space<vmem>>, vector<1x200xf32>
    %35 = vector.broadcast %34 : vector<1x200xf32> to vector<8x200xf32>
    %36 = arith.addf %33, %35 : vector<8x200xf32>
    %cst_34 = arith.constant 0.000000e+00 : f32
    %37 = vector.broadcast %cst_34 : f32 to vector<8x200xf32>
    %38 = arith.maximumf %36, %37 : vector<8x200xf32>
    %cst_35 = arith.constant 0.000000e+00 : bf16
    %39 = vector.broadcast %cst_35 : bf16 to vector<2x200xbf16>
    %c0_36 = arith.constant 0 : index
    %c0_37 = arith.constant 0 : index
    %40 = vector.load %arg11[%c0_36, %c0_37] : memref<12x200xbf16, #tpu.memory_space<vmem>>, vector<2x200xbf16>
    tpu.vector_store %arg11[%c0_36, %c0_37], %39 {strides = array<i32>} : memref<12x200xbf16, #tpu.memory_space<vmem>>, vector<2x200xbf16>,
    %cst_38 = arith.constant 0.000000e+00 : bf16
    %41 = vector.broadcast %cst_38 : bf16 to vector<2x200xbf16>
    %c10 = arith.constant 10 : index
    %c0_39 = arith.constant 0 : index
    %42 = vector.load %arg11[%c10, %c0_39] : memref<12x200xbf16, #tpu.memory_space<vmem>>, vector<2x200xbf16>
    tpu.vector_store %arg11[%c10, %c0_39], %41 {strides = array<i32>} : memref<12x200xbf16, #tpu.memory_space<vmem>>, vector<2x200xbf16>,
    %43 = arith.truncf %38 : vector<8x200xf32> to vector<8x200xbf16>
    %c2_40 = arith.constant 2 : index
    %c0_41 = arith.constant 0 : index
    %44 = vector.load %arg11[%c2_40, %c0_41] : memref<12x200xbf16, #tpu.memory_space<vmem>>, vector<8x200xbf16>
    tpu.vector_store %arg11[%c2_40, %c0_41], %43 {strides = array<i32>} : memref<12x200xbf16, #tpu.memory_space<vmem>>, vector<8x200xbf16>,
    %cst_42 = arith.constant 0.000000e+00 : f32
    %45 = vector.broadcast %cst_42 : f32 to vector<8x30xf32>
    %c0_43 = arith.constant 0 : index
    %c0_44 = arith.constant 0 : index
    %46 = vector.load %arg11[%c0_43, %c0_44] : memref<12x200xbf16, #tpu.memory_space<vmem>>, vector<8x200xbf16>
    %c0_45 = arith.constant 0 : index
    %c0_46 = arith.constant 0 : index
    %c0_47 = arith.constant 0 : index
    %47 = vector.load %arg5[%c0_45, %c0_46, %c0_47] : memref<5x200x30xbf16, #tpu.memory_space<vmem>>, vector<1x200x30xbf16>
    %48 = vector.shape_cast %47 : vector<1x200x30xbf16> to vector<200x30xbf16>
    %cst_48 = arith.constant dense<0.000000e+00> : vector<8x30xf32>
    %49 = tpu.matmul %46, %48, %cst_48 {dimension_numbers = #tpu.dot_dimension_numbers<[1], [0], [0], [1], [0, 0, 1, 1], [], []>} : vector<8x200xbf16>, vector<200x30xbf16>, vector<8x30xf32> -> vector<8x30xf32>
    %50 = arith.addf %45, %49 : vector<8x30xf32>
    %c1_49 = arith.constant 1 : index
    %c0_50 = arith.constant 0 : index
    %51 = vector.load %arg11[%c1_49, %c0_50] : memref<12x200xbf16, #tpu.memory_space<vmem>>, vector<8x200xbf16>
    %c1_51 = arith.constant 1 : index
    %c0_52 = arith.constant 0 : index
    %c0_53 = arith.constant 0 : index
    %52 = vector.load %arg5[%c1_51, %c0_52, %c0_53] : memref<5x200x30xbf16, #tpu.memory_space<vmem>>, vector<1x200x30xbf16>
    %53 = vector.shape_cast %52 : vector<1x200x30xbf16> to vector<200x30xbf16>
    %cst_54 = arith.constant dense<0.000000e+00> : vector<8x30xf32>
    %54 = tpu.matmul %51, %53, %cst_54 {dimension_numbers = #tpu.dot_dimension_numbers<[1], [0], [0], [1], [0, 0, 1, 1], [], []>} : vector<8x200xbf16>, vector<200x30xbf16>, vector<8x30xf32> -> vector<8x30xf32>
    %55 = arith.addf %50, %54 : vector<8x30xf32>
    %c2_55 = arith.constant 2 : index
    %c0_56 = arith.constant 0 : index
    %56 = vector.load %arg11[%c2_55, %c0_56] : memref<12x200xbf16, #tpu.memory_space<vmem>>, vector<8x200xbf16>
    %c2_57 = arith.constant 2 : index
    %c0_58 = arith.constant 0 : index
    %c0_59 = arith.constant 0 : index
    %57 = vector.load %arg5[%c2_57, %c0_58, %c0_59] : memref<5x200x30xbf16, #tpu.memory_space<vmem>>, vector<1x200x30xbf16>
    %58 = vector.shape_cast %57 : vector<1x200x30xbf16> to vector<200x30xbf16>
    %cst_60 = arith.constant dense<0.000000e+00> : vector<8x30xf32>
    %59 = tpu.matmul %56, %58, %cst_60 {dimension_numbers = #tpu.dot_dimension_numbers<[1], [0], [0], [1], [0, 0, 1, 1], [], []>} : vector<8x200xbf16>, vector<200x30xbf16>, vector<8x30xf32> -> vector<8x30xf32>
    %60 = arith.addf %55, %59 : vector<8x30xf32>
    %c3_61 = arith.constant 3 : index
    %c0_62 = arith.constant 0 : index
    %61 = vector.load %arg11[%c3_61, %c0_62] : memref<12x200xbf16, #tpu.memory_space<vmem>>, vector<8x200xbf16>
    %c3_63 = arith.constant 3 : index
    %c0_64 = arith.constant 0 : index
    %c0_65 = arith.constant 0 : index
    %62 = vector.load %arg5[%c3_63, %c0_64, %c0_65] : memref<5x200x30xbf16, #tpu.memory_space<vmem>>, vector<1x200x30xbf16>
    %63 = vector.shape_cast %62 : vector<1x200x30xbf16> to vector<200x30xbf16>
    %cst_66 = arith.constant dense<0.000000e+00> : vector<8x30xf32>
    %64 = tpu.matmul %61, %63, %cst_66 {dimension_numbers = #tpu.dot_dimension_numbers<[1], [0], [0], [1], [0, 0, 1, 1], [], []>} : vector<8x200xbf16>, vector<200x30xbf16>, vector<8x30xf32> -> vector<8x30xf32>
    %65 = arith.addf %60, %64 : vector<8x30xf32>
    %c4_67 = arith.constant 4 : index
    %c0_68 = arith.constant 0 : index
    %66 = vector.load %arg11[%c4_67, %c0_68] : memref<12x200xbf16, #tpu.memory_space<vmem>>, vector<8x200xbf16>
    %c4_69 = arith.constant 4 : index
    %c0_70 = arith.constant 0 : index
    %c0_71 = arith.constant 0 : index
    %67 = vector.load %arg5[%c4_69, %c0_70, %c0_71] : memref<5x200x30xbf16, #tpu.memory_space<vmem>>, vector<1x200x30xbf16>
    %68 = vector.shape_cast %67 : vector<1x200x30xbf16> to vector<200x30xbf16>
    %cst_72 = arith.constant dense<0.000000e+00> : vector<8x30xf32>
    %69 = tpu.matmul %66, %68, %cst_72 {dimension_numbers = #tpu.dot_dimension_numbers<[1], [0], [0], [1], [0, 0, 1, 1], [], []>} : vector<8x200xbf16>, vector<200x30xbf16>, vector<8x30xf32> -> vector<8x30xf32>
    %70 = arith.addf %65, %69 : vector<8x30xf32>
    %c0_73 = arith.constant 0 : index
    %c0_74 = arith.constant 0 : index
    %71 = vector.load %arg6[%c0_73, %c0_74] : memref<1x30xf32, #tpu.memory_space<vmem>>, vector<1x30xf32>
    %72 = vector.broadcast %71 : vector<1x30xf32> to vector<8x30xf32>
    %73 = arith.mulf %70, %72 : vector<8x30xf32>
    %c0_75 = arith.constant 0 : index
    %c0_76 = arith.constant 0 : index
    %74 = vector.load %arg7[%c0_75, %c0_76] : memref<1x30xf32, #tpu.memory_space<vmem>>, vector<1x30xf32>
    %75 = vector.broadcast %74 : vector<1x30xf32> to vector<8x30xf32>
    %76 = arith.addf %73, %75 : vector<8x30xf32>
    %cst_77 = arith.constant 0.000000e+00 : f32
    %77 = vector.broadcast %cst_77 : f32 to vector<8x30xf32>
    %78 = arith.maximumf %76, %77 : vector<8x30xf32>
    %c0_78 = arith.constant 0 : index
    %c0_79 = arith.constant 0 : index
    %79 = vector.load %arg8[%c0_78, %c0_79] : memref<30x60xf32, #tpu.memory_space<vmem>>, vector<30x60xf32>
    %cst_80 = arith.constant dense<0.000000e+00> : vector<8x60xf32>
    %80 = tpu.matmul %78, %79, %cst_80 {dimension_numbers = #tpu.dot_dimension_numbers<[1], [0], [0], [1], [0, 0, 1, 1], [], []>} : vector<8x30xf32>, vector<30x60xf32>, vector<8x60xf32> -> vector<8x60xf32>
    %c0_81 = arith.constant 0 : index
    %c0_82 = arith.constant 0 : index
    %81 = vector.load %arg9[%c0_81, %c0_82] : memref<1x60xf32, #tpu.memory_space<vmem>>, vector<1x60xf32>
    %82 = vector.broadcast %81 : vector<1x60xf32> to vector<8x60xf32>
    %83 = arith.addf %80, %82 : vector<8x60xf32>
    %c0_83 = arith.constant 0 : index
    %c0_84 = arith.constant 0 : index
    %c0_85 = arith.constant 0 : index
    %84 = vector.load %arg10[%c0_83, %c0_84, %c0_85] : memref<1x8x60xf32, #tpu.memory_space<vmem>>, vector<1x8x60xf32>
    %85 = vector.shape_cast %84 : vector<1x8x60xf32> to vector<8x60xf32>
    %86 = vector.shape_cast %83 : vector<8x60xf32> to vector<1x8x60xf32>
    tpu.vector_store %arg10[%c0_83, %c0_84, %c0_85], %86 {strides = array<i32>} : memref<1x8x60xf32, #tpu.memory_space<vmem>>, vector<1x8x60xf32>,
    return
  }
  func.func @transform_0(%arg0: i32) -> (i32, i32, i32) {
    %c0_i32 = arith.constant 0 : i32
    %c0_i32_0 = arith.constant 0 : i32
    %c0_i32_1 = arith.constant 0 : i32
    return %arg0, %c0_i32, %c0_i32_0 : i32, i32, i32
  }
  func.func @transform_1(%arg0: i32) -> (i32, i32, i32) {
    %c0_i32 = arith.constant 0 : i32
    %c0_i32_0 = arith.constant 0 : i32
    %c0_i32_1 = arith.constant 0 : i32
    %c0_i32_2 = arith.constant 0 : i32
    return %c0_i32, %c0_i32_0, %c0_i32_1 : i32, i32, i32
  }
  func.func @transform_2(%arg0: i32) -> (i32, i32) {
    %c0_i32 = arith.constant 0 : i32
    %c0_i32_0 = arith.constant 0 : i32
    %c0_i32_1 = arith.constant 0 : i32
    return %c0_i32, %c0_i32_0 : i32, i32
  }
  func.func @transform_3(%arg0: i32) -> (i32, i32) {
    %c0_i32 = arith.constant 0 : i32
    %c0_i32_0 = arith.constant 0 : i32
    %c0_i32_1 = arith.constant 0 : i32
    return %c0_i32, %c0_i32_0 : i32, i32
  }
  func.func @transform_4(%arg0: i32) -> (i32, i32, i32) {
    %c0_i32 = arith.constant 0 : i32
    %c0_i32_0 = arith.constant 0 : i32
    %c0_i32_1 = arith.constant 0 : i32
    %c0_i32_2 = arith.constant 0 : i32
    return %c0_i32, %c0_i32_0, %c0_i32_1 : i32, i32, i32
  }
  func.func @transform_5(%arg0: i32) -> (i32, i32) {
    %c0_i32 = arith.constant 0 : i32
    %c0_i32_0 = arith.constant 0 : i32
    %c0_i32_1 = arith.constant 0 : i32
    return %c0_i32, %c0_i32_0 : i32, i32
  }
  func.func @transform_6(%arg0: i32) -> (i32, i32) {
    %c0_i32 = arith.constant 0 : i32
    %c0_i32_0 = arith.constant 0 : i32
    %c0_i32_1 = arith.constant 0 : i32
    return %c0_i32, %c0_i32_0 : i32, i32
  }
  func.func @transform_7(%arg0: i32) -> (i32, i32) {
    %c0_i32 = arith.constant 0 : i32
    %c0_i32_0 = arith.constant 0 : i32
    %c0_i32_1 = arith.constant 0 : i32
    return %c0_i32, %c0_i32_0 : i32, i32
  }
  func.func @transform_8(%arg0: i32) -> (i32, i32) {
    %c0_i32 = arith.constant 0 : i32
    %c0_i32_0 = arith.constant 0 : i32
    %c0_i32_1 = arith.constant 0 : i32
    return %c0_i32, %c0_i32_0 : i32, i32
  }
  func.func @transform_9(%arg0: i32) -> (i32, i32, i32) {
    %c0_i32 = arith.constant 0 : i32
    %c0_i32_0 = arith.constant 0 : i32
    %c0_i32_1 = arith.constant 0 : i32
    return %arg0, %c0_i32, %c0_i32_0 : i32, i32, i32
  }
}

module attributes {stable_mosaic.version = 11 : i64} {
  func.func @_lstm2_head_kernel(%arg0: i32, %arg1: memref<16x60xf32, #tpu.memory_space<vmem>>, %arg2: memref<15x60xf32, #tpu.memory_space<vmem>>, %arg3: memref<15x60xf32, #tpu.memory_space<vmem>>, %arg4: memref<15x60xf32, #tpu.memory_space<vmem>>, %arg5: memref<1x60xf32, #tpu.memory_space<vmem>>, %arg6: memref<2x2x15xf32, #tpu.memory_space<vmem>>, %arg7: memref<2x2x15xf32, #tpu.memory_space<vmem>>, %arg8: memref<15x5xf32, #tpu.memory_space<vmem>>, %arg9: memref<1x5xf32, #tpu.memory_space<vmem>>, %arg10: memref<5x2xf32, #tpu.memory_space<vmem>>, %arg11: memref<1x2xf32, #tpu.memory_space<vmem>>, %arg12: memref<16x2xf32, #tpu.memory_space<vmem>>, %arg13: memref<2x15xf32, #tpu.memory_space<vmem>>, %arg14: memref<2x15xf32, #tpu.memory_space<vmem>>, %arg15: memref<2x15xf32, #tpu.memory_space<vmem>>, %arg16: memref<2x15xf32, #tpu.memory_space<vmem>>, %arg17: memref<16x15xf32, #tpu.memory_space<vmem>>, %arg18: memref<16x60xf32, #tpu.memory_space<vmem>>) attributes {dimension_semantics = [#tpu.dimension_semantics<arbitrary>], iteration_bounds = array<i64: 1>, scalar_prefetch = 0 : i64, scratch_operands = 6 : i64, tpu.core_type = #tpu.core_type<tc>, window_params = [{transform_indices = @transform_0, window_bounds = array<i64: 16, 60>}, {pipeline_mode = #tpu.pipeline_mode<synchronous>, transform_indices = @transform_1, window_bounds = array<i64: 15, 60>}, {pipeline_mode = #tpu.pipeline_mode<synchronous>, transform_indices = @transform_2, window_bounds = array<i64: 15, 60>}, {pipeline_mode = #tpu.pipeline_mode<synchronous>, transform_indices = @transform_3, window_bounds = array<i64: 15, 60>}, {pipeline_mode = #tpu.pipeline_mode<synchronous>, transform_indices = @transform_4, window_bounds = array<i64: 1, 60>}, {pipeline_mode = #tpu.pipeline_mode<synchronous>, transform_indices = @transform_5, window_bounds = array<i64: 2, 2, 15>}, {pipeline_mode = #tpu.pipeline_mode<synchronous>, transform_indices = @transform_6, window_bounds = array<i64: 2, 2, 15>}, {pipeline_mode = #tpu.pipeline_mode<synchronous>, transform_indices = @transform_7, window_bounds = array<i64: 15, 5>}, {pipeline_mode = #tpu.pipeline_mode<synchronous>, transform_indices = @transform_8, window_bounds = array<i64: 1, 5>}, {pipeline_mode = #tpu.pipeline_mode<synchronous>, transform_indices = @transform_9, window_bounds = array<i64: 5, 2>}, {pipeline_mode = #tpu.pipeline_mode<synchronous>, transform_indices = @transform_10, window_bounds = array<i64: 1, 2>}, {transform_indices = @transform_11, window_bounds = array<i64: 16, 2>}]} {
    %c0_i32 = arith.constant 0 : i32
    %0 = arith.cmpi eq, %arg0, %c0_i32 : i32
    %1 = arith.extui %0 : i1 to i32
    %c0_i32_0 = arith.constant 0 : i32
    %2 = arith.cmpi ne, %1, %c0_i32_0 : i32
    scf.if %2 {
      %c0_321 = arith.constant 0 : index
      %c0_322 = arith.constant 0 : index
      %c0_323 = arith.constant 0 : index
      %632 = vector.load %arg6[%c0_321, %c0_322, %c0_323] : memref<2x2x15xf32, #tpu.memory_space<vmem>>, vector<1x2x15xf32>
      %633 = vector.shape_cast %632 : vector<1x2x15xf32> to vector<2x15xf32>
      %c0_324 = arith.constant 0 : index
      %c0_325 = arith.constant 0 : index
      %634 = vector.load %arg13[%c0_324, %c0_325] : memref<2x15xf32, #tpu.memory_space<vmem>>, vector<2x15xf32>
      tpu.vector_store %arg13[%c0_324, %c0_325], %633 {strides = array<i32>} : memref<2x15xf32, #tpu.memory_space<vmem>>, vector<2x15xf32>,
      %c0_326 = arith.constant 0 : index
      %c0_327 = arith.constant 0 : index
      %c0_328 = arith.constant 0 : index
      %635 = vector.load %arg7[%c0_326, %c0_327, %c0_328] : memref<2x2x15xf32, #tpu.memory_space<vmem>>, vector<1x2x15xf32>
      %636 = vector.shape_cast %635 : vector<1x2x15xf32> to vector<2x15xf32>
      %c0_329 = arith.constant 0 : index
      %c0_330 = arith.constant 0 : index
      %637 = vector.load %arg14[%c0_329, %c0_330] : memref<2x15xf32, #tpu.memory_space<vmem>>, vector<2x15xf32>
      tpu.vector_store %arg14[%c0_329, %c0_330], %636 {strides = array<i32>} : memref<2x15xf32, #tpu.memory_space<vmem>>, vector<2x15xf32>,
      %c1 = arith.constant 1 : index
      %c0_331 = arith.constant 0 : index
      %c0_332 = arith.constant 0 : index
      %638 = vector.load %arg6[%c1, %c0_331, %c0_332] : memref<2x2x15xf32, #tpu.memory_space<vmem>>, vector<1x2x15xf32>
      %639 = vector.shape_cast %638 : vector<1x2x15xf32> to vector<2x15xf32>
      %c0_333 = arith.constant 0 : index
      %c0_334 = arith.constant 0 : index
      %640 = vector.load %arg15[%c0_333, %c0_334] : memref<2x15xf32, #tpu.memory_space<vmem>>, vector<2x15xf32>
      tpu.vector_store %arg15[%c0_333, %c0_334], %639 {strides = array<i32>} : memref<2x15xf32, #tpu.memory_space<vmem>>, vector<2x15xf32>,
      %c1_335 = arith.constant 1 : index
      %c0_336 = arith.constant 0 : index
      %c0_337 = arith.constant 0 : index
      %641 = vector.load %arg7[%c1_335, %c0_336, %c0_337] : memref<2x2x15xf32, #tpu.memory_space<vmem>>, vector<1x2x15xf32>
      %642 = vector.shape_cast %641 : vector<1x2x15xf32> to vector<2x15xf32>
      %c0_338 = arith.constant 0 : index
      %c0_339 = arith.constant 0 : index
      %643 = vector.load %arg16[%c0_338, %c0_339] : memref<2x15xf32, #tpu.memory_space<vmem>>, vector<2x15xf32>
      tpu.vector_store %arg16[%c0_338, %c0_339], %642 {strides = array<i32>} : memref<2x15xf32, #tpu.memory_space<vmem>>, vector<2x15xf32>,
    } else {
    }
    %c0_i32_1 = arith.constant 0 : i32
    %c2_i32 = arith.constant 2 : i32
    %3 = arith.muli %c0_i32_1, %c2_i32 : i32
    %4 = arith.index_cast %3 : i32 to index
    %c0 = arith.constant 0 : index
    %5 = vector.load %arg1[%4, %c0] : memref<16x60xf32, #tpu.memory_space<vmem>>, vector<2x60xf32>
    %c0_2 = arith.constant 0 : index
    %c0_3 = arith.constant 0 : index
    %6 = vector.load %arg13[%c0_2, %c0_3] : memref<2x15xf32, #tpu.memory_space<vmem>>, vector<2x15xf32>
    %c0_4 = arith.constant 0 : index
    %c0_5 = arith.constant 0 : index
    %7 = vector.load %arg14[%c0_4, %c0_5] : memref<2x15xf32, #tpu.memory_space<vmem>>, vector<2x15xf32>
    %c0_6 = arith.constant 0 : index
    %c0_7 = arith.constant 0 : index
    %8 = vector.load %arg2[%c0_6, %c0_7] : memref<15x60xf32, #tpu.memory_space<vmem>>, vector<15x60xf32>
    %cst = arith.constant dense<0.000000e+00> : vector<2x60xf32>
    %9 = tpu.matmul %6, %8, %cst {dimension_numbers = #tpu.dot_dimension_numbers<[1], [0], [0], [1], [0, 0, 1, 1], [], []>} : vector<2x15xf32>, vector<15x60xf32>, vector<2x60xf32> -> vector<2x60xf32>
    %10 = arith.addf %5, %9 : vector<2x60xf32>
    %11 = vector.extract_strided_slice %10 {offsets = [0, 0], sizes = [2, 15], strides = [1, 1]} : vector<2x60xf32> to vector<2x15xf32>
    %12 = arith.negf %11 : vector<2x15xf32>
    %13 = math.exp %12 : vector<2x15xf32>
    %cst_8 = arith.constant 1.000000e+00 : f32
    %14 = vector.broadcast %cst_8 : f32 to vector<2x15xf32>
    %15 = arith.addf %14, %13 : vector<2x15xf32>
    %16 = arith.divf %14, %15 : vector<2x15xf32>
    %17 = vector.extract_strided_slice %10 {offsets = [0, 15], sizes = [2, 15], strides = [1, 1]} : vector<2x60xf32> to vector<2x15xf32>
    %18 = arith.negf %17 : vector<2x15xf32>
    %19 = math.exp %18 : vector<2x15xf32>
    %cst_9 = arith.constant 1.000000e+00 : f32
    %20 = vector.broadcast %cst_9 : f32 to vector<2x15xf32>
    %21 = arith.addf %20, %19 : vector<2x15xf32>
    %22 = arith.divf %20, %21 : vector<2x15xf32>
    %23 = vector.extract_strided_slice %10 {offsets = [0, 30], sizes = [2, 15], strides = [1, 1]} : vector<2x60xf32> to vector<2x15xf32>
    %24 = math.tanh %23 : vector<2x15xf32>
    %25 = vector.extract_strided_slice %10 {offsets = [0, 45], sizes = [2, 15], strides = [1, 1]} : vector<2x60xf32> to vector<2x15xf32>
    %26 = arith.negf %25 : vector<2x15xf32>
    %27 = math.exp %26 : vector<2x15xf32>
    %cst_10 = arith.constant 1.000000e+00 : f32
    %28 = vector.broadcast %cst_10 : f32 to vector<2x15xf32>
    %29 = arith.addf %28, %27 : vector<2x15xf32>
    %30 = arith.divf %28, %29 : vector<2x15xf32>
    %31 = arith.mulf %22, %7 : vector<2x15xf32>
    %32 = arith.mulf %16, %24 : vector<2x15xf32>
    %33 = arith.addf %31, %32 : vector<2x15xf32>
    %34 = math.tanh %33 : vector<2x15xf32>
    %35 = arith.mulf %30, %34 : vector<2x15xf32>
    %c0_11 = arith.constant 0 : index
    %c0_12 = arith.constant 0 : index
    %36 = vector.load %arg13[%c0_11, %c0_12] : memref<2x15xf32, #tpu.memory_space<vmem>>, vector<2x15xf32>
    tpu.vector_store %arg13[%c0_11, %c0_12], %35 {strides = array<i32>} : memref<2x15xf32, #tpu.memory_space<vmem>>, vector<2x15xf32>,
    %c0_13 = arith.constant 0 : index
    %c0_14 = arith.constant 0 : index
    %37 = vector.load %arg14[%c0_13, %c0_14] : memref<2x15xf32, #tpu.memory_space<vmem>>, vector<2x15xf32>
    tpu.vector_store %arg14[%c0_13, %c0_14], %33 {strides = array<i32>} : memref<2x15xf32, #tpu.memory_space<vmem>>, vector<2x15xf32>,
    %c2_i32_15 = arith.constant 2 : i32
    %38 = arith.muli %c0_i32_1, %c2_i32_15 : i32
    %39 = arith.index_cast %38 : i32 to index
    %c0_16 = arith.constant 0 : index
    %40 = vector.load %arg17[%39, %c0_16] : memref<16x15xf32, #tpu.memory_space<vmem>>, vector<2x15xf32>
    tpu.vector_store %arg17[%39, %c0_16], %35 {strides = array<i32>} : memref<16x15xf32, #tpu.memory_space<vmem>>, vector<2x15xf32>,
    %c1_i32 = arith.constant 1 : i32
    %c2_i32_17 = arith.constant 2 : i32
    %41 = arith.muli %c1_i32, %c2_i32_17 : i32
    %42 = arith.index_cast %41 : i32 to index
    %c0_18 = arith.constant 0 : index
    %43 = vector.load %arg1[%42, %c0_18] : memref<16x60xf32, #tpu.memory_space<vmem>>, vector<2x60xf32>
    %c0_19 = arith.constant 0 : index
    %c0_20 = arith.constant 0 : index
    %44 = vector.load %arg13[%c0_19, %c0_20] : memref<2x15xf32, #tpu.memory_space<vmem>>, vector<2x15xf32>
    %c0_21 = arith.constant 0 : index
    %c0_22 = arith.constant 0 : index
    %45 = vector.load %arg14[%c0_21, %c0_22] : memref<2x15xf32, #tpu.memory_space<vmem>>, vector<2x15xf32>
    %c0_23 = arith.constant 0 : index
    %c0_24 = arith.constant 0 : index
    %46 = vector.load %arg2[%c0_23, %c0_24] : memref<15x60xf32, #tpu.memory_space<vmem>>, vector<15x60xf32>
    %cst_25 = arith.constant dense<0.000000e+00> : vector<2x60xf32>
    %47 = tpu.matmul %44, %46, %cst_25 {dimension_numbers = #tpu.dot_dimension_numbers<[1], [0], [0], [1], [0, 0, 1, 1], [], []>} : vector<2x15xf32>, vector<15x60xf32>, vector<2x60xf32> -> vector<2x60xf32>
    %48 = arith.addf %43, %47 : vector<2x60xf32>
    %49 = vector.extract_strided_slice %48 {offsets = [0, 0], sizes = [2, 15], strides = [1, 1]} : vector<2x60xf32> to vector<2x15xf32>
    %50 = arith.negf %49 : vector<2x15xf32>
    %51 = math.exp %50 : vector<2x15xf32>
    %cst_26 = arith.constant 1.000000e+00 : f32
    %52 = vector.broadcast %cst_26 : f32 to vector<2x15xf32>
    %53 = arith.addf %52, %51 : vector<2x15xf32>
    %54 = arith.divf %52, %53 : vector<2x15xf32>
    %55 = vector.extract_strided_slice %48 {offsets = [0, 15], sizes = [2, 15], strides = [1, 1]} : vector<2x60xf32> to vector<2x15xf32>
    %56 = arith.negf %55 : vector<2x15xf32>
    %57 = math.exp %56 : vector<2x15xf32>
    %cst_27 = arith.constant 1.000000e+00 : f32
    %58 = vector.broadcast %cst_27 : f32 to vector<2x15xf32>
    %59 = arith.addf %58, %57 : vector<2x15xf32>
    %60 = arith.divf %58, %59 : vector<2x15xf32>
    %61 = vector.extract_strided_slice %48 {offsets = [0, 30], sizes = [2, 15], strides = [1, 1]} : vector<2x60xf32> to vector<2x15xf32>
    %62 = math.tanh %61 : vector<2x15xf32>
    %63 = vector.extract_strided_slice %48 {offsets = [0, 45], sizes = [2, 15], strides = [1, 1]} : vector<2x60xf32> to vector<2x15xf32>
    %64 = arith.negf %63 : vector<2x15xf32>
    %65 = math.exp %64 : vector<2x15xf32>
    %cst_28 = arith.constant 1.000000e+00 : f32
    %66 = vector.broadcast %cst_28 : f32 to vector<2x15xf32>
    %67 = arith.addf %66, %65 : vector<2x15xf32>
    %68 = arith.divf %66, %67 : vector<2x15xf32>
    %69 = arith.mulf %60, %45 : vector<2x15xf32>
    %70 = arith.mulf %54, %62 : vector<2x15xf32>
    %71 = arith.addf %69, %70 : vector<2x15xf32>
    %72 = math.tanh %71 : vector<2x15xf32>
    %73 = arith.mulf %68, %72 : vector<2x15xf32>
    %c0_29 = arith.constant 0 : index
    %c0_30 = arith.constant 0 : index
    %74 = vector.load %arg13[%c0_29, %c0_30] : memref<2x15xf32, #tpu.memory_space<vmem>>, vector<2x15xf32>
    tpu.vector_store %arg13[%c0_29, %c0_30], %73 {strides = array<i32>} : memref<2x15xf32, #tpu.memory_space<vmem>>, vector<2x15xf32>,
    %c0_31 = arith.constant 0 : index
    %c0_32 = arith.constant 0 : index
    %75 = vector.load %arg14[%c0_31, %c0_32] : memref<2x15xf32, #tpu.memory_space<vmem>>, vector<2x15xf32>
    tpu.vector_store %arg14[%c0_31, %c0_32], %71 {strides = array<i32>} : memref<2x15xf32, #tpu.memory_space<vmem>>, vector<2x15xf32>,
    %c2_i32_33 = arith.constant 2 : i32
    %76 = arith.muli %c1_i32, %c2_i32_33 : i32
    %77 = arith.index_cast %76 : i32 to index
    %c0_34 = arith.constant 0 : index
    %78 = vector.load %arg17[%77, %c0_34] : memref<16x15xf32, #tpu.memory_space<vmem>>, vector<2x15xf32>
    tpu.vector_store %arg17[%77, %c0_34], %73 {strides = array<i32>} : memref<16x15xf32, #tpu.memory_space<vmem>>, vector<2x15xf32>,
    %c2_i32_35 = arith.constant 2 : i32
    %c2_i32_36 = arith.constant 2 : i32
    %79 = arith.muli %c2_i32_35, %c2_i32_36 : i32
    %80 = arith.index_cast %79 : i32 to index
    %c0_37 = arith.constant 0 : index
    %81 = vector.load %arg1[%80, %c0_37] : memref<16x60xf32, #tpu.memory_space<vmem>>, vector<2x60xf32>
    %c0_38 = arith.constant 0 : index
    %c0_39 = arith.constant 0 : index
    %82 = vector.load %arg13[%c0_38, %c0_39] : memref<2x15xf32, #tpu.memory_space<vmem>>, vector<2x15xf32>
    %c0_40 = arith.constant 0 : index
    %c0_41 = arith.constant 0 : index
    %83 = vector.load %arg14[%c0_40, %c0_41] : memref<2x15xf32, #tpu.memory_space<vmem>>, vector<2x15xf32>
    %c0_42 = arith.constant 0 : index
    %c0_43 = arith.constant 0 : index
    %84 = vector.load %arg2[%c0_42, %c0_43] : memref<15x60xf32, #tpu.memory_space<vmem>>, vector<15x60xf32>
    %cst_44 = arith.constant dense<0.000000e+00> : vector<2x60xf32>
    %85 = tpu.matmul %82, %84, %cst_44 {dimension_numbers = #tpu.dot_dimension_numbers<[1], [0], [0], [1], [0, 0, 1, 1], [], []>} : vector<2x15xf32>, vector<15x60xf32>, vector<2x60xf32> -> vector<2x60xf32>
    %86 = arith.addf %81, %85 : vector<2x60xf32>
    %87 = vector.extract_strided_slice %86 {offsets = [0, 0], sizes = [2, 15], strides = [1, 1]} : vector<2x60xf32> to vector<2x15xf32>
    %88 = arith.negf %87 : vector<2x15xf32>
    %89 = math.exp %88 : vector<2x15xf32>
    %cst_45 = arith.constant 1.000000e+00 : f32
    %90 = vector.broadcast %cst_45 : f32 to vector<2x15xf32>
    %91 = arith.addf %90, %89 : vector<2x15xf32>
    %92 = arith.divf %90, %91 : vector<2x15xf32>
    %93 = vector.extract_strided_slice %86 {offsets = [0, 15], sizes = [2, 15], strides = [1, 1]} : vector<2x60xf32> to vector<2x15xf32>
    %94 = arith.negf %93 : vector<2x15xf32>
    %95 = math.exp %94 : vector<2x15xf32>
    %cst_46 = arith.constant 1.000000e+00 : f32
    %96 = vector.broadcast %cst_46 : f32 to vector<2x15xf32>
    %97 = arith.addf %96, %95 : vector<2x15xf32>
    %98 = arith.divf %96, %97 : vector<2x15xf32>
    %99 = vector.extract_strided_slice %86 {offsets = [0, 30], sizes = [2, 15], strides = [1, 1]} : vector<2x60xf32> to vector<2x15xf32>
    %100 = math.tanh %99 : vector<2x15xf32>
    %101 = vector.extract_strided_slice %86 {offsets = [0, 45], sizes = [2, 15], strides = [1, 1]} : vector<2x60xf32> to vector<2x15xf32>
    %102 = arith.negf %101 : vector<2x15xf32>
    %103 = math.exp %102 : vector<2x15xf32>
    %cst_47 = arith.constant 1.000000e+00 : f32
    %104 = vector.broadcast %cst_47 : f32 to vector<2x15xf32>
    %105 = arith.addf %104, %103 : vector<2x15xf32>
    %106 = arith.divf %104, %105 : vector<2x15xf32>
    %107 = arith.mulf %98, %83 : vector<2x15xf32>
    %108 = arith.mulf %92, %100 : vector<2x15xf32>
    %109 = arith.addf %107, %108 : vector<2x15xf32>
    %110 = math.tanh %109 : vector<2x15xf32>
    %111 = arith.mulf %106, %110 : vector<2x15xf32>
    %c0_48 = arith.constant 0 : index
    %c0_49 = arith.constant 0 : index
    %112 = vector.load %arg13[%c0_48, %c0_49] : memref<2x15xf32, #tpu.memory_space<vmem>>, vector<2x15xf32>
    tpu.vector_store %arg13[%c0_48, %c0_49], %111 {strides = array<i32>} : memref<2x15xf32, #tpu.memory_space<vmem>>, vector<2x15xf32>,
    %c0_50 = arith.constant 0 : index
    %c0_51 = arith.constant 0 : index
    %113 = vector.load %arg14[%c0_50, %c0_51] : memref<2x15xf32, #tpu.memory_space<vmem>>, vector<2x15xf32>
    tpu.vector_store %arg14[%c0_50, %c0_51], %109 {strides = array<i32>} : memref<2x15xf32, #tpu.memory_space<vmem>>, vector<2x15xf32>,
    %c2_i32_52 = arith.constant 2 : i32
    %114 = arith.muli %c2_i32_35, %c2_i32_52 : i32
    %115 = arith.index_cast %114 : i32 to index
    %c0_53 = arith.constant 0 : index
    %116 = vector.load %arg17[%115, %c0_53] : memref<16x15xf32, #tpu.memory_space<vmem>>, vector<2x15xf32>
    tpu.vector_store %arg17[%115, %c0_53], %111 {strides = array<i32>} : memref<16x15xf32, #tpu.memory_space<vmem>>, vector<2x15xf32>,
    %c3_i32 = arith.constant 3 : i32
    %c2_i32_54 = arith.constant 2 : i32
    %117 = arith.muli %c3_i32, %c2_i32_54 : i32
    %118 = arith.index_cast %117 : i32 to index
    %c0_55 = arith.constant 0 : index
    %119 = vector.load %arg1[%118, %c0_55] : memref<16x60xf32, #tpu.memory_space<vmem>>, vector<2x60xf32>
    %c0_56 = arith.constant 0 : index
    %c0_57 = arith.constant 0 : index
    %120 = vector.load %arg13[%c0_56, %c0_57] : memref<2x15xf32, #tpu.memory_space<vmem>>, vector<2x15xf32>
    %c0_58 = arith.constant 0 : index
    %c0_59 = arith.constant 0 : index
    %121 = vector.load %arg14[%c0_58, %c0_59] : memref<2x15xf32, #tpu.memory_space<vmem>>, vector<2x15xf32>
    %c0_60 = arith.constant 0 : index
    %c0_61 = arith.constant 0 : index
    %122 = vector.load %arg2[%c0_60, %c0_61] : memref<15x60xf32, #tpu.memory_space<vmem>>, vector<15x60xf32>
    %cst_62 = arith.constant dense<0.000000e+00> : vector<2x60xf32>
    %123 = tpu.matmul %120, %122, %cst_62 {dimension_numbers = #tpu.dot_dimension_numbers<[1], [0], [0], [1], [0, 0, 1, 1], [], []>} : vector<2x15xf32>, vector<15x60xf32>, vector<2x60xf32> -> vector<2x60xf32>
    %124 = arith.addf %119, %123 : vector<2x60xf32>
    %125 = vector.extract_strided_slice %124 {offsets = [0, 0], sizes = [2, 15], strides = [1, 1]} : vector<2x60xf32> to vector<2x15xf32>
    %126 = arith.negf %125 : vector<2x15xf32>
    %127 = math.exp %126 : vector<2x15xf32>
    %cst_63 = arith.constant 1.000000e+00 : f32
    %128 = vector.broadcast %cst_63 : f32 to vector<2x15xf32>
    %129 = arith.addf %128, %127 : vector<2x15xf32>
    %130 = arith.divf %128, %129 : vector<2x15xf32>
    %131 = vector.extract_strided_slice %124 {offsets = [0, 15], sizes = [2, 15], strides = [1, 1]} : vector<2x60xf32> to vector<2x15xf32>
    %132 = arith.negf %131 : vector<2x15xf32>
    %133 = math.exp %132 : vector<2x15xf32>
    %cst_64 = arith.constant 1.000000e+00 : f32
    %134 = vector.broadcast %cst_64 : f32 to vector<2x15xf32>
    %135 = arith.addf %134, %133 : vector<2x15xf32>
    %136 = arith.divf %134, %135 : vector<2x15xf32>
    %137 = vector.extract_strided_slice %124 {offsets = [0, 30], sizes = [2, 15], strides = [1, 1]} : vector<2x60xf32> to vector<2x15xf32>
    %138 = math.tanh %137 : vector<2x15xf32>
    %139 = vector.extract_strided_slice %124 {offsets = [0, 45], sizes = [2, 15], strides = [1, 1]} : vector<2x60xf32> to vector<2x15xf32>
    %140 = arith.negf %139 : vector<2x15xf32>
    %141 = math.exp %140 : vector<2x15xf32>
    %cst_65 = arith.constant 1.000000e+00 : f32
    %142 = vector.broadcast %cst_65 : f32 to vector<2x15xf32>
    %143 = arith.addf %142, %141 : vector<2x15xf32>
    %144 = arith.divf %142, %143 : vector<2x15xf32>
    %145 = arith.mulf %136, %121 : vector<2x15xf32>
    %146 = arith.mulf %130, %138 : vector<2x15xf32>
    %147 = arith.addf %145, %146 : vector<2x15xf32>
    %148 = math.tanh %147 : vector<2x15xf32>
    %149 = arith.mulf %144, %148 : vector<2x15xf32>
    %c0_66 = arith.constant 0 : index
    %c0_67 = arith.constant 0 : index
    %150 = vector.load %arg13[%c0_66, %c0_67] : memref<2x15xf32, #tpu.memory_space<vmem>>, vector<2x15xf32>
    tpu.vector_store %arg13[%c0_66, %c0_67], %149 {strides = array<i32>} : memref<2x15xf32, #tpu.memory_space<vmem>>, vector<2x15xf32>,
    %c0_68 = arith.constant 0 : index
    %c0_69 = arith.constant 0 : index
    %151 = vector.load %arg14[%c0_68, %c0_69] : memref<2x15xf32, #tpu.memory_space<vmem>>, vector<2x15xf32>
    tpu.vector_store %arg14[%c0_68, %c0_69], %147 {strides = array<i32>} : memref<2x15xf32, #tpu.memory_space<vmem>>, vector<2x15xf32>,
    %c2_i32_70 = arith.constant 2 : i32
    %152 = arith.muli %c3_i32, %c2_i32_70 : i32
    %153 = arith.index_cast %152 : i32 to index
    %c0_71 = arith.constant 0 : index
    %154 = vector.load %arg17[%153, %c0_71] : memref<16x15xf32, #tpu.memory_space<vmem>>, vector<2x15xf32>
    tpu.vector_store %arg17[%153, %c0_71], %149 {strides = array<i32>} : memref<16x15xf32, #tpu.memory_space<vmem>>, vector<2x15xf32>,
    %c4_i32 = arith.constant 4 : i32
    %c2_i32_72 = arith.constant 2 : i32
    %155 = arith.muli %c4_i32, %c2_i32_72 : i32
    %156 = arith.index_cast %155 : i32 to index
    %c0_73 = arith.constant 0 : index
    %157 = vector.load %arg1[%156, %c0_73] : memref<16x60xf32, #tpu.memory_space<vmem>>, vector<2x60xf32>
    %c0_74 = arith.constant 0 : index
    %c0_75 = arith.constant 0 : index
    %158 = vector.load %arg13[%c0_74, %c0_75] : memref<2x15xf32, #tpu.memory_space<vmem>>, vector<2x15xf32>
    %c0_76 = arith.constant 0 : index
    %c0_77 = arith.constant 0 : index
    %159 = vector.load %arg14[%c0_76, %c0_77] : memref<2x15xf32, #tpu.memory_space<vmem>>, vector<2x15xf32>
    %c0_78 = arith.constant 0 : index
    %c0_79 = arith.constant 0 : index
    %160 = vector.load %arg2[%c0_78, %c0_79] : memref<15x60xf32, #tpu.memory_space<vmem>>, vector<15x60xf32>
    %cst_80 = arith.constant dense<0.000000e+00> : vector<2x60xf32>
    %161 = tpu.matmul %158, %160, %cst_80 {dimension_numbers = #tpu.dot_dimension_numbers<[1], [0], [0], [1], [0, 0, 1, 1], [], []>} : vector<2x15xf32>, vector<15x60xf32>, vector<2x60xf32> -> vector<2x60xf32>
    %162 = arith.addf %157, %161 : vector<2x60xf32>
    %163 = vector.extract_strided_slice %162 {offsets = [0, 0], sizes = [2, 15], strides = [1, 1]} : vector<2x60xf32> to vector<2x15xf32>
    %164 = arith.negf %163 : vector<2x15xf32>
    %165 = math.exp %164 : vector<2x15xf32>
    %cst_81 = arith.constant 1.000000e+00 : f32
    %166 = vector.broadcast %cst_81 : f32 to vector<2x15xf32>
    %167 = arith.addf %166, %165 : vector<2x15xf32>
    %168 = arith.divf %166, %167 : vector<2x15xf32>
    %169 = vector.extract_strided_slice %162 {offsets = [0, 15], sizes = [2, 15], strides = [1, 1]} : vector<2x60xf32> to vector<2x15xf32>
    %170 = arith.negf %169 : vector<2x15xf32>
    %171 = math.exp %170 : vector<2x15xf32>
    %cst_82 = arith.constant 1.000000e+00 : f32
    %172 = vector.broadcast %cst_82 : f32 to vector<2x15xf32>
    %173 = arith.addf %172, %171 : vector<2x15xf32>
    %174 = arith.divf %172, %173 : vector<2x15xf32>
    %175 = vector.extract_strided_slice %162 {offsets = [0, 30], sizes = [2, 15], strides = [1, 1]} : vector<2x60xf32> to vector<2x15xf32>
    %176 = math.tanh %175 : vector<2x15xf32>
    %177 = vector.extract_strided_slice %162 {offsets = [0, 45], sizes = [2, 15], strides = [1, 1]} : vector<2x60xf32> to vector<2x15xf32>
    %178 = arith.negf %177 : vector<2x15xf32>
    %179 = math.exp %178 : vector<2x15xf32>
    %cst_83 = arith.constant 1.000000e+00 : f32
    %180 = vector.broadcast %cst_83 : f32 to vector<2x15xf32>
    %181 = arith.addf %180, %179 : vector<2x15xf32>
    %182 = arith.divf %180, %181 : vector<2x15xf32>
    %183 = arith.mulf %174, %159 : vector<2x15xf32>
    %184 = arith.mulf %168, %176 : vector<2x15xf32>
    %185 = arith.addf %183, %184 : vector<2x15xf32>
    %186 = math.tanh %185 : vector<2x15xf32>
    %187 = arith.mulf %182, %186 : vector<2x15xf32>
    %c0_84 = arith.constant 0 : index
    %c0_85 = arith.constant 0 : index
    %188 = vector.load %arg13[%c0_84, %c0_85] : memref<2x15xf32, #tpu.memory_space<vmem>>, vector<2x15xf32>
    tpu.vector_store %arg13[%c0_84, %c0_85], %187 {strides = array<i32>} : memref<2x15xf32, #tpu.memory_space<vmem>>, vector<2x15xf32>,
    %c0_86 = arith.constant 0 : index
    %c0_87 = arith.constant 0 : index
    %189 = vector.load %arg14[%c0_86, %c0_87] : memref<2x15xf32, #tpu.memory_space<vmem>>, vector<2x15xf32>
    tpu.vector_store %arg14[%c0_86, %c0_87], %185 {strides = array<i32>} : memref<2x15xf32, #tpu.memory_space<vmem>>, vector<2x15xf32>,
    %c2_i32_88 = arith.constant 2 : i32
    %190 = arith.muli %c4_i32, %c2_i32_88 : i32
    %191 = arith.index_cast %190 : i32 to index
    %c0_89 = arith.constant 0 : index
    %192 = vector.load %arg17[%191, %c0_89] : memref<16x15xf32, #tpu.memory_space<vmem>>, vector<2x15xf32>
    tpu.vector_store %arg17[%191, %c0_89], %187 {strides = array<i32>} : memref<16x15xf32, #tpu.memory_space<vmem>>, vector<2x15xf32>,
    %c5_i32 = arith.constant 5 : i32
    %c2_i32_90 = arith.constant 2 : i32
    %193 = arith.muli %c5_i32, %c2_i32_90 : i32
    %194 = arith.index_cast %193 : i32 to index
    %c0_91 = arith.constant 0 : index
    %195 = vector.load %arg1[%194, %c0_91] : memref<16x60xf32, #tpu.memory_space<vmem>>, vector<2x60xf32>
    %c0_92 = arith.constant 0 : index
    %c0_93 = arith.constant 0 : index
    %196 = vector.load %arg13[%c0_92, %c0_93] : memref<2x15xf32, #tpu.memory_space<vmem>>, vector<2x15xf32>
    %c0_94 = arith.constant 0 : index
    %c0_95 = arith.constant 0 : index
    %197 = vector.load %arg14[%c0_94, %c0_95] : memref<2x15xf32, #tpu.memory_space<vmem>>, vector<2x15xf32>
    %c0_96 = arith.constant 0 : index
    %c0_97 = arith.constant 0 : index
    %198 = vector.load %arg2[%c0_96, %c0_97] : memref<15x60xf32, #tpu.memory_space<vmem>>, vector<15x60xf32>
    %cst_98 = arith.constant dense<0.000000e+00> : vector<2x60xf32>
    %199 = tpu.matmul %196, %198, %cst_98 {dimension_numbers = #tpu.dot_dimension_numbers<[1], [0], [0], [1], [0, 0, 1, 1], [], []>} : vector<2x15xf32>, vector<15x60xf32>, vector<2x60xf32> -> vector<2x60xf32>
    %200 = arith.addf %195, %199 : vector<2x60xf32>
    %201 = vector.extract_strided_slice %200 {offsets = [0, 0], sizes = [2, 15], strides = [1, 1]} : vector<2x60xf32> to vector<2x15xf32>
    %202 = arith.negf %201 : vector<2x15xf32>
    %203 = math.exp %202 : vector<2x15xf32>
    %cst_99 = arith.constant 1.000000e+00 : f32
    %204 = vector.broadcast %cst_99 : f32 to vector<2x15xf32>
    %205 = arith.addf %204, %203 : vector<2x15xf32>
    %206 = arith.divf %204, %205 : vector<2x15xf32>
    %207 = vector.extract_strided_slice %200 {offsets = [0, 15], sizes = [2, 15], strides = [1, 1]} : vector<2x60xf32> to vector<2x15xf32>
    %208 = arith.negf %207 : vector<2x15xf32>
    %209 = math.exp %208 : vector<2x15xf32>
    %cst_100 = arith.constant 1.000000e+00 : f32
    %210 = vector.broadcast %cst_100 : f32 to vector<2x15xf32>
    %211 = arith.addf %210, %209 : vector<2x15xf32>
    %212 = arith.divf %210, %211 : vector<2x15xf32>
    %213 = vector.extract_strided_slice %200 {offsets = [0, 30], sizes = [2, 15], strides = [1, 1]} : vector<2x60xf32> to vector<2x15xf32>
    %214 = math.tanh %213 : vector<2x15xf32>
    %215 = vector.extract_strided_slice %200 {offsets = [0, 45], sizes = [2, 15], strides = [1, 1]} : vector<2x60xf32> to vector<2x15xf32>
    %216 = arith.negf %215 : vector<2x15xf32>
    %217 = math.exp %216 : vector<2x15xf32>
    %cst_101 = arith.constant 1.000000e+00 : f32
    %218 = vector.broadcast %cst_101 : f32 to vector<2x15xf32>
    %219 = arith.addf %218, %217 : vector<2x15xf32>
    %220 = arith.divf %218, %219 : vector<2x15xf32>
    %221 = arith.mulf %212, %197 : vector<2x15xf32>
    %222 = arith.mulf %206, %214 : vector<2x15xf32>
    %223 = arith.addf %221, %222 : vector<2x15xf32>
    %224 = math.tanh %223 : vector<2x15xf32>
    %225 = arith.mulf %220, %224 : vector<2x15xf32>
    %c0_102 = arith.constant 0 : index
    %c0_103 = arith.constant 0 : index
    %226 = vector.load %arg13[%c0_102, %c0_103] : memref<2x15xf32, #tpu.memory_space<vmem>>, vector<2x15xf32>
    tpu.vector_store %arg13[%c0_102, %c0_103], %225 {strides = array<i32>} : memref<2x15xf32, #tpu.memory_space<vmem>>, vector<2x15xf32>,
    %c0_104 = arith.constant 0 : index
    %c0_105 = arith.constant 0 : index
    %227 = vector.load %arg14[%c0_104, %c0_105] : memref<2x15xf32, #tpu.memory_space<vmem>>, vector<2x15xf32>
    tpu.vector_store %arg14[%c0_104, %c0_105], %223 {strides = array<i32>} : memref<2x15xf32, #tpu.memory_space<vmem>>, vector<2x15xf32>,
    %c2_i32_106 = arith.constant 2 : i32
    %228 = arith.muli %c5_i32, %c2_i32_106 : i32
    %229 = arith.index_cast %228 : i32 to index
    %c0_107 = arith.constant 0 : index
    %230 = vector.load %arg17[%229, %c0_107] : memref<16x15xf32, #tpu.memory_space<vmem>>, vector<2x15xf32>
    tpu.vector_store %arg17[%229, %c0_107], %225 {strides = array<i32>} : memref<16x15xf32, #tpu.memory_space<vmem>>, vector<2x15xf32>,
    %c6_i32 = arith.constant 6 : i32
    %c2_i32_108 = arith.constant 2 : i32
    %231 = arith.muli %c6_i32, %c2_i32_108 : i32
    %232 = arith.index_cast %231 : i32 to index
    %c0_109 = arith.constant 0 : index
    %233 = vector.load %arg1[%232, %c0_109] : memref<16x60xf32, #tpu.memory_space<vmem>>, vector<2x60xf32>
    %c0_110 = arith.constant 0 : index
    %c0_111 = arith.constant 0 : index
    %234 = vector.load %arg13[%c0_110, %c0_111] : memref<2x15xf32, #tpu.memory_space<vmem>>, vector<2x15xf32>
    %c0_112 = arith.constant 0 : index
    %c0_113 = arith.constant 0 : index
    %235 = vector.load %arg14[%c0_112, %c0_113] : memref<2x15xf32, #tpu.memory_space<vmem>>, vector<2x15xf32>
    %c0_114 = arith.constant 0 : index
    %c0_115 = arith.constant 0 : index
    %236 = vector.load %arg2[%c0_114, %c0_115] : memref<15x60xf32, #tpu.memory_space<vmem>>, vector<15x60xf32>
    %cst_116 = arith.constant dense<0.000000e+00> : vector<2x60xf32>
    %237 = tpu.matmul %234, %236, %cst_116 {dimension_numbers = #tpu.dot_dimension_numbers<[1], [0], [0], [1], [0, 0, 1, 1], [], []>} : vector<2x15xf32>, vector<15x60xf32>, vector<2x60xf32> -> vector<2x60xf32>
    %238 = arith.addf %233, %237 : vector<2x60xf32>
    %239 = vector.extract_strided_slice %238 {offsets = [0, 0], sizes = [2, 15], strides = [1, 1]} : vector<2x60xf32> to vector<2x15xf32>
    %240 = arith.negf %239 : vector<2x15xf32>
    %241 = math.exp %240 : vector<2x15xf32>
    %cst_117 = arith.constant 1.000000e+00 : f32
    %242 = vector.broadcast %cst_117 : f32 to vector<2x15xf32>
    %243 = arith.addf %242, %241 : vector<2x15xf32>
    %244 = arith.divf %242, %243 : vector<2x15xf32>
    %245 = vector.extract_strided_slice %238 {offsets = [0, 15], sizes = [2, 15], strides = [1, 1]} : vector<2x60xf32> to vector<2x15xf32>
    %246 = arith.negf %245 : vector<2x15xf32>
    %247 = math.exp %246 : vector<2x15xf32>
    %cst_118 = arith.constant 1.000000e+00 : f32
    %248 = vector.broadcast %cst_118 : f32 to vector<2x15xf32>
    %249 = arith.addf %248, %247 : vector<2x15xf32>
    %250 = arith.divf %248, %249 : vector<2x15xf32>
    %251 = vector.extract_strided_slice %238 {offsets = [0, 30], sizes = [2, 15], strides = [1, 1]} : vector<2x60xf32> to vector<2x15xf32>
    %252 = math.tanh %251 : vector<2x15xf32>
    %253 = vector.extract_strided_slice %238 {offsets = [0, 45], sizes = [2, 15], strides = [1, 1]} : vector<2x60xf32> to vector<2x15xf32>
    %254 = arith.negf %253 : vector<2x15xf32>
    %255 = math.exp %254 : vector<2x15xf32>
    %cst_119 = arith.constant 1.000000e+00 : f32
    %256 = vector.broadcast %cst_119 : f32 to vector<2x15xf32>
    %257 = arith.addf %256, %255 : vector<2x15xf32>
    %258 = arith.divf %256, %257 : vector<2x15xf32>
    %259 = arith.mulf %250, %235 : vector<2x15xf32>
    %260 = arith.mulf %244, %252 : vector<2x15xf32>
    %261 = arith.addf %259, %260 : vector<2x15xf32>
    %262 = math.tanh %261 : vector<2x15xf32>
    %263 = arith.mulf %258, %262 : vector<2x15xf32>
    %c0_120 = arith.constant 0 : index
    %c0_121 = arith.constant 0 : index
    %264 = vector.load %arg13[%c0_120, %c0_121] : memref<2x15xf32, #tpu.memory_space<vmem>>, vector<2x15xf32>
    tpu.vector_store %arg13[%c0_120, %c0_121], %263 {strides = array<i32>} : memref<2x15xf32, #tpu.memory_space<vmem>>, vector<2x15xf32>,
    %c0_122 = arith.constant 0 : index
    %c0_123 = arith.constant 0 : index
    %265 = vector.load %arg14[%c0_122, %c0_123] : memref<2x15xf32, #tpu.memory_space<vmem>>, vector<2x15xf32>
    tpu.vector_store %arg14[%c0_122, %c0_123], %261 {strides = array<i32>} : memref<2x15xf32, #tpu.memory_space<vmem>>, vector<2x15xf32>,
    %c2_i32_124 = arith.constant 2 : i32
    %266 = arith.muli %c6_i32, %c2_i32_124 : i32
    %267 = arith.index_cast %266 : i32 to index
    %c0_125 = arith.constant 0 : index
    %268 = vector.load %arg17[%267, %c0_125] : memref<16x15xf32, #tpu.memory_space<vmem>>, vector<2x15xf32>
    tpu.vector_store %arg17[%267, %c0_125], %263 {strides = array<i32>} : memref<16x15xf32, #tpu.memory_space<vmem>>, vector<2x15xf32>,
    %c7_i32 = arith.constant 7 : i32
    %c2_i32_126 = arith.constant 2 : i32
    %269 = arith.muli %c7_i32, %c2_i32_126 : i32
    %270 = arith.index_cast %269 : i32 to index
    %c0_127 = arith.constant 0 : index
    %271 = vector.load %arg1[%270, %c0_127] : memref<16x60xf32, #tpu.memory_space<vmem>>, vector<2x60xf32>
    %c0_128 = arith.constant 0 : index
    %c0_129 = arith.constant 0 : index
    %272 = vector.load %arg13[%c0_128, %c0_129] : memref<2x15xf32, #tpu.memory_space<vmem>>, vector<2x15xf32>
    %c0_130 = arith.constant 0 : index
    %c0_131 = arith.constant 0 : index
    %273 = vector.load %arg14[%c0_130, %c0_131] : memref<2x15xf32, #tpu.memory_space<vmem>>, vector<2x15xf32>
    %c0_132 = arith.constant 0 : index
    %c0_133 = arith.constant 0 : index
    %274 = vector.load %arg2[%c0_132, %c0_133] : memref<15x60xf32, #tpu.memory_space<vmem>>, vector<15x60xf32>
    %cst_134 = arith.constant dense<0.000000e+00> : vector<2x60xf32>
    %275 = tpu.matmul %272, %274, %cst_134 {dimension_numbers = #tpu.dot_dimension_numbers<[1], [0], [0], [1], [0, 0, 1, 1], [], []>} : vector<2x15xf32>, vector<15x60xf32>, vector<2x60xf32> -> vector<2x60xf32>
    %276 = arith.addf %271, %275 : vector<2x60xf32>
    %277 = vector.extract_strided_slice %276 {offsets = [0, 0], sizes = [2, 15], strides = [1, 1]} : vector<2x60xf32> to vector<2x15xf32>
    %278 = arith.negf %277 : vector<2x15xf32>
    %279 = math.exp %278 : vector<2x15xf32>
    %cst_135 = arith.constant 1.000000e+00 : f32
    %280 = vector.broadcast %cst_135 : f32 to vector<2x15xf32>
    %281 = arith.addf %280, %279 : vector<2x15xf32>
    %282 = arith.divf %280, %281 : vector<2x15xf32>
    %283 = vector.extract_strided_slice %276 {offsets = [0, 15], sizes = [2, 15], strides = [1, 1]} : vector<2x60xf32> to vector<2x15xf32>
    %284 = arith.negf %283 : vector<2x15xf32>
    %285 = math.exp %284 : vector<2x15xf32>
    %cst_136 = arith.constant 1.000000e+00 : f32
    %286 = vector.broadcast %cst_136 : f32 to vector<2x15xf32>
    %287 = arith.addf %286, %285 : vector<2x15xf32>
    %288 = arith.divf %286, %287 : vector<2x15xf32>
    %289 = vector.extract_strided_slice %276 {offsets = [0, 30], sizes = [2, 15], strides = [1, 1]} : vector<2x60xf32> to vector<2x15xf32>
    %290 = math.tanh %289 : vector<2x15xf32>
    %291 = vector.extract_strided_slice %276 {offsets = [0, 45], sizes = [2, 15], strides = [1, 1]} : vector<2x60xf32> to vector<2x15xf32>
    %292 = arith.negf %291 : vector<2x15xf32>
    %293 = math.exp %292 : vector<2x15xf32>
    %cst_137 = arith.constant 1.000000e+00 : f32
    %294 = vector.broadcast %cst_137 : f32 to vector<2x15xf32>
    %295 = arith.addf %294, %293 : vector<2x15xf32>
    %296 = arith.divf %294, %295 : vector<2x15xf32>
    %297 = arith.mulf %288, %273 : vector<2x15xf32>
    %298 = arith.mulf %282, %290 : vector<2x15xf32>
    %299 = arith.addf %297, %298 : vector<2x15xf32>
    %300 = math.tanh %299 : vector<2x15xf32>
    %301 = arith.mulf %296, %300 : vector<2x15xf32>
    %c0_138 = arith.constant 0 : index
    %c0_139 = arith.constant 0 : index
    %302 = vector.load %arg13[%c0_138, %c0_139] : memref<2x15xf32, #tpu.memory_space<vmem>>, vector<2x15xf32>
    tpu.vector_store %arg13[%c0_138, %c0_139], %301 {strides = array<i32>} : memref<2x15xf32, #tpu.memory_space<vmem>>, vector<2x15xf32>,
    %c0_140 = arith.constant 0 : index
    %c0_141 = arith.constant 0 : index
    %303 = vector.load %arg14[%c0_140, %c0_141] : memref<2x15xf32, #tpu.memory_space<vmem>>, vector<2x15xf32>
    tpu.vector_store %arg14[%c0_140, %c0_141], %299 {strides = array<i32>} : memref<2x15xf32, #tpu.memory_space<vmem>>, vector<2x15xf32>,
    %c2_i32_142 = arith.constant 2 : i32
    %304 = arith.muli %c7_i32, %c2_i32_142 : i32
    %305 = arith.index_cast %304 : i32 to index
    %c0_143 = arith.constant 0 : index
    %306 = vector.load %arg17[%305, %c0_143] : memref<16x15xf32, #tpu.memory_space<vmem>>, vector<2x15xf32>
    tpu.vector_store %arg17[%305, %c0_143], %301 {strides = array<i32>} : memref<16x15xf32, #tpu.memory_space<vmem>>, vector<2x15xf32>,
    %c8_i32 = arith.constant 8 : i32
    %c0_144 = arith.constant 0 : index
    %c0_145 = arith.constant 0 : index
    %307 = vector.load %arg17[%c0_144, %c0_145] : memref<16x15xf32, #tpu.memory_space<vmem>>, vector<16x15xf32>
    %c0_146 = arith.constant 0 : index
    %c0_147 = arith.constant 0 : index
    %308 = vector.load %arg3[%c0_146, %c0_147] : memref<15x60xf32, #tpu.memory_space<vmem>>, vector<15x60xf32>
    %cst_148 = arith.constant dense<0.000000e+00> : vector<16x60xf32>
    %309 = tpu.matmul %307, %308, %cst_148 {dimension_numbers = #tpu.dot_dimension_numbers<[1], [0], [0], [1], [0, 0, 1, 1], [], []>} : vector<16x15xf32>, vector<15x60xf32>, vector<16x60xf32> -> vector<16x60xf32>
    %c0_149 = arith.constant 0 : index
    %c0_150 = arith.constant 0 : index
    %310 = vector.load %arg5[%c0_149, %c0_150] : memref<1x60xf32, #tpu.memory_space<vmem>>, vector<1x60xf32>
    %311 = vector.broadcast %310 : vector<1x60xf32> to vector<16x60xf32>
    %312 = arith.addf %309, %311 : vector<16x60xf32>
    %c0_151 = arith.constant 0 : index
    %c0_152 = arith.constant 0 : index
    %313 = vector.load %arg18[%c0_151, %c0_152] : memref<16x60xf32, #tpu.memory_space<vmem>>, vector<16x60xf32>
    tpu.vector_store %arg18[%c0_151, %c0_152], %312 {strides = array<i32>} : memref<16x60xf32, #tpu.memory_space<vmem>>, vector<16x60xf32>,
    %c0_i32_153 = arith.constant 0 : i32
    %c2_i32_154 = arith.constant 2 : i32
    %314 = arith.muli %c0_i32_153, %c2_i32_154 : i32
    %315 = arith.index_cast %314 : i32 to index
    %c0_155 = arith.constant 0 : index
    %316 = vector.load %arg18[%315, %c0_155] : memref<16x60xf32, #tpu.memory_space<vmem>>, vector<2x60xf32>
    %c0_156 = arith.constant 0 : index
    %c0_157 = arith.constant 0 : index
    %317 = vector.load %arg15[%c0_156, %c0_157] : memref<2x15xf32, #tpu.memory_space<vmem>>, vector<2x15xf32>
    %c0_158 = arith.constant 0 : index
    %c0_159 = arith.constant 0 : index
    %318 = vector.load %arg16[%c0_158, %c0_159] : memref<2x15xf32, #tpu.memory_space<vmem>>, vector<2x15xf32>
    %c0_160 = arith.constant 0 : index
    %c0_161 = arith.constant 0 : index
    %319 = vector.load %arg4[%c0_160, %c0_161] : memref<15x60xf32, #tpu.memory_space<vmem>>, vector<15x60xf32>
    %cst_162 = arith.constant dense<0.000000e+00> : vector<2x60xf32>
    %320 = tpu.matmul %317, %319, %cst_162 {dimension_numbers = #tpu.dot_dimension_numbers<[1], [0], [0], [1], [0, 0, 1, 1], [], []>} : vector<2x15xf32>, vector<15x60xf32>, vector<2x60xf32> -> vector<2x60xf32>
    %321 = arith.addf %316, %320 : vector<2x60xf32>
    %322 = vector.extract_strided_slice %321 {offsets = [0, 0], sizes = [2, 15], strides = [1, 1]} : vector<2x60xf32> to vector<2x15xf32>
    %323 = arith.negf %322 : vector<2x15xf32>
    %324 = math.exp %323 : vector<2x15xf32>
    %cst_163 = arith.constant 1.000000e+00 : f32
    %325 = vector.broadcast %cst_163 : f32 to vector<2x15xf32>
    %326 = arith.addf %325, %324 : vector<2x15xf32>
    %327 = arith.divf %325, %326 : vector<2x15xf32>
    %328 = vector.extract_strided_slice %321 {offsets = [0, 15], sizes = [2, 15], strides = [1, 1]} : vector<2x60xf32> to vector<2x15xf32>
    %329 = arith.negf %328 : vector<2x15xf32>
    %330 = math.exp %329 : vector<2x15xf32>
    %cst_164 = arith.constant 1.000000e+00 : f32
    %331 = vector.broadcast %cst_164 : f32 to vector<2x15xf32>
    %332 = arith.addf %331, %330 : vector<2x15xf32>
    %333 = arith.divf %331, %332 : vector<2x15xf32>
    %334 = vector.extract_strided_slice %321 {offsets = [0, 30], sizes = [2, 15], strides = [1, 1]} : vector<2x60xf32> to vector<2x15xf32>
    %335 = math.tanh %334 : vector<2x15xf32>
    %336 = vector.extract_strided_slice %321 {offsets = [0, 45], sizes = [2, 15], strides = [1, 1]} : vector<2x60xf32> to vector<2x15xf32>
    %337 = arith.negf %336 : vector<2x15xf32>
    %338 = math.exp %337 : vector<2x15xf32>
    %cst_165 = arith.constant 1.000000e+00 : f32
    %339 = vector.broadcast %cst_165 : f32 to vector<2x15xf32>
    %340 = arith.addf %339, %338 : vector<2x15xf32>
    %341 = arith.divf %339, %340 : vector<2x15xf32>
    %342 = arith.mulf %333, %318 : vector<2x15xf32>
    %343 = arith.mulf %327, %335 : vector<2x15xf32>
    %344 = arith.addf %342, %343 : vector<2x15xf32>
    %345 = math.tanh %344 : vector<2x15xf32>
    %346 = arith.mulf %341, %345 : vector<2x15xf32>
    %c0_166 = arith.constant 0 : index
    %c0_167 = arith.constant 0 : index
    %347 = vector.load %arg15[%c0_166, %c0_167] : memref<2x15xf32, #tpu.memory_space<vmem>>, vector<2x15xf32>
    tpu.vector_store %arg15[%c0_166, %c0_167], %346 {strides = array<i32>} : memref<2x15xf32, #tpu.memory_space<vmem>>, vector<2x15xf32>,
    %c0_168 = arith.constant 0 : index
    %c0_169 = arith.constant 0 : index
    %348 = vector.load %arg16[%c0_168, %c0_169] : memref<2x15xf32, #tpu.memory_space<vmem>>, vector<2x15xf32>
    tpu.vector_store %arg16[%c0_168, %c0_169], %344 {strides = array<i32>} : memref<2x15xf32, #tpu.memory_space<vmem>>, vector<2x15xf32>,
    %c2_i32_170 = arith.constant 2 : i32
    %349 = arith.muli %c0_i32_153, %c2_i32_170 : i32
    %350 = arith.index_cast %349 : i32 to index
    %c0_171 = arith.constant 0 : index
    %351 = vector.load %arg17[%350, %c0_171] : memref<16x15xf32, #tpu.memory_space<vmem>>, vector<2x15xf32>
    tpu.vector_store %arg17[%350, %c0_171], %346 {strides = array<i32>} : memref<16x15xf32, #tpu.memory_space<vmem>>, vector<2x15xf32>,
    %c1_i32_172 = arith.constant 1 : i32
    %c2_i32_173 = arith.constant 2 : i32
    %352 = arith.muli %c1_i32_172, %c2_i32_173 : i32
    %353 = arith.index_cast %352 : i32 to index
    %c0_174 = arith.constant 0 : index
    %354 = vector.load %arg18[%353, %c0_174] : memref<16x60xf32, #tpu.memory_space<vmem>>, vector<2x60xf32>
    %c0_175 = arith.constant 0 : index
    %c0_176 = arith.constant 0 : index
    %355 = vector.load %arg15[%c0_175, %c0_176] : memref<2x15xf32, #tpu.memory_space<vmem>>, vector<2x15xf32>
    %c0_177 = arith.constant 0 : index
    %c0_178 = arith.constant 0 : index
    %356 = vector.load %arg16[%c0_177, %c0_178] : memref<2x15xf32, #tpu.memory_space<vmem>>, vector<2x15xf32>
    %c0_179 = arith.constant 0 : index
    %c0_180 = arith.constant 0 : index
    %357 = vector.load %arg4[%c0_179, %c0_180] : memref<15x60xf32, #tpu.memory_space<vmem>>, vector<15x60xf32>
    %cst_181 = arith.constant dense<0.000000e+00> : vector<2x60xf32>
    %358 = tpu.matmul %355, %357, %cst_181 {dimension_numbers = #tpu.dot_dimension_numbers<[1], [0], [0], [1], [0, 0, 1, 1], [], []>} : vector<2x15xf32>, vector<15x60xf32>, vector<2x60xf32> -> vector<2x60xf32>
    %359 = arith.addf %354, %358 : vector<2x60xf32>
    %360 = vector.extract_strided_slice %359 {offsets = [0, 0], sizes = [2, 15], strides = [1, 1]} : vector<2x60xf32> to vector<2x15xf32>
    %361 = arith.negf %360 : vector<2x15xf32>
    %362 = math.exp %361 : vector<2x15xf32>
    %cst_182 = arith.constant 1.000000e+00 : f32
    %363 = vector.broadcast %cst_182 : f32 to vector<2x15xf32>
    %364 = arith.addf %363, %362 : vector<2x15xf32>
    %365 = arith.divf %363, %364 : vector<2x15xf32>
    %366 = vector.extract_strided_slice %359 {offsets = [0, 15], sizes = [2, 15], strides = [1, 1]} : vector<2x60xf32> to vector<2x15xf32>
    %367 = arith.negf %366 : vector<2x15xf32>
    %368 = math.exp %367 : vector<2x15xf32>
    %cst_183 = arith.constant 1.000000e+00 : f32
    %369 = vector.broadcast %cst_183 : f32 to vector<2x15xf32>
    %370 = arith.addf %369, %368 : vector<2x15xf32>
    %371 = arith.divf %369, %370 : vector<2x15xf32>
    %372 = vector.extract_strided_slice %359 {offsets = [0, 30], sizes = [2, 15], strides = [1, 1]} : vector<2x60xf32> to vector<2x15xf32>
    %373 = math.tanh %372 : vector<2x15xf32>
    %374 = vector.extract_strided_slice %359 {offsets = [0, 45], sizes = [2, 15], strides = [1, 1]} : vector<2x60xf32> to vector<2x15xf32>
    %375 = arith.negf %374 : vector<2x15xf32>
    %376 = math.exp %375 : vector<2x15xf32>
    %cst_184 = arith.constant 1.000000e+00 : f32
    %377 = vector.broadcast %cst_184 : f32 to vector<2x15xf32>
    %378 = arith.addf %377, %376 : vector<2x15xf32>
    %379 = arith.divf %377, %378 : vector<2x15xf32>
    %380 = arith.mulf %371, %356 : vector<2x15xf32>
    %381 = arith.mulf %365, %373 : vector<2x15xf32>
    %382 = arith.addf %380, %381 : vector<2x15xf32>
    %383 = math.tanh %382 : vector<2x15xf32>
    %384 = arith.mulf %379, %383 : vector<2x15xf32>
    %c0_185 = arith.constant 0 : index
    %c0_186 = arith.constant 0 : index
    %385 = vector.load %arg15[%c0_185, %c0_186] : memref<2x15xf32, #tpu.memory_space<vmem>>, vector<2x15xf32>
    tpu.vector_store %arg15[%c0_185, %c0_186], %384 {strides = array<i32>} : memref<2x15xf32, #tpu.memory_space<vmem>>, vector<2x15xf32>,
    %c0_187 = arith.constant 0 : index
    %c0_188 = arith.constant 0 : index
    %386 = vector.load %arg16[%c0_187, %c0_188] : memref<2x15xf32, #tpu.memory_space<vmem>>, vector<2x15xf32>
    tpu.vector_store %arg16[%c0_187, %c0_188], %382 {strides = array<i32>} : memref<2x15xf32, #tpu.memory_space<vmem>>, vector<2x15xf32>,
    %c2_i32_189 = arith.constant 2 : i32
    %387 = arith.muli %c1_i32_172, %c2_i32_189 : i32
    %388 = arith.index_cast %387 : i32 to index
    %c0_190 = arith.constant 0 : index
    %389 = vector.load %arg17[%388, %c0_190] : memref<16x15xf32, #tpu.memory_space<vmem>>, vector<2x15xf32>
    tpu.vector_store %arg17[%388, %c0_190], %384 {strides = array<i32>} : memref<16x15xf32, #tpu.memory_space<vmem>>, vector<2x15xf32>,
    %c2_i32_191 = arith.constant 2 : i32
    %c2_i32_192 = arith.constant 2 : i32
    %390 = arith.muli %c2_i32_191, %c2_i32_192 : i32
    %391 = arith.index_cast %390 : i32 to index
    %c0_193 = arith.constant 0 : index
    %392 = vector.load %arg18[%391, %c0_193] : memref<16x60xf32, #tpu.memory_space<vmem>>, vector<2x60xf32>
    %c0_194 = arith.constant 0 : index
    %c0_195 = arith.constant 0 : index
    %393 = vector.load %arg15[%c0_194, %c0_195] : memref<2x15xf32, #tpu.memory_space<vmem>>, vector<2x15xf32>
    %c0_196 = arith.constant 0 : index
    %c0_197 = arith.constant 0 : index
    %394 = vector.load %arg16[%c0_196, %c0_197] : memref<2x15xf32, #tpu.memory_space<vmem>>, vector<2x15xf32>
    %c0_198 = arith.constant 0 : index
    %c0_199 = arith.constant 0 : index
    %395 = vector.load %arg4[%c0_198, %c0_199] : memref<15x60xf32, #tpu.memory_space<vmem>>, vector<15x60xf32>
    %cst_200 = arith.constant dense<0.000000e+00> : vector<2x60xf32>
    %396 = tpu.matmul %393, %395, %cst_200 {dimension_numbers = #tpu.dot_dimension_numbers<[1], [0], [0], [1], [0, 0, 1, 1], [], []>} : vector<2x15xf32>, vector<15x60xf32>, vector<2x60xf32> -> vector<2x60xf32>
    %397 = arith.addf %392, %396 : vector<2x60xf32>
    %398 = vector.extract_strided_slice %397 {offsets = [0, 0], sizes = [2, 15], strides = [1, 1]} : vector<2x60xf32> to vector<2x15xf32>
    %399 = arith.negf %398 : vector<2x15xf32>
    %400 = math.exp %399 : vector<2x15xf32>
    %cst_201 = arith.constant 1.000000e+00 : f32
    %401 = vector.broadcast %cst_201 : f32 to vector<2x15xf32>
    %402 = arith.addf %401, %400 : vector<2x15xf32>
    %403 = arith.divf %401, %402 : vector<2x15xf32>
    %404 = vector.extract_strided_slice %397 {offsets = [0, 15], sizes = [2, 15], strides = [1, 1]} : vector<2x60xf32> to vector<2x15xf32>
    %405 = arith.negf %404 : vector<2x15xf32>
    %406 = math.exp %405 : vector<2x15xf32>
    %cst_202 = arith.constant 1.000000e+00 : f32
    %407 = vector.broadcast %cst_202 : f32 to vector<2x15xf32>
    %408 = arith.addf %407, %406 : vector<2x15xf32>
    %409 = arith.divf %407, %408 : vector<2x15xf32>
    %410 = vector.extract_strided_slice %397 {offsets = [0, 30], sizes = [2, 15], strides = [1, 1]} : vector<2x60xf32> to vector<2x15xf32>
    %411 = math.tanh %410 : vector<2x15xf32>
    %412 = vector.extract_strided_slice %397 {offsets = [0, 45], sizes = [2, 15], strides = [1, 1]} : vector<2x60xf32> to vector<2x15xf32>
    %413 = arith.negf %412 : vector<2x15xf32>
    %414 = math.exp %413 : vector<2x15xf32>
    %cst_203 = arith.constant 1.000000e+00 : f32
    %415 = vector.broadcast %cst_203 : f32 to vector<2x15xf32>
    %416 = arith.addf %415, %414 : vector<2x15xf32>
    %417 = arith.divf %415, %416 : vector<2x15xf32>
    %418 = arith.mulf %409, %394 : vector<2x15xf32>
    %419 = arith.mulf %403, %411 : vector<2x15xf32>
    %420 = arith.addf %418, %419 : vector<2x15xf32>
    %421 = math.tanh %420 : vector<2x15xf32>
    %422 = arith.mulf %417, %421 : vector<2x15xf32>
    %c0_204 = arith.constant 0 : index
    %c0_205 = arith.constant 0 : index
    %423 = vector.load %arg15[%c0_204, %c0_205] : memref<2x15xf32, #tpu.memory_space<vmem>>, vector<2x15xf32>
    tpu.vector_store %arg15[%c0_204, %c0_205], %422 {strides = array<i32>} : memref<2x15xf32, #tpu.memory_space<vmem>>, vector<2x15xf32>,
    %c0_206 = arith.constant 0 : index
    %c0_207 = arith.constant 0 : index
    %424 = vector.load %arg16[%c0_206, %c0_207] : memref<2x15xf32, #tpu.memory_space<vmem>>, vector<2x15xf32>
    tpu.vector_store %arg16[%c0_206, %c0_207], %420 {strides = array<i32>} : memref<2x15xf32, #tpu.memory_space<vmem>>, vector<2x15xf32>,
    %c2_i32_208 = arith.constant 2 : i32
    %425 = arith.muli %c2_i32_191, %c2_i32_208 : i32
    %426 = arith.index_cast %425 : i32 to index
    %c0_209 = arith.constant 0 : index
    %427 = vector.load %arg17[%426, %c0_209] : memref<16x15xf32, #tpu.memory_space<vmem>>, vector<2x15xf32>
    tpu.vector_store %arg17[%426, %c0_209], %422 {strides = array<i32>} : memref<16x15xf32, #tpu.memory_space<vmem>>, vector<2x15xf32>,
    %c3_i32_210 = arith.constant 3 : i32
    %c2_i32_211 = arith.constant 2 : i32
    %428 = arith.muli %c3_i32_210, %c2_i32_211 : i32
    %429 = arith.index_cast %428 : i32 to index
    %c0_212 = arith.constant 0 : index
    %430 = vector.load %arg18[%429, %c0_212] : memref<16x60xf32, #tpu.memory_space<vmem>>, vector<2x60xf32>
    %c0_213 = arith.constant 0 : index
    %c0_214 = arith.constant 0 : index
    %431 = vector.load %arg15[%c0_213, %c0_214] : memref<2x15xf32, #tpu.memory_space<vmem>>, vector<2x15xf32>
    %c0_215 = arith.constant 0 : index
    %c0_216 = arith.constant 0 : index
    %432 = vector.load %arg16[%c0_215, %c0_216] : memref<2x15xf32, #tpu.memory_space<vmem>>, vector<2x15xf32>
    %c0_217 = arith.constant 0 : index
    %c0_218 = arith.constant 0 : index
    %433 = vector.load %arg4[%c0_217, %c0_218] : memref<15x60xf32, #tpu.memory_space<vmem>>, vector<15x60xf32>
    %cst_219 = arith.constant dense<0.000000e+00> : vector<2x60xf32>
    %434 = tpu.matmul %431, %433, %cst_219 {dimension_numbers = #tpu.dot_dimension_numbers<[1], [0], [0], [1], [0, 0, 1, 1], [], []>} : vector<2x15xf32>, vector<15x60xf32>, vector<2x60xf32> -> vector<2x60xf32>
    %435 = arith.addf %430, %434 : vector<2x60xf32>
    %436 = vector.extract_strided_slice %435 {offsets = [0, 0], sizes = [2, 15], strides = [1, 1]} : vector<2x60xf32> to vector<2x15xf32>
    %437 = arith.negf %436 : vector<2x15xf32>
    %438 = math.exp %437 : vector<2x15xf32>
    %cst_220 = arith.constant 1.000000e+00 : f32
    %439 = vector.broadcast %cst_220 : f32 to vector<2x15xf32>
    %440 = arith.addf %439, %438 : vector<2x15xf32>
    %441 = arith.divf %439, %440 : vector<2x15xf32>
    %442 = vector.extract_strided_slice %435 {offsets = [0, 15], sizes = [2, 15], strides = [1, 1]} : vector<2x60xf32> to vector<2x15xf32>
    %443 = arith.negf %442 : vector<2x15xf32>
    %444 = math.exp %443 : vector<2x15xf32>
    %cst_221 = arith.constant 1.000000e+00 : f32
    %445 = vector.broadcast %cst_221 : f32 to vector<2x15xf32>
    %446 = arith.addf %445, %444 : vector<2x15xf32>
    %447 = arith.divf %445, %446 : vector<2x15xf32>
    %448 = vector.extract_strided_slice %435 {offsets = [0, 30], sizes = [2, 15], strides = [1, 1]} : vector<2x60xf32> to vector<2x15xf32>
    %449 = math.tanh %448 : vector<2x15xf32>
    %450 = vector.extract_strided_slice %435 {offsets = [0, 45], sizes = [2, 15], strides = [1, 1]} : vector<2x60xf32> to vector<2x15xf32>
    %451 = arith.negf %450 : vector<2x15xf32>
    %452 = math.exp %451 : vector<2x15xf32>
    %cst_222 = arith.constant 1.000000e+00 : f32
    %453 = vector.broadcast %cst_222 : f32 to vector<2x15xf32>
    %454 = arith.addf %453, %452 : vector<2x15xf32>
    %455 = arith.divf %453, %454 : vector<2x15xf32>
    %456 = arith.mulf %447, %432 : vector<2x15xf32>
    %457 = arith.mulf %441, %449 : vector<2x15xf32>
    %458 = arith.addf %456, %457 : vector<2x15xf32>
    %459 = math.tanh %458 : vector<2x15xf32>
    %460 = arith.mulf %455, %459 : vector<2x15xf32>
    %c0_223 = arith.constant 0 : index
    %c0_224 = arith.constant 0 : index
    %461 = vector.load %arg15[%c0_223, %c0_224] : memref<2x15xf32, #tpu.memory_space<vmem>>, vector<2x15xf32>
    tpu.vector_store %arg15[%c0_223, %c0_224], %460 {strides = array<i32>} : memref<2x15xf32, #tpu.memory_space<vmem>>, vector<2x15xf32>,
    %c0_225 = arith.constant 0 : index
    %c0_226 = arith.constant 0 : index
    %462 = vector.load %arg16[%c0_225, %c0_226] : memref<2x15xf32, #tpu.memory_space<vmem>>, vector<2x15xf32>
    tpu.vector_store %arg16[%c0_225, %c0_226], %458 {strides = array<i32>} : memref<2x15xf32, #tpu.memory_space<vmem>>, vector<2x15xf32>,
    %c2_i32_227 = arith.constant 2 : i32
    %463 = arith.muli %c3_i32_210, %c2_i32_227 : i32
    %464 = arith.index_cast %463 : i32 to index
    %c0_228 = arith.constant 0 : index
    %465 = vector.load %arg17[%464, %c0_228] : memref<16x15xf32, #tpu.memory_space<vmem>>, vector<2x15xf32>
    tpu.vector_store %arg17[%464, %c0_228], %460 {strides = array<i32>} : memref<16x15xf32, #tpu.memory_space<vmem>>, vector<2x15xf32>,
    %c4_i32_229 = arith.constant 4 : i32
    %c2_i32_230 = arith.constant 2 : i32
    %466 = arith.muli %c4_i32_229, %c2_i32_230 : i32
    %467 = arith.index_cast %466 : i32 to index
    %c0_231 = arith.constant 0 : index
    %468 = vector.load %arg18[%467, %c0_231] : memref<16x60xf32, #tpu.memory_space<vmem>>, vector<2x60xf32>
    %c0_232 = arith.constant 0 : index
    %c0_233 = arith.constant 0 : index
    %469 = vector.load %arg15[%c0_232, %c0_233] : memref<2x15xf32, #tpu.memory_space<vmem>>, vector<2x15xf32>
    %c0_234 = arith.constant 0 : index
    %c0_235 = arith.constant 0 : index
    %470 = vector.load %arg16[%c0_234, %c0_235] : memref<2x15xf32, #tpu.memory_space<vmem>>, vector<2x15xf32>
    %c0_236 = arith.constant 0 : index
    %c0_237 = arith.constant 0 : index
    %471 = vector.load %arg4[%c0_236, %c0_237] : memref<15x60xf32, #tpu.memory_space<vmem>>, vector<15x60xf32>
    %cst_238 = arith.constant dense<0.000000e+00> : vector<2x60xf32>
    %472 = tpu.matmul %469, %471, %cst_238 {dimension_numbers = #tpu.dot_dimension_numbers<[1], [0], [0], [1], [0, 0, 1, 1], [], []>} : vector<2x15xf32>, vector<15x60xf32>, vector<2x60xf32> -> vector<2x60xf32>
    %473 = arith.addf %468, %472 : vector<2x60xf32>
    %474 = vector.extract_strided_slice %473 {offsets = [0, 0], sizes = [2, 15], strides = [1, 1]} : vector<2x60xf32> to vector<2x15xf32>
    %475 = arith.negf %474 : vector<2x15xf32>
    %476 = math.exp %475 : vector<2x15xf32>
    %cst_239 = arith.constant 1.000000e+00 : f32
    %477 = vector.broadcast %cst_239 : f32 to vector<2x15xf32>
    %478 = arith.addf %477, %476 : vector<2x15xf32>
    %479 = arith.divf %477, %478 : vector<2x15xf32>
    %480 = vector.extract_strided_slice %473 {offsets = [0, 15], sizes = [2, 15], strides = [1, 1]} : vector<2x60xf32> to vector<2x15xf32>
    %481 = arith.negf %480 : vector<2x15xf32>
    %482 = math.exp %481 : vector<2x15xf32>
    %cst_240 = arith.constant 1.000000e+00 : f32
    %483 = vector.broadcast %cst_240 : f32 to vector<2x15xf32>
    %484 = arith.addf %483, %482 : vector<2x15xf32>
    %485 = arith.divf %483, %484 : vector<2x15xf32>
    %486 = vector.extract_strided_slice %473 {offsets = [0, 30], sizes = [2, 15], strides = [1, 1]} : vector<2x60xf32> to vector<2x15xf32>
    %487 = math.tanh %486 : vector<2x15xf32>
    %488 = vector.extract_strided_slice %473 {offsets = [0, 45], sizes = [2, 15], strides = [1, 1]} : vector<2x60xf32> to vector<2x15xf32>
    %489 = arith.negf %488 : vector<2x15xf32>
    %490 = math.exp %489 : vector<2x15xf32>
    %cst_241 = arith.constant 1.000000e+00 : f32
    %491 = vector.broadcast %cst_241 : f32 to vector<2x15xf32>
    %492 = arith.addf %491, %490 : vector<2x15xf32>
    %493 = arith.divf %491, %492 : vector<2x15xf32>
    %494 = arith.mulf %485, %470 : vector<2x15xf32>
    %495 = arith.mulf %479, %487 : vector<2x15xf32>
    %496 = arith.addf %494, %495 : vector<2x15xf32>
    %497 = math.tanh %496 : vector<2x15xf32>
    %498 = arith.mulf %493, %497 : vector<2x15xf32>
    %c0_242 = arith.constant 0 : index
    %c0_243 = arith.constant 0 : index
    %499 = vector.load %arg15[%c0_242, %c0_243] : memref<2x15xf32, #tpu.memory_space<vmem>>, vector<2x15xf32>
    tpu.vector_store %arg15[%c0_242, %c0_243], %498 {strides = array<i32>} : memref<2x15xf32, #tpu.memory_space<vmem>>, vector<2x15xf32>,
    %c0_244 = arith.constant 0 : index
    %c0_245 = arith.constant 0 : index
    %500 = vector.load %arg16[%c0_244, %c0_245] : memref<2x15xf32, #tpu.memory_space<vmem>>, vector<2x15xf32>
    tpu.vector_store %arg16[%c0_244, %c0_245], %496 {strides = array<i32>} : memref<2x15xf32, #tpu.memory_space<vmem>>, vector<2x15xf32>,
    %c2_i32_246 = arith.constant 2 : i32
    %501 = arith.muli %c4_i32_229, %c2_i32_246 : i32
    %502 = arith.index_cast %501 : i32 to index
    %c0_247 = arith.constant 0 : index
    %503 = vector.load %arg17[%502, %c0_247] : memref<16x15xf32, #tpu.memory_space<vmem>>, vector<2x15xf32>
    tpu.vector_store %arg17[%502, %c0_247], %498 {strides = array<i32>} : memref<16x15xf32, #tpu.memory_space<vmem>>, vector<2x15xf32>,
    %c5_i32_248 = arith.constant 5 : i32
    %c2_i32_249 = arith.constant 2 : i32
    %504 = arith.muli %c5_i32_248, %c2_i32_249 : i32
    %505 = arith.index_cast %504 : i32 to index
    %c0_250 = arith.constant 0 : index
    %506 = vector.load %arg18[%505, %c0_250] : memref<16x60xf32, #tpu.memory_space<vmem>>, vector<2x60xf32>
    %c0_251 = arith.constant 0 : index
    %c0_252 = arith.constant 0 : index
    %507 = vector.load %arg15[%c0_251, %c0_252] : memref<2x15xf32, #tpu.memory_space<vmem>>, vector<2x15xf32>
    %c0_253 = arith.constant 0 : index
    %c0_254 = arith.constant 0 : index
    %508 = vector.load %arg16[%c0_253, %c0_254] : memref<2x15xf32, #tpu.memory_space<vmem>>, vector<2x15xf32>
    %c0_255 = arith.constant 0 : index
    %c0_256 = arith.constant 0 : index
    %509 = vector.load %arg4[%c0_255, %c0_256] : memref<15x60xf32, #tpu.memory_space<vmem>>, vector<15x60xf32>
    %cst_257 = arith.constant dense<0.000000e+00> : vector<2x60xf32>
    %510 = tpu.matmul %507, %509, %cst_257 {dimension_numbers = #tpu.dot_dimension_numbers<[1], [0], [0], [1], [0, 0, 1, 1], [], []>} : vector<2x15xf32>, vector<15x60xf32>, vector<2x60xf32> -> vector<2x60xf32>
    %511 = arith.addf %506, %510 : vector<2x60xf32>
    %512 = vector.extract_strided_slice %511 {offsets = [0, 0], sizes = [2, 15], strides = [1, 1]} : vector<2x60xf32> to vector<2x15xf32>
    %513 = arith.negf %512 : vector<2x15xf32>
    %514 = math.exp %513 : vector<2x15xf32>
    %cst_258 = arith.constant 1.000000e+00 : f32
    %515 = vector.broadcast %cst_258 : f32 to vector<2x15xf32>
    %516 = arith.addf %515, %514 : vector<2x15xf32>
    %517 = arith.divf %515, %516 : vector<2x15xf32>
    %518 = vector.extract_strided_slice %511 {offsets = [0, 15], sizes = [2, 15], strides = [1, 1]} : vector<2x60xf32> to vector<2x15xf32>
    %519 = arith.negf %518 : vector<2x15xf32>
    %520 = math.exp %519 : vector<2x15xf32>
    %cst_259 = arith.constant 1.000000e+00 : f32
    %521 = vector.broadcast %cst_259 : f32 to vector<2x15xf32>
    %522 = arith.addf %521, %520 : vector<2x15xf32>
    %523 = arith.divf %521, %522 : vector<2x15xf32>
    %524 = vector.extract_strided_slice %511 {offsets = [0, 30], sizes = [2, 15], strides = [1, 1]} : vector<2x60xf32> to vector<2x15xf32>
    %525 = math.tanh %524 : vector<2x15xf32>
    %526 = vector.extract_strided_slice %511 {offsets = [0, 45], sizes = [2, 15], strides = [1, 1]} : vector<2x60xf32> to vector<2x15xf32>
    %527 = arith.negf %526 : vector<2x15xf32>
    %528 = math.exp %527 : vector<2x15xf32>
    %cst_260 = arith.constant 1.000000e+00 : f32
    %529 = vector.broadcast %cst_260 : f32 to vector<2x15xf32>
    %530 = arith.addf %529, %528 : vector<2x15xf32>
    %531 = arith.divf %529, %530 : vector<2x15xf32>
    %532 = arith.mulf %523, %508 : vector<2x15xf32>
    %533 = arith.mulf %517, %525 : vector<2x15xf32>
    %534 = arith.addf %532, %533 : vector<2x15xf32>
    %535 = math.tanh %534 : vector<2x15xf32>
    %536 = arith.mulf %531, %535 : vector<2x15xf32>
    %c0_261 = arith.constant 0 : index
    %c0_262 = arith.constant 0 : index
    %537 = vector.load %arg15[%c0_261, %c0_262] : memref<2x15xf32, #tpu.memory_space<vmem>>, vector<2x15xf32>
    tpu.vector_store %arg15[%c0_261, %c0_262], %536 {strides = array<i32>} : memref<2x15xf32, #tpu.memory_space<vmem>>, vector<2x15xf32>,
    %c0_263 = arith.constant 0 : index
    %c0_264 = arith.constant 0 : index
    %538 = vector.load %arg16[%c0_263, %c0_264] : memref<2x15xf32, #tpu.memory_space<vmem>>, vector<2x15xf32>
    tpu.vector_store %arg16[%c0_263, %c0_264], %534 {strides = array<i32>} : memref<2x15xf32, #tpu.memory_space<vmem>>, vector<2x15xf32>,
    %c2_i32_265 = arith.constant 2 : i32
    %539 = arith.muli %c5_i32_248, %c2_i32_265 : i32
    %540 = arith.index_cast %539 : i32 to index
    %c0_266 = arith.constant 0 : index
    %541 = vector.load %arg17[%540, %c0_266] : memref<16x15xf32, #tpu.memory_space<vmem>>, vector<2x15xf32>
    tpu.vector_store %arg17[%540, %c0_266], %536 {strides = array<i32>} : memref<16x15xf32, #tpu.memory_space<vmem>>, vector<2x15xf32>,
    %c6_i32_267 = arith.constant 6 : i32
    %c2_i32_268 = arith.constant 2 : i32
    %542 = arith.muli %c6_i32_267, %c2_i32_268 : i32
    %543 = arith.index_cast %542 : i32 to index
    %c0_269 = arith.constant 0 : index
    %544 = vector.load %arg18[%543, %c0_269] : memref<16x60xf32, #tpu.memory_space<vmem>>, vector<2x60xf32>
    %c0_270 = arith.constant 0 : index
    %c0_271 = arith.constant 0 : index
    %545 = vector.load %arg15[%c0_270, %c0_271] : memref<2x15xf32, #tpu.memory_space<vmem>>, vector<2x15xf32>
    %c0_272 = arith.constant 0 : index
    %c0_273 = arith.constant 0 : index
    %546 = vector.load %arg16[%c0_272, %c0_273] : memref<2x15xf32, #tpu.memory_space<vmem>>, vector<2x15xf32>
    %c0_274 = arith.constant 0 : index
    %c0_275 = arith.constant 0 : index
    %547 = vector.load %arg4[%c0_274, %c0_275] : memref<15x60xf32, #tpu.memory_space<vmem>>, vector<15x60xf32>
    %cst_276 = arith.constant dense<0.000000e+00> : vector<2x60xf32>
    %548 = tpu.matmul %545, %547, %cst_276 {dimension_numbers = #tpu.dot_dimension_numbers<[1], [0], [0], [1], [0, 0, 1, 1], [], []>} : vector<2x15xf32>, vector<15x60xf32>, vector<2x60xf32> -> vector<2x60xf32>
    %549 = arith.addf %544, %548 : vector<2x60xf32>
    %550 = vector.extract_strided_slice %549 {offsets = [0, 0], sizes = [2, 15], strides = [1, 1]} : vector<2x60xf32> to vector<2x15xf32>
    %551 = arith.negf %550 : vector<2x15xf32>
    %552 = math.exp %551 : vector<2x15xf32>
    %cst_277 = arith.constant 1.000000e+00 : f32
    %553 = vector.broadcast %cst_277 : f32 to vector<2x15xf32>
    %554 = arith.addf %553, %552 : vector<2x15xf32>
    %555 = arith.divf %553, %554 : vector<2x15xf32>
    %556 = vector.extract_strided_slice %549 {offsets = [0, 15], sizes = [2, 15], strides = [1, 1]} : vector<2x60xf32> to vector<2x15xf32>
    %557 = arith.negf %556 : vector<2x15xf32>
    %558 = math.exp %557 : vector<2x15xf32>
    %cst_278 = arith.constant 1.000000e+00 : f32
    %559 = vector.broadcast %cst_278 : f32 to vector<2x15xf32>
    %560 = arith.addf %559, %558 : vector<2x15xf32>
    %561 = arith.divf %559, %560 : vector<2x15xf32>
    %562 = vector.extract_strided_slice %549 {offsets = [0, 30], sizes = [2, 15], strides = [1, 1]} : vector<2x60xf32> to vector<2x15xf32>
    %563 = math.tanh %562 : vector<2x15xf32>
    %564 = vector.extract_strided_slice %549 {offsets = [0, 45], sizes = [2, 15], strides = [1, 1]} : vector<2x60xf32> to vector<2x15xf32>
    %565 = arith.negf %564 : vector<2x15xf32>
    %566 = math.exp %565 : vector<2x15xf32>
    %cst_279 = arith.constant 1.000000e+00 : f32
    %567 = vector.broadcast %cst_279 : f32 to vector<2x15xf32>
    %568 = arith.addf %567, %566 : vector<2x15xf32>
    %569 = arith.divf %567, %568 : vector<2x15xf32>
    %570 = arith.mulf %561, %546 : vector<2x15xf32>
    %571 = arith.mulf %555, %563 : vector<2x15xf32>
    %572 = arith.addf %570, %571 : vector<2x15xf32>
    %573 = math.tanh %572 : vector<2x15xf32>
    %574 = arith.mulf %569, %573 : vector<2x15xf32>
    %c0_280 = arith.constant 0 : index
    %c0_281 = arith.constant 0 : index
    %575 = vector.load %arg15[%c0_280, %c0_281] : memref<2x15xf32, #tpu.memory_space<vmem>>, vector<2x15xf32>
    tpu.vector_store %arg15[%c0_280, %c0_281], %574 {strides = array<i32>} : memref<2x15xf32, #tpu.memory_space<vmem>>, vector<2x15xf32>,
    %c0_282 = arith.constant 0 : index
    %c0_283 = arith.constant 0 : index
    %576 = vector.load %arg16[%c0_282, %c0_283] : memref<2x15xf32, #tpu.memory_space<vmem>>, vector<2x15xf32>
    tpu.vector_store %arg16[%c0_282, %c0_283], %572 {strides = array<i32>} : memref<2x15xf32, #tpu.memory_space<vmem>>, vector<2x15xf32>,
    %c2_i32_284 = arith.constant 2 : i32
    %577 = arith.muli %c6_i32_267, %c2_i32_284 : i32
    %578 = arith.index_cast %577 : i32 to index
    %c0_285 = arith.constant 0 : index
    %579 = vector.load %arg17[%578, %c0_285] : memref<16x15xf32, #tpu.memory_space<vmem>>, vector<2x15xf32>
    tpu.vector_store %arg17[%578, %c0_285], %574 {strides = array<i32>} : memref<16x15xf32, #tpu.memory_space<vmem>>, vector<2x15xf32>,
    %c7_i32_286 = arith.constant 7 : i32
    %c2_i32_287 = arith.constant 2 : i32
    %580 = arith.muli %c7_i32_286, %c2_i32_287 : i32
    %581 = arith.index_cast %580 : i32 to index
    %c0_288 = arith.constant 0 : index
    %582 = vector.load %arg18[%581, %c0_288] : memref<16x60xf32, #tpu.memory_space<vmem>>, vector<2x60xf32>
    %c0_289 = arith.constant 0 : index
    %c0_290 = arith.constant 0 : index
    %583 = vector.load %arg15[%c0_289, %c0_290] : memref<2x15xf32, #tpu.memory_space<vmem>>, vector<2x15xf32>
    %c0_291 = arith.constant 0 : index
    %c0_292 = arith.constant 0 : index
    %584 = vector.load %arg16[%c0_291, %c0_292] : memref<2x15xf32, #tpu.memory_space<vmem>>, vector<2x15xf32>
    %c0_293 = arith.constant 0 : index
    %c0_294 = arith.constant 0 : index
    %585 = vector.load %arg4[%c0_293, %c0_294] : memref<15x60xf32, #tpu.memory_space<vmem>>, vector<15x60xf32>
    %cst_295 = arith.constant dense<0.000000e+00> : vector<2x60xf32>
    %586 = tpu.matmul %583, %585, %cst_295 {dimension_numbers = #tpu.dot_dimension_numbers<[1], [0], [0], [1], [0, 0, 1, 1], [], []>} : vector<2x15xf32>, vector<15x60xf32>, vector<2x60xf32> -> vector<2x60xf32>
    %587 = arith.addf %582, %586 : vector<2x60xf32>
    %588 = vector.extract_strided_slice %587 {offsets = [0, 0], sizes = [2, 15], strides = [1, 1]} : vector<2x60xf32> to vector<2x15xf32>
    %589 = arith.negf %588 : vector<2x15xf32>
    %590 = math.exp %589 : vector<2x15xf32>
    %cst_296 = arith.constant 1.000000e+00 : f32
    %591 = vector.broadcast %cst_296 : f32 to vector<2x15xf32>
    %592 = arith.addf %591, %590 : vector<2x15xf32>
    %593 = arith.divf %591, %592 : vector<2x15xf32>
    %594 = vector.extract_strided_slice %587 {offsets = [0, 15], sizes = [2, 15], strides = [1, 1]} : vector<2x60xf32> to vector<2x15xf32>
    %595 = arith.negf %594 : vector<2x15xf32>
    %596 = math.exp %595 : vector<2x15xf32>
    %cst_297 = arith.constant 1.000000e+00 : f32
    %597 = vector.broadcast %cst_297 : f32 to vector<2x15xf32>
    %598 = arith.addf %597, %596 : vector<2x15xf32>
    %599 = arith.divf %597, %598 : vector<2x15xf32>
    %600 = vector.extract_strided_slice %587 {offsets = [0, 30], sizes = [2, 15], strides = [1, 1]} : vector<2x60xf32> to vector<2x15xf32>
    %601 = math.tanh %600 : vector<2x15xf32>
    %602 = vector.extract_strided_slice %587 {offsets = [0, 45], sizes = [2, 15], strides = [1, 1]} : vector<2x60xf32> to vector<2x15xf32>
    %603 = arith.negf %602 : vector<2x15xf32>
    %604 = math.exp %603 : vector<2x15xf32>
    %cst_298 = arith.constant 1.000000e+00 : f32
    %605 = vector.broadcast %cst_298 : f32 to vector<2x15xf32>
    %606 = arith.addf %605, %604 : vector<2x15xf32>
    %607 = arith.divf %605, %606 : vector<2x15xf32>
    %608 = arith.mulf %599, %584 : vector<2x15xf32>
    %609 = arith.mulf %593, %601 : vector<2x15xf32>
    %610 = arith.addf %608, %609 : vector<2x15xf32>
    %611 = math.tanh %610 : vector<2x15xf32>
    %612 = arith.mulf %607, %611 : vector<2x15xf32>
    %c0_299 = arith.constant 0 : index
    %c0_300 = arith.constant 0 : index
    %613 = vector.load %arg15[%c0_299, %c0_300] : memref<2x15xf32, #tpu.memory_space<vmem>>, vector<2x15xf32>
    tpu.vector_store %arg15[%c0_299, %c0_300], %612 {strides = array<i32>} : memref<2x15xf32, #tpu.memory_space<vmem>>, vector<2x15xf32>,
    %c0_301 = arith.constant 0 : index
    %c0_302 = arith.constant 0 : index
    %614 = vector.load %arg16[%c0_301, %c0_302] : memref<2x15xf32, #tpu.memory_space<vmem>>, vector<2x15xf32>
    tpu.vector_store %arg16[%c0_301, %c0_302], %610 {strides = array<i32>} : memref<2x15xf32, #tpu.memory_space<vmem>>, vector<2x15xf32>,
    %c2_i32_303 = arith.constant 2 : i32
    %615 = arith.muli %c7_i32_286, %c2_i32_303 : i32
    %616 = arith.index_cast %615 : i32 to index
    %c0_304 = arith.constant 0 : index
    %617 = vector.load %arg17[%616, %c0_304] : memref<16x15xf32, #tpu.memory_space<vmem>>, vector<2x15xf32>
    tpu.vector_store %arg17[%616, %c0_304], %612 {strides = array<i32>} : memref<16x15xf32, #tpu.memory_space<vmem>>, vector<2x15xf32>,
    %c8_i32_305 = arith.constant 8 : i32
    %c0_306 = arith.constant 0 : index
    %c0_307 = arith.constant 0 : index
    %618 = vector.load %arg17[%c0_306, %c0_307] : memref<16x15xf32, #tpu.memory_space<vmem>>, vector<16x15xf32>
    %c0_308 = arith.constant 0 : index
    %c0_309 = arith.constant 0 : index
    %619 = vector.load %arg8[%c0_308, %c0_309] : memref<15x5xf32, #tpu.memory_space<vmem>>, vector<15x5xf32>
    %cst_310 = arith.constant dense<0.000000e+00> : vector<16x5xf32>
    %620 = tpu.matmul %618, %619, %cst_310 {dimension_numbers = #tpu.dot_dimension_numbers<[1], [0], [0], [1], [0, 0, 1, 1], [], []>} : vector<16x15xf32>, vector<15x5xf32>, vector<16x5xf32> -> vector<16x5xf32>
    %c0_311 = arith.constant 0 : index
    %c0_312 = arith.constant 0 : index
    %621 = vector.load %arg9[%c0_311, %c0_312] : memref<1x5xf32, #tpu.memory_space<vmem>>, vector<1x5xf32>
    %622 = vector.broadcast %621 : vector<1x5xf32> to vector<16x5xf32>
    %623 = arith.addf %620, %622 : vector<16x5xf32>
    %cst_313 = arith.constant 0.000000e+00 : f32
    %624 = vector.broadcast %cst_313 : f32 to vector<16x5xf32>
    %625 = arith.maximumf %623, %624 : vector<16x5xf32>
    %c0_314 = arith.constant 0 : index
    %c0_315 = arith.constant 0 : index
    %626 = vector.load %arg10[%c0_314, %c0_315] : memref<5x2xf32, #tpu.memory_space<vmem>>, vector<5x2xf32>
    %cst_316 = arith.constant dense<0.000000e+00> : vector<16x2xf32>
    %627 = tpu.matmul %625, %626, %cst_316 {dimension_numbers = #tpu.dot_dimension_numbers<[1], [0], [0], [1], [0, 0, 1, 1], [], []>} : vector<16x5xf32>, vector<5x2xf32>, vector<16x2xf32> -> vector<16x2xf32>
    %c0_317 = arith.constant 0 : index
    %c0_318 = arith.constant 0 : index
    %628 = vector.load %arg11[%c0_317, %c0_318] : memref<1x2xf32, #tpu.memory_space<vmem>>, vector<1x2xf32>
    %629 = vector.broadcast %628 : vector<1x2xf32> to vector<16x2xf32>
    %630 = arith.addf %627, %629 : vector<16x2xf32>
    %c0_319 = arith.constant 0 : index
    %c0_320 = arith.constant 0 : index
    %631 = vector.load %arg12[%c0_319, %c0_320] : memref<16x2xf32, #tpu.memory_space<vmem>>, vector<16x2xf32>
    tpu.vector_store %arg12[%c0_319, %c0_320], %630 {strides = array<i32>} : memref<16x2xf32, #tpu.memory_space<vmem>>, vector<16x2xf32>,
    return
  }
  func.func @transform_0(%arg0: i32) -> (i32, i32) {
    %c0_i32 = arith.constant 0 : i32
    %c0_i32_0 = arith.constant 0 : i32
    return %arg0, %c0_i32 : i32, i32
  }
  func.func @transform_1(%arg0: i32) -> (i32, i32) {
    %c0_i32 = arith.constant 0 : i32
    %c0_i32_0 = arith.constant 0 : i32
    %c0_i32_1 = arith.constant 0 : i32
    return %c0_i32, %c0_i32_0 : i32, i32
  }
  func.func @transform_2(%arg0: i32) -> (i32, i32) {
    %c0_i32 = arith.constant 0 : i32
    %c0_i32_0 = arith.constant 0 : i32
    %c0_i32_1 = arith.constant 0 : i32
    return %c0_i32, %c0_i32_0 : i32, i32
  }
  func.func @transform_3(%arg0: i32) -> (i32, i32) {
    %c0_i32 = arith.constant 0 : i32
    %c0_i32_0 = arith.constant 0 : i32
    %c0_i32_1 = arith.constant 0 : i32
    return %c0_i32, %c0_i32_0 : i32, i32
  }
  func.func @transform_4(%arg0: i32) -> (i32, i32) {
    %c0_i32 = arith.constant 0 : i32
    %c0_i32_0 = arith.constant 0 : i32
    %c0_i32_1 = arith.constant 0 : i32
    return %c0_i32, %c0_i32_0 : i32, i32
  }
  func.func @transform_5(%arg0: i32) -> (i32, i32, i32) {
    %c0_i32 = arith.constant 0 : i32
    %c0_i32_0 = arith.constant 0 : i32
    %c0_i32_1 = arith.constant 0 : i32
    %c0_i32_2 = arith.constant 0 : i32
    return %c0_i32, %c0_i32_0, %c0_i32_1 : i32, i32, i32
  }
  func.func @transform_6(%arg0: i32) -> (i32, i32, i32) {
    %c0_i32 = arith.constant 0 : i32
    %c0_i32_0 = arith.constant 0 : i32
    %c0_i32_1 = arith.constant 0 : i32
    %c0_i32_2 = arith.constant 0 : i32
    return %c0_i32, %c0_i32_0, %c0_i32_1 : i32, i32, i32
  }
  func.func @transform_7(%arg0: i32) -> (i32, i32) {
    %c0_i32 = arith.constant 0 : i32
    %c0_i32_0 = arith.constant 0 : i32
    %c0_i32_1 = arith.constant 0 : i32
    return %c0_i32, %c0_i32_0 : i32, i32
  }
  func.func @transform_8(%arg0: i32) -> (i32, i32) {
    %c0_i32 = arith.constant 0 : i32
    %c0_i32_0 = arith.constant 0 : i32
    %c0_i32_1 = arith.constant 0 : i32
    return %c0_i32, %c0_i32_0 : i32, i32
  }
  func.func @transform_9(%arg0: i32) -> (i32, i32) {
    %c0_i32 = arith.constant 0 : i32
    %c0_i32_0 = arith.constant 0 : i32
    %c0_i32_1 = arith.constant 0 : i32
    return %c0_i32, %c0_i32_0 : i32, i32
  }
  func.func @transform_10(%arg0: i32) -> (i32, i32) {
    %c0_i32 = arith.constant 0 : i32
    %c0_i32_0 = arith.constant 0 : i32
    %c0_i32_1 = arith.constant 0 : i32
    return %c0_i32, %c0_i32_0 : i32, i32
  }
  func.func @transform_11(%arg0: i32) -> (i32, i32) {
    %c0_i32 = arith.constant 0 : i32
    %c0_i32_0 = arith.constant 0 : i32
    return %arg0, %c0_i32 : i32, i32
  }
}

</mosaic_0001>

<llo_original>
// kernel: forward.3
$region0: #{forward.3}
  #allocation0 [shape = 'u32[]', space=smem, size = 0x4, offset = 0x4, fixed_abs, tag = 'smem constant byte address 0x4 - core index']
  #allocation1 [shape = 'u32[72,128]{1,0:T(1,128)}', space=vmem, size = 0x9000, scoped, tag = 'internal scratch']
  #allocation2 [shape = 'f32[2,15]{1,0:T(2,128)}', space=vmem, size = 0x400, scoped, tag = 'scratch operand']
  #allocation3 [shape = 'f32[2,15]{1,0:T(2,128)}', space=vmem, size = 0x400, scoped, tag = 'scratch operand']
  #allocation4 [shape = 'f32[2,15]{1,0:T(2,128)}', space=vmem, size = 0x400, scoped, tag = 'scratch operand']
  #allocation5 [shape = 'f32[2,15]{1,0:T(2,128)}', space=vmem, size = 0x400, scoped, tag = 'scratch operand']
  #allocation6 [shape = 'f32[16,15]{1,0:T(8,128)}', space=vmem, size = 0x2000, scoped, tag = 'scratch operand']
  #allocation7 [shape = 'f32[16,60]{1,0:T(8,128)}', space=vmem, size = 0x2000, scoped, tag = 'scratch operand']
  %s0 = inlined_call_operand.vmem [shape: f32[16,60], index: 0, kind: input, shape index: {}]
  %s1 = inlined_call_operand.vmem [shape: f32[15,60], index: 1, kind: input, shape index: {}]
  %s2 = inlined_call_operand.vmem [shape: f32[15,60], index: 2, kind: input, shape index: {}]
  %s3 = inlined_call_operand.vmem [shape: f32[15,60], index: 3, kind: input, shape index: {}]
  %s4 = inlined_call_operand.vmem [shape: f32[1,60], index: 4, kind: input, shape index: {}]
  %s5 = inlined_call_operand.vmem [shape: f32[2,2,15], index: 5, kind: input, shape index: {}]
  %s6 = inlined_call_operand.vmem [shape: f32[2,2,15], index: 6, kind: input, shape index: {}]
  %s7 = inlined_call_operand.vmem [shape: f32[15,5], index: 7, kind: input, shape index: {}]
  %s8 = inlined_call_operand.vmem [shape: f32[1,5], index: 8, kind: input, shape index: {}]
  %s9 = inlined_call_operand.vmem [shape: f32[5,2], index: 9, kind: input, shape index: {}]
  %s10 = inlined_call_operand.vmem [shape: f32[1,2], index: 10, kind: input, shape index: {}]
  %s11 = inlined_call_operand.vmem [shape: f32[16,2], index: 11, kind: output, shape index: {}]
  %s12 = sld [smem:[#allocation0]]
  $region58: #{forward.3} parent=0
    _
  %s14 = ssub.s32 1, %s12
  %s15 = scalar_select 0, %s14, %s12
  // Predicated region
  $region2: #{forward.3} parent=0 // pred_check
    _
  $region3: #{forward.3} parent=0 // pred_check_branch
    %17 = sbr.rel (0) target = $region5
  $region4: #{forward.3} parent=0 // pred_region
    _
  $region5: #{forward.3} parent=0 // pred_fallthru
    _
  // Predicated region
  $region6: #{forward.3} parent=0 // pred_check
    _
  $region7: #{forward.3} parent=0 // pred_check_branch
    %19 = sbr.rel (0) target = $region9
  $region8: #{forward.3} parent=0 // pred_region
    _
  $region9: #{forward.3} parent=0 // pred_fallthru
    _
  // Predicated region
  $region10: #{forward.3} parent=0 // pred_check
    _
  $region11: #{forward.3} parent=0 // pred_check_branch
    %21 = sbr.rel (0) target = $region13
  $region12: #{forward.3} parent=0 // pred_region
    _
  $region13: #{forward.3} parent=0 // pred_fallthru
    _
  // Predicated region
  $region14: #{forward.3} parent=0 // pred_check
    _
  $region15: #{forward.3} parent=0 // pred_check_branch
    %23 = sbr.rel (0) target = $region17
  $region16: #{forward.3} parent=0 // pred_region
    _
  $region17: #{forward.3} parent=0 // pred_fallthru
    _
  // Predicated region
  $region18: #{forward.3} parent=0 // pred_check
    _
  $region19: #{forward.3} parent=0 // pred_check_branch
    %25 = sbr.rel (0) target = $region21
  $region20: #{forward.3} parent=0 // pred_region
    _
  $region21: #{forward.3} parent=0 // pred_fallthru
    _
  // Predicated region
  $region22: #{forward.3} parent=0 // pred_check
    _
  $region23: #{forward.3} parent=0 // pred_check_branch
    %27 = sbr.rel (0) target = $region25
  $region24: #{forward.3} parent=0 // pred_region
    _
  $region25: #{forward.3} parent=0 // pred_fallthru
    _
  // Predicated region
  $region26: #{forward.3} parent=0 // pred_check
    _
  $region27: #{forward.3} parent=0 // pred_check_branch
    %29 = sbr.rel (0) target = $region29
  $region28: #{forward.3} parent=0 // pred_region
    _
  $region29: #{forward.3} parent=0 // pred_fallthru
    _
  // Predicated region
  $region30: #{forward.3} parent=0 // pred_check
    _
  $region31: #{forward.3} parent=0 // pred_check_branch
    %31 = sbr.rel (0) target = $region33
  $region32: #{forward.3} parent=0 // pred_region
    _
  $region33: #{forward.3} parent=0 // pred_fallthru
    _
  // Predicated region
  $region34: #{forward.3} parent=0 // pred_check
    _
  $region35: #{forward.3} parent=0 // pred_check_branch
    %33 = sbr.rel (0) target = $region37
  $region36: #{forward.3} parent=0 // pred_region
    _
  $region37: #{forward.3} parent=0 // pred_fallthru
    _
  // Predicated region
  $region38: #{forward.3} parent=0 // pred_check
    _
  $region39: #{forward.3} parent=0 // pred_check_branch
    %35 = sbr.rel (0) target = $region41
  $region40: #{forward.3} parent=0 // pred_region
    _
  $region41: #{forward.3} parent=0 // pred_fallthru
    _
  // Predicated region
  $region42: #{forward.3} parent=0 // pred_check
    _
  $region43: #{forward.3} parent=0 // pred_check_branch
    %37 = sbr.rel (0) target = $region45
  $region44: #{forward.3} parent=0 // pred_region
    _
  $region45: #{forward.3} parent=0 // pred_fallthru
    _
  %p38 = scmp.eq.s32.totalorder 0, 0
  // Predicated region
  $region46: #{forward.3} parent=0 // pred_check
    %p39 = pneg %p38
  $region47: #{forward.3} parent=0 // pred_check_branch
    %41 = sbr.rel (%p39) target = $region49
  $region48: #{forward.3} parent=0 // pred_region
    %v42 = vld [vmem:[%s5] sm:$0x3]
    %vm43 = vcmask 115712
    %44 = vst.msk [vmem:[#allocation2] sm:$0x3] %vm43, %v42
    %v45 = vld [vmem:[%s6] sm:$0x3]
    %46 = vst.msk [vmem:[#allocation3] sm:$0x3] %vm43, %v45
    %s47 = scalar_lea.vmem %s5, 2
    %v48 = vld [vmem:[%s47] sm:$0x3]
    %49 = vst.msk [vmem:[#allocation4] sm:$0x3] %vm43, %v48
    %s50 = scalar_lea.vmem %s6, 2
    %v51 = vld [vmem:[%s50] sm:$0x3]
    %52 = vst.msk [vmem:[#allocation5] sm:$0x3] %vm43, %v51
  $region49: #{forward.3} parent=0 // pred_fallthru
    _
  %v53 = vld [vmem:[%s0] sm:$0x3]
  %v54 = vld [vmem:[#allocation2] sm:$0x3]
  %v55 = vld [vmem:[#allocation3] sm:$0x3]
  %v56 = vld [vmem:[%s1] sm:$0xff]
  %v57 = vld [vmem:[%s1 + $0x8] sm:$0x7f]
  %vm58 = vcmask 121856
  %v60 = vsel %vm58, %v54, 0
  %vm62 = vcmask 1046528
  %v64 = vsel %vm62, %v57, 0
  %66 = vmatpush.msra.mxu0 0.0
  %67 = vmatpush.msra.mxu0 0.0
  %68 = vmatpush.msra.mxu0 0.0
  %69 = vmatpush.msra.mxu0 0.0
  %70 = vmatpush.msra.mxu0 0.0
  %71 = vmatpush.msra.mxu0 0.0
  %72 = vmatpush.msra.mxu0 0.0
  %73 = vmatpush.msra.mxu0 0.0
  %74 = vmatpush.msra.mxu0 0.0
  %75 = vmatpush.msra.mxu0 0.0
  %76 = vmatpush.msra.mxu0 0.0
  %77 = vmatpush.msra.mxu0 0.0
  %78 = vmatpush.msra.mxu0 0.0
  %79 = vmatpush.msra.mxu0 0.0
  %80 = vmatpush.msra.mxu0 %v64
  %81 = vmatpush.msra.mxu0 %v56
  %82 = vmatmul.f32.gmra.mxu0 %v60
  %v83 = vpop.f32.mrf.mxu0
  %v84 = vadd.f32 0.0, %v83
  %85 = vdwg.mxu0
  %v86 = vadd.f32 %v53, %v84
  %v87 = vxor.u32 %v86, 2147483648
  %v88 = vmul.f32 %v87, 1.442695
  %v89 = vpow.pop %v88
  %v90 = vadd.f32 %v89, 1.0
  %v91 = vrcp.pop %v90
  %v92 = vmul.f32 %v90, %v91
  %v93 = vsub.f32 1.0, %v92
  %v94 = vmul.f32 %v91, %v93
  %v95 = vadd.f32 %v91, %v94
  %vm96 = vweird.f32 %v90
  %vm97 = vweird.f32 %v91
  %vm98 = vmor %vm96, %vm97
  %v99 = vsel %vm98, %v91, %v95
  %v100 = vand.u32 2147483647, %v90
  %vm101 = vcmp.eq.f32.partialorder %v100, 8.507059e+37
  %v102 = vand.u32 %v90, 2147483648
  %v103 = vor.u32 1.1754944e-38, %v102
  %v104 = vsel %vm101, %v103, %v99
  %v105 = vmul.f32 1.0, %v104
  %v106 = vtanh.pop %v86
  %108 = vrot.lane.b32.xlu0 %v55, 15
  %v109 = vpop.permute.xlu0 %108
  %v111 = vmul.f32 %v105, %v109
  %113 = vrot.lane.b32.xlu0 %v106, 98
  %v114 = vpop.permute.xlu0 %113
  %v116 = vmul.f32 %v105, %v114
  %118 = vrot.lane.b32.xlu0 %v116, 15
  %v119 = vpop.permute.xlu0 %118
  %v121 = vadd.f32 %v111, %v119
  %v122 = vtanh.pop %v121
  %124 = vrot.lane.b32.xlu0 %v122, 30
  %v125 = vpop.permute.xlu0 %124
  %v127 = vmul.f32 %v105, %v125
  %129 = vrot.lane.b32.xlu0 %v127, 83
  %v130 = vpop.permute.xlu0 %129
  %vm132 = vcmask 115712
  %133 = vst.msk [vmem:[#allocation2] sm:$0x3] %vm132, %v130
  %135 = vrot.lane.b32.xlu0 %v121, 113
  %v136 = vpop.permute.xlu0 %135
  %138 = vst.msk [vmem:[#allocation3] sm:$0x3] %vm132, %v136
  %139 = vst.msk [vmem:[#allocation6] sm:$0x3] %vm132, %v130
  %v140 = vld [vmem:[%s0 + $0x2] sm:$0x3]
  %v141 = vld [vmem:[#allocation2] sm:$0x3]
  %v142 = vld [vmem:[#allocation3] sm:$0x3]
  %v143 = vld [vmem:[%s1] sm:$0xff]
  %v144 = vld [vmem:[%s1 + $0x8] sm:$0x7f]
  %v146 = vsel %vm58, %v141, 0
  %v149 = vsel %vm62, %v144, 0
  %151 = vmatpush.msra.mxu0 0.0
  %152 = vmatpush.msra.mxu0 0.0
  %153 = vmatpush.msra.mxu0 0.0
  %154 = vmatpush.msra.mxu0 0.0
  %155 = vmatpush.msra.mxu0 0.0
  %156 = vmatpush.msra.mxu0 0.0
  %157 = vmatpush.msra.mxu0 0.0
  %158 = vmatpush.msra.mxu0 0.0
  %159 = vmatpush.msra.mxu0 0.0
  %160 = vmatpush.msra.mxu0 0.0
  %161 = vmatpush.msra.mxu0 0.0
  %162 = vmatpush.msra.mxu0 0.0
  %163 = vmatpush.msra.mxu0 0.0
  %164 = vmatpush.msra.mxu0 0.0
  %165 = vmatpush.msra.mxu0 %v149
  %166 = vmatpush.msra.mxu0 %v143
  %167 = vmatmul.f32.gmra.mxu0 %v146
  %v168 = vpop.f32.mrf.mxu0
  %v169 = vadd.f32 0.0, %v168
  %170 = vdwg.mxu0
  %v171 = vadd.f32 %v140, %v169
  %v172 = vxor.u32 %v171, 2147483648
  %v173 = vmul.f32 %v172, 1.442695
  %v174 = vpow.pop %v173
  %v175 = vadd.f32 %v174, 1.0
  %v176 = vrcp.pop %v175
  %v177 = vmul.f32 %v175, %v176
  %v178 = vsub.f32 1.0, %v177
  %v179 = vmul.f32 %v176, %v178
  %v180 = vadd.f32 %v176, %v179
  %vm181 = vweird.f32 %v175
  %vm182 = vweird.f32 %v176
  %vm183 = vmor %vm181, %vm182
  %v184 = vsel %vm183, %v176, %v180
  %v185 = vand.u32 2147483647, %v175
  %vm186 = vcmp.eq.f32.partialorder %v185, 8.507059e+37
  %v187 = vand.u32 %v175, 2147483648
  %v188 = vor.u32 1.1754944e-38, %v187
  %v189 = vsel %vm186, %v188, %v184
  %v190 = vmul.f32 1.0, %v189
  %v191 = vtanh.pop %v171
  %193 = vrot.lane.b32.xlu0 %v142, 15
  %v194 = vpop.permute.xlu0 %193
  %v196 = vmul.f32 %v190, %v194
  %198 = vrot.lane.b32.xlu0 %v191, 98
  %v199 = vpop.permute.xlu0 %198
  %v201 = vmul.f32 %v190, %v199
  %203 = vrot.lane.b32.xlu0 %v201, 15
  %v204 = vpop.permute.xlu0 %203
  %v206 = vadd.f32 %v196, %v204
  %v207 = vtanh.pop %v206
  %209 = vrot.lane.b32.xlu0 %v207, 30
  %v210 = vpop.permute.xlu0 %209
  %v212 = vmul.f32 %v190, %v210
  %214 = vrot.lane.b32.xlu0 %v212, 83
  %v215 = vpop.permute.xlu0 %214
  %217 = vst.msk [vmem:[#allocation2] sm:$0x3] %vm132, %v215
  %219 = vrot.lane.b32.xlu0 %v206, 113
  %v220 = vpop.permute.xlu0 %219
  %222 = vst.msk [vmem:[#allocation3] sm:$0x3] %vm132, %v220
  %223 = vst.msk [vmem:[#allocation6 + $0x2] sm:$0x3] %vm132, %v215
  %v224 = vld [vmem:[%s0 + $0x4] sm:$0x3]
  %v225 = vld [vmem:[#allocation2] sm:$0x3]
  %v226 = vld [vmem:[#allocation3] sm:$0x3]
  %v227 = vld [vmem:[%s1] sm:$0xff]
  %v228 = vld [vmem:[%s1 + $0x8] sm:$0x7f]
  %v230 = vsel %vm58, %v225, 0
  %v233 = vsel %vm62, %v228, 0
  %235 = vmatpush.msra.mxu0 0.0
  %236 = vmatpush.msra.mxu0 0.0
  %237 = vmatpush.msra.mxu0 0.0
  %238 = vmatpush.msra.mxu0 0.0
  %239 = vmatpush.msra.mxu0 0.0
  %240 = vmatpush.msra.mxu0 0.0
  %241 = vmatpush.msra.mxu0 0.0
  %242 = vmatpush.msra.mxu0 0.0
  %243 = vmatpush.msra.mxu0 0.0
  %244 = vmatpush.msra.mxu0 0.0
  %245 = vmatpush.msra.mxu0 0.0
  %246 = vmatpush.msra.mxu0 0.0
  %247 = vmatpush.msra.mxu0 0.0
  %248 = vmatpush.msra.mxu0 0.0
  %249 = vmatpush.msra.mxu0 %v233
  %250 = vmatpush.msra.mxu0 %v227
  %251 = vmatmul.f32.gmra.mxu0 %v230
  %v252 = vpop.f32.mrf.mxu0
  %v253 = vadd.f32 0.0, %v252
  %254 = vdwg.mxu0
  %v255 = vadd.f32 %v224, %v253
  %v256 = vxor.u32 %v255, 2147483648
  %v257 = vmul.f32 %v256, 1.442695
  %v258 = vpow.pop %v257
  %v259 = vadd.f32 %v258, 1.0
  %v260 = vrcp.pop %v259
  %v261 = vmul.f32 %v259, %v260
  %v262 = vsub.f32 1.0, %v261
  %v263 = vmul.f32 %v260, %v262
  %v264 = vadd.f32 %v260, %v263
  %vm265 = vweird.f32 %v259
  %vm266 = vweird.f32 %v260
  %vm267 = vmor %vm265, %vm266
  %v268 = vsel %vm267, %v260, %v264
  %v269 = vand.u32 2147483647, %v259
  %vm270 = vcmp.eq.f32.partialorder %v269, 8.507059e+37
  %v271 = vand.u32 %v259, 2147483648
  %v272 = vor.u32 1.1754944e-38, %v271
  %v273 = vsel %vm270, %v272, %v268
  %v274 = vmul.f32 1.0, %v273
  %v275 = vtanh.pop %v255
  %277 = vrot.lane.b32.xlu0 %v226, 15
  %v278 = vpop.permute.xlu0 %277
  %v280 = vmul.f32 %v274, %v278
  %282 = vrot.lane.b32.xlu0 %v275, 98
  %v283 = vpop.permute.xlu0 %282
  %v285 = vmul.f32 %v274, %v283
  %287 = vrot.lane.b32.xlu0 %v285, 15
  %v288 = vpop.permute.xlu0 %287
  %v290 = vadd.f32 %v280, %v288
  %v291 = vtanh.pop %v290
  %293 = vrot.lane.b32.xlu0 %v291, 30
  %v294 = vpop.permute.xlu0 %293
  %v296 = vmul.f32 %v274, %v294
  %298 = vrot.lane.b32.xlu0 %v296, 83
  %v299 = vpop.permute.xlu0 %298
  %301 = vst.msk [vmem:[#allocation2] sm:$0x3] %vm132, %v299
  %303 = vrot.lane.b32.xlu0 %v290, 113
  %v304 = vpop.permute.xlu0 %303
  %306 = vst.msk [vmem:[#allocation3] sm:$0x3] %vm132, %v304
  %307 = vst.msk [vmem:[#allocation6 + $0x4] sm:$0x3] %vm132, %v299
  %v308 = vld [vmem:[%s0 + $0x6] sm:$0x3]
  %v309 = vld [vmem:[#allocation2] sm:$0x3]
  %v310 = vld [vmem:[#allocation3] sm:$0x3]
  %v311 = vld [vmem:[%s1] sm:$0xff]
  %v312 = vld [vmem:[%s1 + $0x8] sm:$0x7f]
  %v314 = vsel %vm58, %v309, 0
  %v317 = vsel %vm62, %v312, 0
  %319 = vmatpush.msra.mxu0 0.0
  %320 = vmatpush.msra.mxu0 0.0
  %321 = vmatpush.msra.mxu0 0.0
  %322 = vmatpush.msra.mxu0 0.0
  %323 = vmatpush.msra.mxu0 0.0
  %324 = vmatpush.msra.mxu0 0.0
  %325 = vmatpush.msra.mxu0 0.0
  %326 = vmatpush.msra.mxu0 0.0
  %327 = vmatpush.msra.mxu0 0.0
  %328 = vmatpush.msra.mxu0 0.0
  %329 = vmatpush.msra.mxu0 0.0
  %330 = vmatpush.msra.mxu0 0.0
  %331 = vmatpush.msra.mxu0 0.0
  %332 = vmatpush.msra.mxu0 0.0
  %333 = vmatpush.msra.mxu0 %v317
  %334 = vmatpush.msra.mxu0 %v311
  %335 = vmatmul.f32.gmra.mxu0 %v314
  %v336 = vpop.f32.mrf.mxu0
  %v337 = vadd.f32 0.0, %v336
  %338 = vdwg.mxu0
  %v339 = vadd.f32 %v308, %v337
  %v340 = vxor.u32 %v339, 2147483648
  %v341 = vmul.f32 %v340, 1.442695
  %v342 = vpow.pop %v341
  %v343 = vadd.f32 %v342, 1.0
  %v344 = vrcp.pop %v343
  %v345 = vmul.f32 %v343, %v344
  %v346 = vsub.f32 1.0, %v345
  %v347 = vmul.f32 %v344, %v346
  %v348 = vadd.f32 %v344, %v347
  %vm349 = vweird.f32 %v343
  %vm350 = vweird.f32 %v344
  %vm351 = vmor %vm349, %vm350
  %v352 = vsel %vm351, %v344, %v348
  %v353 = vand.u32 2147483647, %v343
  %vm354 = vcmp.eq.f32.partialorder %v353, 8.507059e+37
  %v355 = vand.u32 %v343, 2147483648
  %v356 = vor.u32 1.1754944e-38, %v355
  %v357 = vsel %vm354, %v356, %v352
  %v358 = vmul.f32 1.0, %v357
  %v359 = vtanh.pop %v339
  %361 = vrot.lane.b32.xlu0 %v310, 15
  %v362 = vpop.permute.xlu0 %361
  %v364 = vmul.f32 %v358, %v362
  %366 = vrot.lane.b32.xlu0 %v359, 98
  %v367 = vpop.permute.xlu0 %366
  %v369 = vmul.f32 %v358, %v367
  %371 = vrot.lane.b32.xlu0 %v369, 15
  %v372 = vpop.permute.xlu0 %371
  %v374 = vadd.f32 %v364, %v372
  %v375 = vtanh.pop %v374
  %377 = vrot.lane.b32.xlu0 %v375, 30
  %v378 = vpop.permute.xlu0 %377
  %v380 = vmul.f32 %v358, %v378
  %382 = vrot.lane.b32.xlu0 %v380, 83
  %v383 = vpop.permute.xlu0 %382
  %385 = vst.msk [vmem:[#allocation2] sm:$0x3] %vm132, %v383
  %387 = vrot.lane.b32.xlu0 %v374, 113
  %v388 = vpop.permute.xlu0 %387
  %390 = vst.msk [vmem:[#allocation3] sm:$0x3] %vm132, %v388
  %391 = vst.msk [vmem:[#allocation6 + $0x6] sm:$0x3] %vm132, %v383
  %v392 = vld [vmem:[%s0 + $0x8] sm:$0x3]
  %v393 = vld [vmem:[#allocation2] sm:$0x3]
  %v394 = vld [vmem:[#allocation3] sm:$0x3]
  %v395 = vld [vmem:[%s1] sm:$0xff]
  %v396 = vld [vmem:[%s1 + $0x8] sm:$0x7f]
  %v398 = vsel %vm58, %v393, 0
  %v401 = vsel %vm62, %v396, 0
  %403 = vmatpush.msra.mxu0 0.0
  %404 = vmatpush.msra.mxu0 0.0
  %405 = vmatpush.msra.mxu0 0.0
  %406 = vmatpush.msra.mxu0 0.0
  %407 = vmatpush.msra.mxu0 0.0
  %408 = vmatpush.msra.mxu0 0.0
  %409 = vmatpush.msra.mxu0 0.0
  %410 = vmatpush.msra.mxu0 0.0
  %411 = vmatpush.msra.mxu0 0.0
  %412 = vmatpush.msra.mxu0 0.0
  %413 = vmatpush.msra.mxu0 0.0
  %414 = vmatpush.msra.mxu0 0.0
  %415 = vmatpush.msra.mxu0 0.0
  %416 = vmatpush.msra.mxu0 0.0
  %417 = vmatpush.msra.mxu0 %v401
  %418 = vmatpush.msra.mxu0 %v395
  %419 = vmatmul.f32.gmra.mxu0 %v398
  %v420 = vpop.f32.mrf.mxu0
  %v421 = vadd.f32 0.0, %v420
  %422 = vdwg.mxu0
  %v423 = vadd.f32 %v392, %v421
  %v424 = vxor.u32 %v423, 2147483648
  %v425 = vmul.f32 %v424, 1.442695
  %v426 = vpow.pop %v425
  %v427 = vadd.f32 %v426, 1.0
  %v428 = vrcp.pop %v427
  %v429 = vmul.f32 %v427, %v428
  %v430 = vsub.f32 1.0, %v429
  %v431 = vmul.f32 %v428, %v430
  %v432 = vadd.f32 %v428, %v431
  %vm433 = vweird.f32 %v427
  %vm434 = vweird.f32 %v428
  %vm435 = vmor %vm433, %vm434
  %v436 = vsel %vm435, %v428, %v432
  %v437 = vand.u32 2147483647, %v427
  %vm438 = vcmp.eq.f32.partialorder %v437, 8.507059e+37
  %v439 = vand.u32 %v427, 2147483648
  %v440 = vor.u32 1.1754944e-38, %v439
  %v441 = vsel %vm438, %v440, %v436
  %v442 = vmul.f32 1.0, %v441
  %v443 = vtanh.pop %v423
  %445 = vrot.lane.b32.xlu0 %v394, 15
  %v446 = vpop.permute.xlu0 %445
  %v448 = vmul.f32 %v442, %v446
  %450 = vrot.lane.b32.xlu0 %v443, 98
  %v451 = vpop.permute.xlu0 %450
  %v453 = vmul.f32 %v442, %v451
  %455 = vrot.lane.b32.xlu0 %v453, 15
  %v456 = vpop.permute.xlu0 %455
  %v458 = vadd.f32 %v448, %v456
  %v459 = vtanh.pop %v458
  %461 = vrot.lane.b32.xlu0 %v459, 30
  %v462 = vpop.permute.xlu0 %461
  %v464 = vmul.f32 %v442, %v462
  %466 = vrot.lane.b32.xlu0 %v464, 83
  %v467 = vpop.permute.xlu0 %466
  %469 = vst.msk [vmem:[#allocation2] sm:$0x3] %vm132, %v467
  %471 = vrot.lane.b32.xlu0 %v458, 113
  %v472 = vpop.permute.xlu0 %471
  %474 = vst.msk [vmem:[#allocation3] sm:$0x3] %vm132, %v472
  %475 = vst.msk [vmem:[#allocation6 + $0x8] sm:$0x3] %vm132, %v467
  %v476 = vld [vmem:[%s0 + $0xa] sm:$0x3]
  %v477 = vld [vmem:[#allocation2] sm:$0x3]
  %v478 = vld [vmem:[#allocation3] sm:$0x3]
  %v479 = vld [vmem:[%s1] sm:$0xff]
  %v480 = vld [vmem:[%s1 + $0x8] sm:$0x7f]
  %v482 = vsel %vm58, %v477, 0
  %v485 = vsel %vm62, %v480, 0
  %487 = vmatpush.msra.mxu0 0.0
  %488 = vmatpush.msra.mxu0 0.0
  %489 = vmatpush.msra.mxu0 0.0
  %490 = vmatpush.msra.mxu0 0.0
  %491 = vmatpush.msra.mxu0 0.0
  %492 = vmatpush.msra.mxu0 0.0
  %493 = vmatpush.msra.mxu0 0.0
  %494 = vmatpush.msra.mxu0 0.0
  %495 = vmatpush.msra.mxu0 0.0
  %496 = vmatpush.msra.mxu0 0.0
  %497 = vmatpush.msra.mxu0 0.0
  %498 = vmatpush.msra.mxu0 0.0
  %499 = vmatpush.msra.mxu0 0.0
  %500 = vmatpush.msra.mxu0 0.0
  %501 = vmatpush.msra.mxu0 %v485
  %502 = vmatpush.msra.mxu0 %v479
  %503 = vmatmul.f32.gmra.mxu0 %v482
  %v504 = vpop.f32.mrf.mxu0
  %v505 = vadd.f32 0.0, %v504
  %506 = vdwg.mxu0
  %v507 = vadd.f32 %v476, %v505
  %v508 = vxor.u32 %v507, 2147483648
  %v509 = vmul.f32 %v508, 1.442695
  %v510 = vpow.pop %v509
  %v511 = vadd.f32 %v510, 1.0
  %v512 = vrcp.pop %v511
  %v513 = vmul.f32 %v511, %v512
  %v514 = vsub.f32 1.0, %v513
  %v515 = vmul.f32 %v512, %v514
  %v516 = vadd.f32 %v512, %v515
  %vm517 = vweird.f32 %v511
  %vm518 = vweird.f32 %v512
  %vm519 = vmor %vm517, %vm518
  %v520 = vsel %vm519, %v512, %v516
  %v521 = vand.u32 2147483647, %v511
  %vm522 = vcmp.eq.f32.partialorder %v521, 8.507059e+37
  %v523 = vand.u32 %v511, 2147483648
  %v524 = vor.u32 1.1754944e-38, %v523
  %v525 = vsel %vm522, %v524, %v520
  %v526 = vmul.f32 1.0, %v525
  %v527 = vtanh.pop %v507
  %529 = vrot.lane.b32.xlu0 %v478, 15
  %v530 = vpop.permute.xlu0 %529
  %v532 = vmul.f32 %v526, %v530
  %534 = vrot.lane.b32.xlu0 %v527, 98
  %v535 = vpop.permute.xlu0 %534
  %v537 = vmul.f32 %v526, %v535
  %539 = vrot.lane.b32.xlu0 %v537, 15
  %v540 = vpop.permute.xlu0 %539
  %v542 = vadd.f32 %v532, %v540
  %v543 = vtanh.pop %v542
  %545 = vrot.lane.b32.xlu0 %v543, 30
  %v546 = vpop.permute.xlu0 %545
  %v548 = vmul.f32 %v526, %v546
  %550 = vrot.lane.b32.xlu0 %v548, 83
  %v551 = vpop.permute.xlu0 %550
  %553 = vst.msk [vmem:[#allocation2] sm:$0x3] %vm132, %v551
  %555 = vrot.lane.b32.xlu0 %v542, 113
  %v556 = vpop.permute.xlu0 %555
  %558 = vst.msk [vmem:[#allocation3] sm:$0x3] %vm132, %v556
  %559 = vst.msk [vmem:[#allocation6 + $0xa] sm:$0x3] %vm132, %v551
  %v560 = vld [vmem:[%s0 + $0xc] sm:$0x3]
  %v561 = vld [vmem:[#allocation2] sm:$0x3]
  %v562 = vld [vmem:[#allocation3] sm:$0x3]
  %v563 = vld [vmem:[%s1] sm:$0xff]
  %v564 = vld [vmem:[%s1 + $0x8] sm:$0x7f]
  %v566 = vsel %vm58, %v561, 0
  %v569 = vsel %vm62, %v564, 0
  %571 = vmatpush.msra.mxu0 0.0
  %572 = vmatpush.msra.mxu0 0.0
  %573 = vmatpush.msra.mxu0 0.0
  %574 = vmatpush.msra.mxu0 0.0
  %575 = vmatpush.msra.mxu0 0.0
  %576 = vmatpush.msra.mxu0 0.0
  %577 = vmatpush.msra.mxu0 0.0
  %578 = vmatpush.msra.mxu0 0.0
  %579 = vmatpush.msra.mxu0 0.0
  %580 = vmatpush.msra.mxu0 0.0
  %581 = vmatpush.msra.mxu0 0.0
  %582 = vmatpush.msra.mxu0 0.0
  %583 = vmatpush.msra.mxu0 0.0
  %584 = vmatpush.msra.mxu0 0.0
  %585 = vmatpush.msra.mxu0 %v569
  %586 = vmatpush.msra.mxu0 %v563
  %587 = vmatmul.f32.gmra.mxu0 %v566
  %v588 = vpop.f32.mrf.mxu0
  %v589 = vadd.f32 0.0, %v588
  %590 = vdwg.mxu0
  %v591 = vadd.f32 %v560, %v589
  %v592 = vxor.u32 %v591, 2147483648
  %v593 = vmul.f32 %v592, 1.442695
  %v594 = vpow.pop %v593
  %v595 = vadd.f32 %v594, 1.0
  %v596 = vrcp.pop %v595
  %v597 = vmul.f32 %v595, %v596
  %v598 = vsub.f32 1.0, %v597
  %v599 = vmul.f32 %v596, %v598
  %v600 = vadd.f32 %v596, %v599
  %vm601 = vweird.f32 %v595
  %vm602 = vweird.f32 %v596
  %vm603 = vmor %vm601, %vm602
  %v604 = vsel %vm603, %v596, %v600
  %v605 = vand.u32 2147483647, %v595
  %vm606 = vcmp.eq.f32.partialorder %v605, 8.507059e+37
  %v607 = vand.u32 %v595, 2147483648
  %v608 = vor.u32 1.1754944e-38, %v607
  %v609 = vsel %vm606, %v608, %v604
  %v610 = vmul.f32 1.0, %v609
  %v611 = vtanh.pop %v591
  %613 = vrot.lane.b32.xlu0 %v562, 15
  %v614 = vpop.permute.xlu0 %613
  %v616 = vmul.f32 %v610, %v614
  %618 = vrot.lane.b32.xlu0 %v611, 98
  %v619 = vpop.permute.xlu0 %618
  %v621 = vmul.f32 %v610, %v619
  %623 = vrot.lane.b32.xlu0 %v621, 15
  %v624 = vpop.permute.xlu0 %623
  %v626 = vadd.f32 %v616, %v624
  %v627 = vtanh.pop %v626
  %629 = vrot.lane.b32.xlu0 %v627, 30
  %v630 = vpop.permute.xlu0 %629
  %v632 = vmul.f32 %v610, %v630
  %634 = vrot.lane.b32.xlu0 %v632, 83
  %v635 = vpop.permute.xlu0 %634
  %637 = vst.msk [vmem:[#allocation2] sm:$0x3] %vm132, %v635
  %639 = vrot.lane.b32.xlu0 %v626, 113
  %v640 = vpop.permute.xlu0 %639
  %642 = vst.msk [vmem:[#allocation3] sm:$0x3] %vm132, %v640
  %643 = vst.msk [vmem:[#allocation6 + $0xc] sm:$0x3] %vm132, %v635
  %v644 = vld [vmem:[%s0 + $0xe] sm:$0x3]
  %v645 = vld [vmem:[#allocation2] sm:$0x3]
  %v646 = vld [vmem:[#allocation3] sm:$0x3]
  %v647 = vld [vmem:[%s1] sm:$0xff]
  %v648 = vld [vmem:[%s1 + $0x8] sm:$0x7f]
  %v650 = vsel %vm58, %v645, 0
  %v653 = vsel %vm62, %v648, 0
  %655 = vmatpush.msra.mxu0 0.0
  %656 = vmatpush.msra.mxu0 0.0
  %657 = vmatpush.msra.mxu0 0.0
  %658 = vmatpush.msra.mxu0 0.0
  %659 = vmatpush.msra.mxu0 0.0
  %660 = vmatpush.msra.mxu0 0.0
  %661 = vmatpush.msra.mxu0 0.0
  %662 = vmatpush.msra.mxu0 0.0
  %663 = vmatpush.msra.mxu0 0.0
  %664 = vmatpush.msra.mxu0 0.0
  %665 = vmatpush.msra.mxu0 0.0
  %666 = vmatpush.msra.mxu0 0.0
  %667 = vmatpush.msra.mxu0 0.0
  %668 = vmatpush.msra.mxu0 0.0
  %669 = vmatpush.msra.mxu0 %v653
  %670 = vmatpush.msra.mxu0 %v647
  %671 = vmatmul.f32.gmra.mxu0 %v650
  %v672 = vpop.f32.mrf.mxu0
  %v673 = vadd.f32 0.0, %v672
  %674 = vdwg.mxu0
  %v675 = vadd.f32 %v644, %v673
  %v676 = vxor.u32 %v675, 2147483648
  %v677 = vmul.f32 %v676, 1.442695
  %v678 = vpow.pop %v677
  %v679 = vadd.f32 %v678, 1.0
  %v680 = vrcp.pop %v679
  %v681 = vmul.f32 %v679, %v680
  %v682 = vsub.f32 1.0, %v681
  %v683 = vmul.f32 %v680, %v682
  %v684 = vadd.f32 %v680, %v683
  %vm685 = vweird.f32 %v679
  %vm686 = vweird.f32 %v680
  %vm687 = vmor %vm685, %vm686
  %v688 = vsel %vm687, %v680, %v684
  %v689 = vand.u32 2147483647, %v679
  %vm690 = vcmp.eq.f32.partialorder %v689, 8.507059e+37
  %v691 = vand.u32 %v679, 2147483648
  %v692 = vor.u32 1.1754944e-38, %v691
  %v693 = vsel %vm690, %v692, %v688
  %v694 = vmul.f32 1.0, %v693
  %v695 = vtanh.pop %v675
  %697 = vrot.lane.b32.xlu0 %v646, 15
  %v698 = vpop.permute.xlu0 %697
  %v700 = vmul.f32 %v694, %v698
  %702 = vrot.lane.b32.xlu0 %v695, 98
  %v703 = vpop.permute.xlu0 %702
  %v705 = vmul.f32 %v694, %v703
  %707 = vrot.lane.b32.xlu0 %v705, 15
  %v708 = vpop.permute.xlu0 %707
  %v710 = vadd.f32 %v700, %v708
  %v711 = vtanh.pop %v710
  %713 = vrot.lane.b32.xlu0 %v711, 30
  %v714 = vpop.permute.xlu0 %713
  %v716 = vmul.f32 %v694, %v714
  %718 = vrot.lane.b32.xlu0 %v716, 83
  %v719 = vpop.permute.xlu0 %718
  %721 = vst.msk [vmem:[#allocation2] sm:$0x3] %vm132, %v719
  %723 = vrot.lane.b32.xlu0 %v710, 113
  %v724 = vpop.permute.xlu0 %723
  %726 = vst.msk [vmem:[#allocation3] sm:$0x3] %vm132, %v724
  %727 = vst.msk [vmem:[#allocation6 + $0xe] sm:$0x3] %vm132, %v719
  %v728 = vld [vmem:[#allocation6] sm:$0xff]
  %v729 = vld [vmem:[#allocation6 + $0x8] sm:$0xff]
  %v730 = vld [vmem:[%s2] sm:$0xff]
  %v731 = vld [vmem:[%s2 + $0x8] sm:$0x7f]
  %v732 = vld [vmem:[%s4] sm:$0x1]
  %v734 = vperm.slane %v732, 0
  %v737 = vsel %vm58, %v728, 0
  %v740 = vsel %vm58, %v729, 0
  %v743 = vsel %vm62, %v731, 0
  %745 = vmatpush.msra.mxu0 0.0
  %746 = vmatpush.msra.mxu0 0.0
  %747 = vmatpush.msra.mxu0 0.0
  %748 = vmatpush.msra.mxu0 0.0
  %749 = vmatpush.msra.mxu0 0.0
  %750 = vmatpush.msra.mxu0 0.0
  %751 = vmatpush.msra.mxu0 0.0
  %752 = vmatpush.msra.mxu0 0.0
  %753 = vmatpush.msra.mxu0 0.0
  %754 = vmatpush.msra.mxu0 0.0
  %755 = vmatpush.msra.mxu0 0.0
  %756 = vmatpush.msra.mxu0 0.0
  %757 = vmatpush.msra.mxu0 0.0
  %758 = vmatpush.msra.mxu0 0.0
  %759 = vmatpush.msra.mxu0 %v743
  %760 = vmatpush.msra.mxu0 %v730
  %761 = vmatmul.f32.gmra.mxu0 %v737
  %v762 = vpop.f32.mrf.mxu0
  %v763 = vadd.f32 %v734, %v762
  %764 = vmatmul.f32.gmra.mxu0 %v740
  %v765 = vpop.f32.mrf.mxu0
  %v766 = vadd.f32 %v734, %v765
  %767 = vdwg.mxu0
  %vm768 = vcmask 490496
  %769 = vst.msk [vmem:[#allocation7] sm:$0xff] %vm768, %v763
  %770 = vst.msk [vmem:[#allocation7 + $0x8] sm:$0xff] %vm768, %v766
  %v771 = vld [vmem:[#allocation7] sm:$0x3]
  %v772 = vld [vmem:[#allocation4] sm:$0x3]
  %v773 = vld [vmem:[#allocation5] sm:$0x3]
  %v774 = vld [vmem:[%s3] sm:$0xff]
  %v775 = vld [vmem:[%s3 + $0x8] sm:$0x7f]
  %v777 = vsel %vm58, %v772, 0
  %v780 = vsel %vm62, %v775, 0
  %782 = vmatpush.msra.mxu0 0.0
  %783 = vmatpush.msra.mxu0 0.0
  %784 = vmatpush.msra.mxu0 0.0
  %785 = vmatpush.msra.mxu0 0.0
  %786 = vmatpush.msra.mxu0 0.0
  %787 = vmatpush.msra.mxu0 0.0
  %788 = vmatpush.msra.mxu0 0.0
  %789 = vmatpush.msra.mxu0 0.0
  %790 = vmatpush.msra.mxu0 0.0
  %791 = vmatpush.msra.mxu0 0.0
  %792 = vmatpush.msra.mxu0 0.0
  %793 = vmatpush.msra.mxu0 0.0
  %794 = vmatpush.msra.mxu0 0.0
  %795 = vmatpush.msra.mxu0 0.0
  %796 = vmatpush.msra.mxu0 %v780
  %797 = vmatpush.msra.mxu0 %v774
  %798 = vmatmul.f32.gmra.mxu0 %v777
  %v799 = vpop.f32.mrf.mxu0
  %v800 = vadd.f32 0.0, %v799
  %801 = vdwg.mxu0
  %v802 = vadd.f32 %v771, %v800
  %v803 = vxor.u32 %v802, 2147483648
  %v804 = vmul.f32 %v803, 1.442695
  %v805 = vpow.pop %v804
  %v806 = vadd.f32 %v805, 1.0
  %v807 = vrcp.pop %v806
  %v808 = vmul.f32 %v806, %v807
  %v809 = vsub.f32 1.0, %v808
  %v810 = vmul.f32 %v807, %v809
  %v811 = vadd.f32 %v807, %v810
  %vm812 = vweird.f32 %v806
  %vm813 = vweird.f32 %v807
  %vm814 = vmor %vm812, %vm813
  %v815 = vsel %vm814, %v807, %v811
  %v816 = vand.u32 2147483647, %v806
  %vm817 = vcmp.eq.f32.partialorder %v816, 8.507059e+37
  %v818 = vand.u32 %v806, 2147483648
  %v819 = vor.u32 1.1754944e-38, %v818
  %v820 = vsel %vm817, %v819, %v815
  %v821 = vmul.f32 1.0, %v820
  %v822 = vtanh.pop %v802
  %824 = vrot.lane.b32.xlu0 %v773, 15
  %v825 = vpop.permute.xlu0 %824
  %v827 = vmul.f32 %v821, %v825
  %829 = vrot.lane.b32.xlu0 %v822, 98
  %v830 = vpop.permute.xlu0 %829
  %v832 = vmul.f32 %v821, %v830
  %834 = vrot.lane.b32.xlu0 %v832, 15
  %v835 = vpop.permute.xlu0 %834
  %v837 = vadd.f32 %v827, %v835
  %v838 = vtanh.pop %v837
  %840 = vrot.lane.b32.xlu0 %v838, 30
  %v841 = vpop.permute.xlu0 %840
  %v843 = vmul.f32 %v821, %v841
  %845 = vrot.lane.b32.xlu0 %v843, 83
  %v846 = vpop.permute.xlu0 %845
  %848 = vst.msk [vmem:[#allocation4] sm:$0x3] %vm132, %v846
  %850 = vrot.lane.b32.xlu0 %v837, 113
  %v851 = vpop.permute.xlu0 %850
  %853 = vst.msk [vmem:[#allocation5] sm:$0x3] %vm132, %v851
  %854 = vst.msk [vmem:[#allocation6] sm:$0x3] %vm132, %v846
  %v855 = vld [vmem:[#allocation7 + $0x2] sm:$0x3]
  %v856 = vld [vmem:[#allocation4] sm:$0x3]
  %v857 = vld [vmem:[#allocation5] sm:$0x3]
  %v858 = vld [vmem:[%s3] sm:$0xff]
  %v859 = vld [vmem:[%s3 + $0x8] sm:$0x7f]
  %v861 = vsel %vm58, %v856, 0
  %v864 = vsel %vm62, %v859, 0
  %866 = vmatpush.msra.mxu0 0.0
  %867 = vmatpush.msra.mxu0 0.0
  %868 = vmatpush.msra.mxu0 0.0
  %869 = vmatpush.msra.mxu0 0.0
  %870 = vmatpush.msra.mxu0 0.0
  %871 = vmatpush.msra.mxu0 0.0
  %872 = vmatpush.msra.mxu0 0.0
  %873 = vmatpush.msra.mxu0 0.0
  %874 = vmatpush.msra.mxu0 0.0
  %875 = vmatpush.msra.mxu0 0.0
  %876 = vmatpush.msra.mxu0 0.0
  %877 = vmatpush.msra.mxu0 0.0
  %878 = vmatpush.msra.mxu0 0.0
  %879 = vmatpush.msra.mxu0 0.0
  %880 = vmatpush.msra.mxu0 %v864
  %881 = vmatpush.msra.mxu0 %v858
  %882 = vmatmul.f32.gmra.mxu0 %v861
  %v883 = vpop.f32.mrf.mxu0
  %v884 = vadd.f32 0.0, %v883
  %885 = vdwg.mxu0
  %v886 = vadd.f32 %v855, %v884
  %v887 = vxor.u32 %v886, 2147483648
  %v888 = vmul.f32 %v887, 1.442695
  %v889 = vpow.pop %v888
  %v890 = vadd.f32 %v889, 1.0
  %v891 = vrcp.pop %v890
  %v892 = vmul.f32 %v890, %v891
  %v893 = vsub.f32 1.0, %v892
  %v894 = vmul.f32 %v891, %v893
  %v895 = vadd.f32 %v891, %v894
  %vm896 = vweird.f32 %v890
  %vm897 = vweird.f32 %v891
  %vm898 = vmor %vm896, %vm897
  %v899 = vsel %vm898, %v891, %v895
  %v900 = vand.u32 2147483647, %v890
  %vm901 = vcmp.eq.f32.partialorder %v900, 8.507059e+37
  %v902 = vand.u32 %v890, 2147483648
  %v903 = vor.u32 1.1754944e-38, %v902
  %v904 = vsel %vm901, %v903, %v899
  %v905 = vmul.f32 1.0, %v904
  %v906 = vtanh.pop %v886
  %908 = vrot.lane.b32.xlu0 %v857, 15
  %v909 = vpop.permute.xlu0 %908
  %v911 = vmul.f32 %v905, %v909
  %913 = vrot.lane.b32.xlu0 %v906, 98
  %v914 = vpop.permute.xlu0 %913
  %v916 = vmul.f32 %v905, %v914
  %918 = vrot.lane.b32.xlu0 %v916, 15
  %v919 = vpop.permute.xlu0 %918
  %v921 = vadd.f32 %v911, %v919
  %v922 = vtanh.pop %v921
  %924 = vrot.lane.b32.xlu0 %v922, 30
  %v925 = vpop.permute.xlu0 %924
  %v927 = vmul.f32 %v905, %v925
  %929 = vrot.lane.b32.xlu0 %v927, 83
  %v930 = vpop.permute.xlu0 %929
  %932 = vst.msk [vmem:[#allocation4] sm:$0x3] %vm132, %v930
  %934 = vrot.lane.b32.xlu0 %v921, 113
  %v935 = vpop.permute.xlu0 %934
  %937 = vst.msk [vmem:[#allocation5] sm:$0x3] %vm132, %v935
  %938 = vst.msk [vmem:[#allocation6 + $0x2] sm:$0x3] %vm132, %v930
  %v939 = vld [vmem:[#allocation7 + $0x4] sm:$0x3]
  %v940 = vld [vmem:[#allocation4] sm:$0x3]
  %v941 = vld [vmem:[#allocation5] sm:$0x3]
  %v942 = vld [vmem:[%s3] sm:$0xff]
  %v943 = vld [vmem:[%s3 + $0x8] sm:$0x7f]
  %v945 = vsel %vm58, %v940, 0
  %v948 = vsel %vm62, %v943, 0
  %950 = vmatpush.msra.mxu0 0.0
  %951 = vmatpush.msra.mxu0 0.0
  %952 = vmatpush.msra.mxu0 0.0
  %953 = vmatpush.msra.mxu0 0.0
  %954 = vmatpush.msra.mxu0 0.0
  %955 = vmatpush.msra.mxu0 0.0
  %956 = vmatpush.msra.mxu0 0.0
  %957 = vmatpush.msra.mxu0 0.0
  %958 = vmatpush.msra.mxu0 0.0
  %959 = vmatpush.msra.mxu0 0.0
  %960 = vmatpush.msra.mxu0 0.0
  %961 = vmatpush.msra.mxu0 0.0
  %962 = vmatpush.msra.mxu0 0.0
  %963 = vmatpush.msra.mxu0 0.0
  %964 = vmatpush.msra.mxu0 %v948
  %965 = vmatpush.msra.mxu0 %v942
  %966 = vmatmul.f32.gmra.mxu0 %v945
  %v967 = vpop.f32.mrf.mxu0
  %v968 = vadd.f32 0.0, %v967
  %969 = vdwg.mxu0
  %v970 = vadd.f32 %v939, %v968
  %v971 = vxor.u32 %v970, 2147483648
  %v972 = vmul.f32 %v971, 1.442695
  %v973 = vpow.pop %v972
  %v974 = vadd.f32 %v973, 1.0
  %v975 = vrcp.pop %v974
  %v976 = vmul.f32 %v974, %v975
  %v977 = vsub.f32 1.0, %v976
  %v978 = vmul.f32 %v975, %v977
  %v979 = vadd.f32 %v975, %v978
  %vm980 = vweird.f32 %v974
  %vm981 = vweird.f32 %v975
  %vm982 = vmor %vm980, %vm981
  %v983 = vsel %vm982, %v975, %v979
  %v984 = vand.u32 2147483647, %v974
  %vm985 = vcmp.eq.f32.partialorder %v984, 8.507059e+37
  %v986 = vand.u32 %v974, 2147483648
  %v987 = vor.u32 1.1754944e-38, %v986
  %v988 = vsel %vm985, %v987, %v983
  %v989 = vmul.f32 1.0, %v988
  %v990 = vtanh.pop %v970
  %992 = vrot.lane.b32.xlu0 %v941, 15
  %v993 = vpop.permute.xlu0 %992
  %v995 = vmul.f32 %v989, %v993
  %997 = vrot.lane.b32.xlu0 %v990, 98
  %v998 = vpop.permute.xlu0 %997
  %v1000 = vmul.f32 %v989, %v998
  %1002 = vrot.lane.b32.xlu0 %v1000, 15
  %v1003 = vpop.permute.xlu0 %1002
  %v1005 = vadd.f32 %v995, %v1003
  %v1006 = vtanh.pop %v1005
  %1008 = vrot.lane.b32.xlu0 %v1006, 30
  %v1009 = vpop.permute.xlu0 %1008
  %v1011 = vmul.f32 %v989, %v1009
  %1013 = vrot.lane.b32.xlu0 %v1011, 83
  %v1014 = vpop.permute.xlu0 %1013
  %1016 = vst.msk [vmem:[#allocation4] sm:$0x3] %vm132, %v1014
  %1018 = vrot.lane.b32.xlu0 %v1005, 113
  %v1019 = vpop.permute.xlu0 %1018
  %1021 = vst.msk [vmem:[#allocation5] sm:$0x3] %vm132, %v1019
  %1022 = vst.msk [vmem:[#allocation6 + $0x4] sm:$0x3] %vm132, %v1014
  %v1023 = vld [vmem:[#allocation7 + $0x6] sm:$0x3]
  %v1024 = vld [vmem:[#allocation4] sm:$0x3]
  %v1025 = vld [vmem:[#allocation5] sm:$0x3]
  %v1026 = vld [vmem:[%s3] sm:$0xff]
  %v1027 = vld [vmem:[%s3 + $0x8] sm:$0x7f]
  %v1029 = vsel %vm58, %v1024, 0
  %v1032 = vsel %vm62, %v1027, 0
  %1034 = vmatpush.msra.mxu0 0.0
  %1035 = vmatpush.msra.mxu0 0.0
  %1036 = vmatpush.msra.mxu0 0.0
  %1037 = vmatpush.msra.mxu0 0.0
  %1038 = vmatpush.msra.mxu0 0.0
  %1039 = vmatpush.msra.mxu0 0.0
  %1040 = vmatpush.msra.mxu0 0.0
  %1041 = vmatpush.msra.mxu0 0.0
  %1042 = vmatpush.msra.mxu0 0.0
  %1043 = vmatpush.msra.mxu0 0.0
  %1044 = vmatpush.msra.mxu0 0.0
  %1045 = vmatpush.msra.mxu0 0.0
  %1046 = vmatpush.msra.mxu0 0.0
  %1047 = vmatpush.msra.mxu0 0.0
  %1048 = vmatpush.msra.mxu0 %v1032
  %1049 = vmatpush.msra.mxu0 %v1026
  %1050 = vmatmul.f32.gmra.mxu0 %v1029
  %v1051 = vpop.f32.mrf.mxu0
  %v1052 = vadd.f32 0.0, %v1051
  %1053 = vdwg.mxu0
  %v1054 = vadd.f32 %v1023, %v1052
  %v1055 = vxor.u32 %v1054, 2147483648
  %v1056 = vmul.f32 %v1055, 1.442695
  %v1057 = vpow.pop %v1056
  %v1058 = vadd.f32 %v1057, 1.0
  %v1059 = vrcp.pop %v1058
  %v1060 = vmul.f32 %v1058, %v1059
  %v1061 = vsub.f32 1.0, %v1060
  %v1062 = vmul.f32 %v1059, %v1061
  %v1063 = vadd.f32 %v1059, %v1062
  %vm1064 = vweird.f32 %v1058
  %vm1065 = vweird.f32 %v1059
  %vm1066 = vmor %vm1064, %vm1065
  %v1067 = vsel %vm1066, %v1059, %v1063
  %v1068 = vand.u32 2147483647, %v1058
  %vm1069 = vcmp.eq.f32.partialorder %v1068, 8.507059e+37
  %v1070 = vand.u32 %v1058, 2147483648
  %v1071 = vor.u32 1.1754944e-38, %v1070
  %v1072 = vsel %vm1069, %v1071, %v1067
  %v1073 = vmul.f32 1.0, %v1072
  %v1074 = vtanh.pop %v1054
  %1076 = vrot.lane.b32.xlu0 %v1025, 15
  %v1077 = vpop.permute.xlu0 %1076
  %v1079 = vmul.f32 %v1073, %v1077
  %1081 = vrot.lane.b32.xlu0 %v1074, 98
  %v1082 = vpop.permute.xlu0 %1081
  %v1084 = vmul.f32 %v1073, %v1082
  %1086 = vrot.lane.b32.xlu0 %v1084, 15
  %v1087 = vpop.permute.xlu0 %1086
  %v1089 = vadd.f32 %v1079, %v1087
  %v1090 = vtanh.pop %v1089
  %1092 = vrot.lane.b32.xlu0 %v1090, 30
  %v1093 = vpop.permute.xlu0 %1092
  %v1095 = vmul.f32 %v1073, %v1093
  %1097 = vrot.lane.b32.xlu0 %v1095, 83
  %v1098 = vpop.permute.xlu0 %1097
  %1100 = vst.msk [vmem:[#allocation4] sm:$0x3] %vm132, %v1098
  %1102 = vrot.lane.b32.xlu0 %v1089, 113
  %v1103 = vpop.permute.xlu0 %1102
  %1105 = vst.msk [vmem:[#allocation5] sm:$0x3] %vm132, %v1103
  %1106 = vst.msk [vmem:[#allocation6 + $0x6] sm:$0x3] %vm132, %v1098
  %v1107 = vld [vmem:[#allocation7 + $0x8] sm:$0x3]
  %v1108 = vld [vmem:[#allocation4] sm:$0x3]
  %v1109 = vld [vmem:[#allocation5] sm:$0x3]
  %v1110 = vld [vmem:[%s3] sm:$0xff]
  %v1111 = vld [vmem:[%s3 + $0x8] sm:$0x7f]
  %v1113 = vsel %vm58, %v1108, 0
  %v1116 = vsel %vm62, %v1111, 0
  %1118 = vmatpush.msra.mxu0 0.0
  %1119 = vmatpush.msra.mxu0 0.0
  %1120 = vmatpush.msra.mxu0 0.0
  %1121 = vmatpush.msra.mxu0 0.0
  %1122 = vmatpush.msra.mxu0 0.0
  %1123 = vmatpush.msra.mxu0 0.0
  %1124 = vmatpush.msra.mxu0 0.0
  %1125 = vmatpush.msra.mxu0 0.0
  %1126 = vmatpush.msra.mxu0 0.0
  %1127 = vmatpush.msra.mxu0 0.0
  %1128 = vmatpush.msra.mxu0 0.0
  %1129 = vmatpush.msra.mxu0 0.0
  %1130 = vmatpush.msra.mxu0 0.0
  %1131 = vmatpush.msra.mxu0 0.0
  %1132 = vmatpush.msra.mxu0 %v1116
  %1133 = vmatpush.msra.mxu0 %v1110
  %1134 = vmatmul.f32.gmra.mxu0 %v1113
  %v1135 = vpop.f32.mrf.mxu0
  %v1136 = vadd.f32 0.0, %v1135
  %1137 = vdwg.mxu0
  %v1138 = vadd.f32 %v1107, %v1136
  %v1139 = vxor.u32 %v1138, 2147483648
  %v1140 = vmul.f32 %v1139, 1.442695
  %v1141 = vpow.pop %v1140
  %v1142 = vadd.f32 %v1141, 1.0
  %v1143 = vrcp.pop %v1142
  %v1144 = vmul.f32 %v1142, %v1143
  %v1145 = vsub.f32 1.0, %v1144
  %v1146 = vmul.f32 %v1143, %v1145
  %v1147 = vadd.f32 %v1143, %v1146
  %vm1148 = vweird.f32 %v1142
  %vm1149 = vweird.f32 %v1143
  %vm1150 = vmor %vm1148, %vm1149
  %v1151 = vsel %vm1150, %v1143, %v1147
  %v1152 = vand.u32 2147483647, %v1142
  %vm1153 = vcmp.eq.f32.partialorder %v1152, 8.507059e+37
  %v1154 = vand.u32 %v1142, 2147483648
  %v1155 = vor.u32 1.1754944e-38, %v1154
  %v1156 = vsel %vm1153, %v1155, %v1151
  %v1157 = vmul.f32 1.0, %v1156
  %v1158 = vtanh.pop %v1138
  %1160 = vrot.lane.b32.xlu0 %v1109, 15
  %v1161 = vpop.permute.xlu0 %1160
  %v1163 = vmul.f32 %v1157, %v1161
  %1165 = vrot.lane.b32.xlu0 %v1158, 98
  %v1166 = vpop.permute.xlu0 %1165
  %v1168 = vmul.f32 %v1157, %v1166
  %1170 = vrot.lane.b32.xlu0 %v1168, 15
  %v1171 = vpop.permute.xlu0 %1170
  %v1173 = vadd.f32 %v1163, %v1171
  %v1174 = vtanh.pop %v1173
  %1176 = vrot.lane.b32.xlu0 %v1174, 30
  %v1177 = vpop.permute.xlu0 %1176
  %v1179 = vmul.f32 %v1157, %v1177
  %1181 = vrot.lane.b32.xlu0 %v1179, 83
  %v1182 = vpop.permute.xlu0 %1181
  %1184 = vst.msk [vmem:[#allocation4] sm:$0x3] %vm132, %v1182
  %1186 = vrot.lane.b32.xlu0 %v1173, 113
  %v1187 = vpop.permute.xlu0 %1186
  %1189 = vst.msk [vmem:[#allocation5] sm:$0x3] %vm132, %v1187
  %1190 = vst.msk [vmem:[#allocation6 + $0x8] sm:$0x3] %vm132, %v1182
  %v1191 = vld [vmem:[#allocation7 + $0xa] sm:$0x3]
  %v1192 = vld [vmem:[#allocation4] sm:$0x3]
  %v1193 = vld [vmem:[#allocation5] sm:$0x3]
  %v1194 = vld [vmem:[%s3] sm:$0xff]
  %v1195 = vld [vmem:[%s3 + $0x8] sm:$0x7f]
  %v1197 = vsel %vm58, %v1192, 0
  %v1200 = vsel %vm62, %v1195, 0
  %1202 = vmatpush.msra.mxu0 0.0
  %1203 = vmatpush.msra.mxu0 0.0
  %1204 = vmatpush.msra.mxu0 0.0
  %1205 = vmatpush.msra.mxu0 0.0
  %1206 = vmatpush.msra.mxu0 0.0
  %1207 = vmatpush.msra.mxu0 0.0
  %1208 = vmatpush.msra.mxu0 0.0
  %1209 = vmatpush.msra.mxu0 0.0
  %1210 = vmatpush.msra.mxu0 0.0
  %1211 = vmatpush.msra.mxu0 0.0
  %1212 = vmatpush.msra.mxu0 0.0
  %1213 = vmatpush.msra.mxu0 0.0
  %1214 = vmatpush.msra.mxu0 0.0
  %1215 = vmatpush.msra.mxu0 0.0
  %1216 = vmatpush.msra.mxu0 %v1200
  %1217 = vmatpush.msra.mxu0 %v1194
  %1218 = vmatmul.f32.gmra.mxu0 %v1197
  %v1219 = vpop.f32.mrf.mxu0
  %v1220 = vadd.f32 0.0, %v1219
  %1221 = vdwg.mxu0
  %v1222 = vadd.f32 %v1191, %v1220
  %v1223 = vxor.u32 %v1222, 2147483648
  %v1224 = vmul.f32 %v1223, 1.442695
  %v1225 = vpow.pop %v1224
  %v1226 = vadd.f32 %v1225, 1.0
  %v1227 = vrcp.pop %v1226
  %v1228 = vmul.f32 %v1226, %v1227
  %v1229 = vsub.f32 1.0, %v1228
  %v1230 = vmul.f32 %v1227, %v1229
  %v1231 = vadd.f32 %v1227, %v1230
  %vm1232 = vweird.f32 %v1226
  %vm1233 = vweird.f32 %v1227
  %vm1234 = vmor %vm1232, %vm1233
  %v1235 = vsel %vm1234, %v1227, %v1231
  %v1236 = vand.u32 2147483647, %v1226
  %vm1237 = vcmp.eq.f32.partialorder %v1236, 8.507059e+37
  %v1238 = vand.u32 %v1226, 2147483648
  %v1239 = vor.u32 1.1754944e-38, %v1238
  %v1240 = vsel %vm1237, %v1239, %v1235
  %v1241 = vmul.f32 1.0, %v1240
  %v1242 = vtanh.pop %v1222
  %1244 = vrot.lane.b32.xlu0 %v1193, 15
  %v1245 = vpop.permute.xlu0 %1244
  %v1247 = vmul.f32 %v1241, %v1245
  %1249 = vrot.lane.b32.xlu0 %v1242, 98
  %v1250 = vpop.permute.xlu0 %1249
  %v1252 = vmul.f32 %v1241, %v1250
  %1254 = vrot.lane.b32.xlu0 %v1252, 15
  %v1255 = vpop.permute.xlu0 %1254
  %v1257 = vadd.f32 %v1247, %v1255
  %v1258 = vtanh.pop %v1257
  %1260 = vrot.lane.b32.xlu0 %v1258, 30
  %v1261 = vpop.permute.xlu0 %1260
  %v1263 = vmul.f32 %v1241, %v1261
  %1265 = vrot.lane.b32.xlu0 %v1263, 83
  %v1266 = vpop.permute.xlu0 %1265
  %1268 = vst.msk [vmem:[#allocation4] sm:$0x3] %vm132, %v1266
  %1270 = vrot.lane.b32.xlu0 %v1257, 113
  %v1271 = vpop.permute.xlu0 %1270
  %1273 = vst.msk [vmem:[#allocation5] sm:$0x3] %vm132, %v1271
  %1274 = vst.msk [vmem:[#allocation6 + $0xa] sm:$0x3] %vm132, %v1266
  %v1275 = vld [vmem:[#allocation7 + $0xc] sm:$0x3]
  %v1276 = vld [vmem:[#allocation4] sm:$0x3]
  %v1277 = vld [vmem:[#allocation5] sm:$0x3]
  %v1278 = vld [vmem:[%s3] sm:$0xff]
  %v1279 = vld [vmem:[%s3 + $0x8] sm:$0x7f]
  %v1281 = vsel %vm58, %v1276, 0
  %v1284 = vsel %vm62, %v1279, 0
  %1286 = vmatpush.msra.mxu0 0.0
  %1287 = vmatpush.msra.mxu0 0.0
  %1288 = vmatpush.msra.mxu0 0.0
  %1289 = vmatpush.msra.mxu0 0.0
  %1290 = vmatpush.msra.mxu0 0.0
  %1291 = vmatpush.msra.mxu0 0.0
  %1292 = vmatpush.msra.mxu0 0.0
  %1293 = vmatpush.msra.mxu0 0.0
  %1294 = vmatpush.msra.mxu0 0.0
  %1295 = vmatpush.msra.mxu0 0.0
  %1296 = vmatpush.msra.mxu0 0.0
  %1297 = vmatpush.msra.mxu0 0.0
  %1298 = vmatpush.msra.mxu0 0.0
  %1299 = vmatpush.msra.mxu0 0.0
  %1300 = vmatpush.msra.mxu0 %v1284
  %1301 = vmatpush.msra.mxu0 %v1278
  %1302 = vmatmul.f32.gmra.mxu0 %v1281
  %v1303 = vpop.f32.mrf.mxu0
  %v1304 = vadd.f32 0.0, %v1303
  %1305 = vdwg.mxu0
  %v1306 = vadd.f32 %v1275, %v1304
  %v1307 = vxor.u32 %v1306, 2147483648
  %v1308 = vmul.f32 %v1307, 1.442695
  %v1309 = vpow.pop %v1308
  %v1310 = vadd.f32 %v1309, 1.0
  %v1311 = vrcp.pop %v1310
  %v1312 = vmul.f32 %v1310, %v1311
  %v1313 = vsub.f32 1.0, %v1312
  %v1314 = vmul.f32 %v1311, %v1313
  %v1315 = vadd.f32 %v1311, %v1314
  %vm1316 = vweird.f32 %v1310
  %vm1317 = vweird.f32 %v1311
  %vm1318 = vmor %vm1316, %vm1317
  %v1319 = vsel %vm1318, %v1311, %v1315
  %v1320 = vand.u32 2147483647, %v1310
  %vm1321 = vcmp.eq.f32.partialorder %v1320, 8.507059e+37
  %v1322 = vand.u32 %v1310, 2147483648
  %v1323 = vor.u32 1.1754944e-38, %v1322
  %v1324 = vsel %vm1321, %v1323, %v1319
  %v1325 = vmul.f32 1.0, %v1324
  %v1326 = vtanh.pop %v1306
  %1328 = vrot.lane.b32.xlu0 %v1277, 15
  %v1329 = vpop.permute.xlu0 %1328
  %v1331 = vmul.f32 %v1325, %v1329
  %1333 = vrot.lane.b32.xlu0 %v1326, 98
  %v1334 = vpop.permute.xlu0 %1333
  %v1336 = vmul.f32 %v1325, %v1334
  %1338 = vrot.lane.b32.xlu0 %v1336, 15
  %v1339 = vpop.permute.xlu0 %1338
  %v1341 = vadd.f32 %v1331, %v1339
  %v1342 = vtanh.pop %v1341
  %1344 = vrot.lane.b32.xlu0 %v1342, 30
  %v1345 = vpop.permute.xlu0 %1344
  %v1347 = vmul.f32 %v1325, %v1345
  %1349 = vrot.lane.b32.xlu0 %v1347, 83
  %v1350 = vpop.permute.xlu0 %1349
  %1352 = vst.msk [vmem:[#allocation4] sm:$0x3] %vm132, %v1350
  %1354 = vrot.lane.b32.xlu0 %v1341, 113
  %v1355 = vpop.permute.xlu0 %1354
  %1357 = vst.msk [vmem:[#allocation5] sm:$0x3] %vm132, %v1355
  %1358 = vst.msk [vmem:[#allocation6 + $0xc] sm:$0x3] %vm132, %v1350
  %v1359 = vld [vmem:[#allocation7 + $0xe] sm:$0x3]
  %v1360 = vld [vmem:[#allocation4] sm:$0x3]
  %v1361 = vld [vmem:[#allocation5] sm:$0x3]
  %v1362 = vld [vmem:[%s3] sm:$0xff]
  %v1363 = vld [vmem:[%s3 + $0x8] sm:$0x7f]
  %v1365 = vsel %vm58, %v1360, 0
  %v1368 = vsel %vm62, %v1363, 0
  %1370 = vmatpush.msra.mxu0 0.0
  %1371 = vmatpush.msra.mxu0 0.0
  %1372 = vmatpush.msra.mxu0 0.0
  %1373 = vmatpush.msra.mxu0 0.0
  %1374 = vmatpush.msra.mxu0 0.0
  %1375 = vmatpush.msra.mxu0 0.0
  %1376 = vmatpush.msra.mxu0 0.0
  %1377 = vmatpush.msra.mxu0 0.0
  %1378 = vmatpush.msra.mxu0 0.0
  %1379 = vmatpush.msra.mxu0 0.0
  %1380 = vmatpush.msra.mxu0 0.0
  %1381 = vmatpush.msra.mxu0 0.0
  %1382 = vmatpush.msra.mxu0 0.0
  %1383 = vmatpush.msra.mxu0 0.0
  %1384 = vmatpush.msra.mxu0 %v1368
  %1385 = vmatpush.msra.mxu0 %v1362
  %1386 = vmatmul.f32.gmra.mxu0 %v1365
  %v1387 = vpop.f32.mrf.mxu0
  %v1388 = vadd.f32 0.0, %v1387
  %1389 = vdwg.mxu0
  %v1390 = vadd.f32 %v1359, %v1388
  %v1391 = vxor.u32 %v1390, 2147483648
  %v1392 = vmul.f32 %v1391, 1.442695
  %v1393 = vpow.pop %v1392
  %v1394 = vadd.f32 %v1393, 1.0
  %v1395 = vrcp.pop %v1394
  %v1396 = vmul.f32 %v1394, %v1395
  %v1397 = vsub.f32 1.0, %v1396
  %v1398 = vmul.f32 %v1395, %v1397
  %v1399 = vadd.f32 %v1395, %v1398
  %vm1400 = vweird.f32 %v1394
  %vm1401 = vweird.f32 %v1395
  %vm1402 = vmor %vm1400, %vm1401
  %v1403 = vsel %vm1402, %v1395, %v1399
  %v1404 = vand.u32 2147483647, %v1394
  %vm1405 = vcmp.eq.f32.partialorder %v1404, 8.507059e+37
  %v1406 = vand.u32 %v1394, 2147483648
  %v1407 = vor.u32 1.1754944e-38, %v1406
  %v1408 = vsel %vm1405, %v1407, %v1403
  %v1409 = vmul.f32 1.0, %v1408
  %v1410 = vtanh.pop %v1390
  %1412 = vrot.lane.b32.xlu0 %v1361, 15
  %v1413 = vpop.permute.xlu0 %1412
  %v1415 = vmul.f32 %v1409, %v1413
  %1417 = vrot.lane.b32.xlu0 %v1410, 98
  %v1418 = vpop.permute.xlu0 %1417
  %v1420 = vmul.f32 %v1409, %v1418
  %1422 = vrot.lane.b32.xlu0 %v1420, 15
  %v1423 = vpop.permute.xlu0 %1422
  %v1425 = vadd.f32 %v1415, %v1423
  %v1426 = vtanh.pop %v1425
  %1428 = vrot.lane.b32.xlu0 %v1426, 30
  %v1429 = vpop.permute.xlu0 %1428
  %v1431 = vmul.f32 %v1409, %v1429
  %1433 = vrot.lane.b32.xlu0 %v1431, 83
  %v1434 = vpop.permute.xlu0 %1433
  %1436 = vst.msk [vmem:[#allocation4] sm:$0x3] %vm132, %v1434
  %1438 = vrot.lane.b32.xlu0 %v1425, 113
  %v1439 = vpop.permute.xlu0 %1438
  %1441 = vst.msk [vmem:[#allocation5] sm:$0x3] %vm132, %v1439
  %1442 = vst.msk [vmem:[#allocation6 + $0xe] sm:$0x3] %vm132, %v1434
  %v1443 = vld [vmem:[#allocation6] sm:$0xff]
  %v1444 = vld [vmem:[#allocation6 + $0x8] sm:$0xff]
  %v1445 = vld [vmem:[%s7] sm:$0xff]
  %v1446 = vld [vmem:[%s7 + $0x8] sm:$0x7f]
  %v1447 = vld [vmem:[%s8] sm:$0x1]
  %v1449 = vperm.slane %v1447, 0
  %v1452 = vsel %vm58, %v1443, 0
  %v1455 = vsel %vm58, %v1444, 0
  %v1458 = vsel %vm62, %v1446, 0
  %1460 = vmatpush.msra.mxu0 0.0
  %1461 = vmatpush.msra.mxu0 0.0
  %1462 = vmatpush.msra.mxu0 0.0
  %1463 = vmatpush.msra.mxu0 0.0
  %1464 = vmatpush.msra.mxu0 0.0
  %1465 = vmatpush.msra.mxu0 0.0
  %1466 = vmatpush.msra.mxu0 0.0
  %1467 = vmatpush.msra.mxu0 0.0
  %1468 = vmatpush.msra.mxu0 0.0
  %1469 = vmatpush.msra.mxu0 0.0
  %1470 = vmatpush.msra.mxu0 0.0
  %1471 = vmatpush.msra.mxu0 0.0
  %1472 = vmatpush.msra.mxu0 0.0
  %1473 = vmatpush.msra.mxu0 0.0
  %1474 = vmatpush.msra.mxu0 %v1458
  %1475 = vmatpush.msra.mxu0 %v1445
  %1476 = vmatmul.f32.gmra.mxu0 %v1452
  %v1477 = vpop.f32.mrf.mxu0
  %v1478 = vadd.f32 %v1449, %v1477
  %1479 = vmatmul.f32.gmra.mxu0 %v1455
  %v1480 = vpop.f32.mrf.mxu0
  %v1481 = vadd.f32 %v1449, %v1480
  %1482 = vdwg.mxu0
  %v1483 = vmax.f32 %v1478, 0.0
  %v1484 = vmax.f32 %v1481, 0.0
  %v1485 = vld [vmem:[%s9] sm:$0x1f]
  %v1486 = vld [vmem:[%s10] sm:$0x1]
  %v1488 = vperm.slane %v1486, 0
  %vm1490 = vcmask 39936
  %v1492 = vsel %vm1490, %v1483, 0
  %v1495 = vsel %vm1490, %v1484, 0
  %vm1497 = vcmask 1044480
  %v1499 = vsel %vm1497, %v1485, 0
  %1501 = vmatpush.msra.mxu0 0.0
  %1502 = vmatpush.msra.mxu0 0.0
  %1503 = vmatpush.msra.mxu0 0.0
  %1504 = vmatpush.msra.mxu0 0.0
  %1505 = vmatpush.msra.mxu0 0.0
  %1506 = vmatpush.msra.mxu0 0.0
  %1507 = vmatpush.msra.mxu0 0.0
  %1508 = vmatpush.msra.mxu0 0.0
  %1509 = vmatpush.msra.mxu0 0.0
  %1510 = vmatpush.msra.mxu0 0.0
  %1511 = vmatpush.msra.mxu0 0.0
  %1512 = vmatpush.msra.mxu0 0.0
  %1513 = vmatpush.msra.mxu0 0.0
  %1514 = vmatpush.msra.mxu0 0.0
  %1515 = vmatpush.msra.mxu0 0.0
  %1516 = vmatpush.msra.mxu0 %v1499
  %1517 = vmatmul.f32.gmra.mxu0 %v1492
  %v1518 = vpop.f32.mrf.mxu0
  %v1519 = vadd.f32 %v1488, %v1518
  %1520 = vmatmul.f32.gmra.mxu0 %v1495
  %v1521 = vpop.f32.mrf.mxu0
  %v1522 = vadd.f32 %v1488, %v1521
  %1523 = vdwg.mxu0
  %vm1524 = vcmask 15360
  %1525 = vst.msk [vmem:[%s11] sm:$0xff] %vm1524, %v1519
  %1526 = vst.msk [vmem:[%s11 + $0x8] sm:$0xff] %vm1524, %v1522
  // Predicated region
  $region50: #{forward.3} parent=0 // pred_check
    _
  $region51: #{forward.3} parent=0 // pred_check_branch
    %1528 = sbr.rel (0) target = $region53
  $region52: #{forward.3} parent=0 // pred_region
    _
  $region53: #{forward.3} parent=0 // pred_fallthru
    _
  // Predicated region
  $region54: #{forward.3} parent=0 // pred_check
    _
  $region55: #{forward.3} parent=0 // pred_check_branch
    %1530 = sbr.rel (0) target = $region57
  $region56: #{forward.3} parent=0 // pred_region
    _
  $region57: #{forward.3} parent=0 // pred_fallthru
    _

// kernel: forward.2
$region0: #{forward.2}
  #allocation0 [shape = 'u32[]', space=smem, size = 0x4, offset = 0x4, fixed_abs, tag = 'smem constant byte address 0x4 - core index']
  #allocation1 [shape = 'u32[72,128]{1,0:T(1,128)}', space=vmem, size = 0x9000, scoped, tag = 'internal scratch']
  #allocation2 [shape = 'bf16[12,200]{1,0:T(8,128)(2,1)}', space=vmem, size = 0x2000, scoped, tag = 'scratch operand']
  %s0 = inlined_call_operand.vmem [shape: bf16[2,12,1000], index: 0, kind: input, shape index: {}]
  %s1 = inlined_call_operand.vmem [shape: bf16[5,1000,200], index: 1, kind: input, shape index: {}]
  %s2 = inlined_call_operand.vmem [shape: f32[1,200], index: 2, kind: input, shape index: {}]
  %s3 = inlined_call_operand.vmem [shape: f32[1,200], index: 3, kind: input, shape index: {}]
  %s4 = inlined_call_operand.vmem [shape: bf16[5,200,30], index: 4, kind: input, shape index: {}]
  %s5 = inlined_call_operand.vmem [shape: f32[1,30], index: 5, kind: input, shape index: {}]
  %s6 = inlined_call_operand.vmem [shape: f32[1,30], index: 6, kind: input, shape index: {}]
  %s7 = inlined_call_operand.vmem [shape: f32[30,60], index: 7, kind: input, shape index: {}]
  %s8 = inlined_call_operand.vmem [shape: f32[1,60], index: 8, kind: input, shape index: {}]
  %s9 = inlined_call_operand.vmem [shape: f32[2,8,60], index: 9, kind: output, shape index: {}]
  %s10 = sld [smem:[#allocation0]]
  $region69: #{forward.2} parent=0
    _
  %s12 = ssub.s32 1, %s10
  %s13 = scalar_select 0, %s12, %s10
  loop: start=0, step=1, limit=4
  $region2: #{forward.2} parent=0 // loop_pre_header
    _
  $region3: #{forward.2} parent=0 // loop_header
    %s15 = sphi 0, %s19
    %p16 = scmp.ge.s32.totalorder %s15, 4
    %s25 = sphi 0, %s27
    %s28 = sphi 0, %s25
    %s29 = sphi 0, %s28
    %s45 = sphi 0, %s29
    %s49 = sphi 0, %s49
    %s51 = sphi 0, %s49
    %s52 = sphi 0, %s51
    %s66 = sphi 0, %s52
    %s70 = sphi 0, %s70
    %s72 = sphi 0, %s70
    %s73 = sphi 0, %s72
    %s87 = sphi 0, %s73
    %s91 = sphi 0, %s91
    %s93 = sphi 0, %s91
    %s94 = sphi 0, %s93
    %s108 = sphi 0, %s94
    %s112 = sphi 0, %s112
    %s114 = sphi 0, %s112
    %s115 = sphi 0, %s114
    %s129 = sphi 0, %s115
    %s133 = sphi 0, %s133
    %s135 = sphi 0, %s133
    %s136 = sphi 0, %s135
    %s150 = sphi 0, %s136
    %s154 = sphi 0, %s154
    %s156 = sphi 0, %s154
    %s157 = sphi 0, %s156
    %s171 = sphi 0, %s157
    %s175 = sphi 0, %s175
    %s177 = sphi 0, %s175
    %s178 = sphi 0, %s177
    %s192 = sphi 0, %s178
    %s196 = sphi 0, %s196
    %s198 = sphi 0, %s196
    %s199 = sphi 0, %s198
    %s213 = sphi 0, %s199
    %s219 = sphi 0, %s221
    %s222 = sphi 0, %s219
    %s223 = sphi 0, %s222
    %s239 = sphi 0, %s223
  $region4: #{forward.2} parent=0 // loop_header_branch
    %18 = sbr.rel (%p16) target = $region8
  $region5: #{forward.2} parent=0 // loop_body
    %s20 = ssub.s32 %s15, 1
    %s21 = ssub.s32 %s15, 2
    %s22 = sadd.s32 %s15, 1
    %s23 = ssub.s32 %s15, %s22
    %p24 = scmp.eq.s32.totalorder %s23, 0
    %s26 = sadd.s32 %s25, 1
    %s27 = scalar_select %p24, %s25, %s26
    %p30 = pneg %p24
    %p31 = scmp.eq.s32.totalorder %s15, 1
    %p32 = por %p30, %p31
    %p33 = scmp.ne.s32.totalorder %s25, %s28
    %p34 = scmp.eq.s32.totalorder %s15, 0
    %p35 = por %p33, %p34
    %p36 = scmp.ne.s32.totalorder %s25, %s28
    %p37 = scmp.eq.s32.totalorder %s20, 1
    %p38 = por %p36, %p37
    %p39 = scmp.ne.s32.totalorder %s28, %s29
    %p40 = scmp.eq.s32.totalorder %s20, 0
    %p41 = por %p39, %p40
    %p42 = scmp.ne.s32.totalorder %s28, %s29
    %p43 = scmp.eq.s32.totalorder %s21, 1
    %p44 = por %p42, %p43
    %p46 = scmp.ne.s32.totalorder %s29, %s45
    %p47 = scmp.eq.s32.totalorder %s21, 0
    %p48 = por %p46, %p47
    %s50 = sadd.s32 %s49, 1
    %p53 = scmp.eq.s32.totalorder %s15, 1
    %p54 = scmp.ne.s32.totalorder %s49, %s51
    %p55 = scmp.eq.s32.totalorder %s15, 0
    %p56 = por %p54, %p55
    %p57 = scmp.ne.s32.totalorder %s49, %s51
    %p58 = scmp.eq.s32.totalorder %s20, 1
    %p59 = por %p57, %p58
    %p60 = scmp.ne.s32.totalorder %s51, %s52
    %p61 = scmp.eq.s32.totalorder %s20, 0
    %p62 = por %p60, %p61
    %p63 = scmp.ne.s32.totalorder %s51, %s52
    %p64 = scmp.eq.s32.totalorder %s21, 1
    %p65 = por %p63, %p64
    %p67 = scmp.ne.s32.totalorder %s52, %s66
    %p68 = scmp.eq.s32.totalorder %s21, 0
    %p69 = por %p67, %p68
    %s71 = sadd.s32 %s70, 1
    %p74 = scmp.eq.s32.totalorder %s15, 1
    %p75 = scmp.ne.s32.totalorder %s70, %s72
    %p76 = scmp.eq.s32.totalorder %s15, 0
    %p77 = por %p75, %p76
    %p78 = scmp.ne.s32.totalorder %s70, %s72
    %p79 = scmp.eq.s32.totalorder %s20, 1
    %p80 = por %p78, %p79
    %p81 = scmp.ne.s32.totalorder %s72, %s73
    %p82 = scmp.eq.s32.totalorder %s20, 0
    %p83 = por %p81, %p82
    %p84 = scmp.ne.s32.totalorder %s72, %s73
    %p85 = scmp.eq.s32.totalorder %s21, 1
    %p86 = por %p84, %p85
    %p88 = scmp.ne.s32.totalorder %s73, %s87
    %p89 = scmp.eq.s32.totalorder %s21, 0
    %p90 = por %p88, %p89
    %s92 = sadd.s32 %s91, 1
    %p95 = scmp.eq.s32.totalorder %s15, 1
    %p96 = scmp.ne.s32.totalorder %s91, %s93
    %p97 = scmp.eq.s32.totalorder %s15, 0
    %p98 = por %p96, %p97
    %p99 = scmp.ne.s32.totalorder %s91, %s93
    %p100 = scmp.eq.s32.totalorder %s20, 1
    %p101 = por %p99, %p100
    %p102 = scmp.ne.s32.totalorder %s93, %s94
    %p103 = scmp.eq.s32.totalorder %s20, 0
    %p104 = por %p102, %p103
    %p105 = scmp.ne.s32.totalorder %s93, %s94
    %p106 = scmp.eq.s32.totalorder %s21, 1
    %p107 = por %p105, %p106
    %p109 = scmp.ne.s32.totalorder %s94, %s108
    %p110 = scmp.eq.s32.totalorder %s21, 0
    %p111 = por %p109, %p110
    %s113 = sadd.s32 %s112, 1
    %p116 = scmp.eq.s32.totalorder %s15, 1
    %p117 = scmp.ne.s32.totalorder %s112, %s114
    %p118 = scmp.eq.s32.totalorder %s15, 0
    %p119 = por %p117, %p118
    %p120 = scmp.ne.s32.totalorder %s112, %s114
    %p121 = scmp.eq.s32.totalorder %s20, 1
    %p122 = por %p120, %p121
    %p123 = scmp.ne.s32.totalorder %s114, %s115
    %p124 = scmp.eq.s32.totalorder %s20, 0
    %p125 = por %p123, %p124
    %p126 = scmp.ne.s32.totalorder %s114, %s115
    %p127 = scmp.eq.s32.totalorder %s21, 1
    %p128 = por %p126, %p127
    %p130 = scmp.ne.s32.totalorder %s115, %s129
    %p131 = scmp.eq.s32.totalorder %s21, 0
    %p132 = por %p130, %p131
    %s134 = sadd.s32 %s133, 1
    %p137 = scmp.eq.s32.totalorder %s15, 1
    %p138 = scmp.ne.s32.totalorder %s133, %s135
    %p139 = scmp.eq.s32.totalorder %s15, 0
    %p140 = por %p138, %p139
    %p141 = scmp.ne.s32.totalorder %s133, %s135
    %p142 = scmp.eq.s32.totalorder %s20, 1
    %p143 = por %p141, %p142
    %p144 = scmp.ne.s32.totalorder %s135, %s136
    %p145 = scmp.eq.s32.totalorder %s20, 0
    %p146 = por %p144, %p145
    %p147 = scmp.ne.s32.totalorder %s135, %s136
    %p148 = scmp.eq.s32.totalorder %s21, 1
    %p149 = por %p147, %p148
    %p151 = scmp.ne.s32.totalorder %s136, %s150
    %p152 = scmp.eq.s32.totalorder %s21, 0
    %p153 = por %p151, %p152
    %s155 = sadd.s32 %s154, 1
    %p158 = scmp.eq.s32.totalorder %s15, 1
    %p159 = scmp.ne.s32.totalorder %s154, %s156
    %p160 = scmp.eq.s32.totalorder %s15, 0
    %p161 = por %p159, %p160
    %p162 = scmp.ne.s32.totalorder %s154, %s156
    %p163 = scmp.eq.s32.totalorder %s20, 1
    %p164 = por %p162, %p163
    %p165 = scmp.ne.s32.totalorder %s156, %s157
    %p166 = scmp.eq.s32.totalorder %s20, 0
    %p167 = por %p165, %p166
    %p168 = scmp.ne.s32.totalorder %s156, %s157
    %p169 = scmp.eq.s32.totalorder %s21, 1
    %p170 = por %p168, %p169
    %p172 = scmp.ne.s32.totalorder %s157, %s171
    %p173 = scmp.eq.s32.totalorder %s21, 0
    %p174 = por %p172, %p173
    %s176 = sadd.s32 %s175, 1
    %p179 = scmp.eq.s32.totalorder %s15, 1
    %p180 = scmp.ne.s32.totalorder %s175, %s177
    %p181 = scmp.eq.s32.totalorder %s15, 0
    %p182 = por %p180, %p181
    %p183 = scmp.ne.s32.totalorder %s175, %s177
    %p184 = scmp.eq.s32.totalorder %s20, 1
    %p185 = por %p183, %p184
    %p186 = scmp.ne.s32.totalorder %s177, %s178
    %p187 = scmp.eq.s32.totalorder %s20, 0
    %p188 = por %p186, %p187
    %p189 = scmp.ne.s32.totalorder %s177, %s178
    %p190 = scmp.eq.s32.totalorder %s21, 1
    %p191 = por %p189, %p190
    %p193 = scmp.ne.s32.totalorder %s178, %s192
    %p194 = scmp.eq.s32.totalorder %s21, 0
    %p195 = por %p193, %p194
    %s197 = sadd.s32 %s196, 1
    %p200 = scmp.eq.s32.totalorder %s15, 1
    %p201 = scmp.ne.s32.totalorder %s196, %s198
    %p202 = scmp.eq.s32.totalorder %s15, 0
    %p203 = por %p201, %p202
    %p204 = scmp.ne.s32.totalorder %s196, %s198
    %p205 = scmp.eq.s32.totalorder %s20, 1
    %p206 = por %p204, %p205
    %p207 = scmp.ne.s32.totalorder %s198, %s199
    %p208 = scmp.eq.s32.totalorder %s20, 0
    %p209 = por %p207, %p208
    %p210 = scmp.ne.s32.totalorder %s198, %s199
    %p211 = scmp.eq.s32.totalorder %s21, 1
    %p212 = por %p210, %p211
    %p214 = scmp.ne.s32.totalorder %s199, %s213
    %p215 = scmp.eq.s32.totalorder %s21, 0
    %p216 = por %p214, %p215
    %s217 = ssub.s32 %s15, %s22
    %p218 = scmp.eq.s32.totalorder %s217, 0
    %s220 = sadd.s32 %s219, 1
    %s221 = scalar_select %p218, %s219, %s220
    %p224 = pneg %p218
    %p225 = scmp.eq.s32.totalorder %s15, 1
    %p226 = por %p224, %p225
    %p227 = scmp.ne.s32.totalorder %s219, %s222
    %p228 = scmp.eq.s32.totalorder %s15, 0
    %p229 = por %p227, %p228
    %p230 = scmp.ne.s32.totalorder %s219, %s222
    %p231 = scmp.eq.s32.totalorder %s20, 1
    %p232 = por %p230, %p231
    %p233 = scmp.ne.s32.totalorder %s222, %s223
    %p234 = scmp.eq.s32.totalorder %s20, 0
    %p235 = por %p233, %p234
    %p236 = scmp.ne.s32.totalorder %s222, %s223
    %p237 = scmp.eq.s32.totalorder %s21, 1
    %p238 = por %p236, %p237
    %p240 = scmp.ne.s32.totalorder %s223, %s239
    %p241 = scmp.eq.s32.totalorder %s21, 0
    %p242 = por %p240, %p241
    %p243 = scmp.le.s32.totalorder 1, %s15
    %p244 = scmp.lt.s32.totalorder %s15, 3
    %p245 = pnand %p243, %p244
    %p246 = pneg %p245
    // Predicated region
    $region9: #{forward.2} parent=5 // pred_check
      _
    $region10: #{forward.2} parent=5 // pred_check_branch
      %248 = sbr.rel (%p245) target = $region12
    $region11: #{forward.2} parent=5 // pred_region
      %s249 = ssub.s32 %s15, 1
      // Predicated region
      $region13: #{forward.2} parent=11 // pred_check
        %p250 = pneg %p62
      $region14: #{forward.2} parent=11 // pred_check_branch
        %252 = sbr.rel (%p250) target = $region16
      $region15: #{forward.2} parent=11 // pred_region
        _
      $region16: #{forward.2} parent=11 // pred_fallthru
        _
      // Predicated region
      $region17: #{forward.2} parent=11 // pred_check
        %p253 = pneg %p83
      $region18: #{forward.2} parent=11 // pred_check_branch
        %255 = sbr.rel (%p253) target = $region20
      $region19: #{forward.2} parent=11 // pred_region
        _
      $region20: #{forward.2} parent=11 // pred_fallthru
        _
      // Predicated region
      $region21: #{forward.2} parent=11 // pred_check
        %p256 = pneg %p104
      $region22: #{forward.2} parent=11 // pred_check_branch
        %258 = sbr.rel (%p256) target = $region24
      $region23: #{forward.2} parent=11 // pred_region
        _
      $region24: #{forward.2} parent=11 // pred_fallthru
        _
      // Predicated region
      $region25: #{forward.2} parent=11 // pred_check
        %p259 = pneg %p125
      $region26: #{forward.2} parent=11 // pred_check_branch
        %261 = sbr.rel (%p259) target = $region28
      $region27: #{forward.2} parent=11 // pred_region
        _
      $region28: #{forward.2} parent=11 // pred_fallthru
        _
      // Predicated region
      $region29: #{forward.2} parent=11 // pred_check
        %p262 = pneg %p146
      $region30: #{forward.2} parent=11 // pred_check_branch
        %264 = sbr.rel (%p262) target = $region32
      $region31: #{forward.2} parent=11 // pred_region
        _
      $region32: #{forward.2} parent=11 // pred_fallthru
        _
      // Predicated region
      $region33: #{forward.2} parent=11 // pred_check
        %p265 = pneg %p167
      $region34: #{forward.2} parent=11 // pred_check_branch
        %267 = sbr.rel (%p265) target = $region36
      $region35: #{forward.2} parent=11 // pred_region
        _
      $region36: #{forward.2} parent=11 // pred_fallthru
        _
      // Predicated region
      $region37: #{forward.2} parent=11 // pred_check
        %p268 = pneg %p188
      $region38: #{forward.2} parent=11 // pred_check_branch
        %270 = sbr.rel (%p268) target = $region40
      $region39: #{forward.2} parent=11 // pred_region
        _
      $region40: #{forward.2} parent=11 // pred_fallthru
        _
      // Predicated region
      $region41: #{forward.2} parent=11 // pred_check
        %p271 = pneg %p209
      $region42: #{forward.2} parent=11 // pred_check_branch
        %273 = sbr.rel (%p271) target = $region44
      $region43: #{forward.2} parent=11 // pred_region
        _
      $region44: #{forward.2} parent=11 // pred_fallthru
        _
    $region12: #{forward.2} parent=5 // pred_fallthru
      _
    %p274 = scmp.lt.s32.totalorder %s15, 2
    // Predicated region
    $region45: #{forward.2} parent=5 // pred_check
      %p275 = pneg %p274
    $region46: #{forward.2} parent=5 // pred_check_branch
      %277 = sbr.rel (%p275) target = $region48
    $region47: #{forward.2} parent=5 // pred_region
      // Predicated region
      $region49: #{forward.2} parent=47 // pred_check
        %p278 = pneg %p35
      $region50: #{forward.2} parent=47 // pred_check_branch
        %280 = sbr.rel (%p278) target = $region52
      $region51: #{forward.2} parent=47 // pred_region
        %p281 = scmp.lt.s32.totalorder %s15, 1
        %s282 = scalar_select %p281, %s15, 1
        %s283 = smul.addr %s282, 16
        %s284 = smul.addr %s283, 4
        %s285 = scalar_lea.vmem %s0, %s284
      $region52: #{forward.2} parent=47 // pred_fallthru
        _
    $region48: #{forward.2} parent=5 // pred_fallthru
      _
    %p286 = scmp.le.s32.totalorder 1, %s15
    %p287 = scmp.lt.s32.totalorder %s15, 3
    %p288 = pnand %p286, %p287
    %p289 = pneg %p288
    // Predicated region
    $region53: #{forward.2} parent=5 // pred_check
      _
    $region54: #{forward.2} parent=5 // pred_check_branch
      %291 = sbr.rel (%p288) target = $region56
    $region55: #{forward.2} parent=5 // pred_region
      %s292 = ssub.s32 %s15, 1
      %p293 = scmp.lt.s32.totalorder %s20, 1
      %s294 = scalar_select %p293, %s20, 1
      %s295 = smul.addr %s294, 16
      %s296 = smul.addr %s295, 4
      %s297 = scalar_lea.vmem %s0, %s296
      %p298 = pneg %p41
      %p299 = pneg %p38
      %p300 = pneg %p62
      %p301 = pneg %p59
      %p302 = pneg %p83
      %p303 = pneg %p80
      %p304 = pneg %p104
      %p305 = pneg %p101
      %p306 = pneg %p125
      %p307 = pneg %p122
      %p308 = pneg %p146
      %p309 = pneg %p143
      %p310 = pneg %p167
      %p311 = pneg %p164
      %p312 = pneg %p188
      %p313 = pneg %p185
      %p314 = pneg %p209
      %p315 = pneg %p206
      %p316 = pneg %p235
      %p317 = pneg %p232
      %p318 = scmp.lt.s32.totalorder %s20, 1
      %s319 = scalar_select %p318, %s20, 1
      %s320 = smul.addr %s319, 8
      %s321 = scalar_lea.vmem %s9, %s320
      %p322 = scmp.lt.s32.totalorder %s20, 1
      %s323 = scalar_select %p322, %s20, 1
      %s324 = smul.addr %s323, 16
      %s325 = smul.addr %s324, 4
      %s326 = scalar_lea.vmem %s0, %s325
      %p327 = scmp.lt.s32.totalorder %s20, 1
      %s328 = scalar_select %p327, %s20, 1
      %s329 = smul.addr %s328, 8
      %s330 = scalar_lea.vmem %s9, %s329
      %v332 = vld [vmem:[%s326] sm:$0xff]
      %v333 = vld [vmem:[%s326 + $0x8] sm:$0xff]
      %v334 = vld [vmem:[%s326 + $0x10] sm:$0xff]
      %v335 = vld [vmem:[%s326 + $0x18] sm:$0xff]
      %v336 = vld [vmem:[%s1] sm:$0xff]
      %v337 = vld [vmem:[%s1 + $0x8] sm:$0xff]
      %v338 = vld [vmem:[%s1 + $0x10] sm:$0xff]
      %v339 = vld [vmem:[%s1 + $0x18] sm:$0xff]
      %v340 = vld [vmem:[%s1 + $0x20] sm:$0xff]
      %v341 = vld [vmem:[%s1 + $0x28] sm:$0xff]
      %v342 = vld [vmem:[%s1 + $0x30] sm:$0xff]
      %v343 = vld [vmem:[%s1 + $0x38] sm:$0xff]
      %v344 = vld [vmem:[%s1 + $0x40] sm:$0xff]
      %v345 = vld [vmem:[%s1 + $0x48] sm:$0xff]
      %v346 = vld [vmem:[%s1 + $0x50] sm:$0xff]
      %v347 = vld [vmem:[%s1 + $0x58] sm:$0xff]
      %v348 = vld [vmem:[%s1 + $0x60] sm:$0xff]
      %v349 = vld [vmem:[%s1 + $0x68] sm:$0xff]
      %v350 = vld [vmem:[%s1 + $0x70] sm:$0xff]
      %v351 = vld [vmem:[%s1 + $0x78] sm:$0xff]
      %v352 = vld [vmem:[%s1 + $0x80] sm:$0xff]
      %v353 = vld [vmem:[%s1 + $0x88] sm:$0xff]
      %v354 = vld [vmem:[%s1 + $0x90] sm:$0xff]
      %v355 = vld [vmem:[%s1 + $0x98] sm:$0xff]
      %v356 = vld [vmem:[%s1 + $0xa0] sm:$0xff]
      %v357 = vld [vmem:[%s1 + $0xa8] sm:$0xff]
      %v358 = vld [vmem:[%s1 + $0xb0] sm:$0xff]
      %v359 = vld [vmem:[%s1 + $0xb8] sm:$0xff]
      %v360 = vld [vmem:[%s1 + $0xc0] sm:$0xff]
      %v361 = vld [vmem:[%s1 + $0xc8] sm:$0xff]
      %v362 = vld [vmem:[%s1 + $0xd0] sm:$0xff]
      %v363 = vld [vmem:[%s1 + $0xd8] sm:$0xff]
      %v364 = vld [vmem:[%s1 + $0xe0] sm:$0xff]
      %v365 = vld [vmem:[%s1 + $0xe8] sm:$0xff]
      %v366 = vld [vmem:[%s1 + $0xf0] sm:$0xff]
      %v367 = vld [vmem:[%s1 + $0xf8] sm:$0xff]
      %v368 = vld [vmem:[%s1 + $0x100] sm:$0xff]
      %v369 = vld [vmem:[%s1 + $0x108] sm:$0xff]
      %v370 = vld [vmem:[%s1 + $0x110] sm:$0xff]
      %v371 = vld [vmem:[%s1 + $0x118] sm:$0xff]
      %v372 = vld [vmem:[%s1 + $0x120] sm:$0xff]
      %v373 = vld [vmem:[%s1 + $0x128] sm:$0xff]
      %v374 = vld [vmem:[%s1 + $0x130] sm:$0xff]
      %v375 = vld [vmem:[%s1 + $0x138] sm:$0xff]
      %v376 = vld [vmem:[%s1 + $0x140] sm:$0xff]
      %v377 = vld [vmem:[%s1 + $0x148] sm:$0xff]
      %v378 = vld [vmem:[%s1 + $0x150] sm:$0xff]
      %v379 = vld [vmem:[%s1 + $0x158] sm:$0xff]
      %v380 = vld [vmem:[%s1 + $0x160] sm:$0xff]
      %v381 = vld [vmem:[%s1 + $0x168] sm:$0xff]
      %v382 = vld [vmem:[%s1 + $0x170] sm:$0xff]
      %v383 = vld [vmem:[%s1 + $0x178] sm:$0xff]
      %v384 = vld [vmem:[%s1 + $0x180] sm:$0xff]
      %v385 = vld [vmem:[%s1 + $0x188] sm:$0xff]
      %v386 = vld [vmem:[%s1 + $0x190] sm:$0xff]
      %v387 = vld [vmem:[%s1 + $0x198] sm:$0xff]
      %v388 = vld [vmem:[%s1 + $0x1a0] sm:$0xff]
      %v389 = vld [vmem:[%s1 + $0x1a8] sm:$0xff]
      %v390 = vld [vmem:[%s1 + $0x1b0] sm:$0xff]
      %v391 = vld [vmem:[%s1 + $0x1b8] sm:$0xff]
      %v392 = vld [vmem:[%s1 + $0x1c0] sm:$0xff]
      %v393 = vld [vmem:[%s1 + $0x1c8] sm:$0xff]
      %v394 = vld [vmem:[%s1 + $0x1d0] sm:$0xff]
      %v395 = vld [vmem:[%s1 + $0x1d8] sm:$0xff]
      %v396 = vld [vmem:[%s1 + $0x1e0] sm:$0xff]
      %v397 = vld [vmem:[%s1 + $0x1e8] sm:$0xff]
      %v398 = vld [vmem:[%s1 + $0x1f0] sm:$0xff]
      %v399 = vld [vmem:[%s1 + $0x1f8] sm:$0xff]
      %v400 = vld [vmem:[%s1 + $0x200] sm:$0xff]
      %v401 = vld [vmem:[%s1 + $0x208] sm:$0xff]
      %v402 = vld [vmem:[%s1 + $0x210] sm:$0xff]
      %v403 = vld [vmem:[%s1 + $0x218] sm:$0xff]
      %v404 = vld [vmem:[%s1 + $0x220] sm:$0xff]
      %v405 = vld [vmem:[%s1 + $0x228] sm:$0xff]
      %v406 = vld [vmem:[%s1 + $0x230] sm:$0xff]
      %v407 = vld [vmem:[%s1 + $0x238] sm:$0xff]
      %v408 = vld [vmem:[%s1 + $0x240] sm:$0xff]
      %v409 = vld [vmem:[%s1 + $0x248] sm:$0xff]
      %v410 = vld [vmem:[%s1 + $0x250] sm:$0xff]
      %v411 = vld [vmem:[%s1 + $0x258] sm:$0xff]
      %v412 = vld [vmem:[%s1 + $0x260] sm:$0xff]
      %v413 = vld [vmem:[%s1 + $0x268] sm:$0xff]
      %v414 = vld [vmem:[%s1 + $0x270] sm:$0xff]
      %v415 = vld [vmem:[%s1 + $0x278] sm:$0xff]
      %v416 = vld [vmem:[%s1 + $0x280] sm:$0xff]
      %v417 = vld [vmem:[%s1 + $0x288] sm:$0xff]
      %v418 = vld [vmem:[%s1 + $0x290] sm:$0xff]
      %v419 = vld [vmem:[%s1 + $0x298] sm:$0xff]
      %v420 = vld [vmem:[%s1 + $0x2a0] sm:$0xff]
      %v421 = vld [vmem:[%s1 + $0x2a8] sm:$0xff]
      %v422 = vld [vmem:[%s1 + $0x2b0] sm:$0xff]
      %v423 = vld [vmem:[%s1 + $0x2b8] sm:$0xff]
      %v424 = vld [vmem:[%s1 + $0x2c0] sm:$0xff]
      %v425 = vld [vmem:[%s1 + $0x2c8] sm:$0xff]
      %v426 = vld [vmem:[%s1 + $0x2d0] sm:$0xff]
      %v427 = vld [vmem:[%s1 + $0x2d8] sm:$0xff]
      %v428 = vld [vmem:[%s1 + $0x2e0] sm:$0xff]
      %v429 = vld [vmem:[%s1 + $0x2e8] sm:$0xff]
      %v430 = vld [vmem:[%s1 + $0x2f0] sm:$0xff]
      %v431 = vld [vmem:[%s1 + $0x2f8] sm:$0xff]
      %v432 = vld [vmem:[%s1 + $0x300] sm:$0xff]
      %v433 = vld [vmem:[%s1 + $0x308] sm:$0xff]
      %v434 = vld [vmem:[%s1 + $0x310] sm:$0xff]
      %v435 = vld [vmem:[%s1 + $0x318] sm:$0xff]
      %v436 = vld [vmem:[%s1 + $0x320] sm:$0xff]
      %v437 = vld [vmem:[%s1 + $0x328] sm:$0xff]
      %v438 = vld [vmem:[%s1 + $0x330] sm:$0xff]
      %v439 = vld [vmem:[%s1 + $0x338] sm:$0xff]
      %v440 = vld [vmem:[%s1 + $0x340] sm:$0xff]
      %v441 = vld [vmem:[%s1 + $0x348] sm:$0xff]
      %v442 = vld [vmem:[%s1 + $0x350] sm:$0xff]
      %v443 = vld [vmem:[%s1 + $0x358] sm:$0xff]
      %v444 = vld [vmem:[%s1 + $0x360] sm:$0xff]
      %v445 = vld [vmem:[%s1 + $0x368] sm:$0xff]
      %v446 = vld [vmem:[%s1 + $0x370] sm:$0xff]
      %v447 = vld [vmem:[%s1 + $0x378] sm:$0xff]
      %v448 = vld [vmem:[%s1 + $0x380] sm:$0xff]
      %v449 = vld [vmem:[%s1 + $0x388] sm:$0xff]
      %v450 = vld [vmem:[%s1 + $0x390] sm:$0xff]
      %v451 = vld [vmem:[%s1 + $0x398] sm:$0xff]
      %v452 = vld [vmem:[%s1 + $0x3a0] sm:$0xff]
      %v453 = vld [vmem:[%s1 + $0x3a8] sm:$0xff]
      %v454 = vld [vmem:[%s1 + $0x3b0] sm:$0xff]
      %v455 = vld [vmem:[%s1 + $0x3b8] sm:$0xff]
      %v456 = vld [vmem:[%s1 + $0x3c0] sm:$0xff]
      %v457 = vld [vmem:[%s1 + $0x3c8] sm:$0xff]
      %v458 = vld [vmem:[%s1 + $0x3d0] sm:$0xff]
      %v459 = vld [vmem:[%s1 + $0x3d8] sm:$0xff]
      %v460 = vld [vmem:[%s1 + $0x3e0] sm:$0xff]
      %v461 = vld [vmem:[%s326 + $0x20] sm:$0x11]
      %v462 = vld [vmem:[%s326 + $0x28] sm:$0x11]
      %v463 = vld [vmem:[%s326 + $0x30] sm:$0x11]
      %v464 = vld [vmem:[%s326 + $0x38] sm:$0x11]
      %s465 = scalar_lea.vmem %s1, 1000
      %v466 = vld [vmem:[%s465] sm:$0xff]
      %v467 = vld [vmem:[%s465 + $0x8] sm:$0xff]
      %v468 = vld [vmem:[%s465 + $0x10] sm:$0xff]
      %v469 = vld [vmem:[%s465 + $0x18] sm:$0xff]
      %v470 = vld [vmem:[%s465 + $0x20] sm:$0xff]
      %v471 = vld [vmem:[%s465 + $0x28] sm:$0xff]
      %v472 = vld [vmem:[%s465 + $0x30] sm:$0xff]
      %v473 = vld [vmem:[%s465 + $0x38] sm:$0xff]
      %v474 = vld [vmem:[%s465 + $0x40] sm:$0xff]
      %v475 = vld [vmem:[%s465 + $0x48] sm:$0xff]
      %v476 = vld [vmem:[%s465 + $0x50] sm:$0xff]
      %v477 = vld [vmem:[%s465 + $0x58] sm:$0xff]
      %v478 = vld [vmem:[%s465 + $0x60] sm:$0xff]
      %v479 = vld [vmem:[%s465 + $0x68] sm:$0xff]
      %v480 = vld [vmem:[%s465 + $0x70] sm:$0xff]
      %v481 = vld [vmem:[%s465 + $0x78] sm:$0xff]
      %v482 = vld [vmem:[%s465 + $0x80] sm:$0xff]
      %v483 = vld [vmem:[%s465 + $0x88] sm:$0xff]
      %v484 = vld [vmem:[%s465 + $0x90] sm:$0xff]
      %v485 = vld [vmem:[%s465 + $0x98] sm:$0xff]
      %v486 = vld [vmem:[%s465 + $0xa0] sm:$0xff]
      %v487 = vld [vmem:[%s465 + $0xa8] sm:$0xff]
      %v488 = vld [vmem:[%s465 + $0xb0] sm:$0xff]
      %v489 = vld [vmem:[%s465 + $0xb8] sm:$0xff]
      %v490 = vld [vmem:[%s465 + $0xc0] sm:$0xff]
      %v491 = vld [vmem:[%s465 + $0xc8] sm:$0xff]
      %v492 = vld [vmem:[%s465 + $0xd0] sm:$0xff]
      %v493 = vld [vmem:[%s465 + $0xd8] sm:$0xff]
      %v494 = vld [vmem:[%s465 + $0xe0] sm:$0xff]
      %v495 = vld [vmem:[%s465 + $0xe8] sm:$0xff]
      %v496 = vld [vmem:[%s465 + $0xf0] sm:$0xff]
      %v497 = vld [vmem:[%s465 + $0xf8] sm:$0xff]
      %v498 = vld [vmem:[%s465 + $0x100] sm:$0xff]
      %v499 = vld [vmem:[%s465 + $0x108] sm:$0xff]
      %v500 = vld [vmem:[%s465 + $0x110] sm:$0xff]
      %v501 = vld [vmem:[%s465 + $0x118] sm:$0xff]
      %v502 = vld [vmem:[%s465 + $0x120] sm:$0xff]
      %v503 = vld [vmem:[%s465 + $0x128] sm:$0xff]
      %v504 = vld [vmem:[%s465 + $0x130] sm:$0xff]
      %v505 = vld [vmem:[%s465 + $0x138] sm:$0xff]
      %v506 = vld [vmem:[%s465 + $0x140] sm:$0xff]
      %v507 = vld [vmem:[%s465 + $0x148] sm:$0xff]
      %v508 = vld [vmem:[%s465 + $0x150] sm:$0xff]
      %v509 = vld [vmem:[%s465 + $0x158] sm:$0xff]
      %v510 = vld [vmem:[%s465 + $0x160] sm:$0xff]
      %v511 = vld [vmem:[%s465 + $0x168] sm:$0xff]
      %v512 = vld [vmem:[%s465 + $0x170] sm:$0xff]
      %v513 = vld [vmem:[%s465 + $0x178] sm:$0xff]
      %v514 = vld [vmem:[%s465 + $0x180] sm:$0xff]
      %v515 = vld [vmem:[%s465 + $0x188] sm:$0xff]
      %v516 = vld [vmem:[%s465 + $0x190] sm:$0xff]
      %v517 = vld [vmem:[%s465 + $0x198] sm:$0xff]
      %v518 = vld [vmem:[%s465 + $0x1a0] sm:$0xff]
      %v519 = vld [vmem:[%s465 + $0x1a8] sm:$0xff]
      %v520 = vld [vmem:[%s465 + $0x1b0] sm:$0xff]
      %v521 = vld [vmem:[%s465 + $0x1b8] sm:$0xff]
      %v522 = vld [vmem:[%s465 + $0x1c0] sm:$0xff]
      %v523 = vld [vmem:[%s465 + $0x1c8] sm:$0xff]
      %v524 = vld [vmem:[%s465 + $0x1d0] sm:$0xff]
      %v525 = vld [vmem:[%s465 + $0x1d8] sm:$0xff]
      %v526 = vld [vmem:[%s465 + $0x1e0] sm:$0xff]
      %v527 = vld [vmem:[%s465 + $0x1e8] sm:$0xff]
      %v528 = vld [vmem:[%s465 + $0x1f0] sm:$0xff]
      %v529 = vld [vmem:[%s465 + $0x1f8] sm:$0xff]
      %v530 = vld [vmem:[%s465 + $0x200] sm:$0xff]
      %v531 = vld [vmem:[%s465 + $0x208] sm:$0xff]
      %v532 = vld [vmem:[%s465 + $0x210] sm:$0xff]
      %v533 = vld [vmem:[%s465 + $0x218] sm:$0xff]
      %v534 = vld [vmem:[%s465 + $0x220] sm:$0xff]
      %v535 = vld [vmem:[%s465 + $0x228] sm:$0xff]
      %v536 = vld [vmem:[%s465 + $0x230] sm:$0xff]
      %v537 = vld [vmem:[%s465 + $0x238] sm:$0xff]
      %v538 = vld [vmem:[%s465 + $0x240] sm:$0xff]
      %v539 = vld [vmem:[%s465 + $0x248] sm:$0xff]
      %v540 = vld [vmem:[%s465 + $0x250] sm:$0xff]
      %v541 = vld [vmem:[%s465 + $0x258] sm:$0xff]
      %v542 = vld [vmem:[%s465 + $0x260] sm:$0xff]
      %v543 = vld [vmem:[%s465 + $0x268] sm:$0xff]
      %v544 = vld [vmem:[%s465 + $0x270] sm:$0xff]
      %v545 = vld [vmem:[%s465 + $0x278] sm:$0xff]
      %v546 = vld [vmem:[%s465 + $0x280] sm:$0xff]
      %v547 = vld [vmem:[%s465 + $0x288] sm:$0xff]
      %v548 = vld [vmem:[%s465 + $0x290] sm:$0xff]
      %v549 = vld [vmem:[%s465 + $0x298] sm:$0xff]
      %v550 = vld [vmem:[%s465 + $0x2a0] sm:$0xff]
      %v551 = vld [vmem:[%s465 + $0x2a8] sm:$0xff]
      %v552 = vld [vmem:[%s465 + $0x2b0] sm:$0xff]
      %v553 = vld [vmem:[%s465 + $0x2b8] sm:$0xff]
      %v554 = vld [vmem:[%s465 + $0x2c0] sm:$0xff]
      %v555 = vld [vmem:[%s465 + $0x2c8] sm:$0xff]
      %v556 = vld [vmem:[%s465 + $0x2d0] sm:$0xff]
      %v557 = vld [vmem:[%s465 + $0x2d8] sm:$0xff]
      %v558 = vld [vmem:[%s465 + $0x2e0] sm:$0xff]
      %v559 = vld [vmem:[%s465 + $0x2e8] sm:$0xff]
      %v560 = vld [vmem:[%s465 + $0x2f0] sm:$0xff]
      %v561 = vld [vmem:[%s465 + $0x2f8] sm:$0xff]
      %v562 = vld [vmem:[%s465 + $0x300] sm:$0xff]
      %v563 = vld [vmem:[%s465 + $0x308] sm:$0xff]
      %v564 = vld [vmem:[%s465 + $0x310] sm:$0xff]
      %v565 = vld [vmem:[%s465 + $0x318] sm:$0xff]
      %v566 = vld [vmem:[%s465 + $0x320] sm:$0xff]
      %v567 = vld [vmem:[%s465 + $0x328] sm:$0xff]
      %v568 = vld [vmem:[%s465 + $0x330] sm:$0xff]
      %v569 = vld [vmem:[%s465 + $0x338] sm:$0xff]
      %v570 = vld [vmem:[%s465 + $0x340] sm:$0xff]
      %v571 = vld [vmem:[%s465 + $0x348] sm:$0xff]
      %v572 = vld [vmem:[%s465 + $0x350] sm:$0xff]
      %v573 = vld [vmem:[%s465 + $0x358] sm:$0xff]
      %v574 = vld [vmem:[%s465 + $0x360] sm:$0xff]
      %v575 = vld [vmem:[%s465 + $0x368] sm:$0xff]
      %v576 = vld [vmem:[%s465 + $0x370] sm:$0xff]
      %v577 = vld [vmem:[%s465 + $0x378] sm:$0xff]
      %v578 = vld [vmem:[%s465 + $0x380] sm:$0xff]
      %v579 = vld [vmem:[%s465 + $0x388] sm:$0xff]
      %v580 = vld [vmem:[%s465 + $0x390] sm:$0xff]
      %v581 = vld [vmem:[%s465 + $0x398] sm:$0xff]
      %v582 = vld [vmem:[%s465 + $0x3a0] sm:$0xff]
      %v583 = vld [vmem:[%s465 + $0x3a8] sm:$0xff]
      %v584 = vld [vmem:[%s465 + $0x3b0] sm:$0xff]
      %v585 = vld [vmem:[%s465 + $0x3b8] sm:$0xff]
      %v586 = vld [vmem:[%s465 + $0x3c0] sm:$0xff]
      %v587 = vld [vmem:[%s465 + $0x3c8] sm:$0xff]
      %v588 = vld [vmem:[%s465 + $0x3d0] sm:$0xff]
      %v589 = vld [vmem:[%s465 + $0x3d8] sm:$0xff]
      %v590 = vld [vmem:[%s465 + $0x3e0] sm:$0xff]
      %v599 = vunpack.c.l.b16 %v332
      %v600 = vunpack.c.h.b16 %v332
      %v601 = vunpack.c.l.b16 %v333
      %v602 = vunpack.c.h.b16 %v333
      %v603 = vunpack.c.l.b16 %v334
      %v604 = vunpack.c.h.b16 %v334
      %v605 = vunpack.c.l.b16 %v335
      %v606 = vunpack.c.h.b16 %v335
      %v607 = vunpack.c.l.b16 %v461
      %v608 = vunpack.c.h.b16 %v461
      %v609 = vunpack.c.l.b16 %v462
      %v610 = vunpack.c.h.b16 %v462
      %v611 = vunpack.c.l.b16 %v463
      %v612 = vunpack.c.h.b16 %v463
      %v613 = vunpack.c.l.b16 %v464
      %v614 = vunpack.c.h.b16 %v464
      %v615 = vpack.c.b16 %v607, %v599
      %v616 = vpack.c.b16 %v608, %v600
      %v617 = vpack.c.b16 %v609, %v601
      %v618 = vpack.c.b16 %v610, %v602
      %v619 = vpack.c.b16 %v611, %v603
      %v620 = vpack.c.b16 %v612, %v604
      %v621 = vpack.c.b16 %v613, %v605
      %v622 = vpack.c.b16 %v614, %v606
      %v624 = vshrl.u32 %v615, 16
      %v626 = vshll.u32 %v615, 16
      %v628 = vrot.slane %v626, 1
      %v629 = vor.u32 %v624, %v628
      %v631 = vshrl.u32 %v616, 16
      %v633 = vshll.u32 %v616, 16
      %v635 = vrot.slane %v633, 1
      %v636 = vor.u32 %v631, %v635
      %v638 = vshrl.u32 %v617, 16
      %v640 = vshll.u32 %v617, 16
      %v642 = vrot.slane %v640, 1
      %v643 = vor.u32 %v638, %v642
      %v645 = vshrl.u32 %v618, 16
      %v647 = vshll.u32 %v618, 16
      %v649 = vrot.slane %v647, 1
      %v650 = vor.u32 %v645, %v649
      %v652 = vshrl.u32 %v619, 16
      %v654 = vshll.u32 %v619, 16
      %v656 = vrot.slane %v654, 1
      %v657 = vor.u32 %v652, %v656
      %v659 = vshrl.u32 %v620, 16
      %v661 = vshll.u32 %v620, 16
      %v663 = vrot.slane %v661, 1
      %v664 = vor.u32 %v659, %v663
      %v666 = vshrl.u32 %v621, 16
      %v668 = vshll.u32 %v621, 16
      %v670 = vrot.slane %v668, 1
      %v671 = vor.u32 %v666, %v670
      %v673 = vshrl.u32 %v622, 16
      %v675 = vshll.u32 %v622, 16
      %v677 = vrot.slane %v675, 1
      %v678 = vor.u32 %v673, %v677
      %v811 = vunpack.c.l.b16 %v466
      %v812 = vunpack.c.h.b16 %v466
      %v813 = vunpack.c.l.b16 %v467
      %v814 = vunpack.c.h.b16 %v467
      %v815 = vunpack.c.l.b16 %v468
      %v816 = vunpack.c.h.b16 %v468
      %v817 = vunpack.c.l.b16 %v469
      %v818 = vunpack.c.h.b16 %v469
      %v819 = vunpack.c.l.b16 %v470
      %v820 = vunpack.c.h.b16 %v470
      %v821 = vunpack.c.l.b16 %v471
      %v822 = vunpack.c.h.b16 %v471
      %v823 = vunpack.c.l.b16 %v472
      %v824 = vunpack.c.h.b16 %v472
      %v825 = vunpack.c.l.b16 %v473
      %v826 = vunpack.c.h.b16 %v473
      %v827 = vunpack.c.l.b16 %v474
      %v828 = vunpack.c.h.b16 %v474
      %v829 = vunpack.c.l.b16 %v475
      %v830 = vunpack.c.h.b16 %v475
      %v831 = vunpack.c.l.b16 %v476
      %v832 = vunpack.c.h.b16 %v476
      %v833 = vunpack.c.l.b16 %v477
      %v834 = vunpack.c.h.b16 %v477
      %v835 = vunpack.c.l.b16 %v478
      %v836 = vunpack.c.h.b16 %v478
      %v837 = vunpack.c.l.b16 %v479
      %v838 = vunpack.c.h.b16 %v479
      %v839 = vunpack.c.l.b16 %v480
      %v840 = vunpack.c.h.b16 %v480
      %v841 = vunpack.c.l.b16 %v481
      %v842 = vunpack.c.h.b16 %v481
      %v843 = vunpack.c.l.b16 %v482
      %v844 = vunpack.c.h.b16 %v482
      %v845 = vunpack.c.l.b16 %v483
      %v846 = vunpack.c.h.b16 %v483
      %v847 = vunpack.c.l.b16 %v484
      %v848 = vunpack.c.h.b16 %v484
      %v849 = vunpack.c.l.b16 %v485
      %v850 = vunpack.c.h.b16 %v485
      %v851 = vunpack.c.l.b16 %v486
      %v852 = vunpack.c.h.b16 %v486
      %v853 = vunpack.c.l.b16 %v487
      %v854 = vunpack.c.h.b16 %v487
      %v855 = vunpack.c.l.b16 %v488
      %v856 = vunpack.c.h.b16 %v488
      %v857 = vunpack.c.l.b16 %v489
      %v858 = vunpack.c.h.b16 %v489
      %v859 = vunpack.c.l.b16 %v490
      %v860 = vunpack.c.h.b16 %v490
      %v861 = vunpack.c.l.b16 %v491
      %v862 = vunpack.c.h.b16 %v491
      %v863 = vunpack.c.l.b16 %v492
      %v864 = vunpack.c.h.b16 %v492
      %v865 = vunpack.c.l.b16 %v493
      %v866 = vunpack.c.h.b16 %v493
      %v867 = vunpack.c.l.b16 %v494
      %v868 = vunpack.c.h.b16 %v494
      %v869 = vunpack.c.l.b16 %v495
      %v870 = vunpack.c.h.b16 %v495
      %v871 = vunpack.c.l.b16 %v496
      %v872 = vunpack.c.h.b16 %v496
      %v873 = vunpack.c.l.b16 %v497
      %v874 = vunpack.c.h.b16 %v497
      %v875 = vunpack.c.l.b16 %v498
      %v876 = vunpack.c.h.b16 %v498
      %v877 = vunpack.c.l.b16 %v499
      %v878 = vunpack.c.h.b16 %v499
      %v879 = vunpack.c.l.b16 %v500
      %v880 = vunpack.c.h.b16 %v500
      %v881 = vunpack.c.l.b16 %v501
      %v882 = vunpack.c.h.b16 %v501
      %v883 = vunpack.c.l.b16 %v502
      %v884 = vunpack.c.h.b16 %v502
      %v885 = vunpack.c.l.b16 %v503
      %v886 = vunpack.c.h.b16 %v503
      %v887 = vunpack.c.l.b16 %v504
      %v888 = vunpack.c.h.b16 %v504
      %v889 = vunpack.c.l.b16 %v505
      %v890 = vunpack.c.h.b16 %v505
      %v891 = vunpack.c.l.b16 %v506
      %v892 = vunpack.c.h.b16 %v506
      %v893 = vunpack.c.l.b16 %v507
      %v894 = vunpack.c.h.b16 %v507
      %v895 = vunpack.c.l.b16 %v508
      %v896 = vunpack.c.h.b16 %v508
      %v897 = vunpack.c.l.b16 %v509
      %v898 = vunpack.c.h.b16 %v509
      %v899 = vunpack.c.l.b16 %v510
      %v900 = vunpack.c.h.b16 %v510
      %v901 = vunpack.c.l.b16 %v511
      %v902 = vunpack.c.h.b16 %v511
      %v903 = vunpack.c.l.b16 %v512
      %v904 = vunpack.c.h.b16 %v512
      %v905 = vunpack.c.l.b16 %v513
      %v906 = vunpack.c.h.b16 %v513
      %v907 = vunpack.c.l.b16 %v514
      %v908 = vunpack.c.h.b16 %v514
      %v909 = vunpack.c.l.b16 %v515
      %v910 = vunpack.c.h.b16 %v515
      %v911 = vunpack.c.l.b16 %v516
      %v912 = vunpack.c.h.b16 %v516
      %v913 = vunpack.c.l.b16 %v517
      %v914 = vunpack.c.h.b16 %v517
      %v915 = vunpack.c.l.b16 %v518
      %v916 = vunpack.c.h.b16 %v518
      %v917 = vunpack.c.l.b16 %v519
      %v918 = vunpack.c.h.b16 %v519
      %v919 = vunpack.c.l.b16 %v520
      %v920 = vunpack.c.h.b16 %v520
      %v921 = vunpack.c.l.b16 %v521
      %v922 = vunpack.c.h.b16 %v521
      %v923 = vunpack.c.l.b16 %v522
      %v924 = vunpack.c.h.b16 %v522
      %v925 = vunpack.c.l.b16 %v523
      %v926 = vunpack.c.h.b16 %v523
      %v927 = vunpack.c.l.b16 %v524
      %v928 = vunpack.c.h.b16 %v524
      %v929 = vunpack.c.l.b16 %v525
      %v930 = vunpack.c.h.b16 %v525
      %v931 = vunpack.c.l.b16 %v526
      %v932 = vunpack.c.h.b16 %v526
      %v933 = vunpack.c.l.b16 %v527
      %v934 = vunpack.c.h.b16 %v527
      %v935 = vunpack.c.l.b16 %v528
      %v936 = vunpack.c.h.b16 %v528
      %v937 = vunpack.c.l.b16 %v529
      %v938 = vunpack.c.h.b16 %v529
      %v939 = vunpack.c.l.b16 %v530
      %v940 = vunpack.c.h.b16 %v530
      %v941 = vunpack.c.l.b16 %v531
      %v942 = vunpack.c.h.b16 %v531
      %v943 = vunpack.c.l.b16 %v532
      %v944 = vunpack.c.h.b16 %v532
      %v945 = vunpack.c.l.b16 %v533
      %v946 = vunpack.c.h.b16 %v533
      %v947 = vunpack.c.l.b16 %v534
      %v948 = vunpack.c.h.b16 %v534
      %v949 = vunpack.c.l.b16 %v535
      %v950 = vunpack.c.h.b16 %v535
      %v951 = vunpack.c.l.b16 %v536
      %v952 = vunpack.c.h.b16 %v536
      %v953 = vunpack.c.l.b16 %v537
      %v954 = vunpack.c.h.b16 %v537
      %v955 = vunpack.c.l.b16 %v538
      %v956 = vunpack.c.h.b16 %v538
      %v957 = vunpack.c.l.b16 %v539
      %v958 = vunpack.c.h.b16 %v539
      %v959 = vunpack.c.l.b16 %v540
      %v960 = vunpack.c.h.b16 %v540
      %v961 = vunpack.c.l.b16 %v541
      %v962 = vunpack.c.h.b16 %v541
      %v963 = vunpack.c.l.b16 %v542
      %v964 = vunpack.c.h.b16 %v542
      %v965 = vunpack.c.l.b16 %v543
      %v966 = vunpack.c.h.b16 %v543
      %v967 = vunpack.c.l.b16 %v544
      %v968 = vunpack.c.h.b16 %v544
      %v969 = vunpack.c.l.b16 %v545
      %v970 = vunpack.c.h.b16 %v545
      %v971 = vunpack.c.l.b16 %v546
      %v972 = vunpack.c.h.b16 %v546
      %v973 = vunpack.c.l.b16 %v547
      %v974 = vunpack.c.h.b16 %v547
      %v975 = vunpack.c.l.b16 %v548
      %v976 = vunpack.c.h.b16 %v548
      %v977 = vunpack.c.l.b16 %v549
      %v978 = vunpack.c.h.b16 %v549
      %v979 = vunpack.c.l.b16 %v550
      %v980 = vunpack.c.h.b16 %v550
      %v981 = vunpack.c.l.b16 %v551
      %v982 = vunpack.c.h.b16 %v551
      %v983 = vunpack.c.l.b16 %v552
      %v984 = vunpack.c.h.b16 %v552
      %v985 = vunpack.c.l.b16 %v553
      %v986 = vunpack.c.h.b16 %v553
      %v987 = vunpack.c.l.b16 %v554
      %v988 = vunpack.c.h.b16 %v554
      %v989 = vunpack.c.l.b16 %v555
      %v990 = vunpack.c.h.b16 %v555
      %v991 = vunpack.c.l.b16 %v556
      %v992 = vunpack.c.h.b16 %v556
      %v993 = vunpack.c.l.b16 %v557
      %v994 = vunpack.c.h.b16 %v557
      %v995 = vunpack.c.l.b16 %v558
      %v996 = vunpack.c.h.b16 %v558
      %v997 = vunpack.c.l.b16 %v559
      %v998 = vunpack.c.h.b16 %v559
      %v999 = vunpack.c.l.b16 %v560
      %v1000 = vunpack.c.h.b16 %v560
      %v1001 = vunpack.c.l.b16 %v561
      %v1002 = vunpack.c.h.b16 %v561
      %v1003 = vunpack.c.l.b16 %v562
      %v1004 = vunpack.c.h.b16 %v562
      %v1005 = vunpack.c.l.b16 %v563
      %v1006 = vunpack.c.h.b16 %v563
      %v1007 = vunpack.c.l.b16 %v564
      %v1008 = vunpack.c.h.b16 %v564
      %v1009 = vunpack.c.l.b16 %v565
      %v1010 = vunpack.c.h.b16 %v565
      %v1011 = vunpack.c.l.b16 %v566
      %v1012 = vunpack.c.h.b16 %v566
      %v1013 = vunpack.c.l.b16 %v567
      %v1014 = vunpack.c.h.b16 %v567
      %v1015 = vunpack.c.l.b16 %v568
      %v1016 = vunpack.c.h.b16 %v568
      %v1017 = vunpack.c.l.b16 %v569
      %v1018 = vunpack.c.h.b16 %v569
      %v1019 = vunpack.c.l.b16 %v570
      %v1020 = vunpack.c.h.b16 %v570
      %v1021 = vunpack.c.l.b16 %v571
      %v1022 = vunpack.c.h.b16 %v571
      %v1023 = vunpack.c.l.b16 %v572
      %v1024 = vunpack.c.h.b16 %v572
      %v1025 = vunpack.c.l.b16 %v573
      %v1026 = vunpack.c.h.b16 %v573
      %v1027 = vunpack.c.l.b16 %v574
      %v1028 = vunpack.c.h.b16 %v574
      %v1029 = vunpack.c.l.b16 %v575
      %v1030 = vunpack.c.h.b16 %v575
      %v1031 = vunpack.c.l.b16 %v576
      %v1032 = vunpack.c.h.b16 %v576
      %v1033 = vunpack.c.l.b16 %v577
      %v1034 = vunpack.c.h.b16 %v577
      %v1035 = vunpack.c.l.b16 %v578
      %v1036 = vunpack.c.h.b16 %v578
      %v1037 = vunpack.c.l.b16 %v579
      %v1038 = vunpack.c.h.b16 %v579
      %v1039 = vunpack.c.l.b16 %v580
      %v1040 = vunpack.c.h.b16 %v580
      %v1041 = vunpack.c.l.b16 %v581
      %v1042 = vunpack.c.h.b16 %v581
      %v1043 = vunpack.c.l.b16 %v582
      %v1044 = vunpack.c.h.b16 %v582
      %v1045 = vunpack.c.l.b16 %v583
      %v1046 = vunpack.c.h.b16 %v583
      %v1047 = vunpack.c.l.b16 %v584
      %v1048 = vunpack.c.h.b16 %v584
      %v1049 = vunpack.c.l.b16 %v585
      %v1050 = vunpack.c.h.b16 %v585
      %v1051 = vunpack.c.l.b16 %v586
      %v1052 = vunpack.c.h.b16 %v586
      %v1053 = vunpack.c.l.b16 %v587
      %v1054 = vunpack.c.h.b16 %v587
      %v1055 = vunpack.c.l.b16 %v588
      %v1056 = vunpack.c.h.b16 %v588
      %v1057 = vunpack.c.l.b16 %v589
      %v1058 = vunpack.c.h.b16 %v589
      %v1059 = vunpack.c.l.b16 %v590
      %v1060 = vunpack.c.h.b16 %v590
      %v1061 = vpack.c.b16 %v813, %v811
      %v1062 = vpack.c.b16 %v814, %v812
      %v1063 = vpack.c.b16 %v817, %v815
      %v1064 = vpack.c.b16 %v818, %v816
      %v1065 = vpack.c.b16 %v821, %v819
      %v1066 = vpack.c.b16 %v822, %v820
      %v1067 = vpack.c.b16 %v825, %v823
      %v1068 = vpack.c.b16 %v826, %v824
      %v1069 = vpack.c.b16 %v829, %v827
      %v1070 = vpack.c.b16 %v830, %v828
      %v1071 = vpack.c.b16 %v833, %v831
      %v1072 = vpack.c.b16 %v834, %v832
      %v1073 = vpack.c.b16 %v837, %v835
      %v1074 = vpack.c.b16 %v838, %v836
      %v1075 = vpack.c.b16 %v841, %v839
      %v1076 = vpack.c.b16 %v842, %v840
      %v1077 = vpack.c.b16 %v845, %v843
      %v1078 = vpack.c.b16 %v846, %v844
      %v1079 = vpack.c.b16 %v849, %v847
      %v1080 = vpack.c.b16 %v850, %v848
      %v1081 = vpack.c.b16 %v853, %v851
      %v1082 = vpack.c.b16 %v854, %v852
      %v1083 = vpack.c.b16 %v857, %v855
      %v1084 = vpack.c.b16 %v858, %v856
      %v1085 = vpack.c.b16 %v861, %v859
      %v1086 = vpack.c.b16 %v862, %v860
      %v1087 = vpack.c.b16 %v865, %v863
      %v1088 = vpack.c.b16 %v866, %v864
      %v1089 = vpack.c.b16 %v869, %v867
      %v1090 = vpack.c.b16 %v870, %v868
      %v1091 = vpack.c.b16 %v873, %v871
      %v1092 = vpack.c.b16 %v874, %v872
      %v1093 = vpack.c.b16 %v877, %v875
      %v1094 = vpack.c.b16 %v878, %v876
      %v1095 = vpack.c.b16 %v881, %v879
      %v1096 = vpack.c.b16 %v882, %v880
      %v1097 = vpack.c.b16 %v885, %v883
      %v1098 = vpack.c.b16 %v886, %v884
      %v1099 = vpack.c.b16 %v889, %v887
      %v1100 = vpack.c.b16 %v890, %v888
      %v1101 = vpack.c.b16 %v893, %v891
      %v1102 = vpack.c.b16 %v894, %v892
      %v1103 = vpack.c.b16 %v897, %v895
      %v1104 = vpack.c.b16 %v898, %v896
      %v1105 = vpack.c.b16 %v901, %v899
      %v1106 = vpack.c.b16 %v902, %v900
      %v1107 = vpack.c.b16 %v905, %v903
      %v1108 = vpack.c.b16 %v906, %v904
      %v1109 = vpack.c.b16 %v909, %v907
      %v1110 = vpack.c.b16 %v910, %v908
      %v1111 = vpack.c.b16 %v913, %v911
      %v1112 = vpack.c.b16 %v914, %v912
      %v1113 = vpack.c.b16 %v917, %v915
      %v1114 = vpack.c.b16 %v918, %v916
      %v1115 = vpack.c.b16 %v921, %v919
      %v1116 = vpack.c.b16 %v922, %v920
      %v1117 = vpack.c.b16 %v925, %v923
      %v1118 = vpack.c.b16 %v926, %v924
      %v1119 = vpack.c.b16 %v929, %v927
      %v1120 = vpack.c.b16 %v930, %v928
      %v1121 = vpack.c.b16 %v933, %v931
      %v1122 = vpack.c.b16 %v934, %v932
      %v1123 = vpack.c.b16 %v937, %v935
      %v1124 = vpack.c.b16 %v938, %v936
      %v1125 = vpack.c.b16 %v941, %v939
      %v1126 = vpack.c.b16 %v942, %v940
      %v1127 = vpack.c.b16 %v945, %v943
      %v1128 = vpack.c.b16 %v946, %v944
      %v1129 = vpack.c.b16 %v949, %v947
      %v1130 = vpack.c.b16 %v950, %v948
      %v1131 = vpack.c.b16 %v953, %v951
      %v1132 = vpack.c.b16 %v954, %v952
      %v1133 = vpack.c.b16 %v957, %v955
      %v1134 = vpack.c.b16 %v958, %v956
      %v1135 = vpack.c.b16 %v961, %v959
      %v1136 = vpack.c.b16 %v962, %v960
      %v1137 = vpack.c.b16 %v965, %v963
      %v1138 = vpack.c.b16 %v966, %v964
      %v1139 = vpack.c.b16 %v969, %v967
      %v1140 = vpack.c.b16 %v970, %v968
      %v1141 = vpack.c.b16 %v973, %v971
      %v1142 = vpack.c.b16 %v974, %v972
      %v1143 = vpack.c.b16 %v977, %v975
      %v1144 = vpack.c.b16 %v978, %v976
      %v1145 = vpack.c.b16 %v981, %v979
      %v1146 = vpack.c.b16 %v982, %v980
      %v1147 = vpack.c.b16 %v985, %v983
      %v1148 = vpack.c.b16 %v986, %v984
      %v1149 = vpack.c.b16 %v989, %v987
      %v1150 = vpack.c.b16 %v990, %v988
      %v1151 = vpack.c.b16 %v993, %v991
      %v1152 = vpack.c.b16 %v994, %v992
      %v1153 = vpack.c.b16 %v997, %v995
      %v1154 = vpack.c.b16 %v998, %v996
      %v1155 = vpack.c.b16 %v1001, %v999
      %v1156 = vpack.c.b16 %v1002, %v1000
      %v1157 = vpack.c.b16 %v1005, %v1003
      %v1158 = vpack.c.b16 %v1006, %v1004
      %v1159 = vpack.c.b16 %v1009, %v1007
      %v1160 = vpack.c.b16 %v1010, %v1008
      %v1161 = vpack.c.b16 %v1013, %v1011
      %v1162 = vpack.c.b16 %v1014, %v1012
      %v1163 = vpack.c.b16 %v1017, %v1015
      %v1164 = vpack.c.b16 %v1018, %v1016
      %v1165 = vpack.c.b16 %v1021, %v1019
      %v1166 = vpack.c.b16 %v1022, %v1020
      %v1167 = vpack.c.b16 %v1025, %v1023
      %v1168 = vpack.c.b16 %v1026, %v1024
      %v1169 = vpack.c.b16 %v1029, %v1027
      %v1170 = vpack.c.b16 %v1030, %v1028
      %v1171 = vpack.c.b16 %v1033, %v1031
      %v1172 = vpack.c.b16 %v1034, %v1032
      %v1173 = vpack.c.b16 %v1037, %v1035
      %v1174 = vpack.c.b16 %v1038, %v1036
      %v1175 = vpack.c.b16 %v1041, %v1039
      %v1176 = vpack.c.b16 %v1042, %v1040
      %v1177 = vpack.c.b16 %v1045, %v1043
      %v1178 = vpack.c.b16 %v1046, %v1044
      %v1179 = vpack.c.b16 %v1049, %v1047
      %v1180 = vpack.c.b16 %v1050, %v1048
      %v1181 = vpack.c.b16 %v1053, %v1051
      %v1182 = vpack.c.b16 %v1054, %v1052
      %v1183 = vpack.c.b16 %v1057, %v1055
      %v1184 = vpack.c.b16 %v1058, %v1056
      %v1185 = vpack.c.b16 %v1059, %v1059
      %v1186 = vpack.c.b16 %v1060, %v1060
      %vm1311 = vcmask 850944
      %v1313 = vsel %vm1311, %v678, 0
      %vm1315 = vcmask 1043456
      %v1317 = vsel %vm1315, %v1185, 0
      %v1320 = vsel %vm1315, %v1186, 0
      %1322 = vmatpush.bf16.msra.mxu0 %v1075
      %1323 = vmatpush.bf16.msra.mxu0 %v1073
      %1324 = vmatpush.bf16.msra.mxu0 %v1071
      %1325 = vmatpush.bf16.msra.mxu0 %v1069
      %1326 = vmatpush.bf16.msra.mxu0 %v1067
      %1327 = vmatpush.bf16.msra.mxu0 %v1065
      %1328 = vmatpush.bf16.msra.mxu0 %v1063
      %1329 = vmatpush.bf16.msra.mxu0 %v1061
      %1330 = vmatmul.bf16.gmra.mxu0 %v629
      %v1331 = vpop.f32.mrf.mxu0
      %v1332 = vadd.f32 0.0, %v1331
      %v1333 = vpop.f32.mrf.mxu0
      %1334 = vdwg.mxu0
      %1335 = vmatpush.bf16.msra.mxu0 %v1091
      %1336 = vmatpush.bf16.msra.mxu0 %v1089
      %1337 = vmatpush.bf16.msra.mxu0 %v1087
      %1338 = vmatpush.bf16.msra.mxu0 %v1085
      %1339 = vmatpush.bf16.msra.mxu0 %v1083
      %1340 = vmatpush.bf16.msra.mxu0 %v1081
      %1341 = vmatpush.bf16.msra.mxu0 %v1079
      %1342 = vmatpush.bf16.msra.mxu0 %v1077
      %1343 = vmatmul.bf16.gmra.mxu0 %v636
      %v1344 = vpop.f32.mrf.mxu0
      %v1345 = vadd.f32 %v1332, %v1344
      %v1346 = vpop.f32.mrf.mxu0
      %1347 = vdwg.mxu0
      %1348 = vmatpush.bf16.msra.mxu0 %v1107
      %1349 = vmatpush.bf16.msra.mxu0 %v1105
      %1350 = vmatpush.bf16.msra.mxu0 %v1103
      %1351 = vmatpush.bf16.msra.mxu0 %v1101
      %1352 = vmatpush.bf16.msra.mxu0 %v1099
      %1353 = vmatpush.bf16.msra.mxu0 %v1097
      %1354 = vmatpush.bf16.msra.mxu0 %v1095
      %1355 = vmatpush.bf16.msra.mxu0 %v1093
      %1356 = vmatmul.bf16.gmra.mxu0 %v643
      %v1357 = vpop.f32.mrf.mxu0
      %v1358 = vadd.f32 %v1345, %v1357
      %v1359 = vpop.f32.mrf.mxu0
      %1360 = vdwg.mxu0
      %1361 = vmatpush.bf16.msra.mxu0 %v1123
      %1362 = vmatpush.bf16.msra.mxu0 %v1121
      %1363 = vmatpush.bf16.msra.mxu0 %v1119
      %1364 = vmatpush.bf16.msra.mxu0 %v1117
      %1365 = vmatpush.bf16.msra.mxu0 %v1115
      %1366 = vmatpush.bf16.msra.mxu0 %v1113
      %1367 = vmatpush.bf16.msra.mxu0 %v1111
      %1368 = vmatpush.bf16.msra.mxu0 %v1109
      %1369 = vmatmul.bf16.gmra.mxu0 %v650
      %v1370 = vpop.f32.mrf.mxu0
      %v1371 = vadd.f32 %v1358, %v1370
      %v1372 = vpop.f32.mrf.mxu0
      %1373 = vdwg.mxu0
      %1374 = vmatpush.bf16.msra.mxu0 %v1139
      %1375 = vmatpush.bf16.msra.mxu0 %v1137
      %1376 = vmatpush.bf16.msra.mxu0 %v1135
      %1377 = vmatpush.bf16.msra.mxu0 %v1133
      %1378 = vmatpush.bf16.msra.mxu0 %v1131
      %1379 = vmatpush.bf16.msra.mxu0 %v1129
      %1380 = vmatpush.bf16.msra.mxu0 %v1127
      %1381 = vmatpush.bf16.msra.mxu0 %v1125
      %1382 = vmatmul.bf16.gmra.mxu0 %v657
      %v1383 = vpop.f32.mrf.mxu0
      %v1384 = vadd.f32 %v1371, %v1383
      %v1385 = vpop.f32.mrf.mxu0
      %1386 = vdwg.mxu0
      %1387 = vmatpush.bf16.msra.mxu0 %v1155
      %1388 = vmatpush.bf16.msra.mxu0 %v1153
      %1389 = vmatpush.bf16.msra.mxu0 %v1151
      %1390 = vmatpush.bf16.msra.mxu0 %v1149
      %1391 = vmatpush.bf16.msra.mxu0 %v1147
      %1392 = vmatpush.bf16.msra.mxu0 %v1145
      %1393 = vmatpush.bf16.msra.mxu0 %v1143
      %1394 = vmatpush.bf16.msra.mxu0 %v1141
      %1395 = vmatmul.bf16.gmra.mxu0 %v664
      %v1396 = vpop.f32.mrf.mxu0
      %v1397 = vadd.f32 %v1384, %v1396
      %v1398 = vpop.f32.mrf.mxu0
      %1399 = vdwg.mxu0
      %1400 = vmatpush.bf16.msra.mxu0 %v1171
      %1401 = vmatpush.bf16.msra.mxu0 %v1169
      %1402 = vmatpush.bf16.msra.mxu0 %v1167
      %1403 = vmatpush.bf16.msra.mxu0 %v1165
      %1404 = vmatpush.bf16.msra.mxu0 %v1163
      %1405 = vmatpush.bf16.msra.mxu0 %v1161
      %1406 = vmatpush.bf16.msra.mxu0 %v1159
      %1407 = vmatpush.bf16.msra.mxu0 %v1157
      %1408 = vmatmul.bf16.gmra.mxu0 %v671
      %v1409 = vpop.f32.mrf.mxu0
      %v1410 = vadd.f32 %v1397, %v1409
      %v1411 = vpop.f32.mrf.mxu0
      %1412 = vdwg.mxu0
      %1413 = vmatpush.bf16.msra.mxu0 0
      %1414 = vmatpush.bf16.msra.mxu0 %v1317
      %1415 = vmatpush.bf16.msra.mxu0 %v1183
      %1416 = vmatpush.bf16.msra.mxu0 %v1181
      %1417 = vmatpush.bf16.msra.mxu0 %v1179
      %1418 = vmatpush.bf16.msra.mxu0 %v1177
      %1419 = vmatpush.bf16.msra.mxu0 %v1175
      %1420 = vmatpush.bf16.msra.mxu0 %v1173
      %1421 = vmatmul.bf16.gmra.mxu0 %v1313
      %v1422 = vpop.f32.mrf.mxu0
      %v1423 = vadd.f32 %v1410, %v1422
      %v1424 = vpop.f32.mrf.mxu0
      %1425 = vdwg.mxu0
      %1426 = vmatpush.bf16.msra.mxu0 %v1076
      %1427 = vmatpush.bf16.msra.mxu0 %v1074
      %1428 = vmatpush.bf16.msra.mxu0 %v1072
      %1429 = vmatpush.bf16.msra.mxu0 %v1070
      %1430 = vmatpush.bf16.msra.mxu0 %v1068
      %1431 = vmatpush.bf16.msra.mxu0 %v1066
      %1432 = vmatpush.bf16.msra.mxu0 %v1064
      %1433 = vmatpush.bf16.msra.mxu0 %v1062
      %1434 = vmatmul.bf16.gmra.mxu0 %v629
      %v1435 = vpop.f32.mrf.mxu0
      %v1436 = vadd.f32 0.0, %v1435
      %v1437 = vpop.f32.mrf.mxu0
      %1438 = vdwg.mxu0
      %1439 = vmatpush.bf16.msra.mxu0 %v1092
      %1440 = vmatpush.bf16.msra.mxu0 %v1090
      %1441 = vmatpush.bf16.msra.mxu0 %v1088
      %1442 = vmatpush.bf16.msra.mxu0 %v1086
      %1443 = vmatpush.bf16.msra.mxu0 %v1084
      %1444 = vmatpush.bf16.msra.mxu0 %v1082
      %1445 = vmatpush.bf16.msra.mxu0 %v1080
      %1446 = vmatpush.bf16.msra.mxu0 %v1078
      %1447 = vmatmul.bf16.gmra.mxu0 %v636
      %v1448 = vpop.f32.mrf.mxu0
      %v1449 = vadd.f32 %v1436, %v1448
      %v1450 = vpop.f32.mrf.mxu0
      %1451 = vdwg.mxu0
      %1452 = vmatpush.bf16.msra.mxu0 %v1108
      %1453 = vmatpush.bf16.msra.mxu0 %v1106
      %1454 = vmatpush.bf16.msra.mxu0 %v1104
      %1455 = vmatpush.bf16.msra.mxu0 %v1102
      %1456 = vmatpush.bf16.msra.mxu0 %v1100
      %1457 = vmatpush.bf16.msra.mxu0 %v1098
      %1458 = vmatpush.bf16.msra.mxu0 %v1096
      %1459 = vmatpush.bf16.msra.mxu0 %v1094
      %1460 = vmatmul.bf16.gmra.mxu0 %v643
      %v1461 = vpop.f32.mrf.mxu0
      %v1462 = vadd.f32 %v1449, %v1461
      %v1463 = vpop.f32.mrf.mxu0
      %1464 = vdwg.mxu0
      %1465 = vmatpush.bf16.msra.mxu0 %v1124
      %1466 = vmatpush.bf16.msra.mxu0 %v1122
      %1467 = vmatpush.bf16.msra.mxu0 %v1120
      %1468 = vmatpush.bf16.msra.mxu0 %v1118
      %1469 = vmatpush.bf16.msra.mxu0 %v1116
      %1470 = vmatpush.bf16.msra.mxu0 %v1114
      %1471 = vmatpush.bf16.msra.mxu0 %v1112
      %1472 = vmatpush.bf16.msra.mxu0 %v1110
      %1473 = vmatmul.bf16.gmra.mxu0 %v650
      %v1474 = vpop.f32.mrf.mxu0
      %v1475 = vadd.f32 %v1462, %v1474
      %v1476 = vpop.f32.mrf.mxu0
      %1477 = vdwg.mxu0
      %1478 = vmatpush.bf16.msra.mxu0 %v1140
      %1479 = vmatpush.bf16.msra.mxu0 %v1138
      %1480 = vmatpush.bf16.msra.mxu0 %v1136
      %1481 = vmatpush.bf16.msra.mxu0 %v1134
      %1482 = vmatpush.bf16.msra.mxu0 %v1132
      %1483 = vmatpush.bf16.msra.mxu0 %v1130
      %1484 = vmatpush.bf16.msra.mxu0 %v1128
      %1485 = vmatpush.bf16.msra.mxu0 %v1126
      %1486 = vmatmul.bf16.gmra.mxu0 %v657
      %v1487 = vpop.f32.mrf.mxu0
      %v1488 = vadd.f32 %v1475, %v1487
      %v1489 = vpop.f32.mrf.mxu0
      %1490 = vdwg.mxu0
      %1491 = vmatpush.bf16.msra.mxu0 %v1156
      %1492 = vmatpush.bf16.msra.mxu0 %v1154
      %1493 = vmatpush.bf16.msra.mxu0 %v1152
      %1494 = vmatpush.bf16.msra.mxu0 %v1150
      %1495 = vmatpush.bf16.msra.mxu0 %v1148
      %1496 = vmatpush.bf16.msra.mxu0 %v1146
      %1497 = vmatpush.bf16.msra.mxu0 %v1144
      %1498 = vmatpush.bf16.msra.mxu0 %v1142
      %1499 = vmatmul.bf16.gmra.mxu0 %v664
      %v1500 = vpop.f32.mrf.mxu0
      %v1501 = vadd.f32 %v1488, %v1500
      %v1502 = vpop.f32.mrf.mxu0
      %1503 = vdwg.mxu0
      %1504 = vmatpush.bf16.msra.mxu0 %v1172
      %1505 = vmatpush.bf16.msra.mxu0 %v1170
      %1506 = vmatpush.bf16.msra.mxu0 %v1168
      %1507 = vmatpush.bf16.msra.mxu0 %v1166
      %1508 = vmatpush.bf16.msra.mxu0 %v1164
      %1509 = vmatpush.bf16.msra.mxu0 %v1162
      %1510 = vmatpush.bf16.msra.mxu0 %v1160
      %1511 = vmatpush.bf16.msra.mxu0 %v1158
      %1512 = vmatmul.bf16.gmra.mxu0 %v671
      %v1513 = vpop.f32.mrf.mxu0
      %v1514 = vadd.f32 %v1501, %v1513
      %v1515 = vpop.f32.mrf.mxu0
      %1516 = vdwg.mxu0
      %1517 = vmatpush.bf16.msra.mxu0 0
      %1518 = vmatpush.bf16.msra.mxu0 %v1320
      %1519 = vmatpush.bf16.msra.mxu0 %v1184
      %1520 = vmatpush.bf16.msra.mxu0 %v1182
      %1521 = vmatpush.bf16.msra.mxu0 %v1180
      %1522 = vmatpush.bf16.msra.mxu0 %v1178
      %1523 = vmatpush.bf16.msra.mxu0 %v1176
      %1524 = vmatpush.bf16.msra.mxu0 %v1174
      %1525 = vmatmul.bf16.gmra.mxu0 %v1313
      %v1526 = vpop.f32.mrf.mxu0
      %v1527 = vadd.f32 %v1514, %v1526
      %v1528 = vpop.f32.mrf.mxu0
      %1529 = vdwg.mxu0
      %v1530 = vpack.c.b16 %v599, %v599
      %v1531 = vpack.c.b16 %v600, %v600
      %v1532 = vpack.c.b16 %v601, %v601
      %v1533 = vpack.c.b16 %v602, %v602
      %v1534 = vpack.c.b16 %v603, %v603
      %v1535 = vpack.c.b16 %v604, %v604
      %v1536 = vpack.c.b16 %v605, %v605
      %v1537 = vpack.c.b16 %v606, %v606
      %v1670 = vunpack.c.l.b16 %v336
      %v1671 = vunpack.c.h.b16 %v336
      %v1672 = vunpack.c.l.b16 %v337
      %v1673 = vunpack.c.h.b16 %v337
      %v1674 = vunpack.c.l.b16 %v338
      %v1675 = vunpack.c.h.b16 %v338
      %v1676 = vunpack.c.l.b16 %v339
      %v1677 = vunpack.c.h.b16 %v339
      %v1678 = vunpack.c.l.b16 %v340
      %v1679 = vunpack.c.h.b16 %v340
      %v1680 = vunpack.c.l.b16 %v341
      %v1681 = vunpack.c.h.b16 %v341
      %v1682 = vunpack.c.l.b16 %v342
      %v1683 = vunpack.c.h.b16 %v342
      %v1684 = vunpack.c.l.b16 %v343
      %v1685 = vunpack.c.h.b16 %v343
      %v1686 = vunpack.c.l.b16 %v344
      %v1687 = vunpack.c.h.b16 %v344
      %v1688 = vunpack.c.l.b16 %v345
      %v1689 = vunpack.c.h.b16 %v345
      %v1690 = vunpack.c.l.b16 %v346
      %v1691 = vunpack.c.h.b16 %v346
      %v1692 = vunpack.c.l.b16 %v347
      %v1693 = vunpack.c.h.b16 %v347
      %v1694 = vunpack.c.l.b16 %v348
      %v1695 = vunpack.c.h.b16 %v348
      %v1696 = vunpack.c.l.b16 %v349
      %v1697 = vunpack.c.h.b16 %v349
      %v1698 = vunpack.c.l.b16 %v350
      %v1699 = vunpack.c.h.b16 %v350
      %v1700 = vunpack.c.l.b16 %v351
      %v1701 = vunpack.c.h.b16 %v351
      %v1702 = vunpack.c.l.b16 %v352
      %v1703 = vunpack.c.h.b16 %v352
      %v1704 = vunpack.c.l.b16 %v353
      %v1705 = vunpack.c.h.b16 %v353
      %v1706 = vunpack.c.l.b16 %v354
      %v1707 = vunpack.c.h.b16 %v354
      %v1708 = vunpack.c.l.b16 %v355
      %v1709 = vunpack.c.h.b16 %v355
      %v1710 = vunpack.c.l.b16 %v356
      %v1711 = vunpack.c.h.b16 %v356
      %v1712 = vunpack.c.l.b16 %v357
      %v1713 = vunpack.c.h.b16 %v357
      %v1714 = vunpack.c.l.b16 %v358
      %v1715 = vunpack.c.h.b16 %v358
      %v1716 = vunpack.c.l.b16 %v359
      %v1717 = vunpack.c.h.b16 %v359
      %v1718 = vunpack.c.l.b16 %v360
      %v1719 = vunpack.c.h.b16 %v360
      %v1720 = vunpack.c.l.b16 %v361
      %v1721 = vunpack.c.h.b16 %v361
      %v1722 = vunpack.c.l.b16 %v362
      %v1723 = vunpack.c.h.b16 %v362
      %v1724 = vunpack.c.l.b16 %v363
      %v1725 = vunpack.c.h.b16 %v363
      %v1726 = vunpack.c.l.b16 %v364
      %v1727 = vunpack.c.h.b16 %v364
      %v1728 = vunpack.c.l.b16 %v365
      %v1729 = vunpack.c.h.b16 %v365
      %v1730 = vunpack.c.l.b16 %v366
      %v1731 = vunpack.c.h.b16 %v366
      %v1732 = vunpack.c.l.b16 %v367
      %v1733 = vunpack.c.h.b16 %v367
      %v1734 = vunpack.c.l.b16 %v368
      %v1735 = vunpack.c.h.b16 %v368
      %v1736 = vunpack.c.l.b16 %v369
      %v1737 = vunpack.c.h.b16 %v369
      %v1738 = vunpack.c.l.b16 %v370
      %v1739 = vunpack.c.h.b16 %v370
      %v1740 = vunpack.c.l.b16 %v371
      %v1741 = vunpack.c.h.b16 %v371
      %v1742 = vunpack.c.l.b16 %v372
      %v1743 = vunpack.c.h.b16 %v372
      %v1744 = vunpack.c.l.b16 %v373
      %v1745 = vunpack.c.h.b16 %v373
      %v1746 = vunpack.c.l.b16 %v374
      %v1747 = vunpack.c.h.b16 %v374
      %v1748 = vunpack.c.l.b16 %v375
      %v1749 = vunpack.c.h.b16 %v375
      %v1750 = vunpack.c.l.b16 %v376
      %v1751 = vunpack.c.h.b16 %v376
      %v1752 = vunpack.c.l.b16 %v377
      %v1753 = vunpack.c.h.b16 %v377
      %v1754 = vunpack.c.l.b16 %v378
      %v1755 = vunpack.c.h.b16 %v378
      %v1756 = vunpack.c.l.b16 %v379
      %v1757 = vunpack.c.h.b16 %v379
      %v1758 = vunpack.c.l.b16 %v380
      %v1759 = vunpack.c.h.b16 %v380
      %v1760 = vunpack.c.l.b16 %v381
      %v1761 = vunpack.c.h.b16 %v381
      %v1762 = vunpack.c.l.b16 %v382
      %v1763 = vunpack.c.h.b16 %v382
      %v1764 = vunpack.c.l.b16 %v383
      %v1765 = vunpack.c.h.b16 %v383
      %v1766 = vunpack.c.l.b16 %v384
      %v1767 = vunpack.c.h.b16 %v384
      %v1768 = vunpack.c.l.b16 %v385
      %v1769 = vunpack.c.h.b16 %v385
      %v1770 = vunpack.c.l.b16 %v386
      %v1771 = vunpack.c.h.b16 %v386
      %v1772 = vunpack.c.l.b16 %v387
      %v1773 = vunpack.c.h.b16 %v387
      %v1774 = vunpack.c.l.b16 %v388
      %v1775 = vunpack.c.h.b16 %v388
      %v1776 = vunpack.c.l.b16 %v389
      %v1777 = vunpack.c.h.b16 %v389
      %v1778 = vunpack.c.l.b16 %v390
      %v1779 = vunpack.c.h.b16 %v390
      %v1780 = vunpack.c.l.b16 %v391
      %v1781 = vunpack.c.h.b16 %v391
      %v1782 = vunpack.c.l.b16 %v392
      %v1783 = vunpack.c.h.b16 %v392
      %v1784 = vunpack.c.l.b16 %v393
      %v1785 = vunpack.c.h.b16 %v393
      %v1786 = vunpack.c.l.b16 %v394
      %v1787 = vunpack.c.h.b16 %v394
      %v1788 = vunpack.c.l.b16 %v395
      %v1789 = vunpack.c.h.b16 %v395
      %v1790 = vunpack.c.l.b16 %v396
      %v1791 = vunpack.c.h.b16 %v396
      %v1792 = vunpack.c.l.b16 %v397
      %v1793 = vunpack.c.h.b16 %v397
      %v1794 = vunpack.c.l.b16 %v398
      %v1795 = vunpack.c.h.b16 %v398
      %v1796 = vunpack.c.l.b16 %v399
      %v1797 = vunpack.c.h.b16 %v399
      %v1798 = vunpack.c.l.b16 %v400
      %v1799 = vunpack.c.h.b16 %v400
      %v1800 = vunpack.c.l.b16 %v401
      %v1801 = vunpack.c.h.b16 %v401
      %v1802 = vunpack.c.l.b16 %v402
      %v1803 = vunpack.c.h.b16 %v402
      %v1804 = vunpack.c.l.b16 %v403
      %v1805 = vunpack.c.h.b16 %v403
      %v1806 = vunpack.c.l.b16 %v404
      %v1807 = vunpack.c.h.b16 %v404
      %v1808 = vunpack.c.l.b16 %v405
      %v1809 = vunpack.c.h.b16 %v405
      %v1810 = vunpack.c.l.b16 %v406
      %v1811 = vunpack.c.h.b16 %v406
      %v1812 = vunpack.c.l.b16 %v407
      %v1813 = vunpack.c.h.b16 %v407
      %v1814 = vunpack.c.l.b16 %v408
      %v1815 = vunpack.c.h.b16 %v408
      %v1816 = vunpack.c.l.b16 %v409
      %v1817 = vunpack.c.h.b16 %v409
      %v1818 = vunpack.c.l.b16 %v410
      %v1819 = vunpack.c.h.b16 %v410
      %v1820 = vunpack.c.l.b16 %v411
      %v1821 = vunpack.c.h.b16 %v411
      %v1822 = vunpack.c.l.b16 %v412
      %v1823 = vunpack.c.h.b16 %v412
      %v1824 = vunpack.c.l.b16 %v413
      %v1825 = vunpack.c.h.b16 %v413
      %v1826 = vunpack.c.l.b16 %v414
      %v1827 = vunpack.c.h.b16 %v414
      %v1828 = vunpack.c.l.b16 %v415
      %v1829 = vunpack.c.h.b16 %v415
      %v1830 = vunpack.c.l.b16 %v416
      %v1831 = vunpack.c.h.b16 %v416
      %v1832 = vunpack.c.l.b16 %v417
      %v1833 = vunpack.c.h.b16 %v417
      %v1834 = vunpack.c.l.b16 %v418
      %v1835 = vunpack.c.h.b16 %v418
      %v1836 = vunpack.c.l.b16 %v419
      %v1837 = vunpack.c.h.b16 %v419
      %v1838 = vunpack.c.l.b16 %v420
      %v1839 = vunpack.c.h.b16 %v420
      %v1840 = vunpack.c.l.b16 %v421
      %v1841 = vunpack.c.h.b16 %v421
      %v1842 = vunpack.c.l.b16 %v422
      %v1843 = vunpack.c.h.b16 %v422
      %v1844 = vunpack.c.l.b16 %v423
      %v1845 = vunpack.c.h.b16 %v423
      %v1846 = vunpack.c.l.b16 %v424
      %v1847 = vunpack.c.h.b16 %v424
      %v1848 = vunpack.c.l.b16 %v425
      %v1849 = vunpack.c.h.b16 %v425
      %v1850 = vunpack.c.l.b16 %v426
      %v1851 = vunpack.c.h.b16 %v426
      %v1852 = vunpack.c.l.b16 %v427
      %v1853 = vunpack.c.h.b16 %v427
      %v1854 = vunpack.c.l.b16 %v428
      %v1855 = vunpack.c.h.b16 %v428
      %v1856 = vunpack.c.l.b16 %v429
      %v1857 = vunpack.c.h.b16 %v429
      %v1858 = vunpack.c.l.b16 %v430
      %v1859 = vunpack.c.h.b16 %v430
      %v1860 = vunpack.c.l.b16 %v431
      %v1861 = vunpack.c.h.b16 %v431
      %v1862 = vunpack.c.l.b16 %v432
      %v1863 = vunpack.c.h.b16 %v432
      %v1864 = vunpack.c.l.b16 %v433
      %v1865 = vunpack.c.h.b16 %v433
      %v1866 = vunpack.c.l.b16 %v434
      %v1867 = vunpack.c.h.b16 %v434
      %v1868 = vunpack.c.l.b16 %v435
      %v1869 = vunpack.c.h.b16 %v435
      %v1870 = vunpack.c.l.b16 %v436
      %v1871 = vunpack.c.h.b16 %v436
      %v1872 = vunpack.c.l.b16 %v437
      %v1873 = vunpack.c.h.b16 %v437
      %v1874 = vunpack.c.l.b16 %v438
      %v1875 = vunpack.c.h.b16 %v438
      %v1876 = vunpack.c.l.b16 %v439
      %v1877 = vunpack.c.h.b16 %v439
      %v1878 = vunpack.c.l.b16 %v440
      %v1879 = vunpack.c.h.b16 %v440
      %v1880 = vunpack.c.l.b16 %v441
      %v1881 = vunpack.c.h.b16 %v441
      %v1882 = vunpack.c.l.b16 %v442
      %v1883 = vunpack.c.h.b16 %v442
      %v1884 = vunpack.c.l.b16 %v443
      %v1885 = vunpack.c.h.b16 %v443
      %v1886 = vunpack.c.l.b16 %v444
      %v1887 = vunpack.c.h.b16 %v444
      %v1888 = vunpack.c.l.b16 %v445
      %v1889 = vunpack.c.h.b16 %v445
      %v1890 = vunpack.c.l.b16 %v446
      %v1891 = vunpack.c.h.b16 %v446
      %v1892 = vunpack.c.l.b16 %v447
      %v1893 = vunpack.c.h.b16 %v447
      %v1894 = vunpack.c.l.b16 %v448
      %v1895 = vunpack.c.h.b16 %v448
      %v1896 = vunpack.c.l.b16 %v449
      %v1897 = vunpack.c.h.b16 %v449
      %v1898 = vunpack.c.l.b16 %v450
      %v1899 = vunpack.c.h.b16 %v450
      %v1900 = vunpack.c.l.b16 %v451
      %v1901 = vunpack.c.h.b16 %v451
      %v1902 = vunpack.c.l.b16 %v452
      %v1903 = vunpack.c.h.b16 %v452
      %v1904 = vunpack.c.l.b16 %v453
      %v1905 = vunpack.c.h.b16 %v453
      %v1906 = vunpack.c.l.b16 %v454
      %v1907 = vunpack.c.h.b16 %v454
      %v1908 = vunpack.c.l.b16 %v455
      %v1909 = vunpack.c.h.b16 %v455
      %v1910 = vunpack.c.l.b16 %v456
      %v1911 = vunpack.c.h.b16 %v456
      %v1912 = vunpack.c.l.b16 %v457
      %v1913 = vunpack.c.h.b16 %v457
      %v1914 = vunpack.c.l.b16 %v458
      %v1915 = vunpack.c.h.b16 %v458
      %v1916 = vunpack.c.l.b16 %v459
      %v1917 = vunpack.c.h.b16 %v459
      %v1918 = vunpack.c.l.b16 %v460
      %v1919 = vunpack.c.h.b16 %v460
      %v1920 = vpack.c.b16 %v1672, %v1670
      %v1921 = vpack.c.b16 %v1673, %v1671
      %v1922 = vpack.c.b16 %v1676, %v1674
      %v1923 = vpack.c.b16 %v1677, %v1675
      %v1924 = vpack.c.b16 %v1680, %v1678
      %v1925 = vpack.c.b16 %v1681, %v1679
      %v1926 = vpack.c.b16 %v1684, %v1682
      %v1927 = vpack.c.b16 %v1685, %v1683
      %v1928 = vpack.c.b16 %v1688, %v1686
      %v1929 = vpack.c.b16 %v1689, %v1687
      %v1930 = vpack.c.b16 %v1692, %v1690
      %v1931 = vpack.c.b16 %v1693, %v1691
      %v1932 = vpack.c.b16 %v1696, %v1694
      %v1933 = vpack.c.b16 %v1697, %v1695
      %v1934 = vpack.c.b16 %v1700, %v1698
      %v1935 = vpack.c.b16 %v1701, %v1699
      %v1936 = vpack.c.b16 %v1704, %v1702
      %v1937 = vpack.c.b16 %v1705, %v1703
      %v1938 = vpack.c.b16 %v1708, %v1706
      %v1939 = vpack.c.b16 %v1709, %v1707
      %v1940 = vpack.c.b16 %v1712, %v1710
      %v1941 = vpack.c.b16 %v1713, %v1711
      %v1942 = vpack.c.b16 %v1716, %v1714
      %v1943 = vpack.c.b16 %v1717, %v1715
      %v1944 = vpack.c.b16 %v1720, %v1718
      %v1945 = vpack.c.b16 %v1721, %v1719
      %v1946 = vpack.c.b16 %v1724, %v1722
      %v1947 = vpack.c.b16 %v1725, %v1723
      %v1948 = vpack.c.b16 %v1728, %v1726
      %v1949 = vpack.c.b16 %v1729, %v1727
      %v1950 = vpack.c.b16 %v1732, %v1730
      %v1951 = vpack.c.b16 %v1733, %v1731
      %v1952 = vpack.c.b16 %v1736, %v1734
      %v1953 = vpack.c.b16 %v1737, %v1735
      %v1954 = vpack.c.b16 %v1740, %v1738
      %v1955 = vpack.c.b16 %v1741, %v1739
      %v1956 = vpack.c.b16 %v1744, %v1742
      %v1957 = vpack.c.b16 %v1745, %v1743
      %v1958 = vpack.c.b16 %v1748, %v1746
      %v1959 = vpack.c.b16 %v1749, %v1747
      %v1960 = vpack.c.b16 %v1752, %v1750
      %v1961 = vpack.c.b16 %v1753, %v1751
      %v1962 = vpack.c.b16 %v1756, %v1754
      %v1963 = vpack.c.b16 %v1757, %v1755
      %v1964 = vpack.c.b16 %v1760, %v1758
      %v1965 = vpack.c.b16 %v1761, %v1759
      %v1966 = vpack.c.b16 %v1764, %v1762
      %v1967 = vpack.c.b16 %v1765, %v1763
      %v1968 = vpack.c.b16 %v1768, %v1766
      %v1969 = vpack.c.b16 %v1769, %v1767
      %v1970 = vpack.c.b16 %v1772, %v1770
      %v1971 = vpack.c.b16 %v1773, %v1771
      %v1972 = vpack.c.b16 %v1776, %v1774
      %v1973 = vpack.c.b16 %v1777, %v1775
      %v1974 = vpack.c.b16 %v1780, %v1778
      %v1975 = vpack.c.b16 %v1781, %v1779
      %v1976 = vpack.c.b16 %v1784, %v1782
      %v1977 = vpack.c.b16 %v1785, %v1783
      %v1978 = vpack.c.b16 %v1788, %v1786
      %v1979 = vpack.c.b16 %v1789, %v1787
      %v1980 = vpack.c.b16 %v1792, %v1790
      %v1981 = vpack.c.b16 %v1793, %v1791
      %v1982 = vpack.c.b16 %v1796, %v1794
      %v1983 = vpack.c.b16 %v1797, %v1795
      %v1984 = vpack.c.b16 %v1800, %v1798
      %v1985 = vpack.c.b16 %v1801, %v1799
      %v1986 = vpack.c.b16 %v1804, %v1802
      %v1987 = vpack.c.b16 %v1805, %v1803
      %v1988 = vpack.c.b16 %v1808, %v1806
      %v1989 = vpack.c.b16 %v1809, %v1807
      %v1990 = vpack.c.b16 %v1812, %v1810
      %v1991 = vpack.c.b16 %v1813, %v1811
      %v1992 = vpack.c.b16 %v1816, %v1814
      %v1993 = vpack.c.b16 %v1817, %v1815
      %v1994 = vpack.c.b16 %v1820, %v1818
      %v1995 = vpack.c.b16 %v1821, %v1819
      %v1996 = vpack.c.b16 %v1824, %v1822
      %v1997 = vpack.c.b16 %v1825, %v1823
      %v1998 = vpack.c.b16 %v1828, %v1826
      %v1999 = vpack.c.b16 %v1829, %v1827
      %v2000 = vpack.c.b16 %v1832, %v1830
      %v2001 = vpack.c.b16 %v1833, %v1831
      %v2002 = vpack.c.b16 %v1836, %v1834
      %v2003 = vpack.c.b16 %v1837, %v1835
      %v2004 = vpack.c.b16 %v1840, %v1838
      %v2005 = vpack.c.b16 %v1841, %v1839
      %v2006 = vpack.c.b16 %v1844, %v1842
      %v2007 = vpack.c.b16 %v1845, %v1843
      %v2008 = vpack.c.b16 %v1848, %v1846
      %v2009 = vpack.c.b16 %v1849, %v1847
      %v2010 = vpack.c.b16 %v1852, %v1850
      %v2011 = vpack.c.b16 %v1853, %v1851
      %v2012 = vpack.c.b16 %v1856, %v1854
      %v2013 = vpack.c.b16 %v1857, %v1855
      %v2014 = vpack.c.b16 %v1860, %v1858
      %v2015 = vpack.c.b16 %v1861, %v1859
      %v2016 = vpack.c.b16 %v1864, %v1862
      %v2017 = vpack.c.b16 %v1865, %v1863
      %v2018 = vpack.c.b16 %v1868, %v1866
      %v2019 = vpack.c.b16 %v1869, %v1867
      %v2020 = vpack.c.b16 %v1872, %v1870
      %v2021 = vpack.c.b16 %v1873, %v1871
      %v2022 = vpack.c.b16 %v1876, %v1874
      %v2023 = vpack.c.b16 %v1877, %v1875
      %v2024 = vpack.c.b16 %v1880, %v1878
      %v2025 = vpack.c.b16 %v1881, %v1879
      %v2026 = vpack.c.b16 %v1884, %v1882
      %v2027 = vpack.c.b16 %v1885, %v1883
      %v2028 = vpack.c.b16 %v1888, %v1886
      %v2029 = vpack.c.b16 %v1889, %v1887
      %v2030 = vpack.c.b16 %v1892, %v1890
      %v2031 = vpack.c.b16 %v1893, %v1891
      %v2032 = vpack.c.b16 %v1896, %v1894
      %v2033 = vpack.c.b16 %v1897, %v1895
      %v2034 = vpack.c.b16 %v1900, %v1898
      %v2035 = vpack.c.b16 %v1901, %v1899
      %v2036 = vpack.c.b16 %v1904, %v1902
      %v2037 = vpack.c.b16 %v1905, %v1903
      %v2038 = vpack.c.b16 %v1908, %v1906
      %v2039 = vpack.c.b16 %v1909, %v1907
      %v2040 = vpack.c.b16 %v1912, %v1910
      %v2041 = vpack.c.b16 %v1913, %v1911
      %v2042 = vpack.c.b16 %v1916, %v1914
      %v2043 = vpack.c.b16 %v1917, %v1915
      %v2044 = vpack.c.b16 %v1918, %v1918
      %v2045 = vpack.c.b16 %v1919, %v1919
      %v2171 = vsel %vm1311, %v1537, 0
      %v2174 = vsel %vm1315, %v2044, 0
      %v2177 = vsel %vm1315, %v2045, 0
      %2179 = vmatpush.bf16.msra.mxu0 %v1934
      %2180 = vmatpush.bf16.msra.mxu0 %v1932
      %2181 = vmatpush.bf16.msra.mxu0 %v1930
      %2182 = vmatpush.bf16.msra.mxu0 %v1928
      %2183 = vmatpush.bf16.msra.mxu0 %v1926
      %2184 = vmatpush.bf16.msra.mxu0 %v1924
      %2185 = vmatpush.bf16.msra.mxu0 %v1922
      %2186 = vmatpush.bf16.msra.mxu0 %v1920
      %2187 = vmatmul.bf16.gmra.mxu0 %v1530
      %v2188 = vpop.f32.mrf.mxu0
      %v2189 = vadd.f32 %v1423, %v2188
      %v2190 = vpop.f32.mrf.mxu0
      %2191 = vdwg.mxu0
      %2192 = vmatpush.bf16.msra.mxu0 %v1950
      %2193 = vmatpush.bf16.msra.mxu0 %v1948
      %2194 = vmatpush.bf16.msra.mxu0 %v1946
      %2195 = vmatpush.bf16.msra.mxu0 %v1944
      %2196 = vmatpush.bf16.msra.mxu0 %v1942
      %2197 = vmatpush.bf16.msra.mxu0 %v1940
      %2198 = vmatpush.bf16.msra.mxu0 %v1938
      %2199 = vmatpush.bf16.msra.mxu0 %v1936
      %2200 = vmatmul.bf16.gmra.mxu0 %v1531
      %v2201 = vpop.f32.mrf.mxu0
      %v2202 = vadd.f32 %v2189, %v2201
      %v2203 = vpop.f32.mrf.mxu0
      %2204 = vdwg.mxu0
      %2205 = vmatpush.bf16.msra.mxu0 %v1966
      %2206 = vmatpush.bf16.msra.mxu0 %v1964
      %2207 = vmatpush.bf16.msra.mxu0 %v1962
      %2208 = vmatpush.bf16.msra.mxu0 %v1960
      %2209 = vmatpush.bf16.msra.mxu0 %v1958
      %2210 = vmatpush.bf16.msra.mxu0 %v1956
      %2211 = vmatpush.bf16.msra.mxu0 %v1954
      %2212 = vmatpush.bf16.msra.mxu0 %v1952
      %2213 = vmatmul.bf16.gmra.mxu0 %v1532
      %v2214 = vpop.f32.mrf.mxu0
      %v2215 = vadd.f32 %v2202, %v2214
      %v2216 = vpop.f32.mrf.mxu0
      %2217 = vdwg.mxu0
      %2218 = vmatpush.bf16.msra.mxu0 %v1982
      %2219 = vmatpush.bf16.msra.mxu0 %v1980
      %2220 = vmatpush.bf16.msra.mxu0 %v1978
      %2221 = vmatpush.bf16.msra.mxu0 %v1976
      %2222 = vmatpush.bf16.msra.mxu0 %v1974
      %2223 = vmatpush.bf16.msra.mxu0 %v1972
      %2224 = vmatpush.bf16.msra.mxu0 %v1970
      %2225 = vmatpush.bf16.msra.mxu0 %v1968
      %2226 = vmatmul.bf16.gmra.mxu0 %v1533
      %v2227 = vpop.f32.mrf.mxu0
      %v2228 = vadd.f32 %v2215, %v2227
      %v2229 = vpop.f32.mrf.mxu0
      %2230 = vdwg.mxu0
      %2231 = vmatpush.bf16.msra.mxu0 %v1998
      %2232 = vmatpush.bf16.msra.mxu0 %v1996
      %2233 = vmatpush.bf16.msra.mxu0 %v1994
      %2234 = vmatpush.bf16.msra.mxu0 %v1992
      %2235 = vmatpush.bf16.msra.mxu0 %v1990
      %2236 = vmatpush.bf16.msra.mxu0 %v1988
      %2237 = vmatpush.bf16.msra.mxu0 %v1986
      %2238 = vmatpush.bf16.msra.mxu0 %v1984
      %2239 = vmatmul.bf16.gmra.mxu0 %v1534
      %v2240 = vpop.f32.mrf.mxu0
      %v2241 = vadd.f32 %v2228, %v2240
      %v2242 = vpop.f32.mrf.mxu0
      %2243 = vdwg.mxu0
      %2244 = vmatpush.bf16.msra.mxu0 %v2014
      %2245 = vmatpush.bf16.msra.mxu0 %v2012
      %2246 = vmatpush.bf16.msra.mxu0 %v2010
      %2247 = vmatpush.bf16.msra.mxu0 %v2008
      %2248 = vmatpush.bf16.msra.mxu0 %v2006
      %2249 = vmatpush.bf16.msra.mxu0 %v2004
      %2250 = vmatpush.bf16.msra.mxu0 %v2002
      %2251 = vmatpush.bf16.msra.mxu0 %v2000
      %2252 = vmatmul.bf16.gmra.mxu0 %v1535
      %v2253 = vpop.f32.mrf.mxu0
      %v2254 = vadd.f32 %v2241, %v2253
      %v2255 = vpop.f32.mrf.mxu0
      %2256 = vdwg.mxu0
      %2257 = vmatpush.bf16.msra.mxu0 %v2030
      %2258 = vmatpush.bf16.msra.mxu0 %v2028
      %2259 = vmatpush.bf16.msra.mxu0 %v2026
      %2260 = vmatpush.bf16.msra.mxu0 %v2024
      %2261 = vmatpush.bf16.msra.mxu0 %v2022
      %2262 = vmatpush.bf16.msra.mxu0 %v2020
      %2263 = vmatpush.bf16.msra.mxu0 %v2018
      %2264 = vmatpush.bf16.msra.mxu0 %v2016
      %2265 = vmatmul.bf16.gmra.mxu0 %v1536
      %v2266 = vpop.f32.mrf.mxu0
      %v2267 = vadd.f32 %v2254, %v2266
      %v2268 = vpop.f32.mrf.mxu0
      %2269 = vdwg.mxu0
      %2270 = vmatpush.bf16.msra.mxu0 0
      %2271 = vmatpush.bf16.msra.mxu0 %v2174
      %2272 = vmatpush.bf16.msra.mxu0 %v2042
      %2273 = vmatpush.bf16.msra.mxu0 %v2040
      %2274 = vmatpush.bf16.msra.mxu0 %v2038
      %2275 = vmatpush.bf16.msra.mxu0 %v2036
      %2276 = vmatpush.bf16.msra.mxu0 %v2034
      %2277 = vmatpush.bf16.msra.mxu0 %v2032
      %2278 = vmatmul.bf16.gmra.mxu0 %v2171
      %v2279 = vpop.f32.mrf.mxu0
      %v2280 = vadd.f32 %v2267, %v2279
      %v2281 = vpop.f32.mrf.mxu0
      %2282 = vdwg.mxu0
      %2283 = vmatpush.bf16.msra.mxu0 %v1935
      %2284 = vmatpush.bf16.msra.mxu0 %v1933
      %2285 = vmatpush.bf16.msra.mxu0 %v1931
      %2286 = vmatpush.bf16.msra.mxu0 %v1929
      %2287 = vmatpush.bf16.msra.mxu0 %v1927
      %2288 = vmatpush.bf16.msra.mxu0 %v1925
      %2289 = vmatpush.bf16.msra.mxu0 %v1923
      %2290 = vmatpush.bf16.msra.mxu0 %v1921
      %2291 = vmatmul.bf16.gmra.mxu0 %v1530
      %v2292 = vpop.f32.mrf.mxu0
      %v2293 = vadd.f32 %v1527, %v2292
      %v2294 = vpop.f32.mrf.mxu0
      %2295 = vdwg.mxu0
      %2296 = vmatpush.bf16.msra.mxu0 %v1951
      %2297 = vmatpush.bf16.msra.mxu0 %v1949
      %2298 = vmatpush.bf16.msra.mxu0 %v1947
      %2299 = vmatpush.bf16.msra.mxu0 %v1945
      %2300 = vmatpush.bf16.msra.mxu0 %v1943
      %2301 = vmatpush.bf16.msra.mxu0 %v1941
      %2302 = vmatpush.bf16.msra.mxu0 %v1939
      %2303 = vmatpush.bf16.msra.mxu0 %v1937
      %2304 = vmatmul.bf16.gmra.mxu0 %v1531
      %v2305 = vpop.f32.mrf.mxu0
      %v2306 = vadd.f32 %v2293, %v2305
      %v2307 = vpop.f32.mrf.mxu0
      %2308 = vdwg.mxu0
      %2309 = vmatpush.bf16.msra.mxu0 %v1967
      %2310 = vmatpush.bf16.msra.mxu0 %v1965
      %2311 = vmatpush.bf16.msra.mxu0 %v1963
      %2312 = vmatpush.bf16.msra.mxu0 %v1961
      %2313 = vmatpush.bf16.msra.mxu0 %v1959
      %2314 = vmatpush.bf16.msra.mxu0 %v1957
      %2315 = vmatpush.bf16.msra.mxu0 %v1955
      %2316 = vmatpush.bf16.msra.mxu0 %v1953
      %2317 = vmatmul.bf16.gmra.mxu0 %v1532
      %v2318 = vpop.f32.mrf.mxu0
      %v2319 = vadd.f32 %v2306, %v2318
      %v2320 = vpop.f32.mrf.mxu0
      %2321 = vdwg.mxu0
      %2322 = vmatpush.bf16.msra.mxu0 %v1983
      %2323 = vmatpush.bf16.msra.mxu0 %v1981
      %2324 = vmatpush.bf16.msra.mxu0 %v1979
      %2325 = vmatpush.bf16.msra.mxu0 %v1977
      %2326 = vmatpush.bf16.msra.mxu0 %v1975
      %2327 = vmatpush.bf16.msra.mxu0 %v1973
      %2328 = vmatpush.bf16.msra.mxu0 %v1971
      %2329 = vmatpush.bf16.msra.mxu0 %v1969
      %2330 = vmatmul.bf16.gmra.mxu0 %v1533
      %v2331 = vpop.f32.mrf.mxu0
      %v2332 = vadd.f32 %v2319, %v2331
      %v2333 = vpop.f32.mrf.mxu0
      %2334 = vdwg.mxu0
      %2335 = vmatpush.bf16.msra.mxu0 %v1999
      %2336 = vmatpush.bf16.msra.mxu0 %v1997
      %2337 = vmatpush.bf16.msra.mxu0 %v1995
      %2338 = vmatpush.bf16.msra.mxu0 %v1993
      %2339 = vmatpush.bf16.msra.mxu0 %v1991
      %2340 = vmatpush.bf16.msra.mxu0 %v1989
      %2341 = vmatpush.bf16.msra.mxu0 %v1987
      %2342 = vmatpush.bf16.msra.mxu0 %v1985
      %2343 = vmatmul.bf16.gmra.mxu0 %v1534
      %v2344 = vpop.f32.mrf.mxu0
      %v2345 = vadd.f32 %v2332, %v2344
      %v2346 = vpop.f32.mrf.mxu0
      %2347 = vdwg.mxu0
      %2348 = vmatpush.bf16.msra.mxu0 %v2015
      %2349 = vmatpush.bf16.msra.mxu0 %v2013
      %2350 = vmatpush.bf16.msra.mxu0 %v2011
      %2351 = vmatpush.bf16.msra.mxu0 %v2009
      %2352 = vmatpush.bf16.msra.mxu0 %v2007
      %2353 = vmatpush.bf16.msra.mxu0 %v2005
      %2354 = vmatpush.bf16.msra.mxu0 %v2003
      %2355 = vmatpush.bf16.msra.mxu0 %v2001
      %2356 = vmatmul.bf16.gmra.mxu0 %v1535
      %v2357 = vpop.f32.mrf.mxu0
      %v2358 = vadd.f32 %v2345, %v2357
      %v2359 = vpop.f32.mrf.mxu0
      %2360 = vdwg.mxu0
      %2361 = vmatpush.bf16.msra.mxu0 %v2031
      %2362 = vmatpush.bf16.msra.mxu0 %v2029
      %2363 = vmatpush.bf16.msra.mxu0 %v2027
      %2364 = vmatpush.bf16.msra.mxu0 %v2025
      %2365 = vmatpush.bf16.msra.mxu0 %v2023
      %2366 = vmatpush.bf16.msra.mxu0 %v2021
      %2367 = vmatpush.bf16.msra.mxu0 %v2019
      %2368 = vmatpush.bf16.msra.mxu0 %v2017
      %2369 = vmatmul.bf16.gmra.mxu0 %v1536
      %v2370 = vpop.f32.mrf.mxu0
      %v2371 = vadd.f32 %v2358, %v2370
      %v2372 = vpop.f32.mrf.mxu0
      %2373 = vdwg.mxu0
      %2374 = vmatpush.bf16.msra.mxu0 0
      %2375 = vmatpush.bf16.msra.mxu0 %v2177
      %2376 = vmatpush.bf16.msra.mxu0 %v2043
      %2377 = vmatpush.bf16.msra.mxu0 %v2041
      %2378 = vmatpush.bf16.msra.mxu0 %v2039
      %2379 = vmatpush.bf16.msra.mxu0 %v2037
      %2380 = vmatpush.bf16.msra.mxu0 %v2035
      %2381 = vmatpush.bf16.msra.mxu0 %v2033
      %2382 = vmatmul.bf16.gmra.mxu0 %v2171
      %v2383 = vpop.f32.mrf.mxu0
      %v2384 = vadd.f32 %v2371, %v2383
      %v2385 = vpop.f32.mrf.mxu0
      %2386 = vdwg.mxu0
      %v2387 = vld [vmem:[%s326] sm:$0xee]
      %v2388 = vld [vmem:[%s326 + $0x8] sm:$0xee]
      %v2389 = vld [vmem:[%s326 + $0x10] sm:$0xee]
      %v2390 = vld [vmem:[%s326 + $0x18] sm:$0xee]
      %s2391 = scalar_lea.vmem %s1, 2000
      %v2392 = vld [vmem:[%s2391] sm:$0xff]
      %v2393 = vld [vmem:[%s2391 + $0x8] sm:$0xff]
      %v2394 = vld [vmem:[%s2391 + $0x10] sm:$0xff]
      %v2395 = vld [vmem:[%s2391 + $0x18] sm:$0xff]
      %v2396 = vld [vmem:[%s2391 + $0x20] sm:$0xff]
      %v2397 = vld [vmem:[%s2391 + $0x28] sm:$0xff]
      %v2398 = vld [vmem:[%s2391 + $0x30] sm:$0xff]
      %v2399 = vld [vmem:[%s2391 + $0x38] sm:$0xff]
      %v2400 = vld [vmem:[%s2391 + $0x40] sm:$0xff]
      %v2401 = vld [vmem:[%s2391 + $0x48] sm:$0xff]
      %v2402 = vld [vmem:[%s2391 + $0x50] sm:$0xff]
      %v2403 = vld [vmem:[%s2391 + $0x58] sm:$0xff]
      %v2404 = vld [vmem:[%s2391 + $0x60] sm:$0xff]
      %v2405 = vld [vmem:[%s2391 + $0x68] sm:$0xff]
      %v2406 = vld [vmem:[%s2391 + $0x70] sm:$0xff]
      %v2407 = vld [vmem:[%s2391 + $0x78] sm:$0xff]
      %v2408 = vld [vmem:[%s2391 + $0x80] sm:$0xff]
      %v2409 = vld [vmem:[%s2391 + $0x88] sm:$0xff]
      %v2410 = vld [vmem:[%s2391 + $0x90] sm:$0xff]
      %v2411 = vld [vmem:[%s2391 + $0x98] sm:$0xff]
      %v2412 = vld [vmem:[%s2391 + $0xa0] sm:$0xff]
      %v2413 = vld [vmem:[%s2391 + $0xa8] sm:$0xff]
      %v2414 = vld [vmem:[%s2391 + $0xb0] sm:$0xff]
      %v2415 = vld [vmem:[%s2391 + $0xb8] sm:$0xff]
      %v2416 = vld [vmem:[%s2391 + $0xc0] sm:$0xff]
      %v2417 = vld [vmem:[%s2391 + $0xc8] sm:$0xff]
      %v2418 = vld [vmem:[%s2391 + $0xd0] sm:$0xff]
      %v2419 = vld [vmem:[%s2391 + $0xd8] sm:$0xff]
      %v2420 = vld [vmem:[%s2391 + $0xe0] sm:$0xff]
      %v2421 = vld [vmem:[%s2391 + $0xe8] sm:$0xff]
      %v2422 = vld [vmem:[%s2391 + $0xf0] sm:$0xff]
      %v2423 = vld [vmem:[%s2391 + $0xf8] sm:$0xff]
      %v2424 = vld [vmem:[%s2391 + $0x100] sm:$0xff]
      %v2425 = vld [vmem:[%s2391 + $0x108] sm:$0xff]
      %v2426 = vld [vmem:[%s2391 + $0x110] sm:$0xff]
      %v2427 = vld [vmem:[%s2391 + $0x118] sm:$0xff]
      %v2428 = vld [vmem:[%s2391 + $0x120] sm:$0xff]
      %v2429 = vld [vmem:[%s2391 + $0x128] sm:$0xff]
      %v2430 = vld [vmem:[%s2391 + $0x130] sm:$0xff]
      %v2431 = vld [vmem:[%s2391 + $0x138] sm:$0xff]
      %v2432 = vld [vmem:[%s2391 + $0x140] sm:$0xff]
      %v2433 = vld [vmem:[%s2391 + $0x148] sm:$0xff]
      %v2434 = vld [vmem:[%s2391 + $0x150] sm:$0xff]
      %v2435 = vld [vmem:[%s2391 + $0x158] sm:$0xff]
      %v2436 = vld [vmem:[%s2391 + $0x160] sm:$0xff]
      %v2437 = vld [vmem:[%s2391 + $0x168] sm:$0xff]
      %v2438 = vld [vmem:[%s2391 + $0x170] sm:$0xff]
      %v2439 = vld [vmem:[%s2391 + $0x178] sm:$0xff]
      %v2440 = vld [vmem:[%s2391 + $0x180] sm:$0xff]
      %v2441 = vld [vmem:[%s2391 + $0x188] sm:$0xff]
      %v2442 = vld [vmem:[%s2391 + $0x190] sm:$0xff]
      %v2443 = vld [vmem:[%s2391 + $0x198] sm:$0xff]
      %v2444 = vld [vmem:[%s2391 + $0x1a0] sm:$0xff]
      %v2445 = vld [vmem:[%s2391 + $0x1a8] sm:$0xff]
      %v2446 = vld [vmem:[%s2391 + $0x1b0] sm:$0xff]
      %v2447 = vld [vmem:[%s2391 + $0x1b8] sm:$0xff]
      %v2448 = vld [vmem:[%s2391 + $0x1c0] sm:$0xff]
      %v2449 = vld [vmem:[%s2391 + $0x1c8] sm:$0xff]
      %v2450 = vld [vmem:[%s2391 + $0x1d0] sm:$0xff]
      %v2451 = vld [vmem:[%s2391 + $0x1d8] sm:$0xff]
      %v2452 = vld [vmem:[%s2391 + $0x1e0] sm:$0xff]
      %v2453 = vld [vmem:[%s2391 + $0x1e8] sm:$0xff]
      %v2454 = vld [vmem:[%s2391 + $0x1f0] sm:$0xff]
      %v2455 = vld [vmem:[%s2391 + $0x1f8] sm:$0xff]
      %v2456 = vld [vmem:[%s2391 + $0x200] sm:$0xff]
      %v2457 = vld [vmem:[%s2391 + $0x208] sm:$0xff]
      %v2458 = vld [vmem:[%s2391 + $0x210] sm:$0xff]
      %v2459 = vld [vmem:[%s2391 + $0x218] sm:$0xff]
      %v2460 = vld [vmem:[%s2391 + $0x220] sm:$0xff]
      %v2461 = vld [vmem:[%s2391 + $0x228] sm:$0xff]
      %v2462 = vld [vmem:[%s2391 + $0x230] sm:$0xff]
      %v2463 = vld [vmem:[%s2391 + $0x238] sm:$0xff]
      %v2464 = vld [vmem:[%s2391 + $0x240] sm:$0xff]
      %v2465 = vld [vmem:[%s2391 + $0x248] sm:$0xff]
      %v2466 = vld [vmem:[%s2391 + $0x250] sm:$0xff]
      %v2467 = vld [vmem:[%s2391 + $0x258] sm:$0xff]
      %v2468 = vld [vmem:[%s2391 + $0x260] sm:$0xff]
      %v2469 = vld [vmem:[%s2391 + $0x268] sm:$0xff]
      %v2470 = vld [vmem:[%s2391 + $0x270] sm:$0xff]
      %v2471 = vld [vmem:[%s2391 + $0x278] sm:$0xff]
      %v2472 = vld [vmem:[%s2391 + $0x280] sm:$0xff]
      %v2473 = vld [vmem:[%s2391 + $0x288] sm:$0xff]
      %v2474 = vld [vmem:[%s2391 + $0x290] sm:$0xff]
      %v2475 = vld [vmem:[%s2391 + $0x298] sm:$0xff]
      %v2476 = vld [vmem:[%s2391 + $0x2a0] sm:$0xff]
      %v2477 = vld [vmem:[%s2391 + $0x2a8] sm:$0xff]
      %v2478 = vld [vmem:[%s2391 + $0x2b0] sm:$0xff]
      %v2479 = vld [vmem:[%s2391 + $0x2b8] sm:$0xff]
      %v2480 = vld [vmem:[%s2391 + $0x2c0] sm:$0xff]
      %v2481 = vld [vmem:[%s2391 + $0x2c8] sm:$0xff]
      %v2482 = vld [vmem:[%s2391 + $0x2d0] sm:$0xff]
      %v2483 = vld [vmem:[%s2391 + $0x2d8] sm:$0xff]
      %v2484 = vld [vmem:[%s2391 + $0x2e0] sm:$0xff]
      %v2485 = vld [vmem:[%s2391 + $0x2e8] sm:$0xff]
      %v2486 = vld [vmem:[%s2391 + $0x2f0] sm:$0xff]
      %v2487 = vld [vmem:[%s2391 + $0x2f8] sm:$0xff]
      %v2488 = vld [vmem:[%s2391 + $0x300] sm:$0xff]
      %v2489 = vld [vmem:[%s2391 + $0x308] sm:$0xff]
      %v2490 = vld [vmem:[%s2391 + $0x310] sm:$0xff]
      %v2491 = vld [vmem:[%s2391 + $0x318] sm:$0xff]
      %v2492 = vld [vmem:[%s2391 + $0x320] sm:$0xff]
      %v2493 = vld [vmem:[%s2391 + $0x328] sm:$0xff]
      %v2494 = vld [vmem:[%s2391 + $0x330] sm:$0xff]
      %v2495 = vld [vmem:[%s2391 + $0x338] sm:$0xff]
      %v2496 = vld [vmem:[%s2391 + $0x340] sm:$0xff]
      %v2497 = vld [vmem:[%s2391 + $0x348] sm:$0xff]
      %v2498 = vld [vmem:[%s2391 + $0x350] sm:$0xff]
      %v2499 = vld [vmem:[%s2391 + $0x358] sm:$0xff]
      %v2500 = vld [vmem:[%s2391 + $0x360] sm:$0xff]
      %v2501 = vld [vmem:[%s2391 + $0x368] sm:$0xff]
      %v2502 = vld [vmem:[%s2391 + $0x370] sm:$0xff]
      %v2503 = vld [vmem:[%s2391 + $0x378] sm:$0xff]
      %v2504 = vld [vmem:[%s2391 + $0x380] sm:$0xff]
      %v2505 = vld [vmem:[%s2391 + $0x388] sm:$0xff]
      %v2506 = vld [vmem:[%s2391 + $0x390] sm:$0xff]
      %v2507 = vld [vmem:[%s2391 + $0x398] sm:$0xff]
      %v2508 = vld [vmem:[%s2391 + $0x3a0] sm:$0xff]
      %v2509 = vld [vmem:[%s2391 + $0x3a8] sm:$0xff]
      %v2510 = vld [vmem:[%s2391 + $0x3b0] sm:$0xff]
      %v2511 = vld [vmem:[%s2391 + $0x3b8] sm:$0xff]
      %v2512 = vld [vmem:[%s2391 + $0x3c0] sm:$0xff]
      %v2513 = vld [vmem:[%s2391 + $0x3c8] sm:$0xff]
      %v2514 = vld [vmem:[%s2391 + $0x3d0] sm:$0xff]
      %v2515 = vld [vmem:[%s2391 + $0x3d8] sm:$0xff]
      %v2516 = vld [vmem:[%s2391 + $0x3e0] sm:$0xff]
      %v2521 = vunpack.c.l.b16 %v2387
      %v2522 = vunpack.c.h.b16 %v2387
      %v2523 = vunpack.c.l.b16 %v2388
      %v2524 = vunpack.c.h.b16 %v2388
      %v2525 = vunpack.c.l.b16 %v2389
      %v2526 = vunpack.c.h.b16 %v2389
      %v2527 = vunpack.c.l.b16 %v2390
      %v2528 = vunpack.c.h.b16 %v2390
      %v2529 = vpack.c.b16 %v607, %v2521
      %v2530 = vpack.c.b16 %v608, %v2522
      %v2531 = vpack.c.b16 %v609, %v2523
      %v2532 = vpack.c.b16 %v610, %v2524
      %v2533 = vpack.c.b16 %v611, %v2525
      %v2534 = vpack.c.b16 %v612, %v2526
      %v2535 = vpack.c.b16 %v613, %v2527
      %v2536 = vpack.c.b16 %v614, %v2528
      %v2537 = vrot.slane %v2529, 1
      %v2538 = vrot.slane %v2530, 1
      %v2539 = vrot.slane %v2531, 1
      %v2540 = vrot.slane %v2532, 1
      %v2541 = vrot.slane %v2533, 1
      %v2542 = vrot.slane %v2534, 1
      %v2543 = vrot.slane %v2535, 1
      %v2544 = vrot.slane %v2536, 1
      %v2677 = vunpack.c.l.b16 %v2392
      %v2678 = vunpack.c.h.b16 %v2392
      %v2679 = vunpack.c.l.b16 %v2393
      %v2680 = vunpack.c.h.b16 %v2393
      %v2681 = vunpack.c.l.b16 %v2394
      %v2682 = vunpack.c.h.b16 %v2394
      %v2683 = vunpack.c.l.b16 %v2395
      %v2684 = vunpack.c.h.b16 %v2395
      %v2685 = vunpack.c.l.b16 %v2396
      %v2686 = vunpack.c.h.b16 %v2396
      %v2687 = vunpack.c.l.b16 %v2397
      %v2688 = vunpack.c.h.b16 %v2397
      %v2689 = vunpack.c.l.b16 %v2398
      %v2690 = vunpack.c.h.b16 %v2398
      %v2691 = vunpack.c.l.b16 %v2399
      %v2692 = vunpack.c.h.b16 %v2399
      %v2693 = vunpack.c.l.b16 %v2400
      %v2694 = vunpack.c.h.b16 %v2400
      %v2695 = vunpack.c.l.b16 %v2401
      %v2696 = vunpack.c.h.b16 %v2401
      %v2697 = vunpack.c.l.b16 %v2402
      %v2698 = vunpack.c.h.b16 %v2402
      %v2699 = vunpack.c.l.b16 %v2403
      %v2700 = vunpack.c.h.b16 %v2403
      %v2701 = vunpack.c.l.b16 %v2404
      %v2702 = vunpack.c.h.b16 %v2404
      %v2703 = vunpack.c.l.b16 %v2405
      %v2704 = vunpack.c.h.b16 %v2405
      %v2705 = vunpack.c.l.b16 %v2406
      %v2706 = vunpack.c.h.b16 %v2406
      %v2707 = vunpack.c.l.b16 %v2407
      %v2708 = vunpack.c.h.b16 %v2407
      %v2709 = vunpack.c.l.b16 %v2408
      %v2710 = vunpack.c.h.b16 %v2408
      %v2711 = vunpack.c.l.b16 %v2409
      %v2712 = vunpack.c.h.b16 %v2409
      %v2713 = vunpack.c.l.b16 %v2410
      %v2714 = vunpack.c.h.b16 %v2410
      %v2715 = vunpack.c.l.b16 %v2411
      %v2716 = vunpack.c.h.b16 %v2411
      %v2717 = vunpack.c.l.b16 %v2412
      %v2718 = vunpack.c.h.b16 %v2412
      %v2719 = vunpack.c.l.b16 %v2413
      %v2720 = vunpack.c.h.b16 %v2413
      %v2721 = vunpack.c.l.b16 %v2414
      %v2722 = vunpack.c.h.b16 %v2414
      %v2723 = vunpack.c.l.b16 %v2415
      %v2724 = vunpack.c.h.b16 %v2415
      %v2725 = vunpack.c.l.b16 %v2416
      %v2726 = vunpack.c.h.b16 %v2416
      %v2727 = vunpack.c.l.b16 %v2417
      %v2728 = vunpack.c.h.b16 %v2417
      %v2729 = vunpack.c.l.b16 %v2418
      %v2730 = vunpack.c.h.b16 %v2418
      %v2731 = vunpack.c.l.b16 %v2419
      %v2732 = vunpack.c.h.b16 %v2419
      %v2733 = vunpack.c.l.b16 %v2420
      %v2734 = vunpack.c.h.b16 %v2420
      %v2735 = vunpack.c.l.b16 %v2421
      %v2736 = vunpack.c.h.b16 %v2421
      %v2737 = vunpack.c.l.b16 %v2422
      %v2738 = vunpack.c.h.b16 %v2422
      %v2739 = vunpack.c.l.b16 %v2423
      %v2740 = vunpack.c.h.b16 %v2423
      %v2741 = vunpack.c.l.b16 %v2424
      %v2742 = vunpack.c.h.b16 %v2424
      %v2743 = vunpack.c.l.b16 %v2425
      %v2744 = vunpack.c.h.b16 %v2425
      %v2745 = vunpack.c.l.b16 %v2426
      %v2746 = vunpack.c.h.b16 %v2426
      %v2747 = vunpack.c.l.b16 %v2427
      %v2748 = vunpack.c.h.b16 %v2427
      %v2749 = vunpack.c.l.b16 %v2428
      %v2750 = vunpack.c.h.b16 %v2428
      %v2751 = vunpack.c.l.b16 %v2429
      %v2752 = vunpack.c.h.b16 %v2429
      %v2753 = vunpack.c.l.b16 %v2430
      %v2754 = vunpack.c.h.b16 %v2430
      %v2755 = vunpack.c.l.b16 %v2431
      %v2756 = vunpack.c.h.b16 %v2431
      %v2757 = vunpack.c.l.b16 %v2432
      %v2758 = vunpack.c.h.b16 %v2432
      %v2759 = vunpack.c.l.b16 %v2433
      %v2760 = vunpack.c.h.b16 %v2433
      %v2761 = vunpack.c.l.b16 %v2434
      %v2762 = vunpack.c.h.b16 %v2434
      %v2763 = vunpack.c.l.b16 %v2435
      %v2764 = vunpack.c.h.b16 %v2435
      %v2765 = vunpack.c.l.b16 %v2436
      %v2766 = vunpack.c.h.b16 %v2436
      %v2767 = vunpack.c.l.b16 %v2437
      %v2768 = vunpack.c.h.b16 %v2437
      %v2769 = vunpack.c.l.b16 %v2438
      %v2770 = vunpack.c.h.b16 %v2438
      %v2771 = vunpack.c.l.b16 %v2439
      %v2772 = vunpack.c.h.b16 %v2439
      %v2773 = vunpack.c.l.b16 %v2440
      %v2774 = vunpack.c.h.b16 %v2440
      %v2775 = vunpack.c.l.b16 %v2441
      %v2776 = vunpack.c.h.b16 %v2441
      %v2777 = vunpack.c.l.b16 %v2442
      %v2778 = vunpack.c.h.b16 %v2442
      %v2779 = vunpack.c.l.b16 %v2443
      %v2780 = vunpack.c.h.b16 %v2443
      %v2781 = vunpack.c.l.b16 %v2444
      %v2782 = vunpack.c.h.b16 %v2444
      %v2783 = vunpack.c.l.b16 %v2445
      %v2784 = vunpack.c.h.b16 %v2445
      %v2785 = vunpack.c.l.b16 %v2446
      %v2786 = vunpack.c.h.b16 %v2446
      %v2787 = vunpack.c.l.b16 %v2447
      %v2788 = vunpack.c.h.b16 %v2447
      %v2789 = vunpack.c.l.b16 %v2448
      %v2790 = vunpack.c.h.b16 %v2448
      %v2791 = vunpack.c.l.b16 %v2449
      %v2792 = vunpack.c.h.b16 %v2449
      %v2793 = vunpack.c.l.b16 %v2450
      %v2794 = vunpack.c.h.b16 %v2450
      %v2795 = vunpack.c.l.b16 %v2451
      %v2796 = vunpack.c.h.b16 %v2451
      %v2797 = vunpack.c.l.b16 %v2452
      %v2798 = vunpack.c.h.b16 %v2452
      %v2799 = vunpack.c.l.b16 %v2453
      %v2800 = vunpack.c.h.b16 %v2453
      %v2801 = vunpack.c.l.b16 %v2454
      %v2802 = vunpack.c.h.b16 %v2454
      %v2803 = vunpack.c.l.b16 %v2455
      %v2804 = vunpack.c.h.b16 %v2455
      %v2805 = vunpack.c.l.b16 %v2456
      %v2806 = vunpack.c.h.b16 %v2456
      %v2807 = vunpack.c.l.b16 %v2457
      %v2808 = vunpack.c.h.b16 %v2457
      %v2809 = vunpack.c.l.b16 %v2458
      %v2810 = vunpack.c.h.b16 %v2458
      %v2811 = vunpack.c.l.b16 %v2459
      %v2812 = vunpack.c.h.b16 %v2459
      %v2813 = vunpack.c.l.b16 %v2460
      %v2814 = vunpack.c.h.b16 %v2460
      %v2815 = vunpack.c.l.b16 %v2461
      %v2816 = vunpack.c.h.b16 %v2461
      %v2817 = vunpack.c.l.b16 %v2462
      %v2818 = vunpack.c.h.b16 %v2462
      %v2819 = vunpack.c.l.b16 %v2463
      %v2820 = vunpack.c.h.b16 %v2463
      %v2821 = vunpack.c.l.b16 %v2464
      %v2822 = vunpack.c.h.b16 %v2464
      %v2823 = vunpack.c.l.b16 %v2465
      %v2824 = vunpack.c.h.b16 %v2465
      %v2825 = vunpack.c.l.b16 %v2466
      %v2826 = vunpack.c.h.b16 %v2466
      %v2827 = vunpack.c.l.b16 %v2467
      %v2828 = vunpack.c.h.b16 %v2467
      %v2829 = vunpack.c.l.b16 %v2468
      %v2830 = vunpack.c.h.b16 %v2468
      %v2831 = vunpack.c.l.b16 %v2469
      %v2832 = vunpack.c.h.b16 %v2469
      %v2833 = vunpack.c.l.b16 %v2470
      %v2834 = vunpack.c.h.b16 %v2470
      %v2835 = vunpack.c.l.b16 %v2471
      %v2836 = vunpack.c.h.b16 %v2471
      %v2837 = vunpack.c.l.b16 %v2472
      %v2838 = vunpack.c.h.b16 %v2472
      %v2839 = vunpack.c.l.b16 %v2473
      %v2840 = vunpack.c.h.b16 %v2473
      %v2841 = vunpack.c.l.b16 %v2474
      %v2842 = vunpack.c.h.b16 %v2474
      %v2843 = vunpack.c.l.b16 %v2475
      %v2844 = vunpack.c.h.b16 %v2475
      %v2845 = vunpack.c.l.b16 %v2476
      %v2846 = vunpack.c.h.b16 %v2476
      %v2847 = vunpack.c.l.b16 %v2477
      %v2848 = vunpack.c.h.b16 %v2477
      %v2849 = vunpack.c.l.b16 %v2478
      %v2850 = vunpack.c.h.b16 %v2478
      %v2851 = vunpack.c.l.b16 %v2479
      %v2852 = vunpack.c.h.b16 %v2479
      %v2853 = vunpack.c.l.b16 %v2480
      %v2854 = vunpack.c.h.b16 %v2480
      %v2855 = vunpack.c.l.b16 %v2481
      %v2856 = vunpack.c.h.b16 %v2481
      %v2857 = vunpack.c.l.b16 %v2482
      %v2858 = vunpack.c.h.b16 %v2482
      %v2859 = vunpack.c.l.b16 %v2483
      %v2860 = vunpack.c.h.b16 %v2483
      %v2861 = vunpack.c.l.b16 %v2484
      %v2862 = vunpack.c.h.b16 %v2484
      %v2863 = vunpack.c.l.b16 %v2485
      %v2864 = vunpack.c.h.b16 %v2485
      %v2865 = vunpack.c.l.b16 %v2486
      %v2866 = vunpack.c.h.b16 %v2486
      %v2867 = vunpack.c.l.b16 %v2487
      %v2868 = vunpack.c.h.b16 %v2487
      %v2869 = vunpack.c.l.b16 %v2488
      %v2870 = vunpack.c.h.b16 %v2488
      %v2871 = vunpack.c.l.b16 %v2489
      %v2872 = vunpack.c.h.b16 %v2489
      %v2873 = vunpack.c.l.b16 %v2490
      %v2874 = vunpack.c.h.b16 %v2490
      %v2875 = vunpack.c.l.b16 %v2491
      %v2876 = vunpack.c.h.b16 %v2491
      %v2877 = vunpack.c.l.b16 %v2492
      %v2878 = vunpack.c.h.b16 %v2492
      %v2879 = vunpack.c.l.b16 %v2493
      %v2880 = vunpack.c.h.b16 %v2493
      %v2881 = vunpack.c.l.b16 %v2494
      %v2882 = vunpack.c.h.b16 %v2494
      %v2883 = vunpack.c.l.b16 %v2495
      %v2884 = vunpack.c.h.b16 %v2495
      %v2885 = vunpack.c.l.b16 %v2496
      %v2886 = vunpack.c.h.b16 %v2496
      %v2887 = vunpack.c.l.b16 %v2497
      %v2888 = vunpack.c.h.b16 %v2497
      %v2889 = vunpack.c.l.b16 %v2498
      %v2890 = vunpack.c.h.b16 %v2498
      %v2891 = vunpack.c.l.b16 %v2499
      %v2892 = vunpack.c.h.b16 %v2499
      %v2893 = vunpack.c.l.b16 %v2500
      %v2894 = vunpack.c.h.b16 %v2500
      %v2895 = vunpack.c.l.b16 %v2501
      %v2896 = vunpack.c.h.b16 %v2501
      %v2897 = vunpack.c.l.b16 %v2502
      %v2898 = vunpack.c.h.b16 %v2502
      %v2899 = vunpack.c.l.b16 %v2503
      %v2900 = vunpack.c.h.b16 %v2503
      %v2901 = vunpack.c.l.b16 %v2504
      %v2902 = vunpack.c.h.b16 %v2504
      %v2903 = vunpack.c.l.b16 %v2505
      %v2904 = vunpack.c.h.b16 %v2505
      %v2905 = vunpack.c.l.b16 %v2506
      %v2906 = vunpack.c.h.b16 %v2506
      %v2907 = vunpack.c.l.b16 %v2507
      %v2908 = vunpack.c.h.b16 %v2507
      %v2909 = vunpack.c.l.b16 %v2508
      %v2910 = vunpack.c.h.b16 %v2508
      %v2911 = vunpack.c.l.b16 %v2509
      %v2912 = vunpack.c.h.b16 %v2509
      %v2913 = vunpack.c.l.b16 %v2510
      %v2914 = vunpack.c.h.b16 %v2510
      %v2915 = vunpack.c.l.b16 %v2511
      %v2916 = vunpack.c.h.b16 %v2511
      %v2917 = vunpack.c.l.b16 %v2512
      %v2918 = vunpack.c.h.b16 %v2512
      %v2919 = vunpack.c.l.b16 %v2513
      %v2920 = vunpack.c.h.b16 %v2513
      %v2921 = vunpack.c.l.b16 %v2514
      %v2922 = vunpack.c.h.b16 %v2514
      %v2923 = vunpack.c.l.b16 %v2515
      %v2924 = vunpack.c.h.b16 %v2515
      %v2925 = vunpack.c.l.b16 %v2516
      %v2926 = vunpack.c.h.b16 %v2516
      %v2927 = vpack.c.b16 %v2679, %v2677
      %v2928 = vpack.c.b16 %v2680, %v2678
      %v2929 = vpack.c.b16 %v2683, %v2681
      %v2930 = vpack.c.b16 %v2684, %v2682
      %v2931 = vpack.c.b16 %v2687, %v2685
      %v2932 = vpack.c.b16 %v2688, %v2686
      %v2933 = vpack.c.b16 %v2691, %v2689
      %v2934 = vpack.c.b16 %v2692, %v2690
      %v2935 = vpack.c.b16 %v2695, %v2693
      %v2936 = vpack.c.b16 %v2696, %v2694
      %v2937 = vpack.c.b16 %v2699, %v2697
      %v2938 = vpack.c.b16 %v2700, %v2698
      %v2939 = vpack.c.b16 %v2703, %v2701
      %v2940 = vpack.c.b16 %v2704, %v2702
      %v2941 = vpack.c.b16 %v2707, %v2705
      %v2942 = vpack.c.b16 %v2708, %v2706
      %v2943 = vpack.c.b16 %v2711, %v2709
      %v2944 = vpack.c.b16 %v2712, %v2710
      %v2945 = vpack.c.b16 %v2715, %v2713
      %v2946 = vpack.c.b16 %v2716, %v2714
      %v2947 = vpack.c.b16 %v2719, %v2717
      %v2948 = vpack.c.b16 %v2720, %v2718
      %v2949 = vpack.c.b16 %v2723, %v2721
      %v2950 = vpack.c.b16 %v2724, %v2722
      %v2951 = vpack.c.b16 %v2727, %v2725
      %v2952 = vpack.c.b16 %v2728, %v2726
      %v2953 = vpack.c.b16 %v2731, %v2729
      %v2954 = vpack.c.b16 %v2732, %v2730
      %v2955 = vpack.c.b16 %v2735, %v2733
      %v2956 = vpack.c.b16 %v2736, %v2734
      %v2957 = vpack.c.b16 %v2739, %v2737
      %v2958 = vpack.c.b16 %v2740, %v2738
      %v2959 = vpack.c.b16 %v2743, %v2741
      %v2960 = vpack.c.b16 %v2744, %v2742
      %v2961 = vpack.c.b16 %v2747, %v2745
      %v2962 = vpack.c.b16 %v2748, %v2746
      %v2963 = vpack.c.b16 %v2751, %v2749
      %v2964 = vpack.c.b16 %v2752, %v2750
      %v2965 = vpack.c.b16 %v2755, %v2753
      %v2966 = vpack.c.b16 %v2756, %v2754
      %v2967 = vpack.c.b16 %v2759, %v2757
      %v2968 = vpack.c.b16 %v2760, %v2758
      %v2969 = vpack.c.b16 %v2763, %v2761
      %v2970 = vpack.c.b16 %v2764, %v2762
      %v2971 = vpack.c.b16 %v2767, %v2765
      %v2972 = vpack.c.b16 %v2768, %v2766
      %v2973 = vpack.c.b16 %v2771, %v2769
      %v2974 = vpack.c.b16 %v2772, %v2770
      %v2975 = vpack.c.b16 %v2775, %v2773
      %v2976 = vpack.c.b16 %v2776, %v2774
      %v2977 = vpack.c.b16 %v2779, %v2777
      %v2978 = vpack.c.b16 %v2780, %v2778
      %v2979 = vpack.c.b16 %v2783, %v2781
      %v2980 = vpack.c.b16 %v2784, %v2782
      %v2981 = vpack.c.b16 %v2787, %v2785
      %v2982 = vpack.c.b16 %v2788, %v2786
      %v2983 = vpack.c.b16 %v2791, %v2789
      %v2984 = vpack.c.b16 %v2792, %v2790
      %v2985 = vpack.c.b16 %v2795, %v2793
      %v2986 = vpack.c.b16 %v2796, %v2794
      %v2987 = vpack.c.b16 %v2799, %v2797
      %v2988 = vpack.c.b16 %v2800, %v2798
      %v2989 = vpack.c.b16 %v2803, %v2801
      %v2990 = vpack.c.b16 %v2804, %v2802
      %v2991 = vpack.c.b16 %v2807, %v2805
      %v2992 = vpack.c.b16 %v2808, %v2806
      %v2993 = vpack.c.b16 %v2811, %v2809
      %v2994 = vpack.c.b16 %v2812, %v2810
      %v2995 = vpack.c.b16 %v2815, %v2813
      %v2996 = vpack.c.b16 %v2816, %v2814
      %v2997 = vpack.c.b16 %v2819, %v2817
      %v2998 = vpack.c.b16 %v2820, %v2818
      %v2999 = vpack.c.b16 %v2823, %v2821
      %v3000 = vpack.c.b16 %v2824, %v2822
      %v3001 = vpack.c.b16 %v2827, %v2825
      %v3002 = vpack.c.b16 %v2828, %v2826
      %v3003 = vpack.c.b16 %v2831, %v2829
      %v3004 = vpack.c.b16 %v2832, %v2830
      %v3005 = vpack.c.b16 %v2835, %v2833
      %v3006 = vpack.c.b16 %v2836, %v2834
      %v3007 = vpack.c.b16 %v2839, %v2837
      %v3008 = vpack.c.b16 %v2840, %v2838
      %v3009 = vpack.c.b16 %v2843, %v2841
      %v3010 = vpack.c.b16 %v2844, %v2842
      %v3011 = vpack.c.b16 %v2847, %v2845
      %v3012 = vpack.c.b16 %v2848, %v2846
      %v3013 = vpack.c.b16 %v2851, %v2849
      %v3014 = vpack.c.b16 %v2852, %v2850
      %v3015 = vpack.c.b16 %v2855, %v2853
      %v3016 = vpack.c.b16 %v2856, %v2854
      %v3017 = vpack.c.b16 %v2859, %v2857
      %v3018 = vpack.c.b16 %v2860, %v2858
      %v3019 = vpack.c.b16 %v2863, %v2861
      %v3020 = vpack.c.b16 %v2864, %v2862
      %v3021 = vpack.c.b16 %v2867, %v2865
      %v3022 = vpack.c.b16 %v2868, %v2866
      %v3023 = vpack.c.b16 %v2871, %v2869
      %v3024 = vpack.c.b16 %v2872, %v2870
      %v3025 = vpack.c.b16 %v2875, %v2873
      %v3026 = vpack.c.b16 %v2876, %v2874
      %v3027 = vpack.c.b16 %v2879, %v2877
      %v3028 = vpack.c.b16 %v2880, %v2878
      %v3029 = vpack.c.b16 %v2883, %v2881
      %v3030 = vpack.c.b16 %v2884, %v2882
      %v3031 = vpack.c.b16 %v2887, %v2885
      %v3032 = vpack.c.b16 %v2888, %v2886
      %v3033 = vpack.c.b16 %v2891, %v2889
      %v3034 = vpack.c.b16 %v2892, %v2890
      %v3035 = vpack.c.b16 %v2895, %v2893
      %v3036 = vpack.c.b16 %v2896, %v2894
      %v3037 = vpack.c.b16 %v2899, %v2897
      %v3038 = vpack.c.b16 %v2900, %v2898
      %v3039 = vpack.c.b16 %v2903, %v2901
      %v3040 = vpack.c.b16 %v2904, %v2902
      %v3041 = vpack.c.b16 %v2907, %v2905
      %v3042 = vpack.c.b16 %v2908, %v2906
      %v3043 = vpack.c.b16 %v2911, %v2909
      %v3044 = vpack.c.b16 %v2912, %v2910
      %v3045 = vpack.c.b16 %v2915, %v2913
      %v3046 = vpack.c.b16 %v2916, %v2914
      %v3047 = vpack.c.b16 %v2919, %v2917
      %v3048 = vpack.c.b16 %v2920, %v2918
      %v3049 = vpack.c.b16 %v2923, %v2921
      %v3050 = vpack.c.b16 %v2924, %v2922
      %v3051 = vpack.c.b16 %v2925, %v2925
      %v3052 = vpack.c.b16 %v2926, %v2926
      %v3178 = vsel %vm1311, %v2544, 0
      %v3181 = vsel %vm1315, %v3051, 0
      %v3184 = vsel %vm1315, %v3052, 0
      %3186 = vmatpush.bf16.msra.mxu0 %v2941
      %3187 = vmatpush.bf16.msra.mxu0 %v2939
      %3188 = vmatpush.bf16.msra.mxu0 %v2937
      %3189 = vmatpush.bf16.msra.mxu0 %v2935
      %3190 = vmatpush.bf16.msra.mxu0 %v2933
      %3191 = vmatpush.bf16.msra.mxu0 %v2931
      %3192 = vmatpush.bf16.msra.mxu0 %v2929
      %3193 = vmatpush.bf16.msra.mxu0 %v2927
      %3194 = vmatmul.bf16.gmra.mxu0 %v2537
      %v3195 = vpop.f32.mrf.mxu0
      %v3196 = vadd.f32 0.0, %v3195
      %v3197 = vpop.f32.mrf.mxu0
      %3198 = vdwg.mxu0
      %3199 = vmatpush.bf16.msra.mxu0 %v2957
      %3200 = vmatpush.bf16.msra.mxu0 %v2955
      %3201 = vmatpush.bf16.msra.mxu0 %v2953
      %3202 = vmatpush.bf16.msra.mxu0 %v2951
      %3203 = vmatpush.bf16.msra.mxu0 %v2949
      %3204 = vmatpush.bf16.msra.mxu0 %v2947
      %3205 = vmatpush.bf16.msra.mxu0 %v2945
      %3206 = vmatpush.bf16.msra.mxu0 %v2943
      %3207 = vmatmul.bf16.gmra.mxu0 %v2538
      %v3208 = vpop.f32.mrf.mxu0
      %v3209 = vadd.f32 %v3196, %v3208
      %v3210 = vpop.f32.mrf.mxu0
      %3211 = vdwg.mxu0
      %3212 = vmatpush.bf16.msra.mxu0 %v2973
      %3213 = vmatpush.bf16.msra.mxu0 %v2971
      %3214 = vmatpush.bf16.msra.mxu0 %v2969
      %3215 = vmatpush.bf16.msra.mxu0 %v2967
      %3216 = vmatpush.bf16.msra.mxu0 %v2965
      %3217 = vmatpush.bf16.msra.mxu0 %v2963
      %3218 = vmatpush.bf16.msra.mxu0 %v2961
      %3219 = vmatpush.bf16.msra.mxu0 %v2959
      %3220 = vmatmul.bf16.gmra.mxu0 %v2539
      %v3221 = vpop.f32.mrf.mxu0
      %v3222 = vadd.f32 %v3209, %v3221
      %v3223 = vpop.f32.mrf.mxu0
      %3224 = vdwg.mxu0
      %3225 = vmatpush.bf16.msra.mxu0 %v2989
      %3226 = vmatpush.bf16.msra.mxu0 %v2987
      %3227 = vmatpush.bf16.msra.mxu0 %v2985
      %3228 = vmatpush.bf16.msra.mxu0 %v2983
      %3229 = vmatpush.bf16.msra.mxu0 %v2981
      %3230 = vmatpush.bf16.msra.mxu0 %v2979
      %3231 = vmatpush.bf16.msra.mxu0 %v2977
      %3232 = vmatpush.bf16.msra.mxu0 %v2975
      %3233 = vmatmul.bf16.gmra.mxu0 %v2540
      %v3234 = vpop.f32.mrf.mxu0
      %v3235 = vadd.f32 %v3222, %v3234
      %v3236 = vpop.f32.mrf.mxu0
      %3237 = vdwg.mxu0
      %3238 = vmatpush.bf16.msra.mxu0 %v3005
      %3239 = vmatpush.bf16.msra.mxu0 %v3003
      %3240 = vmatpush.bf16.msra.mxu0 %v3001
      %3241 = vmatpush.bf16.msra.mxu0 %v2999
      %3242 = vmatpush.bf16.msra.mxu0 %v2997
      %3243 = vmatpush.bf16.msra.mxu0 %v2995
      %3244 = vmatpush.bf16.msra.mxu0 %v2993
      %3245 = vmatpush.bf16.msra.mxu0 %v2991
      %3246 = vmatmul.bf16.gmra.mxu0 %v2541
      %v3247 = vpop.f32.mrf.mxu0
      %v3248 = vadd.f32 %v3235, %v3247
      %v3249 = vpop.f32.mrf.mxu0
      %3250 = vdwg.mxu0
      %3251 = vmatpush.bf16.msra.mxu0 %v3021
      %3252 = vmatpush.bf16.msra.mxu0 %v3019
      %3253 = vmatpush.bf16.msra.mxu0 %v3017
      %3254 = vmatpush.bf16.msra.mxu0 %v3015
      %3255 = vmatpush.bf16.msra.mxu0 %v3013
      %3256 = vmatpush.bf16.msra.mxu0 %v3011
      %3257 = vmatpush.bf16.msra.mxu0 %v3009
      %3258 = vmatpush.bf16.msra.mxu0 %v3007
      %3259 = vmatmul.bf16.gmra.mxu0 %v2542
      %v3260 = vpop.f32.mrf.mxu0
      %v3261 = vadd.f32 %v3248, %v3260
      %v3262 = vpop.f32.mrf.mxu0
      %3263 = vdwg.mxu0
      %3264 = vmatpush.bf16.msra.mxu0 %v3037
      %3265 = vmatpush.bf16.msra.mxu0 %v3035
      %3266 = vmatpush.bf16.msra.mxu0 %v3033
      %3267 = vmatpush.bf16.msra.mxu0 %v3031
      %3268 = vmatpush.bf16.msra.mxu0 %v3029
      %3269 = vmatpush.bf16.msra.mxu0 %v3027
      %3270 = vmatpush.bf16.msra.mxu0 %v3025
      %3271 = vmatpush.bf16.msra.mxu0 %v3023
      %3272 = vmatmul.bf16.gmra.mxu0 %v2543
      %v3273 = vpop.f32.mrf.mxu0
      %v3274 = vadd.f32 %v3261, %v3273
      %v3275 = vpop.f32.mrf.mxu0
      %3276 = vdwg.mxu0
      %3277 = vmatpush.bf16.msra.mxu0 0
      %3278 = vmatpush.bf16.msra.mxu0 %v3181
      %3279 = vmatpush.bf16.msra.mxu0 %v3049
      %3280 = vmatpush.bf16.msra.mxu0 %v3047
      %3281 = vmatpush.bf16.msra.mxu0 %v3045
      %3282 = vmatpush.bf16.msra.mxu0 %v3043
      %3283 = vmatpush.bf16.msra.mxu0 %v3041
      %3284 = vmatpush.bf16.msra.mxu0 %v3039
      %3285 = vmatmul.bf16.gmra.mxu0 %v3178
      %v3286 = vpop.f32.mrf.mxu0
      %v3287 = vadd.f32 %v3274, %v3286
      %v3288 = vpop.f32.mrf.mxu0
      %3289 = vdwg.mxu0
      %3290 = vmatpush.bf16.msra.mxu0 %v2942
      %3291 = vmatpush.bf16.msra.mxu0 %v2940
      %3292 = vmatpush.bf16.msra.mxu0 %v2938
      %3293 = vmatpush.bf16.msra.mxu0 %v2936
      %3294 = vmatpush.bf16.msra.mxu0 %v2934
      %3295 = vmatpush.bf16.msra.mxu0 %v2932
      %3296 = vmatpush.bf16.msra.mxu0 %v2930
      %3297 = vmatpush.bf16.msra.mxu0 %v2928
      %3298 = vmatmul.bf16.gmra.mxu0 %v2537
      %v3299 = vpop.f32.mrf.mxu0
      %v3300 = vadd.f32 0.0, %v3299
      %v3301 = vpop.f32.mrf.mxu0
      %3302 = vdwg.mxu0
      %3303 = vmatpush.bf16.msra.mxu0 %v2958
      %3304 = vmatpush.bf16.msra.mxu0 %v2956
      %3305 = vmatpush.bf16.msra.mxu0 %v2954
      %3306 = vmatpush.bf16.msra.mxu0 %v2952
      %3307 = vmatpush.bf16.msra.mxu0 %v2950
      %3308 = vmatpush.bf16.msra.mxu0 %v2948
      %3309 = vmatpush.bf16.msra.mxu0 %v2946
      %3310 = vmatpush.bf16.msra.mxu0 %v2944
      %3311 = vmatmul.bf16.gmra.mxu0 %v2538
      %v3312 = vpop.f32.mrf.mxu0
      %v3313 = vadd.f32 %v3300, %v3312
      %v3314 = vpop.f32.mrf.mxu0
      %3315 = vdwg.mxu0
      %3316 = vmatpush.bf16.msra.mxu0 %v2974
      %3317 = vmatpush.bf16.msra.mxu0 %v2972
      %3318 = vmatpush.bf16.msra.mxu0 %v2970
      %3319 = vmatpush.bf16.msra.mxu0 %v2968
      %3320 = vmatpush.bf16.msra.mxu0 %v2966
      %3321 = vmatpush.bf16.msra.mxu0 %v2964
      %3322 = vmatpush.bf16.msra.mxu0 %v2962
      %3323 = vmatpush.bf16.msra.mxu0 %v2960
      %3324 = vmatmul.bf16.gmra.mxu0 %v2539
      %v3325 = vpop.f32.mrf.mxu0
      %v3326 = vadd.f32 %v3313, %v3325
      %v3327 = vpop.f32.mrf.mxu0
      %3328 = vdwg.mxu0
      %3329 = vmatpush.bf16.msra.mxu0 %v2990
      %3330 = vmatpush.bf16.msra.mxu0 %v2988
      %3331 = vmatpush.bf16.msra.mxu0 %v2986
      %3332 = vmatpush.bf16.msra.mxu0 %v2984
      %3333 = vmatpush.bf16.msra.mxu0 %v2982
      %3334 = vmatpush.bf16.msra.mxu0 %v2980
      %3335 = vmatpush.bf16.msra.mxu0 %v2978
      %3336 = vmatpush.bf16.msra.mxu0 %v2976
      %3337 = vmatmul.bf16.gmra.mxu0 %v2540
      %v3338 = vpop.f32.mrf.mxu0
      %v3339 = vadd.f32 %v3326, %v3338
      %v3340 = vpop.f32.mrf.mxu0
      %3341 = vdwg.mxu0
      %3342 = vmatpush.bf16.msra.mxu0 %v3006
      %3343 = vmatpush.bf16.msra.mxu0 %v3004
      %3344 = vmatpush.bf16.msra.mxu0 %v3002
      %3345 = vmatpush.bf16.msra.mxu0 %v3000
      %3346 = vmatpush.bf16.msra.mxu0 %v2998
      %3347 = vmatpush.bf16.msra.mxu0 %v2996
      %3348 = vmatpush.bf16.msra.mxu0 %v2994
      %3349 = vmatpush.bf16.msra.mxu0 %v2992
      %3350 = vmatmul.bf16.gmra.mxu0 %v2541
      %v3351 = vpop.f32.mrf.mxu0
      %v3352 = vadd.f32 %v3339, %v3351
      %v3353 = vpop.f32.mrf.mxu0
      %3354 = vdwg.mxu0
      %3355 = vmatpush.bf16.msra.mxu0 %v3022
      %3356 = vmatpush.bf16.msra.mxu0 %v3020
      %3357 = vmatpush.bf16.msra.mxu0 %v3018
      %3358 = vmatpush.bf16.msra.mxu0 %v3016
      %3359 = vmatpush.bf16.msra.mxu0 %v3014
      %3360 = vmatpush.bf16.msra.mxu0 %v3012
      %3361 = vmatpush.bf16.msra.mxu0 %v3010
      %3362 = vmatpush.bf16.msra.mxu0 %v3008
      %3363 = vmatmul.bf16.gmra.mxu0 %v2542
      %v3364 = vpop.f32.mrf.mxu0
      %v3365 = vadd.f32 %v3352, %v3364
      %v3366 = vpop.f32.mrf.mxu0
      %3367 = vdwg.mxu0
      %3368 = vmatpush.bf16.msra.mxu0 %v3038
      %3369 = vmatpush.bf16.msra.mxu0 %v3036
      %3370 = vmatpush.bf16.msra.mxu0 %v3034
      %3371 = vmatpush.bf16.msra.mxu0 %v3032
      %3372 = vmatpush.bf16.msra.mxu0 %v3030
      %3373 = vmatpush.bf16.msra.mxu0 %v3028
      %3374 = vmatpush.bf16.msra.mxu0 %v3026
      %3375 = vmatpush.bf16.msra.mxu0 %v3024
      %3376 = vmatmul.bf16.gmra.mxu0 %v2543
      %v3377 = vpop.f32.mrf.mxu0
      %v3378 = vadd.f32 %v3365, %v3377
      %v3379 = vpop.f32.mrf.mxu0
      %3380 = vdwg.mxu0
      %3381 = vmatpush.bf16.msra.mxu0 0
      %3382 = vmatpush.bf16.msra.mxu0 %v3184
      %3383 = vmatpush.bf16.msra.mxu0 %v3050
      %3384 = vmatpush.bf16.msra.mxu0 %v3048
      %3385 = vmatpush.bf16.msra.mxu0 %v3046
      %3386 = vmatpush.bf16.msra.mxu0 %v3044
      %3387 = vmatpush.bf16.msra.mxu0 %v3042
      %3388 = vmatpush.bf16.msra.mxu0 %v3040
      %3389 = vmatmul.bf16.gmra.mxu0 %v3178
      %v3390 = vpop.f32.mrf.mxu0
      %v3391 = vadd.f32 %v3378, %v3390
      %v3392 = vpop.f32.mrf.mxu0
      %3393 = vdwg.mxu0
      %v3394 = vadd.f32 %v2280, %v3287
      %v3395 = vadd.f32 %v2384, %v3391
      %v3396 = vld [vmem:[%s326 + $0x20] sm:$0x33]
      %v3397 = vld [vmem:[%s326 + $0x28] sm:$0x33]
      %v3398 = vld [vmem:[%s326 + $0x30] sm:$0x33]
      %v3399 = vld [vmem:[%s326 + $0x38] sm:$0x33]
      %s3400 = scalar_lea.vmem %s1, 3000
      %v3401 = vld [vmem:[%s3400] sm:$0xff]
      %v3402 = vld [vmem:[%s3400 + $0x8] sm:$0xff]
      %v3403 = vld [vmem:[%s3400 + $0x10] sm:$0xff]
      %v3404 = vld [vmem:[%s3400 + $0x18] sm:$0xff]
      %v3405 = vld [vmem:[%s3400 + $0x20] sm:$0xff]
      %v3406 = vld [vmem:[%s3400 + $0x28] sm:$0xff]
      %v3407 = vld [vmem:[%s3400 + $0x30] sm:$0xff]
      %v3408 = vld [vmem:[%s3400 + $0x38] sm:$0xff]
      %v3409 = vld [vmem:[%s3400 + $0x40] sm:$0xff]
      %v3410 = vld [vmem:[%s3400 + $0x48] sm:$0xff]
      %v3411 = vld [vmem:[%s3400 + $0x50] sm:$0xff]
      %v3412 = vld [vmem:[%s3400 + $0x58] sm:$0xff]
      %v3413 = vld [vmem:[%s3400 + $0x60] sm:$0xff]
      %v3414 = vld [vmem:[%s3400 + $0x68] sm:$0xff]
      %v3415 = vld [vmem:[%s3400 + $0x70] sm:$0xff]
      %v3416 = vld [vmem:[%s3400 + $0x78] sm:$0xff]
      %v3417 = vld [vmem:[%s3400 + $0x80] sm:$0xff]
      %v3418 = vld [vmem:[%s3400 + $0x88] sm:$0xff]
      %v3419 = vld [vmem:[%s3400 + $0x90] sm:$0xff]
      %v3420 = vld [vmem:[%s3400 + $0x98] sm:$0xff]
      %v3421 = vld [vmem:[%s3400 + $0xa0] sm:$0xff]
      %v3422 = vld [vmem:[%s3400 + $0xa8] sm:$0xff]
      %v3423 = vld [vmem:[%s3400 + $0xb0] sm:$0xff]
      %v3424 = vld [vmem:[%s3400 + $0xb8] sm:$0xff]
      %v3425 = vld [vmem:[%s3400 + $0xc0] sm:$0xff]
      %v3426 = vld [vmem:[%s3400 + $0xc8] sm:$0xff]
      %v3427 = vld [vmem:[%s3400 + $0xd0] sm:$0xff]
      %v3428 = vld [vmem:[%s3400 + $0xd8] sm:$0xff]
      %v3429 = vld [vmem:[%s3400 + $0xe0] sm:$0xff]
      %v3430 = vld [vmem:[%s3400 + $0xe8] sm:$0xff]
      %v3431 = vld [vmem:[%s3400 + $0xf0] sm:$0xff]
      %v3432 = vld [vmem:[%s3400 + $0xf8] sm:$0xff]
      %v3433 = vld [vmem:[%s3400 + $0x100] sm:$0xff]
      %v3434 = vld [vmem:[%s3400 + $0x108] sm:$0xff]
      %v3435 = vld [vmem:[%s3400 + $0x110] sm:$0xff]
      %v3436 = vld [vmem:[%s3400 + $0x118] sm:$0xff]
      %v3437 = vld [vmem:[%s3400 + $0x120] sm:$0xff]
      %v3438 = vld [vmem:[%s3400 + $0x128] sm:$0xff]
      %v3439 = vld [vmem:[%s3400 + $0x130] sm:$0xff]
      %v3440 = vld [vmem:[%s3400 + $0x138] sm:$0xff]
      %v3441 = vld [vmem:[%s3400 + $0x140] sm:$0xff]
      %v3442 = vld [vmem:[%s3400 + $0x148] sm:$0xff]
      %v3443 = vld [vmem:[%s3400 + $0x150] sm:$0xff]
      %v3444 = vld [vmem:[%s3400 + $0x158] sm:$0xff]
      %v3445 = vld [vmem:[%s3400 + $0x160] sm:$0xff]
      %v3446 = vld [vmem:[%s3400 + $0x168] sm:$0xff]
      %v3447 = vld [vmem:[%s3400 + $0x170] sm:$0xff]
      %v3448 = vld [vmem:[%s3400 + $0x178] sm:$0xff]
      %v3449 = vld [vmem:[%s3400 + $0x180] sm:$0xff]
      %v3450 = vld [vmem:[%s3400 + $0x188] sm:$0xff]
      %v3451 = vld [vmem:[%s3400 + $0x190] sm:$0xff]
      %v3452 = vld [vmem:[%s3400 + $0x198] sm:$0xff]
      %v3453 = vld [vmem:[%s3400 + $0x1a0] sm:$0xff]
      %v3454 = vld [vmem:[%s3400 + $0x1a8] sm:$0xff]
      %v3455 = vld [vmem:[%s3400 + $0x1b0] sm:$0xff]
      %v3456 = vld [vmem:[%s3400 + $0x1b8] sm:$0xff]
      %v3457 = vld [vmem:[%s3400 + $0x1c0] sm:$0xff]
      %v3458 = vld [vmem:[%s3400 + $0x1c8] sm:$0xff]
      %v3459 = vld [vmem:[%s3400 + $0x1d0] sm:$0xff]
      %v3460 = vld [vmem:[%s3400 + $0x1d8] sm:$0xff]
      %v3461 = vld [vmem:[%s3400 + $0x1e0] sm:$0xff]
      %v3462 = vld [vmem:[%s3400 + $0x1e8] sm:$0xff]
      %v3463 = vld [vmem:[%s3400 + $0x1f0] sm:$0xff]
      %v3464 = vld [vmem:[%s3400 + $0x1f8] sm:$0xff]
      %v3465 = vld [vmem:[%s3400 + $0x200] sm:$0xff]
      %v3466 = vld [vmem:[%s3400 + $0x208] sm:$0xff]
      %v3467 = vld [vmem:[%s3400 + $0x210] sm:$0xff]
      %v3468 = vld [vmem:[%s3400 + $0x218] sm:$0xff]
      %v3469 = vld [vmem:[%s3400 + $0x220] sm:$0xff]
      %v3470 = vld [vmem:[%s3400 + $0x228] sm:$0xff]
      %v3471 = vld [vmem:[%s3400 + $0x230] sm:$0xff]
      %v3472 = vld [vmem:[%s3400 + $0x238] sm:$0xff]
      %v3473 = vld [vmem:[%s3400 + $0x240] sm:$0xff]
      %v3474 = vld [vmem:[%s3400 + $0x248] sm:$0xff]
      %v3475 = vld [vmem:[%s3400 + $0x250] sm:$0xff]
      %v3476 = vld [vmem:[%s3400 + $0x258] sm:$0xff]
      %v3477 = vld [vmem:[%s3400 + $0x260] sm:$0xff]
      %v3478 = vld [vmem:[%s3400 + $0x268] sm:$0xff]
      %v3479 = vld [vmem:[%s3400 + $0x270] sm:$0xff]
      %v3480 = vld [vmem:[%s3400 + $0x278] sm:$0xff]
      %v3481 = vld [vmem:[%s3400 + $0x280] sm:$0xff]
      %v3482 = vld [vmem:[%s3400 + $0x288] sm:$0xff]
      %v3483 = vld [vmem:[%s3400 + $0x290] sm:$0xff]
      %v3484 = vld [vmem:[%s3400 + $0x298] sm:$0xff]
      %v3485 = vld [vmem:[%s3400 + $0x2a0] sm:$0xff]
      %v3486 = vld [vmem:[%s3400 + $0x2a8] sm:$0xff]
      %v3487 = vld [vmem:[%s3400 + $0x2b0] sm:$0xff]
      %v3488 = vld [vmem:[%s3400 + $0x2b8] sm:$0xff]
      %v3489 = vld [vmem:[%s3400 + $0x2c0] sm:$0xff]
      %v3490 = vld [vmem:[%s3400 + $0x2c8] sm:$0xff]
      %v3491 = vld [vmem:[%s3400 + $0x2d0] sm:$0xff]
      %v3492 = vld [vmem:[%s3400 + $0x2d8] sm:$0xff]
      %v3493 = vld [vmem:[%s3400 + $0x2e0] sm:$0xff]
      %v3494 = vld [vmem:[%s3400 + $0x2e8] sm:$0xff]
      %v3495 = vld [vmem:[%s3400 + $0x2f0] sm:$0xff]
      %v3496 = vld [vmem:[%s3400 + $0x2f8] sm:$0xff]
      %v3497 = vld [vmem:[%s3400 + $0x300] sm:$0xff]
      %v3498 = vld [vmem:[%s3400 + $0x308] sm:$0xff]
      %v3499 = vld [vmem:[%s3400 + $0x310] sm:$0xff]
      %v3500 = vld [vmem:[%s3400 + $0x318] sm:$0xff]
      %v3501 = vld [vmem:[%s3400 + $0x320] sm:$0xff]
      %v3502 = vld [vmem:[%s3400 + $0x328] sm:$0xff]
      %v3503 = vld [vmem:[%s3400 + $0x330] sm:$0xff]
      %v3504 = vld [vmem:[%s3400 + $0x338] sm:$0xff]
      %v3505 = vld [vmem:[%s3400 + $0x340] sm:$0xff]
      %v3506 = vld [vmem:[%s3400 + $0x348] sm:$0xff]
      %v3507 = vld [vmem:[%s3400 + $0x350] sm:$0xff]
      %v3508 = vld [vmem:[%s3400 + $0x358] sm:$0xff]
      %v3509 = vld [vmem:[%s3400 + $0x360] sm:$0xff]
      %v3510 = vld [vmem:[%s3400 + $0x368] sm:$0xff]
      %v3511 = vld [vmem:[%s3400 + $0x370] sm:$0xff]
      %v3512 = vld [vmem:[%s3400 + $0x378] sm:$0xff]
      %v3513 = vld [vmem:[%s3400 + $0x380] sm:$0xff]
      %v3514 = vld [vmem:[%s3400 + $0x388] sm:$0xff]
      %v3515 = vld [vmem:[%s3400 + $0x390] sm:$0xff]
      %v3516 = vld [vmem:[%s3400 + $0x398] sm:$0xff]
      %v3517 = vld [vmem:[%s3400 + $0x3a0] sm:$0xff]
      %v3518 = vld [vmem:[%s3400 + $0x3a8] sm:$0xff]
      %v3519 = vld [vmem:[%s3400 + $0x3b0] sm:$0xff]
      %v3520 = vld [vmem:[%s3400 + $0x3b8] sm:$0xff]
      %v3521 = vld [vmem:[%s3400 + $0x3c0] sm:$0xff]
      %v3522 = vld [vmem:[%s3400 + $0x3c8] sm:$0xff]
      %v3523 = vld [vmem:[%s3400 + $0x3d0] sm:$0xff]
      %v3524 = vld [vmem:[%s3400 + $0x3d8] sm:$0xff]
      %v3525 = vld [vmem:[%s3400 + $0x3e0] sm:$0xff]
      %v3530 = vunpack.c.l.b16 %v3396
      %v3531 = vunpack.c.h.b16 %v3396
      %v3532 = vunpack.c.l.b16 %v3397
      %v3533 = vunpack.c.h.b16 %v3397
      %v3534 = vunpack.c.l.b16 %v3398
      %v3535 = vunpack.c.h.b16 %v3398
      %v3536 = vunpack.c.l.b16 %v3399
      %v3537 = vunpack.c.h.b16 %v3399
      %v3538 = vpack.c.b16 %v3530, %v2521
      %v3539 = vpack.c.b16 %v3531, %v2522
      %v3540 = vpack.c.b16 %v3532, %v2523
      %v3541 = vpack.c.b16 %v3533, %v2524
      %v3542 = vpack.c.b16 %v3534, %v2525
      %v3543 = vpack.c.b16 %v3535, %v2526
      %v3544 = vpack.c.b16 %v3536, %v2527
      %v3545 = vpack.c.b16 %v3537, %v2528
      %v3547 = vshrl.u32 %v3538, 16
      %v3549 = vrot.slane %v3547, 1
      %v3550 = vshll.u32 %v3538, 16
      %v3552 = vrot.slane %v3550, 2
      %v3553 = vor.u32 %v3549, %v3552
      %v3555 = vshrl.u32 %v3539, 16
      %v3557 = vrot.slane %v3555, 1
      %v3558 = vshll.u32 %v3539, 16
      %v3560 = vrot.slane %v3558, 2
      %v3561 = vor.u32 %v3557, %v3560
      %v3563 = vshrl.u32 %v3540, 16
      %v3565 = vrot.slane %v3563, 1
      %v3566 = vshll.u32 %v3540, 16
      %v3568 = vrot.slane %v3566, 2
      %v3569 = vor.u32 %v3565, %v3568
      %v3571 = vshrl.u32 %v3541, 16
      %v3573 = vrot.slane %v3571, 1
      %v3574 = vshll.u32 %v3541, 16
      %v3576 = vrot.slane %v3574, 2
      %v3577 = vor.u32 %v3573, %v3576
      %v3579 = vshrl.u32 %v3542, 16
      %v3581 = vrot.slane %v3579, 1
      %v3582 = vshll.u32 %v3542, 16
      %v3584 = vrot.slane %v3582, 2
      %v3585 = vor.u32 %v3581, %v3584
      %v3587 = vshrl.u32 %v3543, 16
      %v3589 = vrot.slane %v3587, 1
      %v3590 = vshll.u32 %v3543, 16
      %v3592 = vrot.slane %v3590, 2
      %v3593 = vor.u32 %v3589, %v3592
      %v3595 = vshrl.u32 %v3544, 16
      %v3597 = vrot.slane %v3595, 1
      %v3598 = vshll.u32 %v3544, 16
      %v3600 = vrot.slane %v3598, 2
      %v3601 = vor.u32 %v3597, %v3600
      %v3603 = vshrl.u32 %v3545, 16
      %v3605 = vrot.slane %v3603, 1
      %v3606 = vshll.u32 %v3545, 16
      %v3608 = vrot.slane %v3606, 2
      %v3609 = vor.u32 %v3605, %v3608
      %v3742 = vunpack.c.l.b16 %v3401
      %v3743 = vunpack.c.h.b16 %v3401
      %v3744 = vunpack.c.l.b16 %v3402
      %v3745 = vunpack.c.h.b16 %v3402
      %v3746 = vunpack.c.l.b16 %v3403
      %v3747 = vunpack.c.h.b16 %v3403
      %v3748 = vunpack.c.l.b16 %v3404
      %v3749 = vunpack.c.h.b16 %v3404
      %v3750 = vunpack.c.l.b16 %v3405
      %v3751 = vunpack.c.h.b16 %v3405
      %v3752 = vunpack.c.l.b16 %v3406
      %v3753 = vunpack.c.h.b16 %v3406
      %v3754 = vunpack.c.l.b16 %v3407
      %v3755 = vunpack.c.h.b16 %v3407
      %v3756 = vunpack.c.l.b16 %v3408
      %v3757 = vunpack.c.h.b16 %v3408
      %v3758 = vunpack.c.l.b16 %v3409
      %v3759 = vunpack.c.h.b16 %v3409
      %v3760 = vunpack.c.l.b16 %v3410
      %v3761 = vunpack.c.h.b16 %v3410
      %v3762 = vunpack.c.l.b16 %v3411
      %v3763 = vunpack.c.h.b16 %v3411
      %v3764 = vunpack.c.l.b16 %v3412
      %v3765 = vunpack.c.h.b16 %v3412
      %v3766 = vunpack.c.l.b16 %v3413
      %v3767 = vunpack.c.h.b16 %v3413
      %v3768 = vunpack.c.l.b16 %v3414
      %v3769 = vunpack.c.h.b16 %v3414
      %v3770 = vunpack.c.l.b16 %v3415
      %v3771 = vunpack.c.h.b16 %v3415
      %v3772 = vunpack.c.l.b16 %v3416
      %v3773 = vunpack.c.h.b16 %v3416
      %v3774 = vunpack.c.l.b16 %v3417
      %v3775 = vunpack.c.h.b16 %v3417
      %v3776 = vunpack.c.l.b16 %v3418
      %v3777 = vunpack.c.h.b16 %v3418
      %v3778 = vunpack.c.l.b16 %v3419
      %v3779 = vunpack.c.h.b16 %v3419
      %v3780 = vunpack.c.l.b16 %v3420
      %v3781 = vunpack.c.h.b16 %v3420
      %v3782 = vunpack.c.l.b16 %v3421
      %v3783 = vunpack.c.h.b16 %v3421
      %v3784 = vunpack.c.l.b16 %v3422
      %v3785 = vunpack.c.h.b16 %v3422
      %v3786 = vunpack.c.l.b16 %v3423
      %v3787 = vunpack.c.h.b16 %v3423
      %v3788 = vunpack.c.l.b16 %v3424
      %v3789 = vunpack.c.h.b16 %v3424
      %v3790 = vunpack.c.l.b16 %v3425
      %v3791 = vunpack.c.h.b16 %v3425
      %v3792 = vunpack.c.l.b16 %v3426
      %v3793 = vunpack.c.h.b16 %v3426
      %v3794 = vunpack.c.l.b16 %v3427
      %v3795 = vunpack.c.h.b16 %v3427
      %v3796 = vunpack.c.l.b16 %v3428
      %v3797 = vunpack.c.h.b16 %v3428
      %v3798 = vunpack.c.l.b16 %v3429
      %v3799 = vunpack.c.h.b16 %v3429
      %v3800 = vunpack.c.l.b16 %v3430
      %v3801 = vunpack.c.h.b16 %v3430
      %v3802 = vunpack.c.l.b16 %v3431
      %v3803 = vunpack.c.h.b16 %v3431
      %v3804 = vunpack.c.l.b16 %v3432
      %v3805 = vunpack.c.h.b16 %v3432
      %v3806 = vunpack.c.l.b16 %v3433
      %v3807 = vunpack.c.h.b16 %v3433
      %v3808 = vunpack.c.l.b16 %v3434
      %v3809 = vunpack.c.h.b16 %v3434
      %v3810 = vunpack.c.l.b16 %v3435
      %v3811 = vunpack.c.h.b16 %v3435
      %v3812 = vunpack.c.l.b16 %v3436
      %v3813 = vunpack.c.h.b16 %v3436
      %v3814 = vunpack.c.l.b16 %v3437
      %v3815 = vunpack.c.h.b16 %v3437
      %v3816 = vunpack.c.l.b16 %v3438
      %v3817 = vunpack.c.h.b16 %v3438
      %v3818 = vunpack.c.l.b16 %v3439
      %v3819 = vunpack.c.h.b16 %v3439
      %v3820 = vunpack.c.l.b16 %v3440
      %v3821 = vunpack.c.h.b16 %v3440
      %v3822 = vunpack.c.l.b16 %v3441
      %v3823 = vunpack.c.h.b16 %v3441
      %v3824 = vunpack.c.l.b16 %v3442
      %v3825 = vunpack.c.h.b16 %v3442
      %v3826 = vunpack.c.l.b16 %v3443
      %v3827 = vunpack.c.h.b16 %v3443
      %v3828 = vunpack.c.l.b16 %v3444
      %v3829 = vunpack.c.h.b16 %v3444
      %v3830 = vunpack.c.l.b16 %v3445
      %v3831 = vunpack.c.h.b16 %v3445
      %v3832 = vunpack.c.l.b16 %v3446
      %v3833 = vunpack.c.h.b16 %v3446
      %v3834 = vunpack.c.l.b16 %v3447
      %v3835 = vunpack.c.h.b16 %v3447
      %v3836 = vunpack.c.l.b16 %v3448
      %v3837 = vunpack.c.h.b16 %v3448
      %v3838 = vunpack.c.l.b16 %v3449
      %v3839 = vunpack.c.h.b16 %v3449
      %v3840 = vunpack.c.l.b16 %v3450
      %v3841 = vunpack.c.h.b16 %v3450
      %v3842 = vunpack.c.l.b16 %v3451
      %v3843 = vunpack.c.h.b16 %v3451
      %v3844 = vunpack.c.l.b16 %v3452
      %v3845 = vunpack.c.h.b16 %v3452
      %v3846 = vunpack.c.l.b16 %v3453
      %v3847 = vunpack.c.h.b16 %v3453
      %v3848 = vunpack.c.l.b16 %v3454
      %v3849 = vunpack.c.h.b16 %v3454
      %v3850 = vunpack.c.l.b16 %v3455
      %v3851 = vunpack.c.h.b16 %v3455
      %v3852 = vunpack.c.l.b16 %v3456
      %v3853 = vunpack.c.h.b16 %v3456
      %v3854 = vunpack.c.l.b16 %v3457
      %v3855 = vunpack.c.h.b16 %v3457
      %v3856 = vunpack.c.l.b16 %v3458
      %v3857 = vunpack.c.h.b16 %v3458
      %v3858 = vunpack.c.l.b16 %v3459
      %v3859 = vunpack.c.h.b16 %v3459
      %v3860 = vunpack.c.l.b16 %v3460
      %v3861 = vunpack.c.h.b16 %v3460
      %v3862 = vunpack.c.l.b16 %v3461
      %v3863 = vunpack.c.h.b16 %v3461
      %v3864 = vunpack.c.l.b16 %v3462
      %v3865 = vunpack.c.h.b16 %v3462
      %v3866 = vunpack.c.l.b16 %v3463
      %v3867 = vunpack.c.h.b16 %v3463
      %v3868 = vunpack.c.l.b16 %v3464
      %v3869 = vunpack.c.h.b16 %v3464
      %v3870 = vunpack.c.l.b16 %v3465
      %v3871 = vunpack.c.h.b16 %v3465
      %v3872 = vunpack.c.l.b16 %v3466
      %v3873 = vunpack.c.h.b16 %v3466
      %v3874 = vunpack.c.l.b16 %v3467
      %v3875 = vunpack.c.h.b16 %v3467
      %v3876 = vunpack.c.l.b16 %v3468
      %v3877 = vunpack.c.h.b16 %v3468
      %v3878 = vunpack.c.l.b16 %v3469
      %v3879 = vunpack.c.h.b16 %v3469
      %v3880 = vunpack.c.l.b16 %v3470
      %v3881 = vunpack.c.h.b16 %v3470
      %v3882 = vunpack.c.l.b16 %v3471
      %v3883 = vunpack.c.h.b16 %v3471
      %v3884 = vunpack.c.l.b16 %v3472
      %v3885 = vunpack.c.h.b16 %v3472
      %v3886 = vunpack.c.l.b16 %v3473
      %v3887 = vunpack.c.h.b16 %v3473
      %v3888 = vunpack.c.l.b16 %v3474
      %v3889 = vunpack.c.h.b16 %v3474
      %v3890 = vunpack.c.l.b16 %v3475
      %v3891 = vunpack.c.h.b16 %v3475
      %v3892 = vunpack.c.l.b16 %v3476
      %v3893 = vunpack.c.h.b16 %v3476
      %v3894 = vunpack.c.l.b16 %v3477
      %v3895 = vunpack.c.h.b16 %v3477
      %v3896 = vunpack.c.l.b16 %v3478
      %v3897 = vunpack.c.h.b16 %v3478
      %v3898 = vunpack.c.l.b16 %v3479
      %v3899 = vunpack.c.h.b16 %v3479
      %v3900 = vunpack.c.l.b16 %v3480
      %v3901 = vunpack.c.h.b16 %v3480
      %v3902 = vunpack.c.l.b16 %v3481
      %v3903 = vunpack.c.h.b16 %v3481
      %v3904 = vunpack.c.l.b16 %v3482
      %v3905 = vunpack.c.h.b16 %v3482
      %v3906 = vunpack.c.l.b16 %v3483
      %v3907 = vunpack.c.h.b16 %v3483
      %v3908 = vunpack.c.l.b16 %v3484
      %v3909 = vunpack.c.h.b16 %v3484
      %v3910 = vunpack.c.l.b16 %v3485
      %v3911 = vunpack.c.h.b16 %v3485
      %v3912 = vunpack.c.l.b16 %v3486
      %v3913 = vunpack.c.h.b16 %v3486
      %v3914 = vunpack.c.l.b16 %v3487
      %v3915 = vunpack.c.h.b16 %v3487
      %v3916 = vunpack.c.l.b16 %v3488
      %v3917 = vunpack.c.h.b16 %v3488
      %v3918 = vunpack.c.l.b16 %v3489
      %v3919 = vunpack.c.h.b16 %v3489
      %v3920 = vunpack.c.l.b16 %v3490
      %v3921 = vunpack.c.h.b16 %v3490
      %v3922 = vunpack.c.l.b16 %v3491
      %v3923 = vunpack.c.h.b16 %v3491
      %v3924 = vunpack.c.l.b16 %v3492
      %v3925 = vunpack.c.h.b16 %v3492
      %v3926 = vunpack.c.l.b16 %v3493
      %v3927 = vunpack.c.h.b16 %v3493
      %v3928 = vunpack.c.l.b16 %v3494
      %v3929 = vunpack.c.h.b16 %v3494
      %v3930 = vunpack.c.l.b16 %v3495
      %v3931 = vunpack.c.h.b16 %v3495
      %v3932 = vunpack.c.l.b16 %v3496
      %v3933 = vunpack.c.h.b16 %v3496
      %v3934 = vunpack.c.l.b16 %v3497
      %v3935 = vunpack.c.h.b16 %v3497
      %v3936 = vunpack.c.l.b16 %v3498
      %v3937 = vunpack.c.h.b16 %v3498
      %v3938 = vunpack.c.l.b16 %v3499
      %v3939 = vunpack.c.h.b16 %v3499
      %v3940 = vunpack.c.l.b16 %v3500
      %v3941 = vunpack.c.h.b16 %v3500
      %v3942 = vunpack.c.l.b16 %v3501
      %v3943 = vunpack.c.h.b16 %v3501
      %v3944 = vunpack.c.l.b16 %v3502
      %v3945 = vunpack.c.h.b16 %v3502
      %v3946 = vunpack.c.l.b16 %v3503
      %v3947 = vunpack.c.h.b16 %v3503
      %v3948 = vunpack.c.l.b16 %v3504
      %v3949 = vunpack.c.h.b16 %v3504
      %v3950 = vunpack.c.l.b16 %v3505
      %v3951 = vunpack.c.h.b16 %v3505
      %v3952 = vunpack.c.l.b16 %v3506
      %v3953 = vunpack.c.h.b16 %v3506
      %v3954 = vunpack.c.l.b16 %v3507
      %v3955 = vunpack.c.h.b16 %v3507
      %v3956 = vunpack.c.l.b16 %v3508
      %v3957 = vunpack.c.h.b16 %v3508
      %v3958 = vunpack.c.l.b16 %v3509
      %v3959 = vunpack.c.h.b16 %v3509
      %v3960 = vunpack.c.l.b16 %v3510
      %v3961 = vunpack.c.h.b16 %v3510
      %v3962 = vunpack.c.l.b16 %v3511
      %v3963 = vunpack.c.h.b16 %v3511
      %v3964 = vunpack.c.l.b16 %v3512
      %v3965 = vunpack.c.h.b16 %v3512
      %v3966 = vunpack.c.l.b16 %v3513
      %v3967 = vunpack.c.h.b16 %v3513
      %v3968 = vunpack.c.l.b16 %v3514
      %v3969 = vunpack.c.h.b16 %v3514
      %v3970 = vunpack.c.l.b16 %v3515
      %v3971 = vunpack.c.h.b16 %v3515
      %v3972 = vunpack.c.l.b16 %v3516
      %v3973 = vunpack.c.h.b16 %v3516
      %v3974 = vunpack.c.l.b16 %v3517
      %v3975 = vunpack.c.h.b16 %v3517
      %v3976 = vunpack.c.l.b16 %v3518
      %v3977 = vunpack.c.h.b16 %v3518
      %v3978 = vunpack.c.l.b16 %v3519
      %v3979 = vunpack.c.h.b16 %v3519
      %v3980 = vunpack.c.l.b16 %v3520
      %v3981 = vunpack.c.h.b16 %v3520
      %v3982 = vunpack.c.l.b16 %v3521
      %v3983 = vunpack.c.h.b16 %v3521
      %v3984 = vunpack.c.l.b16 %v3522
      %v3985 = vunpack.c.h.b16 %v3522
      %v3986 = vunpack.c.l.b16 %v3523
      %v3987 = vunpack.c.h.b16 %v3523
      %v3988 = vunpack.c.l.b16 %v3524
      %v3989 = vunpack.c.h.b16 %v3524
      %v3990 = vunpack.c.l.b16 %v3525
      %v3991 = vunpack.c.h.b16 %v3525
      %v3992 = vpack.c.b16 %v3744, %v3742
      %v3993 = vpack.c.b16 %v3745, %v3743
      %v3994 = vpack.c.b16 %v3748, %v3746
      %v3995 = vpack.c.b16 %v3749, %v3747
      %v3996 = vpack.c.b16 %v3752, %v3750
      %v3997 = vpack.c.b16 %v3753, %v3751
      %v3998 = vpack.c.b16 %v3756, %v3754
      %v3999 = vpack.c.b16 %v3757, %v3755
      %v4000 = vpack.c.b16 %v3760, %v3758
      %v4001 = vpack.c.b16 %v3761, %v3759
      %v4002 = vpack.c.b16 %v3764, %v3762
      %v4003 = vpack.c.b16 %v3765, %v3763
      %v4004 = vpack.c.b16 %v3768, %v3766
      %v4005 = vpack.c.b16 %v3769, %v3767
      %v4006 = vpack.c.b16 %v3772, %v3770
      %v4007 = vpack.c.b16 %v3773, %v3771
      %v4008 = vpack.c.b16 %v3776, %v3774
      %v4009 = vpack.c.b16 %v3777, %v3775
      %v4010 = vpack.c.b16 %v3780, %v3778
      %v4011 = vpack.c.b16 %v3781, %v3779
      %v4012 = vpack.c.b16 %v3784, %v3782
      %v4013 = vpack.c.b16 %v3785, %v3783
      %v4014 = vpack.c.b16 %v3788, %v3786
      %v4015 = vpack.c.b16 %v3789, %v3787
      %v4016 = vpack.c.b16 %v3792, %v3790
      %v4017 = vpack.c.b16 %v3793, %v3791
      %v4018 = vpack.c.b16 %v3796, %v3794
      %v4019 = vpack.c.b16 %v3797, %v3795
      %v4020 = vpack.c.b16 %v3800, %v3798
      %v4021 = vpack.c.b16 %v3801, %v3799
      %v4022 = vpack.c.b16 %v3804, %v3802
      %v4023 = vpack.c.b16 %v3805, %v3803
      %v4024 = vpack.c.b16 %v3808, %v3806
      %v4025 = vpack.c.b16 %v3809, %v3807
      %v4026 = vpack.c.b16 %v3812, %v3810
      %v4027 = vpack.c.b16 %v3813, %v3811
      %v4028 = vpack.c.b16 %v3816, %v3814
      %v4029 = vpack.c.b16 %v3817, %v3815
      %v4030 = vpack.c.b16 %v3820, %v3818
      %v4031 = vpack.c.b16 %v3821, %v3819
      %v4032 = vpack.c.b16 %v3824, %v3822
      %v4033 = vpack.c.b16 %v3825, %v3823
      %v4034 = vpack.c.b16 %v3828, %v3826
      %v4035 = vpack.c.b16 %v3829, %v3827
      %v4036 = vpack.c.b16 %v3832, %v3830
      %v4037 = vpack.c.b16 %v3833, %v3831
      %v4038 = vpack.c.b16 %v3836, %v3834
      %v4039 = vpack.c.b16 %v3837, %v3835
      %v4040 = vpack.c.b16 %v3840, %v3838
      %v4041 = vpack.c.b16 %v3841, %v3839
      %v4042 = vpack.c.b16 %v3844, %v3842
      %v4043 = vpack.c.b16 %v3845, %v3843
      %v4044 = vpack.c.b16 %v3848, %v3846
      %v4045 = vpack.c.b16 %v3849, %v3847
      %v4046 = vpack.c.b16 %v3852, %v3850
      %v4047 = vpack.c.b16 %v3853, %v3851
      %v4048 = vpack.c.b16 %v3856, %v3854
      %v4049 = vpack.c.b16 %v3857, %v3855
      %v4050 = vpack.c.b16 %v3860, %v3858
      %v4051 = vpack.c.b16 %v3861, %v3859
      %v4052 = vpack.c.b16 %v3864, %v3862
      %v4053 = vpack.c.b16 %v3865, %v3863
      %v4054 = vpack.c.b16 %v3868, %v3866
      %v4055 = vpack.c.b16 %v3869, %v3867
      %v4056 = vpack.c.b16 %v3872, %v3870
      %v4057 = vpack.c.b16 %v3873, %v3871
      %v4058 = vpack.c.b16 %v3876, %v3874
      %v4059 = vpack.c.b16 %v3877, %v3875
      %v4060 = vpack.c.b16 %v3880, %v3878
      %v4061 = vpack.c.b16 %v3881, %v3879
      %v4062 = vpack.c.b16 %v3884, %v3882
      %v4063 = vpack.c.b16 %v3885, %v3883
      %v4064 = vpack.c.b16 %v3888, %v3886
      %v4065 = vpack.c.b16 %v3889, %v3887
      %v4066 = vpack.c.b16 %v3892, %v3890
      %v4067 = vpack.c.b16 %v3893, %v3891
      %v4068 = vpack.c.b16 %v3896, %v3894
      %v4069 = vpack.c.b16 %v3897, %v3895
      %v4070 = vpack.c.b16 %v3900, %v3898
      %v4071 = vpack.c.b16 %v3901, %v3899
      %v4072 = vpack.c.b16 %v3904, %v3902
      %v4073 = vpack.c.b16 %v3905, %v3903
      %v4074 = vpack.c.b16 %v3908, %v3906
      %v4075 = vpack.c.b16 %v3909, %v3907
      %v4076 = vpack.c.b16 %v3912, %v3910
      %v4077 = vpack.c.b16 %v3913, %v3911
      %v4078 = vpack.c.b16 %v3916, %v3914
      %v4079 = vpack.c.b16 %v3917, %v3915
      %v4080 = vpack.c.b16 %v3920, %v3918
      %v4081 = vpack.c.b16 %v3921, %v3919
      %v4082 = vpack.c.b16 %v3924, %v3922
      %v4083 = vpack.c.b16 %v3925, %v3923
      %v4084 = vpack.c.b16 %v3928, %v3926
      %v4085 = vpack.c.b16 %v3929, %v3927
      %v4086 = vpack.c.b16 %v3932, %v3930
      %v4087 = vpack.c.b16 %v3933, %v3931
      %v4088 = vpack.c.b16 %v3936, %v3934
      %v4089 = vpack.c.b16 %v3937, %v3935
      %v4090 = vpack.c.b16 %v3940, %v3938
      %v4091 = vpack.c.b16 %v3941, %v3939
      %v4092 = vpack.c.b16 %v3944, %v3942
      %v4093 = vpack.c.b16 %v3945, %v3943
      %v4094 = vpack.c.b16 %v3948, %v3946
      %v4095 = vpack.c.b16 %v3949, %v3947
      %v4096 = vpack.c.b16 %v3952, %v3950
      %v4097 = vpack.c.b16 %v3953, %v3951
      %v4098 = vpack.c.b16 %v3956, %v3954
      %v4099 = vpack.c.b16 %v3957, %v3955
      %v4100 = vpack.c.b16 %v3960, %v3958
      %v4101 = vpack.c.b16 %v3961, %v3959
      %v4102 = vpack.c.b16 %v3964, %v3962
      %v4103 = vpack.c.b16 %v3965, %v3963
      %v4104 = vpack.c.b16 %v3968, %v3966
      %v4105 = vpack.c.b16 %v3969, %v3967
      %v4106 = vpack.c.b16 %v3972, %v3970
      %v4107 = vpack.c.b16 %v3973, %v3971
      %v4108 = vpack.c.b16 %v3976, %v3974
      %v4109 = vpack.c.b16 %v3977, %v3975
      %v4110 = vpack.c.b16 %v3980, %v3978
      %v4111 = vpack.c.b16 %v3981, %v3979
      %v4112 = vpack.c.b16 %v3984, %v3982
      %v4113 = vpack.c.b16 %v3985, %v3983
      %v4114 = vpack.c.b16 %v3988, %v3986
      %v4115 = vpack.c.b16 %v3989, %v3987
      %v4116 = vpack.c.b16 %v3990, %v3990
      %v4117 = vpack.c.b16 %v3991, %v3991
      %v4243 = vsel %vm1311, %v3609, 0
      %v4246 = vsel %vm1315, %v4116, 0
      %v4249 = vsel %vm1315, %v4117, 0
      %4251 = vmatpush.bf16.msra.mxu0 %v4006
      %4252 = vmatpush.bf16.msra.mxu0 %v4004
      %4253 = vmatpush.bf16.msra.mxu0 %v4002
      %4254 = vmatpush.bf16.msra.mxu0 %v4000
      %4255 = vmatpush.bf16.msra.mxu0 %v3998
      %4256 = vmatpush.bf16.msra.mxu0 %v3996
      %4257 = vmatpush.bf16.msra.mxu0 %v3994
      %4258 = vmatpush.bf16.msra.mxu0 %v3992
      %4259 = vmatmul.bf16.gmra.mxu0 %v3553
      %v4260 = vpop.f32.mrf.mxu0
      %v4261 = vadd.f32 0.0, %v4260
      %v4262 = vpop.f32.mrf.mxu0
      %4263 = vdwg.mxu0
      %4264 = vmatpush.bf16.msra.mxu0 %v4022
      %4265 = vmatpush.bf16.msra.mxu0 %v4020
      %4266 = vmatpush.bf16.msra.mxu0 %v4018
      %4267 = vmatpush.bf16.msra.mxu0 %v4016
      %4268 = vmatpush.bf16.msra.mxu0 %v4014
      %4269 = vmatpush.bf16.msra.mxu0 %v4012
      %4270 = vmatpush.bf16.msra.mxu0 %v4010
      %4271 = vmatpush.bf16.msra.mxu0 %v4008
      %4272 = vmatmul.bf16.gmra.mxu0 %v3561
      %v4273 = vpop.f32.mrf.mxu0
      %v4274 = vadd.f32 %v4261, %v4273
      %v4275 = vpop.f32.mrf.mxu0
      %4276 = vdwg.mxu0
      %4277 = vmatpush.bf16.msra.mxu0 %v4038
      %4278 = vmatpush.bf16.msra.mxu0 %v4036
      %4279 = vmatpush.bf16.msra.mxu0 %v4034
      %4280 = vmatpush.bf16.msra.mxu0 %v4032
      %4281 = vmatpush.bf16.msra.mxu0 %v4030
      %4282 = vmatpush.bf16.msra.mxu0 %v4028
      %4283 = vmatpush.bf16.msra.mxu0 %v4026
      %4284 = vmatpush.bf16.msra.mxu0 %v4024
      %4285 = vmatmul.bf16.gmra.mxu0 %v3569
      %v4286 = vpop.f32.mrf.mxu0
      %v4287 = vadd.f32 %v4274, %v4286
      %v4288 = vpop.f32.mrf.mxu0
      %4289 = vdwg.mxu0
      %4290 = vmatpush.bf16.msra.mxu0 %v4054
      %4291 = vmatpush.bf16.msra.mxu0 %v4052
      %4292 = vmatpush.bf16.msra.mxu0 %v4050
      %4293 = vmatpush.bf16.msra.mxu0 %v4048
      %4294 = vmatpush.bf16.msra.mxu0 %v4046
      %4295 = vmatpush.bf16.msra.mxu0 %v4044
      %4296 = vmatpush.bf16.msra.mxu0 %v4042
      %4297 = vmatpush.bf16.msra.mxu0 %v4040
      %4298 = vmatmul.bf16.gmra.mxu0 %v3577
      %v4299 = vpop.f32.mrf.mxu0
      %v4300 = vadd.f32 %v4287, %v4299
      %v4301 = vpop.f32.mrf.mxu0
      %4302 = vdwg.mxu0
      %4303 = vmatpush.bf16.msra.mxu0 %v4070
      %4304 = vmatpush.bf16.msra.mxu0 %v4068
      %4305 = vmatpush.bf16.msra.mxu0 %v4066
      %4306 = vmatpush.bf16.msra.mxu0 %v4064
      %4307 = vmatpush.bf16.msra.mxu0 %v4062
      %4308 = vmatpush.bf16.msra.mxu0 %v4060
      %4309 = vmatpush.bf16.msra.mxu0 %v4058
      %4310 = vmatpush.bf16.msra.mxu0 %v4056
      %4311 = vmatmul.bf16.gmra.mxu0 %v3585
      %v4312 = vpop.f32.mrf.mxu0
      %v4313 = vadd.f32 %v4300, %v4312
      %v4314 = vpop.f32.mrf.mxu0
      %4315 = vdwg.mxu0
      %4316 = vmatpush.bf16.msra.mxu0 %v4086
      %4317 = vmatpush.bf16.msra.mxu0 %v4084
      %4318 = vmatpush.bf16.msra.mxu0 %v4082
      %4319 = vmatpush.bf16.msra.mxu0 %v4080
      %4320 = vmatpush.bf16.msra.mxu0 %v4078
      %4321 = vmatpush.bf16.msra.mxu0 %v4076
      %4322 = vmatpush.bf16.msra.mxu0 %v4074
      %4323 = vmatpush.bf16.msra.mxu0 %v4072
      %4324 = vmatmul.bf16.gmra.mxu0 %v3593
      %v4325 = vpop.f32.mrf.mxu0
      %v4326 = vadd.f32 %v4313, %v4325
      %v4327 = vpop.f32.mrf.mxu0
      %4328 = vdwg.mxu0
      %4329 = vmatpush.bf16.msra.mxu0 %v4102
      %4330 = vmatpush.bf16.msra.mxu0 %v4100
      %4331 = vmatpush.bf16.msra.mxu0 %v4098
      %4332 = vmatpush.bf16.msra.mxu0 %v4096
      %4333 = vmatpush.bf16.msra.mxu0 %v4094
      %4334 = vmatpush.bf16.msra.mxu0 %v4092
      %4335 = vmatpush.bf16.msra.mxu0 %v4090
      %4336 = vmatpush.bf16.msra.mxu0 %v4088
      %4337 = vmatmul.bf16.gmra.mxu0 %v3601
      %v4338 = vpop.f32.mrf.mxu0
      %v4339 = vadd.f32 %v4326, %v4338
      %v4340 = vpop.f32.mrf.mxu0
      %4341 = vdwg.mxu0
      %4342 = vmatpush.bf16.msra.mxu0 0
      %4343 = vmatpush.bf16.msra.mxu0 %v4246
      %4344 = vmatpush.bf16.msra.mxu0 %v4114
      %4345 = vmatpush.bf16.msra.mxu0 %v4112
      %4346 = vmatpush.bf16.msra.mxu0 %v4110
      %4347 = vmatpush.bf16.msra.mxu0 %v4108
      %4348 = vmatpush.bf16.msra.mxu0 %v4106
      %4349 = vmatpush.bf16.msra.mxu0 %v4104
      %4350 = vmatmul.bf16.gmra.mxu0 %v4243
      %v4351 = vpop.f32.mrf.mxu0
      %v4352 = vadd.f32 %v4339, %v4351
      %v4353 = vpop.f32.mrf.mxu0
      %4354 = vdwg.mxu0
      %4355 = vmatpush.bf16.msra.mxu0 %v4007
      %4356 = vmatpush.bf16.msra.mxu0 %v4005
      %4357 = vmatpush.bf16.msra.mxu0 %v4003
      %4358 = vmatpush.bf16.msra.mxu0 %v4001
      %4359 = vmatpush.bf16.msra.mxu0 %v3999
      %4360 = vmatpush.bf16.msra.mxu0 %v3997
      %4361 = vmatpush.bf16.msra.mxu0 %v3995
      %4362 = vmatpush.bf16.msra.mxu0 %v3993
      %4363 = vmatmul.bf16.gmra.mxu0 %v3553
      %v4364 = vpop.f32.mrf.mxu0
      %v4365 = vadd.f32 0.0, %v4364
      %v4366 = vpop.f32.mrf.mxu0
      %4367 = vdwg.mxu0
      %4368 = vmatpush.bf16.msra.mxu0 %v4023
      %4369 = vmatpush.bf16.msra.mxu0 %v4021
      %4370 = vmatpush.bf16.msra.mxu0 %v4019
      %4371 = vmatpush.bf16.msra.mxu0 %v4017
      %4372 = vmatpush.bf16.msra.mxu0 %v4015
      %4373 = vmatpush.bf16.msra.mxu0 %v4013
      %4374 = vmatpush.bf16.msra.mxu0 %v4011
      %4375 = vmatpush.bf16.msra.mxu0 %v4009
      %4376 = vmatmul.bf16.gmra.mxu0 %v3561
      %v4377 = vpop.f32.mrf.mxu0
      %v4378 = vadd.f32 %v4365, %v4377
      %v4379 = vpop.f32.mrf.mxu0
      %4380 = vdwg.mxu0
      %4381 = vmatpush.bf16.msra.mxu0 %v4039
      %4382 = vmatpush.bf16.msra.mxu0 %v4037
      %4383 = vmatpush.bf16.msra.mxu0 %v4035
      %4384 = vmatpush.bf16.msra.mxu0 %v4033
      %4385 = vmatpush.bf16.msra.mxu0 %v4031
      %4386 = vmatpush.bf16.msra.mxu0 %v4029
      %4387 = vmatpush.bf16.msra.mxu0 %v4027
      %4388 = vmatpush.bf16.msra.mxu0 %v4025
      %4389 = vmatmul.bf16.gmra.mxu0 %v3569
      %v4390 = vpop.f32.mrf.mxu0
      %v4391 = vadd.f32 %v4378, %v4390
      %v4392 = vpop.f32.mrf.mxu0
      %4393 = vdwg.mxu0
      %4394 = vmatpush.bf16.msra.mxu0 %v4055
      %4395 = vmatpush.bf16.msra.mxu0 %v4053
      %4396 = vmatpush.bf16.msra.mxu0 %v4051
      %4397 = vmatpush.bf16.msra.mxu0 %v4049
      %4398 = vmatpush.bf16.msra.mxu0 %v4047
      %4399 = vmatpush.bf16.msra.mxu0 %v4045
      %4400 = vmatpush.bf16.msra.mxu0 %v4043
      %4401 = vmatpush.bf16.msra.mxu0 %v4041
      %4402 = vmatmul.bf16.gmra.mxu0 %v3577
      %v4403 = vpop.f32.mrf.mxu0
      %v4404 = vadd.f32 %v4391, %v4403
      %v4405 = vpop.f32.mrf.mxu0
      %4406 = vdwg.mxu0
      %4407 = vmatpush.bf16.msra.mxu0 %v4071
      %4408 = vmatpush.bf16.msra.mxu0 %v4069
      %4409 = vmatpush.bf16.msra.mxu0 %v4067
      %4410 = vmatpush.bf16.msra.mxu0 %v4065
      %4411 = vmatpush.bf16.msra.mxu0 %v4063
      %4412 = vmatpush.bf16.msra.mxu0 %v4061
      %4413 = vmatpush.bf16.msra.mxu0 %v4059
      %4414 = vmatpush.bf16.msra.mxu0 %v4057
      %4415 = vmatmul.bf16.gmra.mxu0 %v3585
      %v4416 = vpop.f32.mrf.mxu0
      %v4417 = vadd.f32 %v4404, %v4416
      %v4418 = vpop.f32.mrf.mxu0
      %4419 = vdwg.mxu0
      %4420 = vmatpush.bf16.msra.mxu0 %v4087
      %4421 = vmatpush.bf16.msra.mxu0 %v4085
      %4422 = vmatpush.bf16.msra.mxu0 %v4083
      %4423 = vmatpush.bf16.msra.mxu0 %v4081
      %4424 = vmatpush.bf16.msra.mxu0 %v4079
      %4425 = vmatpush.bf16.msra.mxu0 %v4077
      %4426 = vmatpush.bf16.msra.mxu0 %v4075
      %4427 = vmatpush.bf16.msra.mxu0 %v4073
      %4428 = vmatmul.bf16.gmra.mxu0 %v3593
      %v4429 = vpop.f32.mrf.mxu0
      %v4430 = vadd.f32 %v4417, %v4429
      %v4431 = vpop.f32.mrf.mxu0
      %4432 = vdwg.mxu0
      %4433 = vmatpush.bf16.msra.mxu0 %v4103
      %4434 = vmatpush.bf16.msra.mxu0 %v4101
      %4435 = vmatpush.bf16.msra.mxu0 %v4099
      %4436 = vmatpush.bf16.msra.mxu0 %v4097
      %4437 = vmatpush.bf16.msra.mxu0 %v4095
      %4438 = vmatpush.bf16.msra.mxu0 %v4093
      %4439 = vmatpush.bf16.msra.mxu0 %v4091
      %4440 = vmatpush.bf16.msra.mxu0 %v4089
      %4441 = vmatmul.bf16.gmra.mxu0 %v3601
      %v4442 = vpop.f32.mrf.mxu0
      %v4443 = vadd.f32 %v4430, %v4442
      %v4444 = vpop.f32.mrf.mxu0
      %4445 = vdwg.mxu0
      %4446 = vmatpush.bf16.msra.mxu0 0
      %4447 = vmatpush.bf16.msra.mxu0 %v4249
      %4448 = vmatpush.bf16.msra.mxu0 %v4115
      %4449 = vmatpush.bf16.msra.mxu0 %v4113
      %4450 = vmatpush.bf16.msra.mxu0 %v4111
      %4451 = vmatpush.bf16.msra.mxu0 %v4109
      %4452 = vmatpush.bf16.msra.mxu0 %v4107
      %4453 = vmatpush.bf16.msra.mxu0 %v4105
      %4454 = vmatmul.bf16.gmra.mxu0 %v4243
      %v4455 = vpop.f32.mrf.mxu0
      %v4456 = vadd.f32 %v4443, %v4455
      %v4457 = vpop.f32.mrf.mxu0
      %4458 = vdwg.mxu0
      %v4459 = vadd.f32 %v3394, %v4352
      %v4460 = vadd.f32 %v3395, %v4456
      %v4461 = vld [vmem:[%s326] sm:$0xcc]
      %v4462 = vld [vmem:[%s326 + $0x8] sm:$0xcc]
      %v4463 = vld [vmem:[%s326 + $0x10] sm:$0xcc]
      %v4464 = vld [vmem:[%s326 + $0x18] sm:$0xcc]
      %s4465 = scalar_lea.vmem %s1, 4000
      %v4466 = vld [vmem:[%s4465] sm:$0xff]
      %v4467 = vld [vmem:[%s4465 + $0x8] sm:$0xff]
      %v4468 = vld [vmem:[%s4465 + $0x10] sm:$0xff]
      %v4469 = vld [vmem:[%s4465 + $0x18] sm:$0xff]
      %v4470 = vld [vmem:[%s4465 + $0x20] sm:$0xff]
      %v4471 = vld [vmem:[%s4465 + $0x28] sm:$0xff]
      %v4472 = vld [vmem:[%s4465 + $0x30] sm:$0xff]
      %v4473 = vld [vmem:[%s4465 + $0x38] sm:$0xff]
      %v4474 = vld [vmem:[%s4465 + $0x40] sm:$0xff]
      %v4475 = vld [vmem:[%s4465 + $0x48] sm:$0xff]
      %v4476 = vld [vmem:[%s4465 + $0x50] sm:$0xff]
      %v4477 = vld [vmem:[%s4465 + $0x58] sm:$0xff]
      %v4478 = vld [vmem:[%s4465 + $0x60] sm:$0xff]
      %v4479 = vld [vmem:[%s4465 + $0x68] sm:$0xff]
      %v4480 = vld [vmem:[%s4465 + $0x70] sm:$0xff]
      %v4481 = vld [vmem:[%s4465 + $0x78] sm:$0xff]
      %v4482 = vld [vmem:[%s4465 + $0x80] sm:$0xff]
      %v4483 = vld [vmem:[%s4465 + $0x88] sm:$0xff]
      %v4484 = vld [vmem:[%s4465 + $0x90] sm:$0xff]
      %v4485 = vld [vmem:[%s4465 + $0x98] sm:$0xff]
      %v4486 = vld [vmem:[%s4465 + $0xa0] sm:$0xff]
      %v4487 = vld [vmem:[%s4465 + $0xa8] sm:$0xff]
      %v4488 = vld [vmem:[%s4465 + $0xb0] sm:$0xff]
      %v4489 = vld [vmem:[%s4465 + $0xb8] sm:$0xff]
      %v4490 = vld [vmem:[%s4465 + $0xc0] sm:$0xff]
      %v4491 = vld [vmem:[%s4465 + $0xc8] sm:$0xff]
      %v4492 = vld [vmem:[%s4465 + $0xd0] sm:$0xff]
      %v4493 = vld [vmem:[%s4465 + $0xd8] sm:$0xff]
      %v4494 = vld [vmem:[%s4465 + $0xe0] sm:$0xff]
      %v4495 = vld [vmem:[%s4465 + $0xe8] sm:$0xff]
      %v4496 = vld [vmem:[%s4465 + $0xf0] sm:$0xff]
      %v4497 = vld [vmem:[%s4465 + $0xf8] sm:$0xff]
      %v4498 = vld [vmem:[%s4465 + $0x100] sm:$0xff]
      %v4499 = vld [vmem:[%s4465 + $0x108] sm:$0xff]
      %v4500 = vld [vmem:[%s4465 + $0x110] sm:$0xff]
      %v4501 = vld [vmem:[%s4465 + $0x118] sm:$0xff]
      %v4502 = vld [vmem:[%s4465 + $0x120] sm:$0xff]
      %v4503 = vld [vmem:[%s4465 + $0x128] sm:$0xff]
      %v4504 = vld [vmem:[%s4465 + $0x130] sm:$0xff]
      %v4505 = vld [vmem:[%s4465 + $0x138] sm:$0xff]
      %v4506 = vld [vmem:[%s4465 + $0x140] sm:$0xff]
      %v4507 = vld [vmem:[%s4465 + $0x148] sm:$0xff]
      %v4508 = vld [vmem:[%s4465 + $0x150] sm:$0xff]
      %v4509 = vld [vmem:[%s4465 + $0x158] sm:$0xff]
      %v4510 = vld [vmem:[%s4465 + $0x160] sm:$0xff]
      %v4511 = vld [vmem:[%s4465 + $0x168] sm:$0xff]
      %v4512 = vld [vmem:[%s4465 + $0x170] sm:$0xff]
      %v4513 = vld [vmem:[%s4465 + $0x178] sm:$0xff]
      %v4514 = vld [vmem:[%s4465 + $0x180] sm:$0xff]
      %v4515 = vld [vmem:[%s4465 + $0x188] sm:$0xff]
      %v4516 = vld [vmem:[%s4465 + $0x190] sm:$0xff]
      %v4517 = vld [vmem:[%s4465 + $0x198] sm:$0xff]
      %v4518 = vld [vmem:[%s4465 + $0x1a0] sm:$0xff]
      %v4519 = vld [vmem:[%s4465 + $0x1a8] sm:$0xff]
      %v4520 = vld [vmem:[%s4465 + $0x1b0] sm:$0xff]
      %v4521 = vld [vmem:[%s4465 + $0x1b8] sm:$0xff]
      %v4522 = vld [vmem:[%s4465 + $0x1c0] sm:$0xff]
      %v4523 = vld [vmem:[%s4465 + $0x1c8] sm:$0xff]
      %v4524 = vld [vmem:[%s4465 + $0x1d0] sm:$0xff]
      %v4525 = vld [vmem:[%s4465 + $0x1d8] sm:$0xff]
      %v4526 = vld [vmem:[%s4465 + $0x1e0] sm:$0xff]
      %v4527 = vld [vmem:[%s4465 + $0x1e8] sm:$0xff]
      %v4528 = vld [vmem:[%s4465 + $0x1f0] sm:$0xff]
      %v4529 = vld [vmem:[%s4465 + $0x1f8] sm:$0xff]
      %v4530 = vld [vmem:[%s4465 + $0x200] sm:$0xff]
      %v4531 = vld [vmem:[%s4465 + $0x208] sm:$0xff]
      %v4532 = vld [vmem:[%s4465 + $0x210] sm:$0xff]
      %v4533 = vld [vmem:[%s4465 + $0x218] sm:$0xff]
      %v4534 = vld [vmem:[%s4465 + $0x220] sm:$0xff]
      %v4535 = vld [vmem:[%s4465 + $0x228] sm:$0xff]
      %v4536 = vld [vmem:[%s4465 + $0x230] sm:$0xff]
      %v4537 = vld [vmem:[%s4465 + $0x238] sm:$0xff]
      %v4538 = vld [vmem:[%s4465 + $0x240] sm:$0xff]
      %v4539 = vld [vmem:[%s4465 + $0x248] sm:$0xff]
      %v4540 = vld [vmem:[%s4465 + $0x250] sm:$0xff]
      %v4541 = vld [vmem:[%s4465 + $0x258] sm:$0xff]
      %v4542 = vld [vmem:[%s4465 + $0x260] sm:$0xff]
      %v4543 = vld [vmem:[%s4465 + $0x268] sm:$0xff]
      %v4544 = vld [vmem:[%s4465 + $0x270] sm:$0xff]
      %v4545 = vld [vmem:[%s4465 + $0x278] sm:$0xff]
      %v4546 = vld [vmem:[%s4465 + $0x280] sm:$0xff]
      %v4547 = vld [vmem:[%s4465 + $0x288] sm:$0xff]
      %v4548 = vld [vmem:[%s4465 + $0x290] sm:$0xff]
      %v4549 = vld [vmem:[%s4465 + $0x298] sm:$0xff]
      %v4550 = vld [vmem:[%s4465 + $0x2a0] sm:$0xff]
      %v4551 = vld [vmem:[%s4465 + $0x2a8] sm:$0xff]
      %v4552 = vld [vmem:[%s4465 + $0x2b0] sm:$0xff]
      %v4553 = vld [vmem:[%s4465 + $0x2b8] sm:$0xff]
      %v4554 = vld [vmem:[%s4465 + $0x2c0] sm:$0xff]
      %v4555 = vld [vmem:[%s4465 + $0x2c8] sm:$0xff]
      %v4556 = vld [vmem:[%s4465 + $0x2d0] sm:$0xff]
      %v4557 = vld [vmem:[%s4465 + $0x2d8] sm:$0xff]
      %v4558 = vld [vmem:[%s4465 + $0x2e0] sm:$0xff]
      %v4559 = vld [vmem:[%s4465 + $0x2e8] sm:$0xff]
      %v4560 = vld [vmem:[%s4465 + $0x2f0] sm:$0xff]
      %v4561 = vld [vmem:[%s4465 + $0x2f8] sm:$0xff]
      %v4562 = vld [vmem:[%s4465 + $0x300] sm:$0xff]
      %v4563 = vld [vmem:[%s4465 + $0x308] sm:$0xff]
      %v4564 = vld [vmem:[%s4465 + $0x310] sm:$0xff]
      %v4565 = vld [vmem:[%s4465 + $0x318] sm:$0xff]
      %v4566 = vld [vmem:[%s4465 + $0x320] sm:$0xff]
      %v4567 = vld [vmem:[%s4465 + $0x328] sm:$0xff]
      %v4568 = vld [vmem:[%s4465 + $0x330] sm:$0xff]
      %v4569 = vld [vmem:[%s4465 + $0x338] sm:$0xff]
      %v4570 = vld [vmem:[%s4465 + $0x340] sm:$0xff]
      %v4571 = vld [vmem:[%s4465 + $0x348] sm:$0xff]
      %v4572 = vld [vmem:[%s4465 + $0x350] sm:$0xff]
      %v4573 = vld [vmem:[%s4465 + $0x358] sm:$0xff]
      %v4574 = vld [vmem:[%s4465 + $0x360] sm:$0xff]
      %v4575 = vld [vmem:[%s4465 + $0x368] sm:$0xff]
      %v4576 = vld [vmem:[%s4465 + $0x370] sm:$0xff]
      %v4577 = vld [vmem:[%s4465 + $0x378] sm:$0xff]
      %v4578 = vld [vmem:[%s4465 + $0x380] sm:$0xff]
      %v4579 = vld [vmem:[%s4465 + $0x388] sm:$0xff]
      %v4580 = vld [vmem:[%s4465 + $0x390] sm:$0xff]
      %v4581 = vld [vmem:[%s4465 + $0x398] sm:$0xff]
      %v4582 = vld [vmem:[%s4465 + $0x3a0] sm:$0xff]
      %v4583 = vld [vmem:[%s4465 + $0x3a8] sm:$0xff]
      %v4584 = vld [vmem:[%s4465 + $0x3b0] sm:$0xff]
      %v4585 = vld [vmem:[%s4465 + $0x3b8] sm:$0xff]
      %v4586 = vld [vmem:[%s4465 + $0x3c0] sm:$0xff]
      %v4587 = vld [vmem:[%s4465 + $0x3c8] sm:$0xff]
      %v4588 = vld [vmem:[%s4465 + $0x3d0] sm:$0xff]
      %v4589 = vld [vmem:[%s4465 + $0x3d8] sm:$0xff]
      %v4590 = vld [vmem:[%s4465 + $0x3e0] sm:$0xff]
      %v4595 = vunpack.c.l.b16 %v4461
      %v4596 = vunpack.c.h.b16 %v4461
      %v4597 = vunpack.c.l.b16 %v4462
      %v4598 = vunpack.c.h.b16 %v4462
      %v4599 = vunpack.c.l.b16 %v4463
      %v4600 = vunpack.c.h.b16 %v4463
      %v4601 = vunpack.c.l.b16 %v4464
      %v4602 = vunpack.c.h.b16 %v4464
      %v4603 = vpack.c.b16 %v3530, %v4595
      %v4604 = vpack.c.b16 %v3531, %v4596
      %v4605 = vpack.c.b16 %v3532, %v4597
      %v4606 = vpack.c.b16 %v3533, %v4598
      %v4607 = vpack.c.b16 %v3534, %v4599
      %v4608 = vpack.c.b16 %v3535, %v4600
      %v4609 = vpack.c.b16 %v3536, %v4601
      %v4610 = vpack.c.b16 %v3537, %v4602
      %v4611 = vrot.slane %v4603, 2
      %v4612 = vrot.slane %v4604, 2
      %v4613 = vrot.slane %v4605, 2
      %v4614 = vrot.slane %v4606, 2
      %v4615 = vrot.slane %v4607, 2
      %v4616 = vrot.slane %v4608, 2
      %v4617 = vrot.slane %v4609, 2
      %v4618 = vrot.slane %v4610, 2
      %v4751 = vunpack.c.l.b16 %v4466
      %v4752 = vunpack.c.h.b16 %v4466
      %v4753 = vunpack.c.l.b16 %v4467
      %v4754 = vunpack.c.h.b16 %v4467
      %v4755 = vunpack.c.l.b16 %v4468
      %v4756 = vunpack.c.h.b16 %v4468
      %v4757 = vunpack.c.l.b16 %v4469
      %v4758 = vunpack.c.h.b16 %v4469
      %v4759 = vunpack.c.l.b16 %v4470
      %v4760 = vunpack.c.h.b16 %v4470
      %v4761 = vunpack.c.l.b16 %v4471
      %v4762 = vunpack.c.h.b16 %v4471
      %v4763 = vunpack.c.l.b16 %v4472
      %v4764 = vunpack.c.h.b16 %v4472
      %v4765 = vunpack.c.l.b16 %v4473
      %v4766 = vunpack.c.h.b16 %v4473
      %v4767 = vunpack.c.l.b16 %v4474
      %v4768 = vunpack.c.h.b16 %v4474
      %v4769 = vunpack.c.l.b16 %v4475
      %v4770 = vunpack.c.h.b16 %v4475
      %v4771 = vunpack.c.l.b16 %v4476
      %v4772 = vunpack.c.h.b16 %v4476
      %v4773 = vunpack.c.l.b16 %v4477
      %v4774 = vunpack.c.h.b16 %v4477
      %v4775 = vunpack.c.l.b16 %v4478
      %v4776 = vunpack.c.h.b16 %v4478
      %v4777 = vunpack.c.l.b16 %v4479
      %v4778 = vunpack.c.h.b16 %v4479
      %v4779 = vunpack.c.l.b16 %v4480
      %v4780 = vunpack.c.h.b16 %v4480
      %v4781 = vunpack.c.l.b16 %v4481
      %v4782 = vunpack.c.h.b16 %v4481
      %v4783 = vunpack.c.l.b16 %v4482
      %v4784 = vunpack.c.h.b16 %v4482
      %v4785 = vunpack.c.l.b16 %v4483
      %v4786 = vunpack.c.h.b16 %v4483
      %v4787 = vunpack.c.l.b16 %v4484
      %v4788 = vunpack.c.h.b16 %v4484
      %v4789 = vunpack.c.l.b16 %v4485
      %v4790 = vunpack.c.h.b16 %v4485
      %v4791 = vunpack.c.l.b16 %v4486
      %v4792 = vunpack.c.h.b16 %v4486
      %v4793 = vunpack.c.l.b16 %v4487
      %v4794 = vunpack.c.h.b16 %v4487
      %v4795 = vunpack.c.l.b16 %v4488
      %v4796 = vunpack.c.h.b16 %v4488
      %v4797 = vunpack.c.l.b16 %v4489
      %v4798 = vunpack.c.h.b16 %v4489
      %v4799 = vunpack.c.l.b16 %v4490
      %v4800 = vunpack.c.h.b16 %v4490
      %v4801 = vunpack.c.l.b16 %v4491
      %v4802 = vunpack.c.h.b16 %v4491
      %v4803 = vunpack.c.l.b16 %v4492
      %v4804 = vunpack.c.h.b16 %v4492
      %v4805 = vunpack.c.l.b16 %v4493
      %v4806 = vunpack.c.h.b16 %v4493
      %v4807 = vunpack.c.l.b16 %v4494
      %v4808 = vunpack.c.h.b16 %v4494
      %v4809 = vunpack.c.l.b16 %v4495
      %v4810 = vunpack.c.h.b16 %v4495
      %v4811 = vunpack.c.l.b16 %v4496
      %v4812 = vunpack.c.h.b16 %v4496
      %v4813 = vunpack.c.l.b16 %v4497
      %v4814 = vunpack.c.h.b16 %v4497
      %v4815 = vunpack.c.l.b16 %v4498
      %v4816 = vunpack.c.h.b16 %v4498
      %v4817 = vunpack.c.l.b16 %v4499
      %v4818 = vunpack.c.h.b16 %v4499
      %v4819 = vunpack.c.l.b16 %v4500
      %v4820 = vunpack.c.h.b16 %v4500
      %v4821 = vunpack.c.l.b16 %v4501
      %v4822 = vunpack.c.h.b16 %v4501
      %v4823 = vunpack.c.l.b16 %v4502
      %v4824 = vunpack.c.h.b16 %v4502
      %v4825 = vunpack.c.l.b16 %v4503
      %v4826 = vunpack.c.h.b16 %v4503
      %v4827 = vunpack.c.l.b16 %v4504
      %v4828 = vunpack.c.h.b16 %v4504
      %v4829 = vunpack.c.l.b16 %v4505
      %v4830 = vunpack.c.h.b16 %v4505
      %v4831 = vunpack.c.l.b16 %v4506
      %v4832 = vunpack.c.h.b16 %v4506
      %v4833 = vunpack.c.l.b16 %v4507
      %v4834 = vunpack.c.h.b16 %v4507
      %v4835 = vunpack.c.l.b16 %v4508
      %v4836 = vunpack.c.h.b16 %v4508
      %v4837 = vunpack.c.l.b16 %v4509
      %v4838 = vunpack.c.h.b16 %v4509
      %v4839 = vunpack.c.l.b16 %v4510
      %v4840 = vunpack.c.h.b16 %v4510
      %v4841 = vunpack.c.l.b16 %v4511
      %v4842 = vunpack.c.h.b16 %v4511
      %v4843 = vunpack.c.l.b16 %v4512
      %v4844 = vunpack.c.h.b16 %v4512
      %v4845 = vunpack.c.l.b16 %v4513
      %v4846 = vunpack.c.h.b16 %v4513
      %v4847 = vunpack.c.l.b16 %v4514
      %v4848 = vunpack.c.h.b16 %v4514
      %v4849 = vunpack.c.l.b16 %v4515
      %v4850 = vunpack.c.h.b16 %v4515
      %v4851 = vunpack.c.l.b16 %v4516
      %v4852 = vunpack.c.h.b16 %v4516
      %v4853 = vunpack.c.l.b16 %v4517
      %v4854 = vunpack.c.h.b16 %v4517
      %v4855 = vunpack.c.l.b16 %v4518
      %v4856 = vunpack.c.h.b16 %v4518
      %v4857 = vunpack.c.l.b16 %v4519
      %v4858 = vunpack.c.h.b16 %v4519
      %v4859 = vunpack.c.l.b16 %v4520
      %v4860 = vunpack.c.h.b16 %v4520
      %v4861 = vunpack.c.l.b16 %v4521
      %v4862 = vunpack.c.h.b16 %v4521
      %v4863 = vunpack.c.l.b16 %v4522
      %v4864 = vunpack.c.h.b16 %v4522
      %v4865 = vunpack.c.l.b16 %v4523
      %v4866 = vunpack.c.h.b16 %v4523
      %v4867 = vunpack.c.l.b16 %v4524
      %v4868 = vunpack.c.h.b16 %v4524
      %v4869 = vunpack.c.l.b16 %v4525
      %v4870 = vunpack.c.h.b16 %v4525
      %v4871 = vunpack.c.l.b16 %v4526
      %v4872 = vunpack.c.h.b16 %v4526
      %v4873 = vunpack.c.l.b16 %v4527
      %v4874 = vunpack.c.h.b16 %v4527
      %v4875 = vunpack.c.l.b16 %v4528
      %v4876 = vunpack.c.h.b16 %v4528
      %v4877 = vunpack.c.l.b16 %v4529
      %v4878 = vunpack.c.h.b16 %v4529
      %v4879 = vunpack.c.l.b16 %v4530
      %v4880 = vunpack.c.h.b16 %v4530
      %v4881 = vunpack.c.l.b16 %v4531
      %v4882 = vunpack.c.h.b16 %v4531
      %v4883 = vunpack.c.l.b16 %v4532
      %v4884 = vunpack.c.h.b16 %v4532
      %v4885 = vunpack.c.l.b16 %v4533
      %v4886 = vunpack.c.h.b16 %v4533
      %v4887 = vunpack.c.l.b16 %v4534
      %v4888 = vunpack.c.h.b16 %v4534
      %v4889 = vunpack.c.l.b16 %v4535
      %v4890 = vunpack.c.h.b16 %v4535
      %v4891 = vunpack.c.l.b16 %v4536
      %v4892 = vunpack.c.h.b16 %v4536
      %v4893 = vunpack.c.l.b16 %v4537
      %v4894 = vunpack.c.h.b16 %v4537
      %v4895 = vunpack.c.l.b16 %v4538
      %v4896 = vunpack.c.h.b16 %v4538
      %v4897 = vunpack.c.l.b16 %v4539
      %v4898 = vunpack.c.h.b16 %v4539
      %v4899 = vunpack.c.l.b16 %v4540
      %v4900 = vunpack.c.h.b16 %v4540
      %v4901 = vunpack.c.l.b16 %v4541
      %v4902 = vunpack.c.h.b16 %v4541
      %v4903 = vunpack.c.l.b16 %v4542
      %v4904 = vunpack.c.h.b16 %v4542
      %v4905 = vunpack.c.l.b16 %v4543
      %v4906 = vunpack.c.h.b16 %v4543
      %v4907 = vunpack.c.l.b16 %v4544
      %v4908 = vunpack.c.h.b16 %v4544
      %v4909 = vunpack.c.l.b16 %v4545
      %v4910 = vunpack.c.h.b16 %v4545
      %v4911 = vunpack.c.l.b16 %v4546
      %v4912 = vunpack.c.h.b16 %v4546
      %v4913 = vunpack.c.l.b16 %v4547
      %v4914 = vunpack.c.h.b16 %v4547
      %v4915 = vunpack.c.l.b16 %v4548
      %v4916 = vunpack.c.h.b16 %v4548
      %v4917 = vunpack.c.l.b16 %v4549
      %v4918 = vunpack.c.h.b16 %v4549
      %v4919 = vunpack.c.l.b16 %v4550
      %v4920 = vunpack.c.h.b16 %v4550
      %v4921 = vunpack.c.l.b16 %v4551
      %v4922 = vunpack.c.h.b16 %v4551
      %v4923 = vunpack.c.l.b16 %v4552
      %v4924 = vunpack.c.h.b16 %v4552
      %v4925 = vunpack.c.l.b16 %v4553
      %v4926 = vunpack.c.h.b16 %v4553
      %v4927 = vunpack.c.l.b16 %v4554
      %v4928 = vunpack.c.h.b16 %v4554
      %v4929 = vunpack.c.l.b16 %v4555
      %v4930 = vunpack.c.h.b16 %v4555
      %v4931 = vunpack.c.l.b16 %v4556
      %v4932 = vunpack.c.h.b16 %v4556
      %v4933 = vunpack.c.l.b16 %v4557
      %v4934 = vunpack.c.h.b16 %v4557
      %v4935 = vunpack.c.l.b16 %v4558
      %v4936 = vunpack.c.h.b16 %v4558
      %v4937 = vunpack.c.l.b16 %v4559
      %v4938 = vunpack.c.h.b16 %v4559
      %v4939 = vunpack.c.l.b16 %v4560
      %v4940 = vunpack.c.h.b16 %v4560
      %v4941 = vunpack.c.l.b16 %v4561
      %v4942 = vunpack.c.h.b16 %v4561
      %v4943 = vunpack.c.l.b16 %v4562
      %v4944 = vunpack.c.h.b16 %v4562
      %v4945 = vunpack.c.l.b16 %v4563
      %v4946 = vunpack.c.h.b16 %v4563
      %v4947 = vunpack.c.l.b16 %v4564
      %v4948 = vunpack.c.h.b16 %v4564
      %v4949 = vunpack.c.l.b16 %v4565
      %v4950 = vunpack.c.h.b16 %v4565
      %v4951 = vunpack.c.l.b16 %v4566
      %v4952 = vunpack.c.h.b16 %v4566
      %v4953 = vunpack.c.l.b16 %v4567
      %v4954 = vunpack.c.h.b16 %v4567
      %v4955 = vunpack.c.l.b16 %v4568
      %v4956 = vunpack.c.h.b16 %v4568
      %v4957 = vunpack.c.l.b16 %v4569
      %v4958 = vunpack.c.h.b16 %v4569
      %v4959 = vunpack.c.l.b16 %v4570
      %v4960 = vunpack.c.h.b16 %v4570
      %v4961 = vunpack.c.l.b16 %v4571
      %v4962 = vunpack.c.h.b16 %v4571
      %v4963 = vunpack.c.l.b16 %v4572
      %v4964 = vunpack.c.h.b16 %v4572
      %v4965 = vunpack.c.l.b16 %v4573
      %v4966 = vunpack.c.h.b16 %v4573
      %v4967 = vunpack.c.l.b16 %v4574
      %v4968 = vunpack.c.h.b16 %v4574
      %v4969 = vunpack.c.l.b16 %v4575
      %v4970 = vunpack.c.h.b16 %v4575
      %v4971 = vunpack.c.l.b16 %v4576
      %v4972 = vunpack.c.h.b16 %v4576
      %v4973 = vunpack.c.l.b16 %v4577
      %v4974 = vunpack.c.h.b16 %v4577
      %v4975 = vunpack.c.l.b16 %v4578
      %v4976 = vunpack.c.h.b16 %v4578
      %v4977 = vunpack.c.l.b16 %v4579
      %v4978 = vunpack.c.h.b16 %v4579
      %v4979 = vunpack.c.l.b16 %v4580
      %v4980 = vunpack.c.h.b16 %v4580
      %v4981 = vunpack.c.l.b16 %v4581
      %v4982 = vunpack.c.h.b16 %v4581
      %v4983 = vunpack.c.l.b16 %v4582
      %v4984 = vunpack.c.h.b16 %v4582
      %v4985 = vunpack.c.l.b16 %v4583
      %v4986 = vunpack.c.h.b16 %v4583
      %v4987 = vunpack.c.l.b16 %v4584
      %v4988 = vunpack.c.h.b16 %v4584
      %v4989 = vunpack.c.l.b16 %v4585
      %v4990 = vunpack.c.h.b16 %v4585
      %v4991 = vunpack.c.l.b16 %v4586
      %v4992 = vunpack.c.h.b16 %v4586
      %v4993 = vunpack.c.l.b16 %v4587
      %v4994 = vunpack.c.h.b16 %v4587
      %v4995 = vunpack.c.l.b16 %v4588
      %v4996 = vunpack.c.h.b16 %v4588
      %v4997 = vunpack.c.l.b16 %v4589
      %v4998 = vunpack.c.h.b16 %v4589
      %v4999 = vunpack.c.l.b16 %v4590
      %v5000 = vunpack.c.h.b16 %v4590
      %v5001 = vpack.c.b16 %v4753, %v4751
      %v5002 = vpack.c.b16 %v4754, %v4752
      %v5003 = vpack.c.b16 %v4757, %v4755
      %v5004 = vpack.c.b16 %v4758, %v4756
      %v5005 = vpack.c.b16 %v4761, %v4759
      %v5006 = vpack.c.b16 %v4762, %v4760
      %v5007 = vpack.c.b16 %v4765, %v4763
      %v5008 = vpack.c.b16 %v4766, %v4764
      %v5009 = vpack.c.b16 %v4769, %v4767
      %v5010 = vpack.c.b16 %v4770, %v4768
      %v5011 = vpack.c.b16 %v4773, %v4771
      %v5012 = vpack.c.b16 %v4774, %v4772
      %v5013 = vpack.c.b16 %v4777, %v4775
      %v5014 = vpack.c.b16 %v4778, %v4776
      %v5015 = vpack.c.b16 %v4781, %v4779
      %v5016 = vpack.c.b16 %v4782, %v4780
      %v5017 = vpack.c.b16 %v4785, %v4783
      %v5018 = vpack.c.b16 %v4786, %v4784
      %v5019 = vpack.c.b16 %v4789, %v4787
      %v5020 = vpack.c.b16 %v4790, %v4788
      %v5021 = vpack.c.b16 %v4793, %v4791
      %v5022 = vpack.c.b16 %v4794, %v4792
      %v5023 = vpack.c.b16 %v4797, %v4795
      %v5024 = vpack.c.b16 %v4798, %v4796
      %v5025 = vpack.c.b16 %v4801, %v4799
      %v5026 = vpack.c.b16 %v4802, %v4800
      %v5027 = vpack.c.b16 %v4805, %v4803
      %v5028 = vpack.c.b16 %v4806, %v4804
      %v5029 = vpack.c.b16 %v4809, %v4807
      %v5030 = vpack.c.b16 %v4810, %v4808
      %v5031 = vpack.c.b16 %v4813, %v4811
      %v5032 = vpack.c.b16 %v4814, %v4812
      %v5033 = vpack.c.b16 %v4817, %v4815
      %v5034 = vpack.c.b16 %v4818, %v4816
      %v5035 = vpack.c.b16 %v4821, %v4819
      %v5036 = vpack.c.b16 %v4822, %v4820
      %v5037 = vpack.c.b16 %v4825, %v4823
      %v5038 = vpack.c.b16 %v4826, %v4824
      %v5039 = vpack.c.b16 %v4829, %v4827
      %v5040 = vpack.c.b16 %v4830, %v4828
      %v5041 = vpack.c.b16 %v4833, %v4831
      %v5042 = vpack.c.b16 %v4834, %v4832
      %v5043 = vpack.c.b16 %v4837, %v4835
      %v5044 = vpack.c.b16 %v4838, %v4836
      %v5045 = vpack.c.b16 %v4841, %v4839
      %v5046 = vpack.c.b16 %v4842, %v4840
      %v5047 = vpack.c.b16 %v4845, %v4843
      %v5048 = vpack.c.b16 %v4846, %v4844
      %v5049 = vpack.c.b16 %v4849, %v4847
      %v5050 = vpack.c.b16 %v4850, %v4848
      %v5051 = vpack.c.b16 %v4853, %v4851
      %v5052 = vpack.c.b16 %v4854, %v4852
      %v5053 = vpack.c.b16 %v4857, %v4855
      %v5054 = vpack.c.b16 %v4858, %v4856
      %v5055 = vpack.c.b16 %v4861, %v4859
      %v5056 = vpack.c.b16 %v4862, %v4860
      %v5057 = vpack.c.b16 %v4865, %v4863
      %v5058 = vpack.c.b16 %v4866, %v4864
      %v5059 = vpack.c.b16 %v4869, %v4867
      %v5060 = vpack.c.b16 %v4870, %v4868
      %v5061 = vpack.c.b16 %v4873, %v4871
      %v5062 = vpack.c.b16 %v4874, %v4872
      %v5063 = vpack.c.b16 %v4877, %v4875
      %v5064 = vpack.c.b16 %v4878, %v4876
      %v5065 = vpack.c.b16 %v4881, %v4879
      %v5066 = vpack.c.b16 %v4882, %v4880
      %v5067 = vpack.c.b16 %v4885, %v4883
      %v5068 = vpack.c.b16 %v4886, %v4884
      %v5069 = vpack.c.b16 %v4889, %v4887
      %v5070 = vpack.c.b16 %v4890, %v4888
      %v5071 = vpack.c.b16 %v4893, %v4891
      %v5072 = vpack.c.b16 %v4894, %v4892
      %v5073 = vpack.c.b16 %v4897, %v4895
      %v5074 = vpack.c.b16 %v4898, %v4896
      %v5075 = vpack.c.b16 %v4901, %v4899
      %v5076 = vpack.c.b16 %v4902, %v4900
      %v5077 = vpack.c.b16 %v4905, %v4903
      %v5078 = vpack.c.b16 %v4906, %v4904
      %v5079 = vpack.c.b16 %v4909, %v4907
      %v5080 = vpack.c.b16 %v4910, %v4908
      %v5081 = vpack.c.b16 %v4913, %v4911
      %v5082 = vpack.c.b16 %v4914, %v4912
      %v5083 = vpack.c.b16 %v4917, %v4915
      %v5084 = vpack.c.b16 %v4918, %v4916
      %v5085 = vpack.c.b16 %v4921, %v4919
      %v5086 = vpack.c.b16 %v4922, %v4920
      %v5087 = vpack.c.b16 %v4925, %v4923
      %v5088 = vpack.c.b16 %v4926, %v4924
      %v5089 = vpack.c.b16 %v4929, %v4927
      %v5090 = vpack.c.b16 %v4930, %v4928
      %v5091 = vpack.c.b16 %v4933, %v4931
      %v5092 = vpack.c.b16 %v4934, %v4932
      %v5093 = vpack.c.b16 %v4937, %v4935
      %v5094 = vpack.c.b16 %v4938, %v4936
      %v5095 = vpack.c.b16 %v4941, %v4939
      %v5096 = vpack.c.b16 %v4942, %v4940
      %v5097 = vpack.c.b16 %v4945, %v4943
      %v5098 = vpack.c.b16 %v4946, %v4944
      %v5099 = vpack.c.b16 %v4949, %v4947
      %v5100 = vpack.c.b16 %v4950, %v4948
      %v5101 = vpack.c.b16 %v4953, %v4951
      %v5102 = vpack.c.b16 %v4954, %v4952
      %v5103 = vpack.c.b16 %v4957, %v4955
      %v5104 = vpack.c.b16 %v4958, %v4956
      %v5105 = vpack.c.b16 %v4961, %v4959
      %v5106 = vpack.c.b16 %v4962, %v4960
      %v5107 = vpack.c.b16 %v4965, %v4963
      %v5108 = vpack.c.b16 %v4966, %v4964
      %v5109 = vpack.c.b16 %v4969, %v4967
      %v5110 = vpack.c.b16 %v4970, %v4968
      %v5111 = vpack.c.b16 %v4973, %v4971
      %v5112 = vpack.c.b16 %v4974, %v4972
      %v5113 = vpack.c.b16 %v4977, %v4975
      %v5114 = vpack.c.b16 %v4978, %v4976
      %v5115 = vpack.c.b16 %v4981, %v4979
      %v5116 = vpack.c.b16 %v4982, %v4980
      %v5117 = vpack.c.b16 %v4985, %v4983
      %v5118 = vpack.c.b16 %v4986, %v4984
      %v5119 = vpack.c.b16 %v4989, %v4987
      %v5120 = vpack.c.b16 %v4990, %v4988
      %v5121 = vpack.c.b16 %v4993, %v4991
      %v5122 = vpack.c.b16 %v4994, %v4992
      %v5123 = vpack.c.b16 %v4997, %v4995
      %v5124 = vpack.c.b16 %v4998, %v4996
      %v5125 = vpack.c.b16 %v4999, %v4999
      %v5126 = vpack.c.b16 %v5000, %v5000
      %v5252 = vsel %vm1311, %v4618, 0
      %v5255 = vsel %vm1315, %v5125, 0
      %v5258 = vsel %vm1315, %v5126, 0
      %5260 = vmatpush.bf16.msra.mxu0 %v5015
      %5261 = vmatpush.bf16.msra.mxu0 %v5013
      %5262 = vmatpush.bf16.msra.mxu0 %v5011
      %5263 = vmatpush.bf16.msra.mxu0 %v5009
      %5264 = vmatpush.bf16.msra.mxu0 %v5007
      %5265 = vmatpush.bf16.msra.mxu0 %v5005
      %5266 = vmatpush.bf16.msra.mxu0 %v5003
      %5267 = vmatpush.bf16.msra.mxu0 %v5001
      %5268 = vmatmul.bf16.gmra.mxu0 %v4611
      %v5269 = vpop.f32.mrf.mxu0
      %v5270 = vadd.f32 0.0, %v5269
      %v5271 = vpop.f32.mrf.mxu0
      %5272 = vdwg.mxu0
      %5273 = vmatpush.bf16.msra.mxu0 %v5031
      %5274 = vmatpush.bf16.msra.mxu0 %v5029
      %5275 = vmatpush.bf16.msra.mxu0 %v5027
      %5276 = vmatpush.bf16.msra.mxu0 %v5025
      %5277 = vmatpush.bf16.msra.mxu0 %v5023
      %5278 = vmatpush.bf16.msra.mxu0 %v5021
      %5279 = vmatpush.bf16.msra.mxu0 %v5019
      %5280 = vmatpush.bf16.msra.mxu0 %v5017
      %5281 = vmatmul.bf16.gmra.mxu0 %v4612
      %v5282 = vpop.f32.mrf.mxu0
      %v5283 = vadd.f32 %v5270, %v5282
      %v5284 = vpop.f32.mrf.mxu0
      %5285 = vdwg.mxu0
      %5286 = vmatpush.bf16.msra.mxu0 %v5047
      %5287 = vmatpush.bf16.msra.mxu0 %v5045
      %5288 = vmatpush.bf16.msra.mxu0 %v5043
      %5289 = vmatpush.bf16.msra.mxu0 %v5041
      %5290 = vmatpush.bf16.msra.mxu0 %v5039
      %5291 = vmatpush.bf16.msra.mxu0 %v5037
      %5292 = vmatpush.bf16.msra.mxu0 %v5035
      %5293 = vmatpush.bf16.msra.mxu0 %v5033
      %5294 = vmatmul.bf16.gmra.mxu0 %v4613
      %v5295 = vpop.f32.mrf.mxu0
      %v5296 = vadd.f32 %v5283, %v5295
      %v5297 = vpop.f32.mrf.mxu0
      %5298 = vdwg.mxu0
      %5299 = vmatpush.bf16.msra.mxu0 %v5063
      %5300 = vmatpush.bf16.msra.mxu0 %v5061
      %5301 = vmatpush.bf16.msra.mxu0 %v5059
      %5302 = vmatpush.bf16.msra.mxu0 %v5057
      %5303 = vmatpush.bf16.msra.mxu0 %v5055
      %5304 = vmatpush.bf16.msra.mxu0 %v5053
      %5305 = vmatpush.bf16.msra.mxu0 %v5051
      %5306 = vmatpush.bf16.msra.mxu0 %v5049
      %5307 = vmatmul.bf16.gmra.mxu0 %v4614
      %v5308 = vpop.f32.mrf.mxu0
      %v5309 = vadd.f32 %v5296, %v5308
      %v5310 = vpop.f32.mrf.mxu0
      %5311 = vdwg.mxu0
      %5312 = vmatpush.bf16.msra.mxu0 %v5079
      %5313 = vmatpush.bf16.msra.mxu0 %v5077
      %5314 = vmatpush.bf16.msra.mxu0 %v5075
      %5315 = vmatpush.bf16.msra.mxu0 %v5073
      %5316 = vmatpush.bf16.msra.mxu0 %v5071
      %5317 = vmatpush.bf16.msra.mxu0 %v5069
      %5318 = vmatpush.bf16.msra.mxu0 %v5067
      %5319 = vmatpush.bf16.msra.mxu0 %v5065
      %5320 = vmatmul.bf16.gmra.mxu0 %v4615
      %v5321 = vpop.f32.mrf.mxu0
      %v5322 = vadd.f32 %v5309, %v5321
      %v5323 = vpop.f32.mrf.mxu0
      %5324 = vdwg.mxu0
      %5325 = vmatpush.bf16.msra.mxu0 %v5095
      %5326 = vmatpush.bf16.msra.mxu0 %v5093
      %5327 = vmatpush.bf16.msra.mxu0 %v5091
      %5328 = vmatpush.bf16.msra.mxu0 %v5089
      %5329 = vmatpush.bf16.msra.mxu0 %v5087
      %5330 = vmatpush.bf16.msra.mxu0 %v5085
      %5331 = vmatpush.bf16.msra.mxu0 %v5083
      %5332 = vmatpush.bf16.msra.mxu0 %v5081
      %5333 = vmatmul.bf16.gmra.mxu0 %v4616
      %v5334 = vpop.f32.mrf.mxu0
      %v5335 = vadd.f32 %v5322, %v5334
      %v5336 = vpop.f32.mrf.mxu0
      %5337 = vdwg.mxu0
      %5338 = vmatpush.bf16.msra.mxu0 %v5111
      %5339 = vmatpush.bf16.msra.mxu0 %v5109
      %5340 = vmatpush.bf16.msra.mxu0 %v5107
      %5341 = vmatpush.bf16.msra.mxu0 %v5105
      %5342 = vmatpush.bf16.msra.mxu0 %v5103
      %5343 = vmatpush.bf16.msra.mxu0 %v5101
      %5344 = vmatpush.bf16.msra.mxu0 %v5099
      %5345 = vmatpush.bf16.msra.mxu0 %v5097
      %5346 = vmatmul.bf16.gmra.mxu0 %v4617
      %v5347 = vpop.f32.mrf.mxu0
      %v5348 = vadd.f32 %v5335, %v5347
      %v5349 = vpop.f32.mrf.mxu0
      %5350 = vdwg.mxu0
      %5351 = vmatpush.bf16.msra.mxu0 0
      %5352 = vmatpush.bf16.msra.mxu0 %v5255
      %5353 = vmatpush.bf16.msra.mxu0 %v5123
      %5354 = vmatpush.bf16.msra.mxu0 %v5121
      %5355 = vmatpush.bf16.msra.mxu0 %v5119
      %5356 = vmatpush.bf16.msra.mxu0 %v5117
      %5357 = vmatpush.bf16.msra.mxu0 %v5115
      %5358 = vmatpush.bf16.msra.mxu0 %v5113
      %5359 = vmatmul.bf16.gmra.mxu0 %v5252
      %v5360 = vpop.f32.mrf.mxu0
      %v5361 = vadd.f32 %v5348, %v5360
      %v5362 = vpop.f32.mrf.mxu0
      %5363 = vdwg.mxu0
      %5364 = vmatpush.bf16.msra.mxu0 %v5016
      %5365 = vmatpush.bf16.msra.mxu0 %v5014
      %5366 = vmatpush.bf16.msra.mxu0 %v5012
      %5367 = vmatpush.bf16.msra.mxu0 %v5010
      %5368 = vmatpush.bf16.msra.mxu0 %v5008
      %5369 = vmatpush.bf16.msra.mxu0 %v5006
      %5370 = vmatpush.bf16.msra.mxu0 %v5004
      %5371 = vmatpush.bf16.msra.mxu0 %v5002
      %5372 = vmatmul.bf16.gmra.mxu0 %v4611
      %v5373 = vpop.f32.mrf.mxu0
      %v5374 = vadd.f32 0.0, %v5373
      %v5375 = vpop.f32.mrf.mxu0
      %5376 = vdwg.mxu0
      %5377 = vmatpush.bf16.msra.mxu0 %v5032
      %5378 = vmatpush.bf16.msra.mxu0 %v5030
      %5379 = vmatpush.bf16.msra.mxu0 %v5028
      %5380 = vmatpush.bf16.msra.mxu0 %v5026
      %5381 = vmatpush.bf16.msra.mxu0 %v5024
      %5382 = vmatpush.bf16.msra.mxu0 %v5022
      %5383 = vmatpush.bf16.msra.mxu0 %v5020
      %5384 = vmatpush.bf16.msra.mxu0 %v5018
      %5385 = vmatmul.bf16.gmra.mxu0 %v4612
      %v5386 = vpop.f32.mrf.mxu0
      %v5387 = vadd.f32 %v5374, %v5386
      %v5388 = vpop.f32.mrf.mxu0
      %5389 = vdwg.mxu0
      %5390 = vmatpush.bf16.msra.mxu0 %v5048
      %5391 = vmatpush.bf16.msra.mxu0 %v5046
      %5392 = vmatpush.bf16.msra.mxu0 %v5044
      %5393 = vmatpush.bf16.msra.mxu0 %v5042
      %5394 = vmatpush.bf16.msra.mxu0 %v5040
      %5395 = vmatpush.bf16.msra.mxu0 %v5038
      %5396 = vmatpush.bf16.msra.mxu0 %v5036
      %5397 = vmatpush.bf16.msra.mxu0 %v5034
      %5398 = vmatmul.bf16.gmra.mxu0 %v4613
      %v5399 = vpop.f32.mrf.mxu0
      %v5400 = vadd.f32 %v5387, %v5399
      %v5401 = vpop.f32.mrf.mxu0
      %5402 = vdwg.mxu0
      %5403 = vmatpush.bf16.msra.mxu0 %v5064
      %5404 = vmatpush.bf16.msra.mxu0 %v5062
      %5405 = vmatpush.bf16.msra.mxu0 %v5060
      %5406 = vmatpush.bf16.msra.mxu0 %v5058
      %5407 = vmatpush.bf16.msra.mxu0 %v5056
      %5408 = vmatpush.bf16.msra.mxu0 %v5054
      %5409 = vmatpush.bf16.msra.mxu0 %v5052
      %5410 = vmatpush.bf16.msra.mxu0 %v5050
      %5411 = vmatmul.bf16.gmra.mxu0 %v4614
      %v5412 = vpop.f32.mrf.mxu0
      %v5413 = vadd.f32 %v5400, %v5412
      %v5414 = vpop.f32.mrf.mxu0
      %5415 = vdwg.mxu0
      %5416 = vmatpush.bf16.msra.mxu0 %v5080
      %5417 = vmatpush.bf16.msra.mxu0 %v5078
      %5418 = vmatpush.bf16.msra.mxu0 %v5076
      %5419 = vmatpush.bf16.msra.mxu0 %v5074
      %5420 = vmatpush.bf16.msra.mxu0 %v5072
      %5421 = vmatpush.bf16.msra.mxu0 %v5070
      %5422 = vmatpush.bf16.msra.mxu0 %v5068
      %5423 = vmatpush.bf16.msra.mxu0 %v5066
      %5424 = vmatmul.bf16.gmra.mxu0 %v4615
      %v5425 = vpop.f32.mrf.mxu0
      %v5426 = vadd.f32 %v5413, %v5425
      %v5427 = vpop.f32.mrf.mxu0
      %5428 = vdwg.mxu0
      %5429 = vmatpush.bf16.msra.mxu0 %v5096
      %5430 = vmatpush.bf16.msra.mxu0 %v5094
      %5431 = vmatpush.bf16.msra.mxu0 %v5092
      %5432 = vmatpush.bf16.msra.mxu0 %v5090
      %5433 = vmatpush.bf16.msra.mxu0 %v5088
      %5434 = vmatpush.bf16.msra.mxu0 %v5086
      %5435 = vmatpush.bf16.msra.mxu0 %v5084
      %5436 = vmatpush.bf16.msra.mxu0 %v5082
      %5437 = vmatmul.bf16.gmra.mxu0 %v4616
      %v5438 = vpop.f32.mrf.mxu0
      %v5439 = vadd.f32 %v5426, %v5438
      %v5440 = vpop.f32.mrf.mxu0
      %5441 = vdwg.mxu0
      %5442 = vmatpush.bf16.msra.mxu0 %v5112
      %5443 = vmatpush.bf16.msra.mxu0 %v5110
      %5444 = vmatpush.bf16.msra.mxu0 %v5108
      %5445 = vmatpush.bf16.msra.mxu0 %v5106
      %5446 = vmatpush.bf16.msra.mxu0 %v5104
      %5447 = vmatpush.bf16.msra.mxu0 %v5102
      %5448 = vmatpush.bf16.msra.mxu0 %v5100
      %5449 = vmatpush.bf16.msra.mxu0 %v5098
      %5450 = vmatmul.bf16.gmra.mxu0 %v4617
      %v5451 = vpop.f32.mrf.mxu0
      %v5452 = vadd.f32 %v5439, %v5451
      %v5453 = vpop.f32.mrf.mxu0
      %5454 = vdwg.mxu0
      %5455 = vmatpush.bf16.msra.mxu0 0
      %5456 = vmatpush.bf16.msra.mxu0 %v5258
      %5457 = vmatpush.bf16.msra.mxu0 %v5124
      %5458 = vmatpush.bf16.msra.mxu0 %v5122
      %5459 = vmatpush.bf16.msra.mxu0 %v5120
      %5460 = vmatpush.bf16.msra.mxu0 %v5118
      %5461 = vmatpush.bf16.msra.mxu0 %v5116
      %5462 = vmatpush.bf16.msra.mxu0 %v5114
      %5463 = vmatmul.bf16.gmra.mxu0 %v5252
      %v5464 = vpop.f32.mrf.mxu0
      %v5465 = vadd.f32 %v5452, %v5464
      %v5466 = vpop.f32.mrf.mxu0
      %5467 = vdwg.mxu0
      %v5468 = vadd.f32 %v4459, %v5361
      %v5469 = vadd.f32 %v4460, %v5465
      %v5470 = vld [vmem:[%s2] sm:$0x3]
      %v5472 = vperm.slane %v5470, 0
      %v5473 = vperm.slane %v5470, 1
      %v5476 = vmul.f32 %v5468, %v5472
      %v5477 = vmul.f32 %v5469, %v5473
      %v5478 = vld [vmem:[%s3] sm:$0x3]
      %v5480 = vperm.slane %v5478, 0
      %v5481 = vperm.slane %v5478, 1
      %v5484 = vadd.f32 %v5476, %v5480
      %v5485 = vadd.f32 %v5477, %v5481
      %v5486 = vmax.f32 %v5484, 0.0
      %v5487 = vmax.f32 %v5485, 0.0
      %vm5488 = vcmask 1040384
      %vm5489 = vcmask 585732
      %vm5490 = vmor %vm5489, %vm5488
      %5491 = vst.msk [vmem:[#allocation2] sm:$0x11] %vm5490, 0
      %vm5492 = vcmask 1041409
      %vm5493 = vcmask 586757
      %vm5494 = vmor %vm5493, %vm5492
      %5495 = vst.msk [vmem:[#allocation2 + $0x8] sm:$0x22] %vm5494, 0
      %v5496 = vpack.c.bf16 %v5487, %v5486
      %v5498 = vrot.slane %v5496, 7
      %v5499 = vrot.slane %v5498, 4
      %vm5502 = vcmask 1043457
      %vm5503 = vcmask 588805
      %vm5504 = vmor %vm5503, %vm5502
      %5505 = vst.msk [vmem:[#allocation2] sm:$0xee] %vm5504, %v5498
      %5506 = vst.msk [vmem:[#allocation2 + $0x8] sm:$0x11] %vm5490, %v5499
      %v5507 = vld [vmem:[#allocation2] sm:$0xff]
      %v5508 = vld [vmem:[%s4] sm:$0xf]
      %v5509 = vld [vmem:[%s4 + $0x4] sm:$0xf]
      %v5510 = vld [vmem:[%s4 + $0x8] sm:$0xf]
      %v5511 = vld [vmem:[%s4 + $0xc] sm:$0xf]
      %v5512 = vld [vmem:[%s4 + $0x10] sm:$0xf]
      %v5513 = vld [vmem:[%s4 + $0x14] sm:$0xf]
      %v5514 = vld [vmem:[%s4 + $0x18] sm:$0xf]
      %v5515 = vld [vmem:[%s4 + $0x1c] sm:$0xf]
      %v5516 = vld [vmem:[%s4 + $0x20] sm:$0xf]
      %v5517 = vld [vmem:[%s4 + $0x24] sm:$0xf]
      %v5518 = vld [vmem:[%s4 + $0x28] sm:$0xf]
      %v5519 = vld [vmem:[%s4 + $0x2c] sm:$0xf]
      %v5520 = vld [vmem:[%s4 + $0x30] sm:$0xf]
      %v5521 = vld [vmem:[%s4 + $0x34] sm:$0xf]
      %v5522 = vld [vmem:[%s4 + $0x38] sm:$0xf]
      %v5523 = vld [vmem:[%s4 + $0x3c] sm:$0xf]
      %v5524 = vld [vmem:[%s4 + $0x40] sm:$0xf]
      %v5525 = vld [vmem:[%s4 + $0x44] sm:$0xf]
      %v5526 = vld [vmem:[%s4 + $0x48] sm:$0xf]
      %v5527 = vld [vmem:[%s4 + $0x4c] sm:$0xf]
      %v5528 = vld [vmem:[%s4 + $0x50] sm:$0xf]
      %v5529 = vld [vmem:[%s4 + $0x54] sm:$0xf]
      %v5530 = vld [vmem:[%s4 + $0x58] sm:$0xf]
      %v5531 = vld [vmem:[%s4 + $0x5c] sm:$0xf]
      %v5532 = vld [vmem:[%s4 + $0x60] sm:$0xf]
      %v5533 = vld [vmem:[#allocation2 + $0x8] sm:$0x11]
      %s5534 = scalar_lea.vmem %s4, 100
      %v5535 = vld [vmem:[%s5534] sm:$0xf]
      %v5536 = vld [vmem:[%s5534 + $0x4] sm:$0xf]
      %v5537 = vld [vmem:[%s5534 + $0x8] sm:$0xf]
      %v5538 = vld [vmem:[%s5534 + $0xc] sm:$0xf]
      %v5539 = vld [vmem:[%s5534 + $0x10] sm:$0xf]
      %v5540 = vld [vmem:[%s5534 + $0x14] sm:$0xf]
      %v5541 = vld [vmem:[%s5534 + $0x18] sm:$0xf]
      %v5542 = vld [vmem:[%s5534 + $0x1c] sm:$0xf]
      %v5543 = vld [vmem:[%s5534 + $0x20] sm:$0xf]
      %v5544 = vld [vmem:[%s5534 + $0x24] sm:$0xf]
      %v5545 = vld [vmem:[%s5534 + $0x28] sm:$0xf]
      %v5546 = vld [vmem:[%s5534 + $0x2c] sm:$0xf]
      %v5547 = vld [vmem:[%s5534 + $0x30] sm:$0xf]
      %v5548 = vld [vmem:[%s5534 + $0x34] sm:$0xf]
      %v5549 = vld [vmem:[%s5534 + $0x38] sm:$0xf]
      %v5550 = vld [vmem:[%s5534 + $0x3c] sm:$0xf]
      %v5551 = vld [vmem:[%s5534 + $0x40] sm:$0xf]
      %v5552 = vld [vmem:[%s5534 + $0x44] sm:$0xf]
      %v5553 = vld [vmem:[%s5534 + $0x48] sm:$0xf]
      %v5554 = vld [vmem:[%s5534 + $0x4c] sm:$0xf]
      %v5555 = vld [vmem:[%s5534 + $0x50] sm:$0xf]
      %v5556 = vld [vmem:[%s5534 + $0x54] sm:$0xf]
      %v5557 = vld [vmem:[%s5534 + $0x58] sm:$0xf]
      %v5558 = vld [vmem:[%s5534 + $0x5c] sm:$0xf]
      %v5559 = vld [vmem:[%s5534 + $0x60] sm:$0xf]
      %v5562 = vunpack.c.l.b16 %v5507
      %v5563 = vunpack.c.h.b16 %v5507
      %v5564 = vunpack.c.l.b16 %v5533
      %v5565 = vunpack.c.h.b16 %v5533
      %v5566 = vpack.c.b16 %v5564, %v5562
      %v5567 = vpack.c.b16 %v5565, %v5563
      %v5569 = vshrl.u32 %v5566, 16
      %v5571 = vshll.u32 %v5566, 16
      %v5573 = vrot.slane %v5571, 1
      %v5574 = vor.u32 %v5569, %v5573
      %v5576 = vshrl.u32 %v5567, 16
      %v5578 = vshll.u32 %v5567, 16
      %v5580 = vrot.slane %v5578, 1
      %v5581 = vor.u32 %v5576, %v5580
      %v5608 = vunpack.c.l.b16 %v5535
      %v5609 = vunpack.c.l.b16 %v5536
      %v5610 = vunpack.c.l.b16 %v5537
      %v5611 = vunpack.c.l.b16 %v5538
      %v5612 = vunpack.c.l.b16 %v5539
      %v5613 = vunpack.c.l.b16 %v5540
      %v5614 = vunpack.c.l.b16 %v5541
      %v5615 = vunpack.c.l.b16 %v5542
      %v5616 = vunpack.c.l.b16 %v5543
      %v5617 = vunpack.c.l.b16 %v5544
      %v5618 = vunpack.c.l.b16 %v5545
      %v5619 = vunpack.c.l.b16 %v5546
      %v5620 = vunpack.c.l.b16 %v5547
      %v5621 = vunpack.c.l.b16 %v5548
      %v5622 = vunpack.c.l.b16 %v5549
      %v5623 = vunpack.c.l.b16 %v5550
      %v5624 = vunpack.c.l.b16 %v5551
      %v5625 = vunpack.c.l.b16 %v5552
      %v5626 = vunpack.c.l.b16 %v5553
      %v5627 = vunpack.c.l.b16 %v5554
      %v5628 = vunpack.c.l.b16 %v5555
      %v5629 = vunpack.c.l.b16 %v5556
      %v5630 = vunpack.c.l.b16 %v5557
      %v5631 = vunpack.c.l.b16 %v5558
      %v5632 = vunpack.c.l.b16 %v5559
      %v5633 = vpack.c.b16 %v5609, %v5608
      %v5634 = vpack.c.b16 %v5611, %v5610
      %v5635 = vpack.c.b16 %v5613, %v5612
      %v5636 = vpack.c.b16 %v5615, %v5614
      %v5637 = vpack.c.b16 %v5617, %v5616
      %v5638 = vpack.c.b16 %v5619, %v5618
      %v5639 = vpack.c.b16 %v5621, %v5620
      %v5640 = vpack.c.b16 %v5623, %v5622
      %v5641 = vpack.c.b16 %v5625, %v5624
      %v5642 = vpack.c.b16 %v5627, %v5626
      %v5643 = vpack.c.b16 %v5629, %v5628
      %v5644 = vpack.c.b16 %v5631, %v5630
      %v5645 = vpack.c.b16 %v5632, %v5632
      %vm5658 = vcmask 588800
      %v5660 = vsel %vm5658, %v5581, 0
      %v5663 = vsel %vm1315, %v5645, 0
      %5665 = vmatpush.bf16.msra.mxu0 %v5640
      %5666 = vmatpush.bf16.msra.mxu0 %v5639
      %5667 = vmatpush.bf16.msra.mxu0 %v5638
      %5668 = vmatpush.bf16.msra.mxu0 %v5637
      %5669 = vmatpush.bf16.msra.mxu0 %v5636
      %5670 = vmatpush.bf16.msra.mxu0 %v5635
      %5671 = vmatpush.bf16.msra.mxu0 %v5634
      %5672 = vmatpush.bf16.msra.mxu0 %v5633
      %5673 = vmatmul.bf16.gmra.mxu0 %v5574
      %v5674 = vpop.f32.mrf.mxu0
      %v5675 = vadd.f32 0.0, %v5674
      %v5676 = vpop.f32.mrf.mxu0
      %5677 = vdwg.mxu0
      %5678 = vmatpush.bf16.msra.mxu0 0
      %5679 = vmatpush.bf16.msra.mxu0 0
      %5680 = vmatpush.bf16.msra.mxu0 0
      %5681 = vmatpush.bf16.msra.mxu0 %v5663
      %5682 = vmatpush.bf16.msra.mxu0 %v5644
      %5683 = vmatpush.bf16.msra.mxu0 %v5643
      %5684 = vmatpush.bf16.msra.mxu0 %v5642
      %5685 = vmatpush.bf16.msra.mxu0 %v5641
      %5686 = vmatmul.bf16.gmra.mxu0 %v5660
      %v5687 = vpop.f32.mrf.mxu0
      %v5688 = vadd.f32 %v5675, %v5687
      %v5689 = vpop.f32.mrf.mxu0
      %5690 = vdwg.mxu0
      %v5691 = vpack.c.b16 %v5562, %v5562
      %v5692 = vpack.c.b16 %v5563, %v5563
      %v5719 = vunpack.c.l.b16 %v5508
      %v5720 = vunpack.c.l.b16 %v5509
      %v5721 = vunpack.c.l.b16 %v5510
      %v5722 = vunpack.c.l.b16 %v5511
      %v5723 = vunpack.c.l.b16 %v5512
      %v5724 = vunpack.c.l.b16 %v5513
      %v5725 = vunpack.c.l.b16 %v5514
      %v5726 = vunpack.c.l.b16 %v5515
      %v5727 = vunpack.c.l.b16 %v5516
      %v5728 = vunpack.c.l.b16 %v5517
      %v5729 = vunpack.c.l.b16 %v5518
      %v5730 = vunpack.c.l.b16 %v5519
      %v5731 = vunpack.c.l.b16 %v5520
      %v5732 = vunpack.c.l.b16 %v5521
      %v5733 = vunpack.c.l.b16 %v5522
      %v5734 = vunpack.c.l.b16 %v5523
      %v5735 = vunpack.c.l.b16 %v5524
      %v5736 = vunpack.c.l.b16 %v5525
      %v5737 = vunpack.c.l.b16 %v5526
      %v5738 = vunpack.c.l.b16 %v5527
      %v5739 = vunpack.c.l.b16 %v5528
      %v5740 = vunpack.c.l.b16 %v5529
      %v5741 = vunpack.c.l.b16 %v5530
      %v5742 = vunpack.c.l.b16 %v5531
      %v5743 = vunpack.c.l.b16 %v5532
      %v5744 = vpack.c.b16 %v5720, %v5719
      %v5745 = vpack.c.b16 %v5722, %v5721
      %v5746 = vpack.c.b16 %v5724, %v5723
      %v5747 = vpack.c.b16 %v5726, %v5725
      %v5748 = vpack.c.b16 %v5728, %v5727
      %v5749 = vpack.c.b16 %v5730, %v5729
      %v5750 = vpack.c.b16 %v5732, %v5731
      %v5751 = vpack.c.b16 %v5734, %v5733
      %v5752 = vpack.c.b16 %v5736, %v5735
      %v5753 = vpack.c.b16 %v5738, %v5737
      %v5754 = vpack.c.b16 %v5740, %v5739
      %v5755 = vpack.c.b16 %v5742, %v5741
      %v5756 = vpack.c.b16 %v5743, %v5743
      %v5770 = vsel %vm5658, %v5692, 0
      %v5773 = vsel %vm1315, %v5756, 0
      %5775 = vmatpush.bf16.msra.mxu0 %v5751
      %5776 = vmatpush.bf16.msra.mxu0 %v5750
      %5777 = vmatpush.bf16.msra.mxu0 %v5749
      %5778 = vmatpush.bf16.msra.mxu0 %v5748
      %5779 = vmatpush.bf16.msra.mxu0 %v5747
      %5780 = vmatpush.bf16.msra.mxu0 %v5746
      %5781 = vmatpush.bf16.msra.mxu0 %v5745
      %5782 = vmatpush.bf16.msra.mxu0 %v5744
      %5783 = vmatmul.bf16.gmra.mxu0 %v5691
      %v5784 = vpop.f32.mrf.mxu0
      %v5785 = vadd.f32 %v5688, %v5784
      %v5786 = vpop.f32.mrf.mxu0
      %5787 = vdwg.mxu0
      %5788 = vmatpush.bf16.msra.mxu0 0
      %5789 = vmatpush.bf16.msra.mxu0 0
      %5790 = vmatpush.bf16.msra.mxu0 0
      %5791 = vmatpush.bf16.msra.mxu0 %v5773
      %5792 = vmatpush.bf16.msra.mxu0 %v5755
      %5793 = vmatpush.bf16.msra.mxu0 %v5754
      %5794 = vmatpush.bf16.msra.mxu0 %v5753
      %5795 = vmatpush.bf16.msra.mxu0 %v5752
      %5796 = vmatmul.bf16.gmra.mxu0 %v5770
      %v5797 = vpop.f32.mrf.mxu0
      %v5798 = vadd.f32 %v5785, %v5797
      %v5799 = vpop.f32.mrf.mxu0
      %5800 = vdwg.mxu0
      %v5801 = vld [vmem:[#allocation2] sm:$0xee]
      %s5802 = scalar_lea.vmem %s4, 200
      %v5803 = vld [vmem:[%s5802] sm:$0xf]
      %v5804 = vld [vmem:[%s5802 + $0x4] sm:$0xf]
      %v5805 = vld [vmem:[%s5802 + $0x8] sm:$0xf]
      %v5806 = vld [vmem:[%s5802 + $0xc] sm:$0xf]
      %v5807 = vld [vmem:[%s5802 + $0x10] sm:$0xf]
      %v5808 = vld [vmem:[%s5802 + $0x14] sm:$0xf]
      %v5809 = vld [vmem:[%s5802 + $0x18] sm:$0xf]
      %v5810 = vld [vmem:[%s5802 + $0x1c] sm:$0xf]
      %v5811 = vld [vmem:[%s5802 + $0x20] sm:$0xf]
      %v5812 = vld [vmem:[%s5802 + $0x24] sm:$0xf]
      %v5813 = vld [vmem:[%s5802 + $0x28] sm:$0xf]
      %v5814 = vld [vmem:[%s5802 + $0x2c] sm:$0xf]
      %v5815 = vld [vmem:[%s5802 + $0x30] sm:$0xf]
      %v5816 = vld [vmem:[%s5802 + $0x34] sm:$0xf]
      %v5817 = vld [vmem:[%s5802 + $0x38] sm:$0xf]
      %v5818 = vld [vmem:[%s5802 + $0x3c] sm:$0xf]
      %v5819 = vld [vmem:[%s5802 + $0x40] sm:$0xf]
      %v5820 = vld [vmem:[%s5802 + $0x44] sm:$0xf]
      %v5821 = vld [vmem:[%s5802 + $0x48] sm:$0xf]
      %v5822 = vld [vmem:[%s5802 + $0x4c] sm:$0xf]
      %v5823 = vld [vmem:[%s5802 + $0x50] sm:$0xf]
      %v5824 = vld [vmem:[%s5802 + $0x54] sm:$0xf]
      %v5825 = vld [vmem:[%s5802 + $0x58] sm:$0xf]
      %v5826 = vld [vmem:[%s5802 + $0x5c] sm:$0xf]
      %v5827 = vld [vmem:[%s5802 + $0x60] sm:$0xf]
      %v5829 = vunpack.c.l.b16 %v5801
      %v5830 = vunpack.c.h.b16 %v5801
      %v5831 = vpack.c.b16 %v5564, %v5829
      %v5832 = vpack.c.b16 %v5565, %v5830
      %v5833 = vrot.slane %v5831, 1
      %v5834 = vrot.slane %v5832, 1
      %v5861 = vunpack.c.l.b16 %v5803
      %v5862 = vunpack.c.l.b16 %v5804
      %v5863 = vunpack.c.l.b16 %v5805
      %v5864 = vunpack.c.l.b16 %v5806
      %v5865 = vunpack.c.l.b16 %v5807
      %v5866 = vunpack.c.l.b16 %v5808
      %v5867 = vunpack.c.l.b16 %v5809
      %v5868 = vunpack.c.l.b16 %v5810
      %v5869 = vunpack.c.l.b16 %v5811
      %v5870 = vunpack.c.l.b16 %v5812
      %v5871 = vunpack.c.l.b16 %v5813
      %v5872 = vunpack.c.l.b16 %v5814
      %v5873 = vunpack.c.l.b16 %v5815
      %v5874 = vunpack.c.l.b16 %v5816
      %v5875 = vunpack.c.l.b16 %v5817
      %v5876 = vunpack.c.l.b16 %v5818
      %v5877 = vunpack.c.l.b16 %v5819
      %v5878 = vunpack.c.l.b16 %v5820
      %v5879 = vunpack.c.l.b16 %v5821
      %v5880 = vunpack.c.l.b16 %v5822
      %v5881 = vunpack.c.l.b16 %v5823
      %v5882 = vunpack.c.l.b16 %v5824
      %v5883 = vunpack.c.l.b16 %v5825
      %v5884 = vunpack.c.l.b16 %v5826
      %v5885 = vunpack.c.l.b16 %v5827
      %v5886 = vpack.c.b16 %v5862, %v5861
      %v5887 = vpack.c.b16 %v5864, %v5863
      %v5888 = vpack.c.b16 %v5866, %v5865
      %v5889 = vpack.c.b16 %v5868, %v5867
      %v5890 = vpack.c.b16 %v5870, %v5869
      %v5891 = vpack.c.b16 %v5872, %v5871
      %v5892 = vpack.c.b16 %v5874, %v5873
      %v5893 = vpack.c.b16 %v5876, %v5875
      %v5894 = vpack.c.b16 %v5878, %v5877
      %v5895 = vpack.c.b16 %v5880, %v5879
      %v5896 = vpack.c.b16 %v5882, %v5881
      %v5897 = vpack.c.b16 %v5884, %v5883
      %v5898 = vpack.c.b16 %v5885, %v5885
      %v5912 = vsel %vm5658, %v5834, 0
      %v5915 = vsel %vm1315, %v5898, 0
      %5917 = vmatpush.bf16.msra.mxu0 %v5893
      %5918 = vmatpush.bf16.msra.mxu0 %v5892
      %5919 = vmatpush.bf16.msra.mxu0 %v5891
      %5920 = vmatpush.bf16.msra.mxu0 %v5890
      %5921 = vmatpush.bf16.msra.mxu0 %v5889
      %5922 = vmatpush.bf16.msra.mxu0 %v5888
      %5923 = vmatpush.bf16.msra.mxu0 %v5887
      %5924 = vmatpush.bf16.msra.mxu0 %v5886
      %5925 = vmatmul.bf16.gmra.mxu0 %v5833
      %v5926 = vpop.f32.mrf.mxu0
      %v5927 = vadd.f32 0.0, %v5926
      %v5928 = vpop.f32.mrf.mxu0
      %5929 = vdwg.mxu0
      %5930 = vmatpush.bf16.msra.mxu0 0
      %5931 = vmatpush.bf16.msra.mxu0 0
      %5932 = vmatpush.bf16.msra.mxu0 0
      %5933 = vmatpush.bf16.msra.mxu0 %v5915
      %5934 = vmatpush.bf16.msra.mxu0 %v5897
      %5935 = vmatpush.bf16.msra.mxu0 %v5896
      %5936 = vmatpush.bf16.msra.mxu0 %v5895
      %5937 = vmatpush.bf16.msra.mxu0 %v5894
      %5938 = vmatmul.bf16.gmra.mxu0 %v5912
      %v5939 = vpop.f32.mrf.mxu0
      %v5940 = vadd.f32 %v5927, %v5939
      %v5941 = vpop.f32.mrf.mxu0
      %5942 = vdwg.mxu0
      %v5943 = vadd.f32 %v5798, %v5940
      %v5944 = vld [vmem:[#allocation2 + $0x8] sm:$0x33]
      %s5945 = scalar_lea.vmem %s4, 300
      %v5946 = vld [vmem:[%s5945] sm:$0xf]
      %v5947 = vld [vmem:[%s5945 + $0x4] sm:$0xf]
      %v5948 = vld [vmem:[%s5945 + $0x8] sm:$0xf]
      %v5949 = vld [vmem:[%s5945 + $0xc] sm:$0xf]
      %v5950 = vld [vmem:[%s5945 + $0x10] sm:$0xf]
      %v5951 = vld [vmem:[%s5945 + $0x14] sm:$0xf]
      %v5952 = vld [vmem:[%s5945 + $0x18] sm:$0xf]
      %v5953 = vld [vmem:[%s5945 + $0x1c] sm:$0xf]
      %v5954 = vld [vmem:[%s5945 + $0x20] sm:$0xf]
      %v5955 = vld [vmem:[%s5945 + $0x24] sm:$0xf]
      %v5956 = vld [vmem:[%s5945 + $0x28] sm:$0xf]
      %v5957 = vld [vmem:[%s5945 + $0x2c] sm:$0xf]
      %v5958 = vld [vmem:[%s5945 + $0x30] sm:$0xf]
      %v5959 = vld [vmem:[%s5945 + $0x34] sm:$0xf]
      %v5960 = vld [vmem:[%s5945 + $0x38] sm:$0xf]
      %v5961 = vld [vmem:[%s5945 + $0x3c] sm:$0xf]
      %v5962 = vld [vmem:[%s5945 + $0x40] sm:$0xf]
      %v5963 = vld [vmem:[%s5945 + $0x44] sm:$0xf]
      %v5964 = vld [vmem:[%s5945 + $0x48] sm:$0xf]
      %v5965 = vld [vmem:[%s5945 + $0x4c] sm:$0xf]
      %v5966 = vld [vmem:[%s5945 + $0x50] sm:$0xf]
      %v5967 = vld [vmem:[%s5945 + $0x54] sm:$0xf]
      %v5968 = vld [vmem:[%s5945 + $0x58] sm:$0xf]
      %v5969 = vld [vmem:[%s5945 + $0x5c] sm:$0xf]
      %v5970 = vld [vmem:[%s5945 + $0x60] sm:$0xf]
      %v5972 = vunpack.c.l.b16 %v5944
      %v5973 = vunpack.c.h.b16 %v5944
      %v5974 = vpack.c.b16 %v5972, %v5829
      %v5975 = vpack.c.b16 %v5973, %v5830
      %v5977 = vshrl.u32 %v5974, 16
      %v5979 = vrot.slane %v5977, 1
      %v5980 = vshll.u32 %v5974, 16
      %v5982 = vrot.slane %v5980, 2
      %v5983 = vor.u32 %v5979, %v5982
      %v5985 = vshrl.u32 %v5975, 16
      %v5987 = vrot.slane %v5985, 1
      %v5988 = vshll.u32 %v5975, 16
      %v5990 = vrot.slane %v5988, 2
      %v5991 = vor.u32 %v5987, %v5990
      %v6018 = vunpack.c.l.b16 %v5946
      %v6019 = vunpack.c.l.b16 %v5947
      %v6020 = vunpack.c.l.b16 %v5948
      %v6021 = vunpack.c.l.b16 %v5949
      %v6022 = vunpack.c.l.b16 %v5950
      %v6023 = vunpack.c.l.b16 %v5951
      %v6024 = vunpack.c.l.b16 %v5952
      %v6025 = vunpack.c.l.b16 %v5953
      %v6026 = vunpack.c.l.b16 %v5954
      %v6027 = vunpack.c.l.b16 %v5955
      %v6028 = vunpack.c.l.b16 %v5956
      %v6029 = vunpack.c.l.b16 %v5957
      %v6030 = vunpack.c.l.b16 %v5958
      %v6031 = vunpack.c.l.b16 %v5959
      %v6032 = vunpack.c.l.b16 %v5960
      %v6033 = vunpack.c.l.b16 %v5961
      %v6034 = vunpack.c.l.b16 %v5962
      %v6035 = vunpack.c.l.b16 %v5963
      %v6036 = vunpack.c.l.b16 %v5964
      %v6037 = vunpack.c.l.b16 %v5965
      %v6038 = vunpack.c.l.b16 %v5966
      %v6039 = vunpack.c.l.b16 %v5967
      %v6040 = vunpack.c.l.b16 %v5968
      %v6041 = vunpack.c.l.b16 %v5969
      %v6042 = vunpack.c.l.b16 %v5970
      %v6043 = vpack.c.b16 %v6019, %v6018
      %v6044 = vpack.c.b16 %v6021, %v6020
      %v6045 = vpack.c.b16 %v6023, %v6022
      %v6046 = vpack.c.b16 %v6025, %v6024
      %v6047 = vpack.c.b16 %v6027, %v6026
      %v6048 = vpack.c.b16 %v6029, %v6028
      %v6049 = vpack.c.b16 %v6031, %v6030
      %v6050 = vpack.c.b16 %v6033, %v6032
      %v6051 = vpack.c.b16 %v6035, %v6034
      %v6052 = vpack.c.b16 %v6037, %v6036
      %v6053 = vpack.c.b16 %v6039, %v6038
      %v6054 = vpack.c.b16 %v6041, %v6040
      %v6055 = vpack.c.b16 %v6042, %v6042
      %v6069 = vsel %vm5658, %v5991, 0
      %v6072 = vsel %vm1315, %v6055, 0
      %6074 = vmatpush.bf16.msra.mxu0 %v6050
      %6075 = vmatpush.bf16.msra.mxu0 %v6049
      %6076 = vmatpush.bf16.msra.mxu0 %v6048
      %6077 = vmatpush.bf16.msra.mxu0 %v6047
      %6078 = vmatpush.bf16.msra.mxu0 %v6046
      %6079 = vmatpush.bf16.msra.mxu0 %v6045
      %6080 = vmatpush.bf16.msra.mxu0 %v6044
      %6081 = vmatpush.bf16.msra.mxu0 %v6043
      %6082 = vmatmul.bf16.gmra.mxu0 %v5983
      %v6083 = vpop.f32.mrf.mxu0
      %v6084 = vadd.f32 0.0, %v6083
      %v6085 = vpop.f32.mrf.mxu0
      %6086 = vdwg.mxu0
      %6087 = vmatpush.bf16.msra.mxu0 0
      %6088 = vmatpush.bf16.msra.mxu0 0
      %6089 = vmatpush.bf16.msra.mxu0 0
      %6090 = vmatpush.bf16.msra.mxu0 %v6072
      %6091 = vmatpush.bf16.msra.mxu0 %v6054
      %6092 = vmatpush.bf16.msra.mxu0 %v6053
      %6093 = vmatpush.bf16.msra.mxu0 %v6052
      %6094 = vmatpush.bf16.msra.mxu0 %v6051
      %6095 = vmatmul.bf16.gmra.mxu0 %v6069
      %v6096 = vpop.f32.mrf.mxu0
      %v6097 = vadd.f32 %v6084, %v6096
      %v6098 = vpop.f32.mrf.mxu0
      %6099 = vdwg.mxu0
      %v6100 = vadd.f32 %v5943, %v6097
      %v6101 = vld [vmem:[#allocation2] sm:$0xcc]
      %s6102 = scalar_lea.vmem %s4, 400
      %v6103 = vld [vmem:[%s6102] sm:$0xf]
      %v6104 = vld [vmem:[%s6102 + $0x4] sm:$0xf]
      %v6105 = vld [vmem:[%s6102 + $0x8] sm:$0xf]
      %v6106 = vld [vmem:[%s6102 + $0xc] sm:$0xf]
      %v6107 = vld [vmem:[%s6102 + $0x10] sm:$0xf]
      %v6108 = vld [vmem:[%s6102 + $0x14] sm:$0xf]
      %v6109 = vld [vmem:[%s6102 + $0x18] sm:$0xf]
      %v6110 = vld [vmem:[%s6102 + $0x1c] sm:$0xf]
      %v6111 = vld [vmem:[%s6102 + $0x20] sm:$0xf]
      %v6112 = vld [vmem:[%s6102 + $0x24] sm:$0xf]
      %v6113 = vld [vmem:[%s6102 + $0x28] sm:$0xf]
      %v6114 = vld [vmem:[%s6102 + $0x2c] sm:$0xf]
      %v6115 = vld [vmem:[%s6102 + $0x30] sm:$0xf]
      %v6116 = vld [vmem:[%s6102 + $0x34] sm:$0xf]
      %v6117 = vld [vmem:[%s6102 + $0x38] sm:$0xf]
      %v6118 = vld [vmem:[%s6102 + $0x3c] sm:$0xf]
      %v6119 = vld [vmem:[%s6102 + $0x40] sm:$0xf]
      %v6120 = vld [vmem:[%s6102 + $0x44] sm:$0xf]
      %v6121 = vld [vmem:[%s6102 + $0x48] sm:$0xf]
      %v6122 = vld [vmem:[%s6102 + $0x4c] sm:$0xf]
      %v6123 = vld [vmem:[%s6102 + $0x50] sm:$0xf]
      %v6124 = vld [vmem:[%s6102 + $0x54] sm:$0xf]
      %v6125 = vld [vmem:[%s6102 + $0x58] sm:$0xf]
      %v6126 = vld [vmem:[%s6102 + $0x5c] sm:$0xf]
      %v6127 = vld [vmem:[%s6102 + $0x60] sm:$0xf]
      %v6129 = vunpack.c.l.b16 %v6101
      %v6130 = vunpack.c.h.b16 %v6101
      %v6131 = vpack.c.b16 %v5972, %v6129
      %v6132 = vpack.c.b16 %v5973, %v6130
      %v6133 = vrot.slane %v6131, 2
      %v6134 = vrot.slane %v6132, 2
      %v6161 = vunpack.c.l.b16 %v6103
      %v6162 = vunpack.c.l.b16 %v6104
      %v6163 = vunpack.c.l.b16 %v6105
      %v6164 = vunpack.c.l.b16 %v6106
      %v6165 = vunpack.c.l.b16 %v6107
      %v6166 = vunpack.c.l.b16 %v6108
      %v6167 = vunpack.c.l.b16 %v6109
      %v6168 = vunpack.c.l.b16 %v6110
      %v6169 = vunpack.c.l.b16 %v6111
      %v6170 = vunpack.c.l.b16 %v6112
      %v6171 = vunpack.c.l.b16 %v6113
      %v6172 = vunpack.c.l.b16 %v6114
      %v6173 = vunpack.c.l.b16 %v6115
      %v6174 = vunpack.c.l.b16 %v6116
      %v6175 = vunpack.c.l.b16 %v6117
      %v6176 = vunpack.c.l.b16 %v6118
      %v6177 = vunpack.c.l.b16 %v6119
      %v6178 = vunpack.c.l.b16 %v6120
      %v6179 = vunpack.c.l.b16 %v6121
      %v6180 = vunpack.c.l.b16 %v6122
      %v6181 = vunpack.c.l.b16 %v6123
      %v6182 = vunpack.c.l.b16 %v6124
      %v6183 = vunpack.c.l.b16 %v6125
      %v6184 = vunpack.c.l.b16 %v6126
      %v6185 = vunpack.c.l.b16 %v6127
      %v6186 = vpack.c.b16 %v6162, %v6161
      %v6187 = vpack.c.b16 %v6164, %v6163
      %v6188 = vpack.c.b16 %v6166, %v6165
      %v6189 = vpack.c.b16 %v6168, %v6167
      %v6190 = vpack.c.b16 %v6170, %v6169
      %v6191 = vpack.c.b16 %v6172, %v6171
      %v6192 = vpack.c.b16 %v6174, %v6173
      %v6193 = vpack.c.b16 %v6176, %v6175
      %v6194 = vpack.c.b16 %v6178, %v6177
      %v6195 = vpack.c.b16 %v6180, %v6179
      %v6196 = vpack.c.b16 %v6182, %v6181
      %v6197 = vpack.c.b16 %v6184, %v6183
      %v6198 = vpack.c.b16 %v6185, %v6185
      %v6212 = vsel %vm5658, %v6134, 0
      %v6215 = vsel %vm1315, %v6198, 0
      %6217 = vmatpush.bf16.msra.mxu0 %v6193
      %6218 = vmatpush.bf16.msra.mxu0 %v6192
      %6219 = vmatpush.bf16.msra.mxu0 %v6191
      %6220 = vmatpush.bf16.msra.mxu0 %v6190
      %6221 = vmatpush.bf16.msra.mxu0 %v6189
      %6222 = vmatpush.bf16.msra.mxu0 %v6188
      %6223 = vmatpush.bf16.msra.mxu0 %v6187
      %6224 = vmatpush.bf16.msra.mxu0 %v6186
      %6225 = vmatmul.bf16.gmra.mxu0 %v6133
      %v6226 = vpop.f32.mrf.mxu0
      %v6227 = vadd.f32 0.0, %v6226
      %v6228 = vpop.f32.mrf.mxu0
      %6229 = vdwg.mxu0
      %6230 = vmatpush.bf16.msra.mxu0 0
      %6231 = vmatpush.bf16.msra.mxu0 0
      %6232 = vmatpush.bf16.msra.mxu0 0
      %6233 = vmatpush.bf16.msra.mxu0 %v6215
      %6234 = vmatpush.bf16.msra.mxu0 %v6197
      %6235 = vmatpush.bf16.msra.mxu0 %v6196
      %6236 = vmatpush.bf16.msra.mxu0 %v6195
      %6237 = vmatpush.bf16.msra.mxu0 %v6194
      %6238 = vmatmul.bf16.gmra.mxu0 %v6212
      %v6239 = vpop.f32.mrf.mxu0
      %v6240 = vadd.f32 %v6227, %v6239
      %v6241 = vpop.f32.mrf.mxu0
      %6242 = vdwg.mxu0
      %v6243 = vadd.f32 %v6100, %v6240
      %v6244 = vld [vmem:[%s5] sm:$0x1]
      %v6246 = vperm.slane %v6244, 0
      %v6248 = vmul.f32 %v6243, %v6246
      %v6249 = vld [vmem:[%s6] sm:$0x1]
      %v6251 = vperm.slane %v6249, 0
      %v6253 = vadd.f32 %v6248, %v6251
      %v6254 = vmax.f32 %v6253, 0.0
      %v6255 = vld [vmem:[%s7] sm:$0xff]
      %v6256 = vld [vmem:[%s7 + $0x8] sm:$0xff]
      %v6257 = vld [vmem:[%s7 + $0x10] sm:$0xff]
      %v6258 = vld [vmem:[%s7 + $0x18] sm:$0x3f]
      %v6259 = vld [vmem:[%s8] sm:$0x1]
      %v6261 = vperm.slane %v6259, 0
      %vm6263 = vcmask 244736
      %v6265 = vsel %vm6263, %v6254, 0
      %vm6267 = vcmask 1045504
      %v6269 = vsel %vm6267, %v6258, 0
      %6271 = vmatpush.msra.mxu0 0.0
      %6272 = vmatpush.msra.mxu0 0.0
      %6273 = vmatpush.msra.mxu0 0.0
      %6274 = vmatpush.msra.mxu0 0.0
      %6275 = vmatpush.msra.mxu0 0.0
      %6276 = vmatpush.msra.mxu0 0.0
      %6277 = vmatpush.msra.mxu0 0.0
      %6278 = vmatpush.msra.mxu0 0.0
      %6279 = vmatpush.msra.mxu0 0.0
      %6280 = vmatpush.msra.mxu0 0.0
      %6281 = vmatpush.msra.mxu0 0.0
      %6282 = vmatpush.msra.mxu0 0.0
      %6283 = vmatpush.msra.mxu0 %v6269
      %6284 = vmatpush.msra.mxu0 %v6257
      %6285 = vmatpush.msra.mxu0 %v6256
      %6286 = vmatpush.msra.mxu0 %v6255
      %6287 = vmatmul.f32.gmra.mxu0 %v6265
      %v6288 = vpop.f32.mrf.mxu0
      %v6289 = vadd.f32 %v6261, %v6288
      %6290 = vdwg.mxu0
      %vm6291 = vcmask 490496
      %6292 = vst.msk [vmem:[%s330] sm:$0xff] %vm6291, %v6289
      %p6293 = scmp.lt.s32.totalorder %s20, 1
      %s6294 = scalar_select %p6293, %s20, 1
      %s6295 = smul.addr %s6294, 8
      %s6296 = scalar_lea.vmem %s9, %s6295
      // Predicated region
      $region57: #{forward.2} parent=55 // pred_check
        %p6297 = pneg %p232
      $region58: #{forward.2} parent=55 // pred_check_branch
        %6299 = sbr.rel (%p6297) target = $region60
      $region59: #{forward.2} parent=55 // pred_region
        _
      $region60: #{forward.2} parent=55 // pred_fallthru
        _
    $region56: #{forward.2} parent=5 // pred_fallthru
      _
    %p6300 = scmp.le.s32.totalorder 2, %s15
    // Predicated region
    $region61: #{forward.2} parent=5 // pred_check
      %p6301 = pneg %p6300
    $region62: #{forward.2} parent=5 // pred_check_branch
      %6303 = sbr.rel (%p6301) target = $region64
    $region63: #{forward.2} parent=5 // pred_region
      %s6304 = ssub.s32 %s15, 2
      // Predicated region
      $region65: #{forward.2} parent=63 // pred_check
        %p6305 = pneg %p238
      $region66: #{forward.2} parent=63 // pred_check_branch
        %6307 = sbr.rel (%p6305) target = $region68
      $region67: #{forward.2} parent=63 // pred_region
        %p6308 = scmp.lt.s32.totalorder %s21, 1
        %s6309 = scalar_select %p6308, %s21, 1
        %s6310 = smul.addr %s6309, 8
        %s6311 = scalar_lea.vmem %s9, %s6310
      $region68: #{forward.2} parent=63 // pred_fallthru
        _
    $region64: #{forward.2} parent=5 // pred_fallthru
      _
  $region6: #{forward.2} parent=0 // loop_footer
    %s19 = sadd.s32 1, %s15
  $region7: #{forward.2} parent=0 // loop_footer_branch
    %14 = sbr.rel target = $region3
  $region8: #{forward.2} parent=0 // loop_exit
    _

</llo_original>
